<compile_context>
chip_gen: v7x
topology: tpu7x:2x2x1
jax: 0.10.0
libtpu: 0.0.40
codegen_flags: <defaults>
</compile_context>

<pallas_src>
import numpy as np

import jax
import jax.numpy as jnp
from jax.experimental import pallas as pl
from jax.experimental.pallas import tpu as pltpu

_NB = 32  # images per grid step (any multiple of 8; 32 amortises step overhead)


# ---------------------------------------------------------------------------
# Wrapper-side weight re-packing (exact, one-time, tiny)
# ---------------------------------------------------------------------------
def _band_matrices(w, w_in):
    """Banded matrices so conv = sum over kernel-row di of one matmul.

    w: (OC, C, 5, 5) PyTorch OIHW weights.  Returns bb of shape
    (5, C*w_in, OC*ow) with bb[di, c*w_in + x, oc*ow + xp] = w[oc, c, di, x-xp]
    inside the band (ow = w_in - 4), zero elsewhere.  Built with a gather so
    weight values are copied exactly (no matmul rounding).
    """
    oc, c, kh, kw = w.shape
    ow = w_in - kw + 1
    x = np.arange(w_in)[:, None]
    xp = np.arange(ow)[None, :]
    dj = x - xp                                   # (w_in, ow)
    valid = ((dj >= 0) & (dj < kw)).astype(np.float32)
    dj_c = np.clip(dj, 0, kw - 1)
    wt = jnp.transpose(w, (2, 1, 0, 3))           # (kh, c, oc, kw)
    band = wt[:, :, :, dj_c]                      # (kh, c, oc, w_in, ow)
    band = band * jnp.asarray(valid)
    band = jnp.transpose(band, (0, 1, 3, 2, 4))   # (kh, c, w_in, oc, ow)
    return band.reshape(kh, c * w_in, oc * ow)


def _pool_w_matrix(c, w):
    """(c*w, c*(w//2)) block-diagonal matrix averaging adjacent width pairs."""
    wp = w // 2
    m = np.zeros((w, wp), np.float32)
    m[2 * np.arange(wp), np.arange(wp)] = 0.5
    m[2 * np.arange(wp) + 1, np.arange(wp)] = 0.5
    return jnp.asarray(np.kron(np.eye(c, dtype=np.float32), m))


# ---------------------------------------------------------------------------
# The fused kernel: conv1 -> tanh -> pool -> conv2 -> tanh -> pool -> fc1/2/3
# ---------------------------------------------------------------------------
def _lenet_kernel(x4_ref, bb1_ref, b1_ref, pw1_ref, bb2_ref, b2_ref, pw2_ref,
                  wfc1_ref, bfc1_ref, wfc2_ref, bfc2_ref, wfc3_ref, bfc3_ref,
                  out_ref):
    nb = x4_ref.shape[2]                 # images in this block (multiple of 8)
    f32 = jnp.float32

    def conv1_phase(r):
        # Conv1 output rows y = 4*j + r (j = 0..5); lanes = oc*24 + x.
        acc = jnp.zeros((6 * nb, 144), f32)
        for di in range(5):
            q, o = (r + di) % 4, (r + di) // 4
            # Rows (j, image) of the input at image-row 4*(j+o)+q: contiguous,
            # sublane-aligned slice; the reshape is layout-trivial (inner 8k).
            lhs = x4_ref[q, o:o + 6, :, :].reshape(6 * nb, 28)
            acc = acc + jnp.dot(lhs, bb1_ref[di], preferred_element_type=f32)
        act = jnp.tanh(acc + b1_ref[...])
        # Fused width pooling (2x per channel) on the resident tile.
        return jnp.dot(act, pw1_ref[...], preferred_element_type=f32)  # (6*nb, 72)

    # Fused height pooling: average the two conv1 row-phases per pooled row.
    p1 = (0.5 * (conv1_phase(0) + conv1_phase(1)),   # pooled rows 0,2,...,10
          0.5 * (conv1_phase(2) + conv1_phase(3)))   # pooled rows 1,3,...,11

    def conv2_phase(s):
        # Conv2 output rows y = 2*t + s (t = 0..3); lanes = oc*8 + x.
        acc = jnp.zeros((4 * nb, 128), f32)
        for di in range(5):
            par, o = (s + di) % 2, (s + di) // 2
            lhs = p1[par][o * nb:(o + 4) * nb, :]     # aligned row slice
            acc = acc + jnp.dot(lhs, bb2_ref[di], preferred_element_type=f32)
        act = jnp.tanh(acc + b2_ref[...])
        return jnp.dot(act, pw2_ref[...], preferred_element_type=f32)  # (4*nb, 64)

    # rows = (pooled-y, image), lanes = c*4 + x
    pooled2 = 0.5 * (conv2_phase(0) + conv2_phase(1))

    # fc1: flatten realized as 4 row-group matmuls (no in-kernel reshape); the
    # weight rows were pre-permuted in the wrapper to match this order.
    acc = jnp.zeros((nb, 120), f32)
    for u in range(4):
        acc = acc + jnp.dot(pooled2[u * nb:(u + 1) * nb, :], wfc1_ref[u],
                            preferred_element_type=f32)
    h = jnp.tanh(acc + bfc1_ref[...])
    h = jnp.tanh(jnp.dot(h, wfc2_ref[...], preferred_element_type=f32)
                 + bfc2_ref[...])
    # fc3 weights are zero-padded to 128 output lanes -> unmasked 128-lane store.
    out_ref[...] = (jnp.dot(h, wfc3_ref[...], preferred_element_type=f32)
                    + bfc3_ref[...])


# ---------------------------------------------------------------------------
# Forward wrapper
# ---------------------------------------------------------------------------
def lenet_forward(x, params):
    nb = _NB
    x = x.reshape(-1, 28, 28).astype(jnp.float32)
    n = x.shape[0]
    n_pad = ((n + nb - 1) // nb) * nb
    if n_pad != n:
        x = jnp.pad(x, ((0, n_pad - n), (0, 0), (0, 0)))
    # Split image rows by (row mod 4) so every conv row access in the kernel is
    # a contiguous sublane-aligned slice: x4[q, i, n, :] = x[n, 4*i + q, :].
    x4 = x.reshape(n_pad, 7, 4, 28).transpose(2, 1, 0, 3)   # (4, 7, n_pad, 28)

    bb1 = _band_matrices(params["conv1_w"], 28)              # (5, 28, 144)
    b1l = jnp.repeat(params["conv1_b"], 24)[None, :]         # (1, 144)
    pw1 = _pool_w_matrix(6, 24)                              # (144, 72)
    bb2 = _band_matrices(params["conv2_w"], 12)              # (5, 72, 128)
    b2l = jnp.repeat(params["conv2_b"], 8)[None, :]          # (1, 128)
    pw2 = _pool_w_matrix(16, 8)                              # (128, 64)
    # fc1 weight rows re-ordered to the kernel's (y, c, x) flatten order.
    wfc1 = (params["fc1_w"].reshape(16, 4, 4, 120)
            .transpose(1, 0, 2, 3).reshape(4, 64, 120))
    bfc1 = params["fc1_b"][None, :]
    wfc2, bfc2 = params["fc2_w"], params["fc2_b"][None, :]
    # fc3 zero-padded from 10 -> 128 output columns for a lane-dense out_spec.
    n_cls = params["fc3_w"].shape[1]
    wfc3 = jnp.pad(params["fc3_w"], ((0, 0), (0, 128 - n_cls)))
    bfc3 = jnp.pad(params["fc3_b"], (0, 128 - n_cls))[None, :]

    weights = (bb1, b1l, pw1, bb2, b2l, pw2, wfc1, bfc1, wfc2, bfc2, wfc3, bfc3)
    grid = (n_pad // nb,)

    flops = 2 * grid[0] * nb * (20 * 6 * 28 * 144 + 4 * 6 * 144 * 72
                                + 10 * 4 * 72 * 128 + 2 * 4 * 128 * 64
                                + 4 * 64 * 120 + 120 * 84 + 84 * 128)
    trans = grid[0] * nb * (4 * 6 * 144 + 2 * 4 * 128 + 120 + 84)
    byts = 4 * (x4.size + n_pad * 128 + sum(w.size for w in weights))

    def full(a):
        return pl.BlockSpec(a.shape, lambda i: (0,) * a.ndim)

    out = pl.pallas_call(
        _lenet_kernel,
        out_shape=jax.ShapeDtypeStruct((n_pad, 128), jnp.float32),
        grid=grid,
        in_specs=[pl.BlockSpec((4, 7, nb, 28), lambda i: (0, 0, i, 0))]
                 + [full(w) for w in weights],
        out_specs=pl.BlockSpec((nb, 128), lambda i: (i, 0)),
        compiler_params=pltpu.CompilerParams(
            dimension_semantics=("parallel",)),
        cost_estimate=pl.CostEstimate(flops=flops, transcendentals=trans,
                                      bytes_accessed=byts),
    )(x4, *weights)
    return out[:n, :n_cls]


# ---------------------------------------------------------------------------
# Pure-JAX reference (HIGHEST precision, gold standard)
# ---------------------------------------------------------------------------
def lenet_reference(x, params):
    hi = jax.lax.Precision.HIGHEST
    x = x.reshape(-1, 1, 28, 28)

    def conv(x, w, b):
        y = jax.lax.conv_general_dilated(
            x, w, window_strides=(1, 1), padding="VALID",
            dimension_numbers=("NCHW", "OIHW", "NCHW"), precision=hi)
        return jnp.tanh(y + b[None, :, None, None])

    def pool(x):
        n, c, h, w = x.shape
        return x.reshape(n, c, h // 2, 2, w // 2, 2).mean(axis=(3, 5))

    x = pool(conv(x, params["conv1_w"], params["conv1_b"]))
    x = pool(conv(x, params["conv2_w"], params["conv2_b"]))
    x = x.reshape(x.shape[0], -1)
    x = jnp.tanh(jnp.dot(x, params["fc1_w"], precision=hi) + params["fc1_b"])
    x = jnp.tanh(jnp.dot(x, params["fc2_w"], precision=hi) + params["fc2_b"])
    return jnp.dot(x, params["fc3_w"], precision=hi) + params["fc3_b"]


# ---------------------------------------------------------------------------
# Deterministic parameter init (PyTorch default-style uniform(-1/sqrt(fan), .))
# ---------------------------------------------------------------------------
def init_params(key):
    keys = jax.random.split(key, 10)

    def init(k, shape, fan_in):
        bound = 1.0 / float(fan_in) ** 0.5
        return jax.random.uniform(k, shape, jnp.float32, -bound, bound)

    return {
        "conv1_w": init(keys[0], (6, 1, 5, 5), 25),
        "conv1_b": init(keys[1], (6,), 25),
        "conv2_w": init(keys[2], (16, 6, 5, 5), 150),
        "conv2_b": init(keys[3], (16,), 150),
        # Linear weights stored as (in, out); PyTorch stores (out, in), x @ W.T.
        "fc1_w": init(keys[4], (256, 120), 256),
        "fc1_b": init(keys[5], (120,), 256),
        "fc2_w": init(keys[6], (120, 84), 120),
        "fc2_b": init(keys[7], (84,), 120),
        "fc3_w": init(keys[8], (84, 10), 84),
        "fc3_b": init(keys[9], (10,), 84),
    }


if __name__ == "__main__":
    key = jax.random.PRNGKey(0)
    pkey, xkey = jax.random.split(key)
    params = init_params(pkey)
    x = jax.random.normal(xkey, (2, 1, 28, 28), dtype=jnp.float32)

    out = jax.jit(lenet_forward)(x, params)
    out = jax.block_until_ready(out)
    assert out.shape == (2, 10), out.shape

    ref = lenet_reference(x, params)
    max_err = float(jnp.max(jnp.abs(out - ref)))
    # Tolerance sized for single-pass MXU (bf16-class operand rounding) inside
    # the kernel vs. the HIGHEST-precision reference (Precision.HIGHEST is
    # intentionally not used inside the kernel matmuls).
    assert jnp.allclose(out, ref, rtol=2e-2, atol=2e-2), f"max abs err = {max_err}"

    print("KERNEL_OK")
</pallas_src>

<mosaic_0001>
module attributes {stable_mosaic.version = 11 : i64} {
  func.func @_lenet_kernel(%arg0: i32, %arg1: memref<4x7x32x28xf32, #tpu.memory_space<vmem>>, %arg2: memref<5x28x144xf32, #tpu.memory_space<vmem>>, %arg3: memref<1x144xf32, #tpu.memory_space<vmem>>, %arg4: memref<144x72xf32, #tpu.memory_space<vmem>>, %arg5: memref<5x72x128xf32, #tpu.memory_space<vmem>>, %arg6: memref<1x128xf32, #tpu.memory_space<vmem>>, %arg7: memref<128x64xf32, #tpu.memory_space<vmem>>, %arg8: memref<4x64x120xf32, #tpu.memory_space<vmem>>, %arg9: memref<1x120xf32, #tpu.memory_space<vmem>>, %arg10: memref<120x84xf32, #tpu.memory_space<vmem>>, %arg11: memref<1x84xf32, #tpu.memory_space<vmem>>, %arg12: memref<84x128xf32, #tpu.memory_space<vmem>>, %arg13: memref<1x128xf32, #tpu.memory_space<vmem>>, %arg14: memref<32x128xf32, #tpu.memory_space<vmem>>) attributes {dimension_semantics = [#tpu.dimension_semantics<parallel>], iteration_bounds = array<i64: 1>, scalar_prefetch = 0 : i64, scratch_operands = 0 : i64, tpu.core_type = #tpu.core_type<tc>, window_params = [{transform_indices = @transform_0, window_bounds = array<i64: 4, 7, 32, 28>}, {pipeline_mode = #tpu.pipeline_mode<synchronous>, transform_indices = @transform_1, window_bounds = array<i64: 5, 28, 144>}, {pipeline_mode = #tpu.pipeline_mode<synchronous>, transform_indices = @transform_2, window_bounds = array<i64: 1, 144>}, {pipeline_mode = #tpu.pipeline_mode<synchronous>, transform_indices = @transform_3, window_bounds = array<i64: 144, 72>}, {pipeline_mode = #tpu.pipeline_mode<synchronous>, transform_indices = @transform_4, window_bounds = array<i64: 5, 72, 128>}, {pipeline_mode = #tpu.pipeline_mode<synchronous>, transform_indices = @transform_5, window_bounds = array<i64: 1, 128>}, {pipeline_mode = #tpu.pipeline_mode<synchronous>, transform_indices = @transform_6, window_bounds = array<i64: 128, 64>}, {pipeline_mode = #tpu.pipeline_mode<synchronous>, transform_indices = @transform_7, window_bounds = array<i64: 4, 64, 120>}, {pipeline_mode = #tpu.pipeline_mode<synchronous>, transform_indices = @transform_8, window_bounds = array<i64: 1, 120>}, {pipeline_mode = #tpu.pipeline_mode<synchronous>, transform_indices = @transform_9, window_bounds = array<i64: 120, 84>}, {pipeline_mode = #tpu.pipeline_mode<synchronous>, transform_indices = @transform_10, window_bounds = array<i64: 1, 84>}, {pipeline_mode = #tpu.pipeline_mode<synchronous>, transform_indices = @transform_11, window_bounds = array<i64: 84, 128>}, {pipeline_mode = #tpu.pipeline_mode<synchronous>, transform_indices = @transform_12, window_bounds = array<i64: 1, 128>}, {transform_indices = @transform_13, window_bounds = array<i64: 32, 128>}]} {
    %cst = arith.constant 0.000000e+00 : f32
    %0 = vector.broadcast %cst : f32 to vector<192x144xf32>
    %c0 = arith.constant 0 : index
    %c0_0 = arith.constant 0 : index
    %c0_1 = arith.constant 0 : index
    %c0_2 = arith.constant 0 : index
    %1 = vector.load %arg1[%c0, %c0_0, %c0_1, %c0_2] : memref<4x7x32x28xf32, #tpu.memory_space<vmem>>, vector<1x6x32x28xf32>
    %2 = vector.shape_cast %1 : vector<1x6x32x28xf32> to vector<6x32x28xf32>
    %3 = vector.shape_cast %2 : vector<6x32x28xf32> to vector<192x28xf32>
    %c0_3 = arith.constant 0 : index
    %c0_4 = arith.constant 0 : index
    %c0_5 = arith.constant 0 : index
    %4 = vector.load %arg2[%c0_3, %c0_4, %c0_5] : memref<5x28x144xf32, #tpu.memory_space<vmem>>, vector<1x28x144xf32>
    %5 = vector.shape_cast %4 : vector<1x28x144xf32> to vector<28x144xf32>
    %cst_6 = arith.constant dense<0.000000e+00> : vector<192x144xf32>
    %6 = tpu.matmul %3, %5, %cst_6 {dimension_numbers = #tpu.dot_dimension_numbers<[1], [0], [0], [1], [0, 0, 1, 1], [], []>} : vector<192x28xf32>, vector<28x144xf32>, vector<192x144xf32> -> vector<192x144xf32>
    %7 = arith.addf %0, %6 : vector<192x144xf32>
    %c1 = arith.constant 1 : index
    %c0_7 = arith.constant 0 : index
    %c0_8 = arith.constant 0 : index
    %c0_9 = arith.constant 0 : index
    %8 = vector.load %arg1[%c1, %c0_7, %c0_8, %c0_9] : memref<4x7x32x28xf32, #tpu.memory_space<vmem>>, vector<1x6x32x28xf32>
    %9 = vector.shape_cast %8 : vector<1x6x32x28xf32> to vector<6x32x28xf32>
    %10 = vector.shape_cast %9 : vector<6x32x28xf32> to vector<192x28xf32>
    %c1_10 = arith.constant 1 : index
    %c0_11 = arith.constant 0 : index
    %c0_12 = arith.constant 0 : index
    %11 = vector.load %arg2[%c1_10, %c0_11, %c0_12] : memref<5x28x144xf32, #tpu.memory_space<vmem>>, vector<1x28x144xf32>
    %12 = vector.shape_cast %11 : vector<1x28x144xf32> to vector<28x144xf32>
    %cst_13 = arith.constant dense<0.000000e+00> : vector<192x144xf32>
    %13 = tpu.matmul %10, %12, %cst_13 {dimension_numbers = #tpu.dot_dimension_numbers<[1], [0], [0], [1], [0, 0, 1, 1], [], []>} : vector<192x28xf32>, vector<28x144xf32>, vector<192x144xf32> -> vector<192x144xf32>
    %14 = arith.addf %7, %13 : vector<192x144xf32>
    %c2 = arith.constant 2 : index
    %c0_14 = arith.constant 0 : index
    %c0_15 = arith.constant 0 : index
    %c0_16 = arith.constant 0 : index
    %15 = vector.load %arg1[%c2, %c0_14, %c0_15, %c0_16] : memref<4x7x32x28xf32, #tpu.memory_space<vmem>>, vector<1x6x32x28xf32>
    %16 = vector.shape_cast %15 : vector<1x6x32x28xf32> to vector<6x32x28xf32>
    %17 = vector.shape_cast %16 : vector<6x32x28xf32> to vector<192x28xf32>
    %c2_17 = arith.constant 2 : index
    %c0_18 = arith.constant 0 : index
    %c0_19 = arith.constant 0 : index
    %18 = vector.load %arg2[%c2_17, %c0_18, %c0_19] : memref<5x28x144xf32, #tpu.memory_space<vmem>>, vector<1x28x144xf32>
    %19 = vector.shape_cast %18 : vector<1x28x144xf32> to vector<28x144xf32>
    %cst_20 = arith.constant dense<0.000000e+00> : vector<192x144xf32>
    %20 = tpu.matmul %17, %19, %cst_20 {dimension_numbers = #tpu.dot_dimension_numbers<[1], [0], [0], [1], [0, 0, 1, 1], [], []>} : vector<192x28xf32>, vector<28x144xf32>, vector<192x144xf32> -> vector<192x144xf32>
    %21 = arith.addf %14, %20 : vector<192x144xf32>
    %c3 = arith.constant 3 : index
    %c0_21 = arith.constant 0 : index
    %c0_22 = arith.constant 0 : index
    %c0_23 = arith.constant 0 : index
    %22 = vector.load %arg1[%c3, %c0_21, %c0_22, %c0_23] : memref<4x7x32x28xf32, #tpu.memory_space<vmem>>, vector<1x6x32x28xf32>
    %23 = vector.shape_cast %22 : vector<1x6x32x28xf32> to vector<6x32x28xf32>
    %24 = vector.shape_cast %23 : vector<6x32x28xf32> to vector<192x28xf32>
    %c3_24 = arith.constant 3 : index
    %c0_25 = arith.constant 0 : index
    %c0_26 = arith.constant 0 : index
    %25 = vector.load %arg2[%c3_24, %c0_25, %c0_26] : memref<5x28x144xf32, #tpu.memory_space<vmem>>, vector<1x28x144xf32>
    %26 = vector.shape_cast %25 : vector<1x28x144xf32> to vector<28x144xf32>
    %cst_27 = arith.constant dense<0.000000e+00> : vector<192x144xf32>
    %27 = tpu.matmul %24, %26, %cst_27 {dimension_numbers = #tpu.dot_dimension_numbers<[1], [0], [0], [1], [0, 0, 1, 1], [], []>} : vector<192x28xf32>, vector<28x144xf32>, vector<192x144xf32> -> vector<192x144xf32>
    %28 = arith.addf %21, %27 : vector<192x144xf32>
    %c0_28 = arith.constant 0 : index
    %c1_29 = arith.constant 1 : index
    %c0_30 = arith.constant 0 : index
    %c0_31 = arith.constant 0 : index
    %29 = vector.load %arg1[%c0_28, %c1_29, %c0_30, %c0_31] : memref<4x7x32x28xf32, #tpu.memory_space<vmem>>, vector<1x6x32x28xf32>
    %30 = vector.shape_cast %29 : vector<1x6x32x28xf32> to vector<6x32x28xf32>
    %31 = vector.shape_cast %30 : vector<6x32x28xf32> to vector<192x28xf32>
    %c4 = arith.constant 4 : index
    %c0_32 = arith.constant 0 : index
    %c0_33 = arith.constant 0 : index
    %32 = vector.load %arg2[%c4, %c0_32, %c0_33] : memref<5x28x144xf32, #tpu.memory_space<vmem>>, vector<1x28x144xf32>
    %33 = vector.shape_cast %32 : vector<1x28x144xf32> to vector<28x144xf32>
    %cst_34 = arith.constant dense<0.000000e+00> : vector<192x144xf32>
    %34 = tpu.matmul %31, %33, %cst_34 {dimension_numbers = #tpu.dot_dimension_numbers<[1], [0], [0], [1], [0, 0, 1, 1], [], []>} : vector<192x28xf32>, vector<28x144xf32>, vector<192x144xf32> -> vector<192x144xf32>
    %35 = arith.addf %28, %34 : vector<192x144xf32>
    %c0_35 = arith.constant 0 : index
    %c0_36 = arith.constant 0 : index
    %36 = vector.load %arg3[%c0_35, %c0_36] : memref<1x144xf32, #tpu.memory_space<vmem>>, vector<1x144xf32>
    %37 = vector.broadcast %36 : vector<1x144xf32> to vector<192x144xf32>
    %38 = arith.addf %35, %37 : vector<192x144xf32>
    %39 = math.tanh %38 : vector<192x144xf32>
    %c0_37 = arith.constant 0 : index
    %c0_38 = arith.constant 0 : index
    %40 = vector.load %arg4[%c0_37, %c0_38] : memref<144x72xf32, #tpu.memory_space<vmem>>, vector<144x72xf32>
    %cst_39 = arith.constant dense<0.000000e+00> : vector<192x72xf32>
    %41 = tpu.matmul %39, %40, %cst_39 {dimension_numbers = #tpu.dot_dimension_numbers<[1], [0], [0], [1], [0, 0, 1, 1], [], []>} : vector<192x144xf32>, vector<144x72xf32>, vector<192x72xf32> -> vector<192x72xf32>
    %cst_40 = arith.constant 0.000000e+00 : f32
    %42 = vector.broadcast %cst_40 : f32 to vector<192x144xf32>
    %c1_41 = arith.constant 1 : index
    %c0_42 = arith.constant 0 : index
    %c0_43 = arith.constant 0 : index
    %c0_44 = arith.constant 0 : index
    %43 = vector.load %arg1[%c1_41, %c0_42, %c0_43, %c0_44] : memref<4x7x32x28xf32, #tpu.memory_space<vmem>>, vector<1x6x32x28xf32>
    %44 = vector.shape_cast %43 : vector<1x6x32x28xf32> to vector<6x32x28xf32>
    %45 = vector.shape_cast %44 : vector<6x32x28xf32> to vector<192x28xf32>
    %c0_45 = arith.constant 0 : index
    %c0_46 = arith.constant 0 : index
    %c0_47 = arith.constant 0 : index
    %46 = vector.load %arg2[%c0_45, %c0_46, %c0_47] : memref<5x28x144xf32, #tpu.memory_space<vmem>>, vector<1x28x144xf32>
    %47 = vector.shape_cast %46 : vector<1x28x144xf32> to vector<28x144xf32>
    %cst_48 = arith.constant dense<0.000000e+00> : vector<192x144xf32>
    %48 = tpu.matmul %45, %47, %cst_48 {dimension_numbers = #tpu.dot_dimension_numbers<[1], [0], [0], [1], [0, 0, 1, 1], [], []>} : vector<192x28xf32>, vector<28x144xf32>, vector<192x144xf32> -> vector<192x144xf32>
    %49 = arith.addf %42, %48 : vector<192x144xf32>
    %c2_49 = arith.constant 2 : index
    %c0_50 = arith.constant 0 : index
    %c0_51 = arith.constant 0 : index
    %c0_52 = arith.constant 0 : index
    %50 = vector.load %arg1[%c2_49, %c0_50, %c0_51, %c0_52] : memref<4x7x32x28xf32, #tpu.memory_space<vmem>>, vector<1x6x32x28xf32>
    %51 = vector.shape_cast %50 : vector<1x6x32x28xf32> to vector<6x32x28xf32>
    %52 = vector.shape_cast %51 : vector<6x32x28xf32> to vector<192x28xf32>
    %c1_53 = arith.constant 1 : index
    %c0_54 = arith.constant 0 : index
    %c0_55 = arith.constant 0 : index
    %53 = vector.load %arg2[%c1_53, %c0_54, %c0_55] : memref<5x28x144xf32, #tpu.memory_space<vmem>>, vector<1x28x144xf32>
    %54 = vector.shape_cast %53 : vector<1x28x144xf32> to vector<28x144xf32>
    %cst_56 = arith.constant dense<0.000000e+00> : vector<192x144xf32>
    %55 = tpu.matmul %52, %54, %cst_56 {dimension_numbers = #tpu.dot_dimension_numbers<[1], [0], [0], [1], [0, 0, 1, 1], [], []>} : vector<192x28xf32>, vector<28x144xf32>, vector<192x144xf32> -> vector<192x144xf32>
    %56 = arith.addf %49, %55 : vector<192x144xf32>
    %c3_57 = arith.constant 3 : index
    %c0_58 = arith.constant 0 : index
    %c0_59 = arith.constant 0 : index
    %c0_60 = arith.constant 0 : index
    %57 = vector.load %arg1[%c3_57, %c0_58, %c0_59, %c0_60] : memref<4x7x32x28xf32, #tpu.memory_space<vmem>>, vector<1x6x32x28xf32>
    %58 = vector.shape_cast %57 : vector<1x6x32x28xf32> to vector<6x32x28xf32>
    %59 = vector.shape_cast %58 : vector<6x32x28xf32> to vector<192x28xf32>
    %c2_61 = arith.constant 2 : index
    %c0_62 = arith.constant 0 : index
    %c0_63 = arith.constant 0 : index
    %60 = vector.load %arg2[%c2_61, %c0_62, %c0_63] : memref<5x28x144xf32, #tpu.memory_space<vmem>>, vector<1x28x144xf32>
    %61 = vector.shape_cast %60 : vector<1x28x144xf32> to vector<28x144xf32>
    %cst_64 = arith.constant dense<0.000000e+00> : vector<192x144xf32>
    %62 = tpu.matmul %59, %61, %cst_64 {dimension_numbers = #tpu.dot_dimension_numbers<[1], [0], [0], [1], [0, 0, 1, 1], [], []>} : vector<192x28xf32>, vector<28x144xf32>, vector<192x144xf32> -> vector<192x144xf32>
    %63 = arith.addf %56, %62 : vector<192x144xf32>
    %c0_65 = arith.constant 0 : index
    %c1_66 = arith.constant 1 : index
    %c0_67 = arith.constant 0 : index
    %c0_68 = arith.constant 0 : index
    %64 = vector.load %arg1[%c0_65, %c1_66, %c0_67, %c0_68] : memref<4x7x32x28xf32, #tpu.memory_space<vmem>>, vector<1x6x32x28xf32>
    %65 = vector.shape_cast %64 : vector<1x6x32x28xf32> to vector<6x32x28xf32>
    %66 = vector.shape_cast %65 : vector<6x32x28xf32> to vector<192x28xf32>
    %c3_69 = arith.constant 3 : index
    %c0_70 = arith.constant 0 : index
    %c0_71 = arith.constant 0 : index
    %67 = vector.load %arg2[%c3_69, %c0_70, %c0_71] : memref<5x28x144xf32, #tpu.memory_space<vmem>>, vector<1x28x144xf32>
    %68 = vector.shape_cast %67 : vector<1x28x144xf32> to vector<28x144xf32>
    %cst_72 = arith.constant dense<0.000000e+00> : vector<192x144xf32>
    %69 = tpu.matmul %66, %68, %cst_72 {dimension_numbers = #tpu.dot_dimension_numbers<[1], [0], [0], [1], [0, 0, 1, 1], [], []>} : vector<192x28xf32>, vector<28x144xf32>, vector<192x144xf32> -> vector<192x144xf32>
    %70 = arith.addf %63, %69 : vector<192x144xf32>
    %c1_73 = arith.constant 1 : index
    %c1_74 = arith.constant 1 : index
    %c0_75 = arith.constant 0 : index
    %c0_76 = arith.constant 0 : index
    %71 = vector.load %arg1[%c1_73, %c1_74, %c0_75, %c0_76] : memref<4x7x32x28xf32, #tpu.memory_space<vmem>>, vector<1x6x32x28xf32>
    %72 = vector.shape_cast %71 : vector<1x6x32x28xf32> to vector<6x32x28xf32>
    %73 = vector.shape_cast %72 : vector<6x32x28xf32> to vector<192x28xf32>
    %c4_77 = arith.constant 4 : index
    %c0_78 = arith.constant 0 : index
    %c0_79 = arith.constant 0 : index
    %74 = vector.load %arg2[%c4_77, %c0_78, %c0_79] : memref<5x28x144xf32, #tpu.memory_space<vmem>>, vector<1x28x144xf32>
    %75 = vector.shape_cast %74 : vector<1x28x144xf32> to vector<28x144xf32>
    %cst_80 = arith.constant dense<0.000000e+00> : vector<192x144xf32>
    %76 = tpu.matmul %73, %75, %cst_80 {dimension_numbers = #tpu.dot_dimension_numbers<[1], [0], [0], [1], [0, 0, 1, 1], [], []>} : vector<192x28xf32>, vector<28x144xf32>, vector<192x144xf32> -> vector<192x144xf32>
    %77 = arith.addf %70, %76 : vector<192x144xf32>
    %c0_81 = arith.constant 0 : index
    %c0_82 = arith.constant 0 : index
    %78 = vector.load %arg3[%c0_81, %c0_82] : memref<1x144xf32, #tpu.memory_space<vmem>>, vector<1x144xf32>
    %79 = vector.broadcast %78 : vector<1x144xf32> to vector<192x144xf32>
    %80 = arith.addf %77, %79 : vector<192x144xf32>
    %81 = math.tanh %80 : vector<192x144xf32>
    %c0_83 = arith.constant 0 : index
    %c0_84 = arith.constant 0 : index
    %82 = vector.load %arg4[%c0_83, %c0_84] : memref<144x72xf32, #tpu.memory_space<vmem>>, vector<144x72xf32>
    %cst_85 = arith.constant dense<0.000000e+00> : vector<192x72xf32>
    %83 = tpu.matmul %81, %82, %cst_85 {dimension_numbers = #tpu.dot_dimension_numbers<[1], [0], [0], [1], [0, 0, 1, 1], [], []>} : vector<192x144xf32>, vector<144x72xf32>, vector<192x72xf32> -> vector<192x72xf32>
    %84 = arith.addf %41, %83 : vector<192x72xf32>
    %cst_86 = arith.constant 5.000000e-01 : f32
    %85 = vector.broadcast %cst_86 : f32 to vector<192x72xf32>
    %86 = arith.mulf %85, %84 : vector<192x72xf32>
    %cst_87 = arith.constant 0.000000e+00 : f32
    %87 = vector.broadcast %cst_87 : f32 to vector<192x144xf32>
    %c2_88 = arith.constant 2 : index
    %c0_89 = arith.constant 0 : index
    %c0_90 = arith.constant 0 : index
    %c0_91 = arith.constant 0 : index
    %88 = vector.load %arg1[%c2_88, %c0_89, %c0_90, %c0_91] : memref<4x7x32x28xf32, #tpu.memory_space<vmem>>, vector<1x6x32x28xf32>
    %89 = vector.shape_cast %88 : vector<1x6x32x28xf32> to vector<6x32x28xf32>
    %90 = vector.shape_cast %89 : vector<6x32x28xf32> to vector<192x28xf32>
    %c0_92 = arith.constant 0 : index
    %c0_93 = arith.constant 0 : index
    %c0_94 = arith.constant 0 : index
    %91 = vector.load %arg2[%c0_92, %c0_93, %c0_94] : memref<5x28x144xf32, #tpu.memory_space<vmem>>, vector<1x28x144xf32>
    %92 = vector.shape_cast %91 : vector<1x28x144xf32> to vector<28x144xf32>
    %cst_95 = arith.constant dense<0.000000e+00> : vector<192x144xf32>
    %93 = tpu.matmul %90, %92, %cst_95 {dimension_numbers = #tpu.dot_dimension_numbers<[1], [0], [0], [1], [0, 0, 1, 1], [], []>} : vector<192x28xf32>, vector<28x144xf32>, vector<192x144xf32> -> vector<192x144xf32>
    %94 = arith.addf %87, %93 : vector<192x144xf32>
    %c3_96 = arith.constant 3 : index
    %c0_97 = arith.constant 0 : index
    %c0_98 = arith.constant 0 : index
    %c0_99 = arith.constant 0 : index
    %95 = vector.load %arg1[%c3_96, %c0_97, %c0_98, %c0_99] : memref<4x7x32x28xf32, #tpu.memory_space<vmem>>, vector<1x6x32x28xf32>
    %96 = vector.shape_cast %95 : vector<1x6x32x28xf32> to vector<6x32x28xf32>
    %97 = vector.shape_cast %96 : vector<6x32x28xf32> to vector<192x28xf32>
    %c1_100 = arith.constant 1 : index
    %c0_101 = arith.constant 0 : index
    %c0_102 = arith.constant 0 : index
    %98 = vector.load %arg2[%c1_100, %c0_101, %c0_102] : memref<5x28x144xf32, #tpu.memory_space<vmem>>, vector<1x28x144xf32>
    %99 = vector.shape_cast %98 : vector<1x28x144xf32> to vector<28x144xf32>
    %cst_103 = arith.constant dense<0.000000e+00> : vector<192x144xf32>
    %100 = tpu.matmul %97, %99, %cst_103 {dimension_numbers = #tpu.dot_dimension_numbers<[1], [0], [0], [1], [0, 0, 1, 1], [], []>} : vector<192x28xf32>, vector<28x144xf32>, vector<192x144xf32> -> vector<192x144xf32>
    %101 = arith.addf %94, %100 : vector<192x144xf32>
    %c0_104 = arith.constant 0 : index
    %c1_105 = arith.constant 1 : index
    %c0_106 = arith.constant 0 : index
    %c0_107 = arith.constant 0 : index
    %102 = vector.load %arg1[%c0_104, %c1_105, %c0_106, %c0_107] : memref<4x7x32x28xf32, #tpu.memory_space<vmem>>, vector<1x6x32x28xf32>
    %103 = vector.shape_cast %102 : vector<1x6x32x28xf32> to vector<6x32x28xf32>
    %104 = vector.shape_cast %103 : vector<6x32x28xf32> to vector<192x28xf32>
    %c2_108 = arith.constant 2 : index
    %c0_109 = arith.constant 0 : index
    %c0_110 = arith.constant 0 : index
    %105 = vector.load %arg2[%c2_108, %c0_109, %c0_110] : memref<5x28x144xf32, #tpu.memory_space<vmem>>, vector<1x28x144xf32>
    %106 = vector.shape_cast %105 : vector<1x28x144xf32> to vector<28x144xf32>
    %cst_111 = arith.constant dense<0.000000e+00> : vector<192x144xf32>
    %107 = tpu.matmul %104, %106, %cst_111 {dimension_numbers = #tpu.dot_dimension_numbers<[1], [0], [0], [1], [0, 0, 1, 1], [], []>} : vector<192x28xf32>, vector<28x144xf32>, vector<192x144xf32> -> vector<192x144xf32>
    %108 = arith.addf %101, %107 : vector<192x144xf32>
    %c1_112 = arith.constant 1 : index
    %c1_113 = arith.constant 1 : index
    %c0_114 = arith.constant 0 : index
    %c0_115 = arith.constant 0 : index
    %109 = vector.load %arg1[%c1_112, %c1_113, %c0_114, %c0_115] : memref<4x7x32x28xf32, #tpu.memory_space<vmem>>, vector<1x6x32x28xf32>
    %110 = vector.shape_cast %109 : vector<1x6x32x28xf32> to vector<6x32x28xf32>
    %111 = vector.shape_cast %110 : vector<6x32x28xf32> to vector<192x28xf32>
    %c3_116 = arith.constant 3 : index
    %c0_117 = arith.constant 0 : index
    %c0_118 = arith.constant 0 : index
    %112 = vector.load %arg2[%c3_116, %c0_117, %c0_118] : memref<5x28x144xf32, #tpu.memory_space<vmem>>, vector<1x28x144xf32>
    %113 = vector.shape_cast %112 : vector<1x28x144xf32> to vector<28x144xf32>
    %cst_119 = arith.constant dense<0.000000e+00> : vector<192x144xf32>
    %114 = tpu.matmul %111, %113, %cst_119 {dimension_numbers = #tpu.dot_dimension_numbers<[1], [0], [0], [1], [0, 0, 1, 1], [], []>} : vector<192x28xf32>, vector<28x144xf32>, vector<192x144xf32> -> vector<192x144xf32>
    %115 = arith.addf %108, %114 : vector<192x144xf32>
    %c2_120 = arith.constant 2 : index
    %c1_121 = arith.constant 1 : index
    %c0_122 = arith.constant 0 : index
    %c0_123 = arith.constant 0 : index
    %116 = vector.load %arg1[%c2_120, %c1_121, %c0_122, %c0_123] : memref<4x7x32x28xf32, #tpu.memory_space<vmem>>, vector<1x6x32x28xf32>
    %117 = vector.shape_cast %116 : vector<1x6x32x28xf32> to vector<6x32x28xf32>
    %118 = vector.shape_cast %117 : vector<6x32x28xf32> to vector<192x28xf32>
    %c4_124 = arith.constant 4 : index
    %c0_125 = arith.constant 0 : index
    %c0_126 = arith.constant 0 : index
    %119 = vector.load %arg2[%c4_124, %c0_125, %c0_126] : memref<5x28x144xf32, #tpu.memory_space<vmem>>, vector<1x28x144xf32>
    %120 = vector.shape_cast %119 : vector<1x28x144xf32> to vector<28x144xf32>
    %cst_127 = arith.constant dense<0.000000e+00> : vector<192x144xf32>
    %121 = tpu.matmul %118, %120, %cst_127 {dimension_numbers = #tpu.dot_dimension_numbers<[1], [0], [0], [1], [0, 0, 1, 1], [], []>} : vector<192x28xf32>, vector<28x144xf32>, vector<192x144xf32> -> vector<192x144xf32>
    %122 = arith.addf %115, %121 : vector<192x144xf32>
    %c0_128 = arith.constant 0 : index
    %c0_129 = arith.constant 0 : index
    %123 = vector.load %arg3[%c0_128, %c0_129] : memref<1x144xf32, #tpu.memory_space<vmem>>, vector<1x144xf32>
    %124 = vector.broadcast %123 : vector<1x144xf32> to vector<192x144xf32>
    %125 = arith.addf %122, %124 : vector<192x144xf32>
    %126 = math.tanh %125 : vector<192x144xf32>
    %c0_130 = arith.constant 0 : index
    %c0_131 = arith.constant 0 : index
    %127 = vector.load %arg4[%c0_130, %c0_131] : memref<144x72xf32, #tpu.memory_space<vmem>>, vector<144x72xf32>
    %cst_132 = arith.constant dense<0.000000e+00> : vector<192x72xf32>
    %128 = tpu.matmul %126, %127, %cst_132 {dimension_numbers = #tpu.dot_dimension_numbers<[1], [0], [0], [1], [0, 0, 1, 1], [], []>} : vector<192x144xf32>, vector<144x72xf32>, vector<192x72xf32> -> vector<192x72xf32>
    %cst_133 = arith.constant 0.000000e+00 : f32
    %129 = vector.broadcast %cst_133 : f32 to vector<192x144xf32>
    %c3_134 = arith.constant 3 : index
    %c0_135 = arith.constant 0 : index
    %c0_136 = arith.constant 0 : index
    %c0_137 = arith.constant 0 : index
    %130 = vector.load %arg1[%c3_134, %c0_135, %c0_136, %c0_137] : memref<4x7x32x28xf32, #tpu.memory_space<vmem>>, vector<1x6x32x28xf32>
    %131 = vector.shape_cast %130 : vector<1x6x32x28xf32> to vector<6x32x28xf32>
    %132 = vector.shape_cast %131 : vector<6x32x28xf32> to vector<192x28xf32>
    %c0_138 = arith.constant 0 : index
    %c0_139 = arith.constant 0 : index
    %c0_140 = arith.constant 0 : index
    %133 = vector.load %arg2[%c0_138, %c0_139, %c0_140] : memref<5x28x144xf32, #tpu.memory_space<vmem>>, vector<1x28x144xf32>
    %134 = vector.shape_cast %133 : vector<1x28x144xf32> to vector<28x144xf32>
    %cst_141 = arith.constant dense<0.000000e+00> : vector<192x144xf32>
    %135 = tpu.matmul %132, %134, %cst_141 {dimension_numbers = #tpu.dot_dimension_numbers<[1], [0], [0], [1], [0, 0, 1, 1], [], []>} : vector<192x28xf32>, vector<28x144xf32>, vector<192x144xf32> -> vector<192x144xf32>
    %136 = arith.addf %129, %135 : vector<192x144xf32>
    %c0_142 = arith.constant 0 : index
    %c1_143 = arith.constant 1 : index
    %c0_144 = arith.constant 0 : index
    %c0_145 = arith.constant 0 : index
    %137 = vector.load %arg1[%c0_142, %c1_143, %c0_144, %c0_145] : memref<4x7x32x28xf32, #tpu.memory_space<vmem>>, vector<1x6x32x28xf32>
    %138 = vector.shape_cast %137 : vector<1x6x32x28xf32> to vector<6x32x28xf32>
    %139 = vector.shape_cast %138 : vector<6x32x28xf32> to vector<192x28xf32>
    %c1_146 = arith.constant 1 : index
    %c0_147 = arith.constant 0 : index
    %c0_148 = arith.constant 0 : index
    %140 = vector.load %arg2[%c1_146, %c0_147, %c0_148] : memref<5x28x144xf32, #tpu.memory_space<vmem>>, vector<1x28x144xf32>
    %141 = vector.shape_cast %140 : vector<1x28x144xf32> to vector<28x144xf32>
    %cst_149 = arith.constant dense<0.000000e+00> : vector<192x144xf32>
    %142 = tpu.matmul %139, %141, %cst_149 {dimension_numbers = #tpu.dot_dimension_numbers<[1], [0], [0], [1], [0, 0, 1, 1], [], []>} : vector<192x28xf32>, vector<28x144xf32>, vector<192x144xf32> -> vector<192x144xf32>
    %143 = arith.addf %136, %142 : vector<192x144xf32>
    %c1_150 = arith.constant 1 : index
    %c1_151 = arith.constant 1 : index
    %c0_152 = arith.constant 0 : index
    %c0_153 = arith.constant 0 : index
    %144 = vector.load %arg1[%c1_150, %c1_151, %c0_152, %c0_153] : memref<4x7x32x28xf32, #tpu.memory_space<vmem>>, vector<1x6x32x28xf32>
    %145 = vector.shape_cast %144 : vector<1x6x32x28xf32> to vector<6x32x28xf32>
    %146 = vector.shape_cast %145 : vector<6x32x28xf32> to vector<192x28xf32>
    %c2_154 = arith.constant 2 : index
    %c0_155 = arith.constant 0 : index
    %c0_156 = arith.constant 0 : index
    %147 = vector.load %arg2[%c2_154, %c0_155, %c0_156] : memref<5x28x144xf32, #tpu.memory_space<vmem>>, vector<1x28x144xf32>
    %148 = vector.shape_cast %147 : vector<1x28x144xf32> to vector<28x144xf32>
    %cst_157 = arith.constant dense<0.000000e+00> : vector<192x144xf32>
    %149 = tpu.matmul %146, %148, %cst_157 {dimension_numbers = #tpu.dot_dimension_numbers<[1], [0], [0], [1], [0, 0, 1, 1], [], []>} : vector<192x28xf32>, vector<28x144xf32>, vector<192x144xf32> -> vector<192x144xf32>
    %150 = arith.addf %143, %149 : vector<192x144xf32>
    %c2_158 = arith.constant 2 : index
    %c1_159 = arith.constant 1 : index
    %c0_160 = arith.constant 0 : index
    %c0_161 = arith.constant 0 : index
    %151 = vector.load %arg1[%c2_158, %c1_159, %c0_160, %c0_161] : memref<4x7x32x28xf32, #tpu.memory_space<vmem>>, vector<1x6x32x28xf32>
    %152 = vector.shape_cast %151 : vector<1x6x32x28xf32> to vector<6x32x28xf32>
    %153 = vector.shape_cast %152 : vector<6x32x28xf32> to vector<192x28xf32>
    %c3_162 = arith.constant 3 : index
    %c0_163 = arith.constant 0 : index
    %c0_164 = arith.constant 0 : index
    %154 = vector.load %arg2[%c3_162, %c0_163, %c0_164] : memref<5x28x144xf32, #tpu.memory_space<vmem>>, vector<1x28x144xf32>
    %155 = vector.shape_cast %154 : vector<1x28x144xf32> to vector<28x144xf32>
    %cst_165 = arith.constant dense<0.000000e+00> : vector<192x144xf32>
    %156 = tpu.matmul %153, %155, %cst_165 {dimension_numbers = #tpu.dot_dimension_numbers<[1], [0], [0], [1], [0, 0, 1, 1], [], []>} : vector<192x28xf32>, vector<28x144xf32>, vector<192x144xf32> -> vector<192x144xf32>
    %157 = arith.addf %150, %156 : vector<192x144xf32>
    %c3_166 = arith.constant 3 : index
    %c1_167 = arith.constant 1 : index
    %c0_168 = arith.constant 0 : index
    %c0_169 = arith.constant 0 : index
    %158 = vector.load %arg1[%c3_166, %c1_167, %c0_168, %c0_169] : memref<4x7x32x28xf32, #tpu.memory_space<vmem>>, vector<1x6x32x28xf32>
    %159 = vector.shape_cast %158 : vector<1x6x32x28xf32> to vector<6x32x28xf32>
    %160 = vector.shape_cast %159 : vector<6x32x28xf32> to vector<192x28xf32>
    %c4_170 = arith.constant 4 : index
    %c0_171 = arith.constant 0 : index
    %c0_172 = arith.constant 0 : index
    %161 = vector.load %arg2[%c4_170, %c0_171, %c0_172] : memref<5x28x144xf32, #tpu.memory_space<vmem>>, vector<1x28x144xf32>
    %162 = vector.shape_cast %161 : vector<1x28x144xf32> to vector<28x144xf32>
    %cst_173 = arith.constant dense<0.000000e+00> : vector<192x144xf32>
    %163 = tpu.matmul %160, %162, %cst_173 {dimension_numbers = #tpu.dot_dimension_numbers<[1], [0], [0], [1], [0, 0, 1, 1], [], []>} : vector<192x28xf32>, vector<28x144xf32>, vector<192x144xf32> -> vector<192x144xf32>
    %164 = arith.addf %157, %163 : vector<192x144xf32>
    %c0_174 = arith.constant 0 : index
    %c0_175 = arith.constant 0 : index
    %165 = vector.load %arg3[%c0_174, %c0_175] : memref<1x144xf32, #tpu.memory_space<vmem>>, vector<1x144xf32>
    %166 = vector.broadcast %165 : vector<1x144xf32> to vector<192x144xf32>
    %167 = arith.addf %164, %166 : vector<192x144xf32>
    %168 = math.tanh %167 : vector<192x144xf32>
    %c0_176 = arith.constant 0 : index
    %c0_177 = arith.constant 0 : index
    %169 = vector.load %arg4[%c0_176, %c0_177] : memref<144x72xf32, #tpu.memory_space<vmem>>, vector<144x72xf32>
    %cst_178 = arith.constant dense<0.000000e+00> : vector<192x72xf32>
    %170 = tpu.matmul %168, %169, %cst_178 {dimension_numbers = #tpu.dot_dimension_numbers<[1], [0], [0], [1], [0, 0, 1, 1], [], []>} : vector<192x144xf32>, vector<144x72xf32>, vector<192x72xf32> -> vector<192x72xf32>
    %171 = arith.addf %128, %170 : vector<192x72xf32>
    %cst_179 = arith.constant 5.000000e-01 : f32
    %172 = vector.broadcast %cst_179 : f32 to vector<192x72xf32>
    %173 = arith.mulf %172, %171 : vector<192x72xf32>
    %cst_180 = arith.constant 0.000000e+00 : f32
    %174 = vector.broadcast %cst_180 : f32 to vector<128x128xf32>
    %175 = vector.extract_strided_slice %86 {offsets = [0, 0], sizes = [128, 72], strides = [1, 1]} : vector<192x72xf32> to vector<128x72xf32>
    %c0_181 = arith.constant 0 : index
    %c0_182 = arith.constant 0 : index
    %c0_183 = arith.constant 0 : index
    %176 = vector.load %arg5[%c0_181, %c0_182, %c0_183] : memref<5x72x128xf32, #tpu.memory_space<vmem>>, vector<1x72x128xf32>
    %177 = vector.shape_cast %176 : vector<1x72x128xf32> to vector<72x128xf32>
    %cst_184 = arith.constant dense<0.000000e+00> : vector<128x128xf32>
    %178 = tpu.matmul %175, %177, %cst_184 {dimension_numbers = #tpu.dot_dimension_numbers<[1], [0], [0], [1], [0, 0, 1, 1], [], []>} : vector<128x72xf32>, vector<72x128xf32>, vector<128x128xf32> -> vector<128x128xf32>
    %179 = arith.addf %174, %178 : vector<128x128xf32>
    %180 = vector.extract_strided_slice %173 {offsets = [0, 0], sizes = [128, 72], strides = [1, 1]} : vector<192x72xf32> to vector<128x72xf32>
    %c1_185 = arith.constant 1 : index
    %c0_186 = arith.constant 0 : index
    %c0_187 = arith.constant 0 : index
    %181 = vector.load %arg5[%c1_185, %c0_186, %c0_187] : memref<5x72x128xf32, #tpu.memory_space<vmem>>, vector<1x72x128xf32>
    %182 = vector.shape_cast %181 : vector<1x72x128xf32> to vector<72x128xf32>
    %cst_188 = arith.constant dense<0.000000e+00> : vector<128x128xf32>
    %183 = tpu.matmul %180, %182, %cst_188 {dimension_numbers = #tpu.dot_dimension_numbers<[1], [0], [0], [1], [0, 0, 1, 1], [], []>} : vector<128x72xf32>, vector<72x128xf32>, vector<128x128xf32> -> vector<128x128xf32>
    %184 = arith.addf %179, %183 : vector<128x128xf32>
    %185 = vector.extract_strided_slice %86 {offsets = [32, 0], sizes = [128, 72], strides = [1, 1]} : vector<192x72xf32> to vector<128x72xf32>
    %c2_189 = arith.constant 2 : index
    %c0_190 = arith.constant 0 : index
    %c0_191 = arith.constant 0 : index
    %186 = vector.load %arg5[%c2_189, %c0_190, %c0_191] : memref<5x72x128xf32, #tpu.memory_space<vmem>>, vector<1x72x128xf32>
    %187 = vector.shape_cast %186 : vector<1x72x128xf32> to vector<72x128xf32>
    %cst_192 = arith.constant dense<0.000000e+00> : vector<128x128xf32>
    %188 = tpu.matmul %185, %187, %cst_192 {dimension_numbers = #tpu.dot_dimension_numbers<[1], [0], [0], [1], [0, 0, 1, 1], [], []>} : vector<128x72xf32>, vector<72x128xf32>, vector<128x128xf32> -> vector<128x128xf32>
    %189 = arith.addf %184, %188 : vector<128x128xf32>
    %190 = vector.extract_strided_slice %173 {offsets = [32, 0], sizes = [128, 72], strides = [1, 1]} : vector<192x72xf32> to vector<128x72xf32>
    %c3_193 = arith.constant 3 : index
    %c0_194 = arith.constant 0 : index
    %c0_195 = arith.constant 0 : index
    %191 = vector.load %arg5[%c3_193, %c0_194, %c0_195] : memref<5x72x128xf32, #tpu.memory_space<vmem>>, vector<1x72x128xf32>
    %192 = vector.shape_cast %191 : vector<1x72x128xf32> to vector<72x128xf32>
    %cst_196 = arith.constant dense<0.000000e+00> : vector<128x128xf32>
    %193 = tpu.matmul %190, %192, %cst_196 {dimension_numbers = #tpu.dot_dimension_numbers<[1], [0], [0], [1], [0, 0, 1, 1], [], []>} : vector<128x72xf32>, vector<72x128xf32>, vector<128x128xf32> -> vector<128x128xf32>
    %194 = arith.addf %189, %193 : vector<128x128xf32>
    %195 = vector.extract_strided_slice %86 {offsets = [64, 0], sizes = [128, 72], strides = [1, 1]} : vector<192x72xf32> to vector<128x72xf32>
    %c4_197 = arith.constant 4 : index
    %c0_198 = arith.constant 0 : index
    %c0_199 = arith.constant 0 : index
    %196 = vector.load %arg5[%c4_197, %c0_198, %c0_199] : memref<5x72x128xf32, #tpu.memory_space<vmem>>, vector<1x72x128xf32>
    %197 = vector.shape_cast %196 : vector<1x72x128xf32> to vector<72x128xf32>
    %cst_200 = arith.constant dense<0.000000e+00> : vector<128x128xf32>
    %198 = tpu.matmul %195, %197, %cst_200 {dimension_numbers = #tpu.dot_dimension_numbers<[1], [0], [0], [1], [0, 0, 1, 1], [], []>} : vector<128x72xf32>, vector<72x128xf32>, vector<128x128xf32> -> vector<128x128xf32>
    %199 = arith.addf %194, %198 : vector<128x128xf32>
    %c0_201 = arith.constant 0 : index
    %c0_202 = arith.constant 0 : index
    %200 = vector.load %arg6[%c0_201, %c0_202] : memref<1x128xf32, #tpu.memory_space<vmem>>, vector<1x128xf32>
    %201 = vector.broadcast %200 : vector<1x128xf32> to vector<128x128xf32>
    %202 = arith.addf %199, %201 : vector<128x128xf32>
    %203 = math.tanh %202 : vector<128x128xf32>
    %c0_203 = arith.constant 0 : index
    %c0_204 = arith.constant 0 : index
    %204 = vector.load %arg7[%c0_203, %c0_204] : memref<128x64xf32, #tpu.memory_space<vmem>>, vector<128x64xf32>
    %cst_205 = arith.constant dense<0.000000e+00> : vector<128x64xf32>
    %205 = tpu.matmul %203, %204, %cst_205 {dimension_numbers = #tpu.dot_dimension_numbers<[1], [0], [0], [1], [0, 0, 1, 1], [], []>} : vector<128x128xf32>, vector<128x64xf32>, vector<128x64xf32> -> vector<128x64xf32>
    %cst_206 = arith.constant 0.000000e+00 : f32
    %206 = vector.broadcast %cst_206 : f32 to vector<128x128xf32>
    %207 = vector.extract_strided_slice %173 {offsets = [0, 0], sizes = [128, 72], strides = [1, 1]} : vector<192x72xf32> to vector<128x72xf32>
    %c0_207 = arith.constant 0 : index
    %c0_208 = arith.constant 0 : index
    %c0_209 = arith.constant 0 : index
    %208 = vector.load %arg5[%c0_207, %c0_208, %c0_209] : memref<5x72x128xf32, #tpu.memory_space<vmem>>, vector<1x72x128xf32>
    %209 = vector.shape_cast %208 : vector<1x72x128xf32> to vector<72x128xf32>
    %cst_210 = arith.constant dense<0.000000e+00> : vector<128x128xf32>
    %210 = tpu.matmul %207, %209, %cst_210 {dimension_numbers = #tpu.dot_dimension_numbers<[1], [0], [0], [1], [0, 0, 1, 1], [], []>} : vector<128x72xf32>, vector<72x128xf32>, vector<128x128xf32> -> vector<128x128xf32>
    %211 = arith.addf %206, %210 : vector<128x128xf32>
    %212 = vector.extract_strided_slice %86 {offsets = [32, 0], sizes = [128, 72], strides = [1, 1]} : vector<192x72xf32> to vector<128x72xf32>
    %c1_211 = arith.constant 1 : index
    %c0_212 = arith.constant 0 : index
    %c0_213 = arith.constant 0 : index
    %213 = vector.load %arg5[%c1_211, %c0_212, %c0_213] : memref<5x72x128xf32, #tpu.memory_space<vmem>>, vector<1x72x128xf32>
    %214 = vector.shape_cast %213 : vector<1x72x128xf32> to vector<72x128xf32>
    %cst_214 = arith.constant dense<0.000000e+00> : vector<128x128xf32>
    %215 = tpu.matmul %212, %214, %cst_214 {dimension_numbers = #tpu.dot_dimension_numbers<[1], [0], [0], [1], [0, 0, 1, 1], [], []>} : vector<128x72xf32>, vector<72x128xf32>, vector<128x128xf32> -> vector<128x128xf32>
    %216 = arith.addf %211, %215 : vector<128x128xf32>
    %217 = vector.extract_strided_slice %173 {offsets = [32, 0], sizes = [128, 72], strides = [1, 1]} : vector<192x72xf32> to vector<128x72xf32>
    %c2_215 = arith.constant 2 : index
    %c0_216 = arith.constant 0 : index
    %c0_217 = arith.constant 0 : index
    %218 = vector.load %arg5[%c2_215, %c0_216, %c0_217] : memref<5x72x128xf32, #tpu.memory_space<vmem>>, vector<1x72x128xf32>
    %219 = vector.shape_cast %218 : vector<1x72x128xf32> to vector<72x128xf32>
    %cst_218 = arith.constant dense<0.000000e+00> : vector<128x128xf32>
    %220 = tpu.matmul %217, %219, %cst_218 {dimension_numbers = #tpu.dot_dimension_numbers<[1], [0], [0], [1], [0, 0, 1, 1], [], []>} : vector<128x72xf32>, vector<72x128xf32>, vector<128x128xf32> -> vector<128x128xf32>
    %221 = arith.addf %216, %220 : vector<128x128xf32>
    %222 = vector.extract_strided_slice %86 {offsets = [64, 0], sizes = [128, 72], strides = [1, 1]} : vector<192x72xf32> to vector<128x72xf32>
    %c3_219 = arith.constant 3 : index
    %c0_220 = arith.constant 0 : index
    %c0_221 = arith.constant 0 : index
    %223 = vector.load %arg5[%c3_219, %c0_220, %c0_221] : memref<5x72x128xf32, #tpu.memory_space<vmem>>, vector<1x72x128xf32>
    %224 = vector.shape_cast %223 : vector<1x72x128xf32> to vector<72x128xf32>
    %cst_222 = arith.constant dense<0.000000e+00> : vector<128x128xf32>
    %225 = tpu.matmul %222, %224, %cst_222 {dimension_numbers = #tpu.dot_dimension_numbers<[1], [0], [0], [1], [0, 0, 1, 1], [], []>} : vector<128x72xf32>, vector<72x128xf32>, vector<128x128xf32> -> vector<128x128xf32>
    %226 = arith.addf %221, %225 : vector<128x128xf32>
    %227 = vector.extract_strided_slice %173 {offsets = [64, 0], sizes = [128, 72], strides = [1, 1]} : vector<192x72xf32> to vector<128x72xf32>
    %c4_223 = arith.constant 4 : index
    %c0_224 = arith.constant 0 : index
    %c0_225 = arith.constant 0 : index
    %228 = vector.load %arg5[%c4_223, %c0_224, %c0_225] : memref<5x72x128xf32, #tpu.memory_space<vmem>>, vector<1x72x128xf32>
    %229 = vector.shape_cast %228 : vector<1x72x128xf32> to vector<72x128xf32>
    %cst_226 = arith.constant dense<0.000000e+00> : vector<128x128xf32>
    %230 = tpu.matmul %227, %229, %cst_226 {dimension_numbers = #tpu.dot_dimension_numbers<[1], [0], [0], [1], [0, 0, 1, 1], [], []>} : vector<128x72xf32>, vector<72x128xf32>, vector<128x128xf32> -> vector<128x128xf32>
    %231 = arith.addf %226, %230 : vector<128x128xf32>
    %c0_227 = arith.constant 0 : index
    %c0_228 = arith.constant 0 : index
    %232 = vector.load %arg6[%c0_227, %c0_228] : memref<1x128xf32, #tpu.memory_space<vmem>>, vector<1x128xf32>
    %233 = vector.broadcast %232 : vector<1x128xf32> to vector<128x128xf32>
    %234 = arith.addf %231, %233 : vector<128x128xf32>
    %235 = math.tanh %234 : vector<128x128xf32>
    %c0_229 = arith.constant 0 : index
    %c0_230 = arith.constant 0 : index
    %236 = vector.load %arg7[%c0_229, %c0_230] : memref<128x64xf32, #tpu.memory_space<vmem>>, vector<128x64xf32>
    %cst_231 = arith.constant dense<0.000000e+00> : vector<128x64xf32>
    %237 = tpu.matmul %235, %236, %cst_231 {dimension_numbers = #tpu.dot_dimension_numbers<[1], [0], [0], [1], [0, 0, 1, 1], [], []>} : vector<128x128xf32>, vector<128x64xf32>, vector<128x64xf32> -> vector<128x64xf32>
    %238 = arith.addf %205, %237 : vector<128x64xf32>
    %cst_232 = arith.constant 5.000000e-01 : f32
    %239 = vector.broadcast %cst_232 : f32 to vector<128x64xf32>
    %240 = arith.mulf %239, %238 : vector<128x64xf32>
    %cst_233 = arith.constant 0.000000e+00 : f32
    %241 = vector.broadcast %cst_233 : f32 to vector<32x120xf32>
    %242 = vector.extract_strided_slice %240 {offsets = [0, 0], sizes = [32, 64], strides = [1, 1]} : vector<128x64xf32> to vector<32x64xf32>
    %c0_234 = arith.constant 0 : index
    %c0_235 = arith.constant 0 : index
    %c0_236 = arith.constant 0 : index
    %243 = vector.load %arg8[%c0_234, %c0_235, %c0_236] : memref<4x64x120xf32, #tpu.memory_space<vmem>>, vector<1x64x120xf32>
    %244 = vector.shape_cast %243 : vector<1x64x120xf32> to vector<64x120xf32>
    %cst_237 = arith.constant dense<0.000000e+00> : vector<32x120xf32>
    %245 = tpu.matmul %242, %244, %cst_237 {dimension_numbers = #tpu.dot_dimension_numbers<[1], [0], [0], [1], [0, 0, 1, 1], [], []>} : vector<32x64xf32>, vector<64x120xf32>, vector<32x120xf32> -> vector<32x120xf32>
    %246 = arith.addf %241, %245 : vector<32x120xf32>
    %247 = vector.extract_strided_slice %240 {offsets = [32, 0], sizes = [32, 64], strides = [1, 1]} : vector<128x64xf32> to vector<32x64xf32>
    %c1_238 = arith.constant 1 : index
    %c0_239 = arith.constant 0 : index
    %c0_240 = arith.constant 0 : index
    %248 = vector.load %arg8[%c1_238, %c0_239, %c0_240] : memref<4x64x120xf32, #tpu.memory_space<vmem>>, vector<1x64x120xf32>
    %249 = vector.shape_cast %248 : vector<1x64x120xf32> to vector<64x120xf32>
    %cst_241 = arith.constant dense<0.000000e+00> : vector<32x120xf32>
    %250 = tpu.matmul %247, %249, %cst_241 {dimension_numbers = #tpu.dot_dimension_numbers<[1], [0], [0], [1], [0, 0, 1, 1], [], []>} : vector<32x64xf32>, vector<64x120xf32>, vector<32x120xf32> -> vector<32x120xf32>
    %251 = arith.addf %246, %250 : vector<32x120xf32>
    %252 = vector.extract_strided_slice %240 {offsets = [64, 0], sizes = [32, 64], strides = [1, 1]} : vector<128x64xf32> to vector<32x64xf32>
    %c2_242 = arith.constant 2 : index
    %c0_243 = arith.constant 0 : index
    %c0_244 = arith.constant 0 : index
    %253 = vector.load %arg8[%c2_242, %c0_243, %c0_244] : memref<4x64x120xf32, #tpu.memory_space<vmem>>, vector<1x64x120xf32>
    %254 = vector.shape_cast %253 : vector<1x64x120xf32> to vector<64x120xf32>
    %cst_245 = arith.constant dense<0.000000e+00> : vector<32x120xf32>
    %255 = tpu.matmul %252, %254, %cst_245 {dimension_numbers = #tpu.dot_dimension_numbers<[1], [0], [0], [1], [0, 0, 1, 1], [], []>} : vector<32x64xf32>, vector<64x120xf32>, vector<32x120xf32> -> vector<32x120xf32>
    %256 = arith.addf %251, %255 : vector<32x120xf32>
    %257 = vector.extract_strided_slice %240 {offsets = [96, 0], sizes = [32, 64], strides = [1, 1]} : vector<128x64xf32> to vector<32x64xf32>
    %c3_246 = arith.constant 3 : index
    %c0_247 = arith.constant 0 : index
    %c0_248 = arith.constant 0 : index
    %258 = vector.load %arg8[%c3_246, %c0_247, %c0_248] : memref<4x64x120xf32, #tpu.memory_space<vmem>>, vector<1x64x120xf32>
    %259 = vector.shape_cast %258 : vector<1x64x120xf32> to vector<64x120xf32>
    %cst_249 = arith.constant dense<0.000000e+00> : vector<32x120xf32>
    %260 = tpu.matmul %257, %259, %cst_249 {dimension_numbers = #tpu.dot_dimension_numbers<[1], [0], [0], [1], [0, 0, 1, 1], [], []>} : vector<32x64xf32>, vector<64x120xf32>, vector<32x120xf32> -> vector<32x120xf32>
    %261 = arith.addf %256, %260 : vector<32x120xf32>
    %c0_250 = arith.constant 0 : index
    %c0_251 = arith.constant 0 : index
    %262 = vector.load %arg9[%c0_250, %c0_251] : memref<1x120xf32, #tpu.memory_space<vmem>>, vector<1x120xf32>
    %263 = vector.broadcast %262 : vector<1x120xf32> to vector<32x120xf32>
    %264 = arith.addf %261, %263 : vector<32x120xf32>
    %265 = math.tanh %264 : vector<32x120xf32>
    %c0_252 = arith.constant 0 : index
    %c0_253 = arith.constant 0 : index
    %266 = vector.load %arg10[%c0_252, %c0_253] : memref<120x84xf32, #tpu.memory_space<vmem>>, vector<120x84xf32>
    %cst_254 = arith.constant dense<0.000000e+00> : vector<32x84xf32>
    %267 = tpu.matmul %265, %266, %cst_254 {dimension_numbers = #tpu.dot_dimension_numbers<[1], [0], [0], [1], [0, 0, 1, 1], [], []>} : vector<32x120xf32>, vector<120x84xf32>, vector<32x84xf32> -> vector<32x84xf32>
    %c0_255 = arith.constant 0 : index
    %c0_256 = arith.constant 0 : index
    %268 = vector.load %arg11[%c0_255, %c0_256] : memref<1x84xf32, #tpu.memory_space<vmem>>, vector<1x84xf32>
    %269 = vector.broadcast %268 : vector<1x84xf32> to vector<32x84xf32>
    %270 = arith.addf %267, %269 : vector<32x84xf32>
    %271 = math.tanh %270 : vector<32x84xf32>
    %c0_257 = arith.constant 0 : index
    %c0_258 = arith.constant 0 : index
    %272 = vector.load %arg12[%c0_257, %c0_258] : memref<84x128xf32, #tpu.memory_space<vmem>>, vector<84x128xf32>
    %cst_259 = arith.constant dense<0.000000e+00> : vector<32x128xf32>
    %273 = tpu.matmul %271, %272, %cst_259 {dimension_numbers = #tpu.dot_dimension_numbers<[1], [0], [0], [1], [0, 0, 1, 1], [], []>} : vector<32x84xf32>, vector<84x128xf32>, vector<32x128xf32> -> vector<32x128xf32>
    %c0_260 = arith.constant 0 : index
    %c0_261 = arith.constant 0 : index
    %274 = vector.load %arg13[%c0_260, %c0_261] : memref<1x128xf32, #tpu.memory_space<vmem>>, vector<1x128xf32>
    %275 = vector.broadcast %274 : vector<1x128xf32> to vector<32x128xf32>
    %276 = arith.addf %273, %275 : vector<32x128xf32>
    %c0_262 = arith.constant 0 : index
    %c0_263 = arith.constant 0 : index
    %277 = vector.load %arg14[%c0_262, %c0_263] : memref<32x128xf32, #tpu.memory_space<vmem>>, vector<32x128xf32>
    tpu.vector_store %arg14[%c0_262, %c0_263], %276 {strides = array<i32>} : memref<32x128xf32, #tpu.memory_space<vmem>>, vector<32x128xf32>,
    return
  }
  func.func @transform_0(%arg0: i32) -> (i32, i32, i32, i32) {
    %c0_i32 = arith.constant 0 : i32
    %c0_i32_0 = arith.constant 0 : i32
    %c0_i32_1 = arith.constant 0 : i32
    %c0_i32_2 = arith.constant 0 : i32
    return %c0_i32, %c0_i32_0, %arg0, %c0_i32_1 : i32, i32, i32, i32
  }
  func.func @transform_1(%arg0: i32) -> (i32, i32, i32) {
    %c0_i32 = arith.constant 0 : i32
    %c0_i32_0 = arith.constant 0 : i32
    %c0_i32_1 = arith.constant 0 : i32
    %c0_i32_2 = arith.constant 0 : i32
    return %c0_i32, %c0_i32_0, %c0_i32_1 : i32, i32, i32
  }
  func.func @transform_2(%arg0: i32) -> (i32, i32) {
    %c0_i32 = arith.constant 0 : i32
    %c0_i32_0 = arith.constant 0 : i32
    %c0_i32_1 = arith.constant 0 : i32
    return %c0_i32, %c0_i32_0 : i32, i32
  }
  func.func @transform_3(%arg0: i32) -> (i32, i32) {
    %c0_i32 = arith.constant 0 : i32
    %c0_i32_0 = arith.constant 0 : i32
    %c0_i32_1 = arith.constant 0 : i32
    return %c0_i32, %c0_i32_0 : i32, i32
  }
  func.func @transform_4(%arg0: i32) -> (i32, i32, i32) {
    %c0_i32 = arith.constant 0 : i32
    %c0_i32_0 = arith.constant 0 : i32
    %c0_i32_1 = arith.constant 0 : i32
    %c0_i32_2 = arith.constant 0 : i32
    return %c0_i32, %c0_i32_0, %c0_i32_1 : i32, i32, i32
  }
  func.func @transform_5(%arg0: i32) -> (i32, i32) {
    %c0_i32 = arith.constant 0 : i32
    %c0_i32_0 = arith.constant 0 : i32
    %c0_i32_1 = arith.constant 0 : i32
    return %c0_i32, %c0_i32_0 : i32, i32
  }
  func.func @transform_6(%arg0: i32) -> (i32, i32) {
    %c0_i32 = arith.constant 0 : i32
    %c0_i32_0 = arith.constant 0 : i32
    %c0_i32_1 = arith.constant 0 : i32
    return %c0_i32, %c0_i32_0 : i32, i32
  }
  func.func @transform_7(%arg0: i32) -> (i32, i32, i32) {
    %c0_i32 = arith.constant 0 : i32
    %c0_i32_0 = arith.constant 0 : i32
    %c0_i32_1 = arith.constant 0 : i32
    %c0_i32_2 = arith.constant 0 : i32
    return %c0_i32, %c0_i32_0, %c0_i32_1 : i32, i32, i32
  }
  func.func @transform_8(%arg0: i32) -> (i32, i32) {
    %c0_i32 = arith.constant 0 : i32
    %c0_i32_0 = arith.constant 0 : i32
    %c0_i32_1 = arith.constant 0 : i32
    return %c0_i32, %c0_i32_0 : i32, i32
  }
  func.func @transform_9(%arg0: i32) -> (i32, i32) {
    %c0_i32 = arith.constant 0 : i32
    %c0_i32_0 = arith.constant 0 : i32
    %c0_i32_1 = arith.constant 0 : i32
    return %c0_i32, %c0_i32_0 : i32, i32
  }
  func.func @transform_10(%arg0: i32) -> (i32, i32) {
    %c0_i32 = arith.constant 0 : i32
    %c0_i32_0 = arith.constant 0 : i32
    %c0_i32_1 = arith.constant 0 : i32
    return %c0_i32, %c0_i32_0 : i32, i32
  }
  func.func @transform_11(%arg0: i32) -> (i32, i32) {
    %c0_i32 = arith.constant 0 : i32
    %c0_i32_0 = arith.constant 0 : i32
    %c0_i32_1 = arith.constant 0 : i32
    return %c0_i32, %c0_i32_0 : i32, i32
  }
  func.func @transform_12(%arg0: i32) -> (i32, i32) {
    %c0_i32 = arith.constant 0 : i32
    %c0_i32_0 = arith.constant 0 : i32
    %c0_i32_1 = arith.constant 0 : i32
    return %c0_i32, %c0_i32_0 : i32, i32
  }
  func.func @transform_13(%arg0: i32) -> (i32, i32) {
    %c0_i32 = arith.constant 0 : i32
    %c0_i32_0 = arith.constant 0 : i32
    return %arg0, %c0_i32 : i32, i32
  }
}

</mosaic_0001>

<llo_original>
// kernel: lenet_forward.1
$region0: #{lenet_forward.1}
  #allocation0 [shape = 'u32[]', space=smem, size = 0x4, offset = 0x4, fixed_abs, tag = 'smem constant byte address 0x4 - core index']
  #allocation1 [shape = 'u32[144,128]{1,0:T(1,128)}', space=vmem, size = 0x12000, scoped, tag = 'internal scratch']
  %s0 = inlined_call_operand.vmem [shape: f32[4,7,32,28], index: 0, kind: input, shape index: {}]
  %s1 = inlined_call_operand.vmem [shape: f32[5,28,144], index: 1, kind: input, shape index: {}]
  %s2 = inlined_call_operand.vmem [shape: f32[1,144], index: 2, kind: input, shape index: {}]
  %s3 = inlined_call_operand.vmem [shape: f32[144,72], index: 3, kind: input, shape index: {}]
  %s4 = inlined_call_operand.vmem [shape: f32[5,72,128], index: 4, kind: input, shape index: {}]
  %s5 = inlined_call_operand.vmem [shape: f32[1,128], index: 5, kind: input, shape index: {}]
  %s6 = inlined_call_operand.vmem [shape: f32[128,64], index: 6, kind: input, shape index: {}]
  %s7 = inlined_call_operand.vmem [shape: f32[4,64,120], index: 7, kind: input, shape index: {}]
  %s8 = inlined_call_operand.vmem [shape: f32[1,120], index: 8, kind: input, shape index: {}]
  %s9 = inlined_call_operand.vmem [shape: f32[120,84], index: 9, kind: input, shape index: {}]
  %s10 = inlined_call_operand.vmem [shape: f32[1,84], index: 10, kind: input, shape index: {}]
  %s11 = inlined_call_operand.vmem [shape: f32[84,128], index: 11, kind: input, shape index: {}]
  %s12 = inlined_call_operand.vmem [shape: f32[1,128], index: 12, kind: input, shape index: {}]
  %s13 = inlined_call_operand.vmem [shape: f32[32,128], index: 13, kind: output, shape index: {}]
  %s14 = sld [smem:[#allocation0]]
  $region62: #{lenet_forward.1} parent=0
    _
  %s16 = ssub.s32 1, %s14
  %s17 = scalar_select 0, %s16, %s14
  // Predicated region
  $region2: #{lenet_forward.1} parent=0 // pred_check
    _
  $region3: #{lenet_forward.1} parent=0 // pred_check_branch
    %19 = sbr.rel (0) target = $region5
  $region4: #{lenet_forward.1} parent=0 // pred_region
    _
  $region5: #{lenet_forward.1} parent=0 // pred_fallthru
    _
  // Predicated region
  $region6: #{lenet_forward.1} parent=0 // pred_check
    _
  $region7: #{lenet_forward.1} parent=0 // pred_check_branch
    %21 = sbr.rel (0) target = $region9
  $region8: #{lenet_forward.1} parent=0 // pred_region
    _
  $region9: #{lenet_forward.1} parent=0 // pred_fallthru
    _
  // Predicated region
  $region10: #{lenet_forward.1} parent=0 // pred_check
    _
  $region11: #{lenet_forward.1} parent=0 // pred_check_branch
    %23 = sbr.rel (0) target = $region13
  $region12: #{lenet_forward.1} parent=0 // pred_region
    _
  $region13: #{lenet_forward.1} parent=0 // pred_fallthru
    _
  // Predicated region
  $region14: #{lenet_forward.1} parent=0 // pred_check
    _
  $region15: #{lenet_forward.1} parent=0 // pred_check_branch
    %25 = sbr.rel (0) target = $region17
  $region16: #{lenet_forward.1} parent=0 // pred_region
    _
  $region17: #{lenet_forward.1} parent=0 // pred_fallthru
    _
  // Predicated region
  $region18: #{lenet_forward.1} parent=0 // pred_check
    _
  $region19: #{lenet_forward.1} parent=0 // pred_check_branch
    %27 = sbr.rel (0) target = $region21
  $region20: #{lenet_forward.1} parent=0 // pred_region
    _
  $region21: #{lenet_forward.1} parent=0 // pred_fallthru
    _
  // Predicated region
  $region22: #{lenet_forward.1} parent=0 // pred_check
    _
  $region23: #{lenet_forward.1} parent=0 // pred_check_branch
    %29 = sbr.rel (0) target = $region25
  $region24: #{lenet_forward.1} parent=0 // pred_region
    _
  $region25: #{lenet_forward.1} parent=0 // pred_fallthru
    _
  // Predicated region
  $region26: #{lenet_forward.1} parent=0 // pred_check
    _
  $region27: #{lenet_forward.1} parent=0 // pred_check_branch
    %31 = sbr.rel (0) target = $region29
  $region28: #{lenet_forward.1} parent=0 // pred_region
    _
  $region29: #{lenet_forward.1} parent=0 // pred_fallthru
    _
  // Predicated region
  $region30: #{lenet_forward.1} parent=0 // pred_check
    _
  $region31: #{lenet_forward.1} parent=0 // pred_check_branch
    %33 = sbr.rel (0) target = $region33
  $region32: #{lenet_forward.1} parent=0 // pred_region
    _
  $region33: #{lenet_forward.1} parent=0 // pred_fallthru
    _
  // Predicated region
  $region34: #{lenet_forward.1} parent=0 // pred_check
    _
  $region35: #{lenet_forward.1} parent=0 // pred_check_branch
    %35 = sbr.rel (0) target = $region37
  $region36: #{lenet_forward.1} parent=0 // pred_region
    _
  $region37: #{lenet_forward.1} parent=0 // pred_fallthru
    _
  // Predicated region
  $region38: #{lenet_forward.1} parent=0 // pred_check
    _
  $region39: #{lenet_forward.1} parent=0 // pred_check_branch
    %37 = sbr.rel (0) target = $region41
  $region40: #{lenet_forward.1} parent=0 // pred_region
    _
  $region41: #{lenet_forward.1} parent=0 // pred_fallthru
    _
  // Predicated region
  $region42: #{lenet_forward.1} parent=0 // pred_check
    _
  $region43: #{lenet_forward.1} parent=0 // pred_check_branch
    %39 = sbr.rel (0) target = $region45
  $region44: #{lenet_forward.1} parent=0 // pred_region
    _
  $region45: #{lenet_forward.1} parent=0 // pred_fallthru
    _
  // Predicated region
  $region46: #{lenet_forward.1} parent=0 // pred_check
    _
  $region47: #{lenet_forward.1} parent=0 // pred_check_branch
    %41 = sbr.rel (0) target = $region49
  $region48: #{lenet_forward.1} parent=0 // pred_region
    _
  $region49: #{lenet_forward.1} parent=0 // pred_fallthru
    _
  // Predicated region
  $region50: #{lenet_forward.1} parent=0 // pred_check
    _
  $region51: #{lenet_forward.1} parent=0 // pred_check_branch
    %43 = sbr.rel (0) target = $region53
  $region52: #{lenet_forward.1} parent=0 // pred_region
    _
  $region53: #{lenet_forward.1} parent=0 // pred_fallthru
    _
  %v44 = vld [vmem:[%s0] sm:$0xff]
  %v45 = vld [vmem:[%s0 + $0x8] sm:$0xff]
  %v46 = vld [vmem:[%s0 + $0x10] sm:$0xff]
  %v47 = vld [vmem:[%s0 + $0x18] sm:$0xff]
  %v48 = vld [vmem:[%s0 + $0x20] sm:$0xff]
  %v49 = vld [vmem:[%s0 + $0x28] sm:$0xff]
  %v50 = vld [vmem:[%s0 + $0x30] sm:$0xff]
  %v51 = vld [vmem:[%s0 + $0x38] sm:$0xff]
  %v52 = vld [vmem:[%s0 + $0x40] sm:$0xff]
  %v53 = vld [vmem:[%s0 + $0x48] sm:$0xff]
  %v54 = vld [vmem:[%s0 + $0x50] sm:$0xff]
  %v55 = vld [vmem:[%s0 + $0x58] sm:$0xff]
  %v56 = vld [vmem:[%s0 + $0x60] sm:$0xff]
  %v57 = vld [vmem:[%s0 + $0x68] sm:$0xff]
  %v58 = vld [vmem:[%s0 + $0x70] sm:$0xff]
  %v59 = vld [vmem:[%s0 + $0x78] sm:$0xff]
  %v60 = vld [vmem:[%s0 + $0x80] sm:$0xff]
  %v61 = vld [vmem:[%s0 + $0x88] sm:$0xff]
  %v62 = vld [vmem:[%s0 + $0x90] sm:$0xff]
  %v63 = vld [vmem:[%s0 + $0x98] sm:$0xff]
  %v64 = vld [vmem:[%s0 + $0xa0] sm:$0xff]
  %v65 = vld [vmem:[%s0 + $0xa8] sm:$0xff]
  %v66 = vld [vmem:[%s0 + $0xb0] sm:$0xff]
  %v67 = vld [vmem:[%s0 + $0xb8] sm:$0xff]
  %v68 = vld [vmem:[%s1] sm:$0xff]
  %v69 = vld [vmem:[%s1 + $0x8] sm:$0xff]
  %v70 = vld [vmem:[%s1 + $0x10] sm:$0xff]
  %v71 = vld [vmem:[%s1 + $0x18] sm:$0xff]
  %v72 = vld [vmem:[%s1 + $0x20] sm:$0xff]
  %v73 = vld [vmem:[%s1 + $0x28] sm:$0xff]
  %v74 = vld [vmem:[%s1 + $0x30] sm:$0xf]
  %v75 = vld [vmem:[%s1 + $0x38] sm:$0xf]
  %s76 = scalar_lea.vmem %s0, 224
  %v77 = vld [vmem:[%s76] sm:$0xff]
  %v78 = vld [vmem:[%s76 + $0x8] sm:$0xff]
  %v79 = vld [vmem:[%s76 + $0x10] sm:$0xff]
  %v80 = vld [vmem:[%s76 + $0x18] sm:$0xff]
  %v81 = vld [vmem:[%s76 + $0x20] sm:$0xff]
  %v82 = vld [vmem:[%s76 + $0x28] sm:$0xff]
  %v83 = vld [vmem:[%s76 + $0x30] sm:$0xff]
  %v84 = vld [vmem:[%s76 + $0x38] sm:$0xff]
  %v85 = vld [vmem:[%s76 + $0x40] sm:$0xff]
  %v86 = vld [vmem:[%s76 + $0x48] sm:$0xff]
  %v87 = vld [vmem:[%s76 + $0x50] sm:$0xff]
  %v88 = vld [vmem:[%s76 + $0x58] sm:$0xff]
  %v89 = vld [vmem:[%s76 + $0x60] sm:$0xff]
  %v90 = vld [vmem:[%s76 + $0x68] sm:$0xff]
  %v91 = vld [vmem:[%s76 + $0x70] sm:$0xff]
  %v92 = vld [vmem:[%s76 + $0x78] sm:$0xff]
  %v93 = vld [vmem:[%s76 + $0x80] sm:$0xff]
  %v94 = vld [vmem:[%s76 + $0x88] sm:$0xff]
  %v95 = vld [vmem:[%s76 + $0x90] sm:$0xff]
  %v96 = vld [vmem:[%s76 + $0x98] sm:$0xff]
  %v97 = vld [vmem:[%s76 + $0xa0] sm:$0xff]
  %v98 = vld [vmem:[%s76 + $0xa8] sm:$0xff]
  %v99 = vld [vmem:[%s76 + $0xb0] sm:$0xff]
  %v100 = vld [vmem:[%s76 + $0xb8] sm:$0xff]
  %s101 = scalar_lea.vmem %s1, 64
  %v102 = vld [vmem:[%s101] sm:$0xff]
  %v103 = vld [vmem:[%s101 + $0x8] sm:$0xff]
  %v104 = vld [vmem:[%s101 + $0x10] sm:$0xff]
  %v105 = vld [vmem:[%s101 + $0x18] sm:$0xff]
  %v106 = vld [vmem:[%s101 + $0x20] sm:$0xff]
  %v107 = vld [vmem:[%s101 + $0x28] sm:$0xff]
  %v108 = vld [vmem:[%s101 + $0x30] sm:$0xf]
  %v109 = vld [vmem:[%s101 + $0x38] sm:$0xf]
  %vm110 = vcmask 228352
  %v112 = vsel %vm110, %v77, 0
  %v115 = vsel %vm110, %v78, 0
  %v118 = vsel %vm110, %v79, 0
  %v121 = vsel %vm110, %v80, 0
  %v124 = vsel %vm110, %v81, 0
  %v127 = vsel %vm110, %v82, 0
  %v130 = vsel %vm110, %v83, 0
  %v133 = vsel %vm110, %v84, 0
  %v136 = vsel %vm110, %v85, 0
  %v139 = vsel %vm110, %v86, 0
  %v142 = vsel %vm110, %v87, 0
  %v145 = vsel %vm110, %v88, 0
  %v148 = vsel %vm110, %v89, 0
  %v151 = vsel %vm110, %v90, 0
  %v154 = vsel %vm110, %v91, 0
  %v157 = vsel %vm110, %v92, 0
  %v160 = vsel %vm110, %v93, 0
  %v163 = vsel %vm110, %v94, 0
  %v166 = vsel %vm110, %v95, 0
  %v169 = vsel %vm110, %v96, 0
  %v172 = vsel %vm110, %v97, 0
  %v175 = vsel %vm110, %v98, 0
  %v178 = vsel %vm110, %v99, 0
  %v181 = vsel %vm110, %v100, 0
  %vm183 = vcmask 1043456
  %v185 = vsel %vm183, %v108, 0
  %v188 = vsel %vm183, %v109, 0
  %190 = vmatprep.subr.mxu0 %v103
  %191 = vmatpush1.msra.mxu0 %v102
  %192 = vmatprep.subr.mxu0 %v105
  %193 = vmatpush1.msra.mxu0 %v104
  %194 = vmatprep.subr.mxu0 %v107
  %195 = vmatpush1.msra.mxu0 %v106
  %196 = vmatprep.subr.mxu0 %v188
  %197 = vmatpush1.msra.mxu0 %v185
  %198 = vmatprep.subr.mxu0 0.0
  %199 = vmatpush1.msra.mxu0 0.0
  %200 = vmatprep.subr.mxu0 0.0
  %201 = vmatpush1.msra.mxu0 0.0
  %202 = vmatprep.subr.mxu0 0.0
  %203 = vmatpush1.msra.mxu0 0.0
  %204 = vmatprep.subr.mxu0 0.0
  %205 = vmatpush1.msra.mxu0 0.0
  %206 = vmatprep.subr.mxu0 0.0
  %207 = vmatpush1.msra.mxu0 0.0
  %208 = vmatprep.subr.mxu0 0.0
  %209 = vmatpush1.msra.mxu0 0.0
  %210 = vmatprep.subr.mxu0 0.0
  %211 = vmatpush1.msra.mxu0 0.0
  %212 = vmatprep.subr.mxu0 0.0
  %213 = vmatpush1.msra.mxu0 0.0
  %214 = vmatprep.subr.mxu0 0.0
  %215 = vmatpush1.msra.mxu0 0.0
  %216 = vmatprep.subr.mxu0 0.0
  %217 = vmatpush1.msra.mxu0 0.0
  %218 = vmatprep.subr.mxu0 0.0
  %219 = vmatpush1.msra.mxu0 0.0
  %220 = vmatprep.subr.mxu0 0.0
  %221 = vmatpush1.msra.mxu0 0.0
  %222 = vmatprep.subr.mxu0 0.0
  %223 = vmatpush1.msra.mxu0 0.0
  %224 = vmatprep.subr.mxu0 0.0
  %225 = vmatpush1.msra.mxu0 0.0
  %226 = vmatprep.subr.mxu0 0.0
  %227 = vmatpush1.msra.mxu0 0.0
  %228 = vmatprep.subr.mxu0 0.0
  %229 = vmatpush1.msra.mxu0 0.0
  %230 = vmatprep.subr.mxu0 0.0
  %231 = vmatpush1.msra.mxu0 0.0
  %232 = vmatprep.subr.mxu0 0.0
  %233 = vmatpush1.msra.mxu0 0.0
  %234 = vmatprep.subr.mxu0 0.0
  %235 = vmatpush1.msra.mxu0 0.0
  %236 = vmatprep.subr.mxu0 0.0
  %237 = vmatpush1.msra.mxu0 0.0
  %238 = vmatprep.subr.mxu0 0.0
  %239 = vmatpush1.msra.mxu0 0.0
  %240 = vmatprep.subr.mxu0 0.0
  %241 = vmatpush1.msra.mxu0 0.0
  %242 = vmatprep.subr.mxu0 0.0
  %243 = vmatpush1.msra.mxu0 0.0
  %244 = vmatprep.subr.mxu0 0.0
  %245 = vmatpush1.msra.mxu0 0.0
  %246 = vmatprep.subr.mxu0 0.0
  %247 = vmatpush1.msra.mxu0 0.0
  %248 = vmatprep.subr.mxu0 0.0
  %249 = vmatpush1.msra.mxu0 0.0
  %250 = vmatprep.subr.mxu0 0.0
  %251 = vmatpush1.msra.mxu0 0.0
  %252 = vmatprep.subr.mxu0 0.0
  %253 = vmatpush1.msra.mxu0 0.0
  %254 = vmatprep.mubr.f32.mxu0 0.0
  %255 = vmatmul.mubr.f32.gmra.mrb[0].mxu0 %v112
  %v256 = vpop.f32.mrb[0].mxu0
  %v257 = vadd.f32 0.0, %v256
  %v258 = vpop.f32.mrb[0].mxu0
  %v259 = vadd.f32 0.0, %v258
  %260 = vmatprep.mubr.f32.mxu0 0.0
  %261 = vmatmul.mubr.f32.gmra.mrb[0].mxu0 %v115
  %v262 = vpop.f32.mrb[0].mxu0
  %v263 = vadd.f32 0.0, %v262
  %v264 = vpop.f32.mrb[0].mxu0
  %v265 = vadd.f32 0.0, %v264
  %266 = vmatprep.mubr.f32.mxu0 0.0
  %267 = vmatmul.mubr.f32.gmra.mrb[0].mxu0 %v118
  %v268 = vpop.f32.mrb[0].mxu0
  %v269 = vadd.f32 0.0, %v268
  %v270 = vpop.f32.mrb[0].mxu0
  %v271 = vadd.f32 0.0, %v270
  %272 = vmatprep.mubr.f32.mxu0 0.0
  %273 = vmatmul.mubr.f32.gmra.mrb[0].mxu0 %v121
  %v274 = vpop.f32.mrb[0].mxu0
  %v275 = vadd.f32 0.0, %v274
  %v276 = vpop.f32.mrb[0].mxu0
  %v277 = vadd.f32 0.0, %v276
  %278 = vmatprep.mubr.f32.mxu0 0.0
  %279 = vmatmul.mubr.f32.gmra.mrb[0].mxu0 %v124
  %v280 = vpop.f32.mrb[0].mxu0
  %v281 = vadd.f32 0.0, %v280
  %v282 = vpop.f32.mrb[0].mxu0
  %v283 = vadd.f32 0.0, %v282
  %284 = vmatprep.mubr.f32.mxu0 0.0
  %285 = vmatmul.mubr.f32.gmra.mrb[0].mxu0 %v127
  %v286 = vpop.f32.mrb[0].mxu0
  %v287 = vadd.f32 0.0, %v286
  %v288 = vpop.f32.mrb[0].mxu0
  %v289 = vadd.f32 0.0, %v288
  %290 = vmatprep.mubr.f32.mxu0 0.0
  %291 = vmatmul.mubr.f32.gmra.mrb[0].mxu0 %v130
  %v292 = vpop.f32.mrb[0].mxu0
  %v293 = vadd.f32 0.0, %v292
  %v294 = vpop.f32.mrb[0].mxu0
  %v295 = vadd.f32 0.0, %v294
  %296 = vmatprep.mubr.f32.mxu0 0.0
  %297 = vmatmul.mubr.f32.gmra.mrb[0].mxu0 %v133
  %v298 = vpop.f32.mrb[0].mxu0
  %v299 = vadd.f32 0.0, %v298
  %v300 = vpop.f32.mrb[0].mxu0
  %v301 = vadd.f32 0.0, %v300
  %302 = vmatprep.mubr.f32.mxu0 0.0
  %303 = vmatmul.mubr.f32.gmra.mrb[0].mxu0 %v136
  %v304 = vpop.f32.mrb[0].mxu0
  %v305 = vadd.f32 0.0, %v304
  %v306 = vpop.f32.mrb[0].mxu0
  %v307 = vadd.f32 0.0, %v306
  %308 = vmatprep.mubr.f32.mxu0 0.0
  %309 = vmatmul.mubr.f32.gmra.mrb[0].mxu0 %v139
  %v310 = vpop.f32.mrb[0].mxu0
  %v311 = vadd.f32 0.0, %v310
  %v312 = vpop.f32.mrb[0].mxu0
  %v313 = vadd.f32 0.0, %v312
  %314 = vmatprep.mubr.f32.mxu0 0.0
  %315 = vmatmul.mubr.f32.gmra.mrb[0].mxu0 %v142
  %v316 = vpop.f32.mrb[0].mxu0
  %v317 = vadd.f32 0.0, %v316
  %v318 = vpop.f32.mrb[0].mxu0
  %v319 = vadd.f32 0.0, %v318
  %320 = vmatprep.mubr.f32.mxu0 0.0
  %321 = vmatmul.mubr.f32.gmra.mrb[0].mxu0 %v145
  %v322 = vpop.f32.mrb[0].mxu0
  %v323 = vadd.f32 0.0, %v322
  %v324 = vpop.f32.mrb[0].mxu0
  %v325 = vadd.f32 0.0, %v324
  %326 = vmatprep.mubr.f32.mxu0 0.0
  %327 = vmatmul.mubr.f32.gmra.mrb[0].mxu0 %v148
  %v328 = vpop.f32.mrb[0].mxu0
  %v329 = vadd.f32 0.0, %v328
  %v330 = vpop.f32.mrb[0].mxu0
  %v331 = vadd.f32 0.0, %v330
  %332 = vmatprep.mubr.f32.mxu0 0.0
  %333 = vmatmul.mubr.f32.gmra.mrb[0].mxu0 %v151
  %v334 = vpop.f32.mrb[0].mxu0
  %v335 = vadd.f32 0.0, %v334
  %v336 = vpop.f32.mrb[0].mxu0
  %v337 = vadd.f32 0.0, %v336
  %338 = vmatprep.mubr.f32.mxu0 0.0
  %339 = vmatmul.mubr.f32.gmra.mrb[0].mxu0 %v154
  %v340 = vpop.f32.mrb[0].mxu0
  %v341 = vadd.f32 0.0, %v340
  %v342 = vpop.f32.mrb[0].mxu0
  %v343 = vadd.f32 0.0, %v342
  %344 = vmatprep.mubr.f32.mxu0 0.0
  %345 = vmatmul.mubr.f32.gmra.mrb[0].mxu0 %v157
  %v346 = vpop.f32.mrb[0].mxu0
  %v347 = vadd.f32 0.0, %v346
  %v348 = vpop.f32.mrb[0].mxu0
  %v349 = vadd.f32 0.0, %v348
  %350 = vmatprep.mubr.f32.mxu0 0.0
  %351 = vmatmul.mubr.f32.gmra.mrb[0].mxu0 %v160
  %v352 = vpop.f32.mrb[0].mxu0
  %v353 = vadd.f32 0.0, %v352
  %v354 = vpop.f32.mrb[0].mxu0
  %v355 = vadd.f32 0.0, %v354
  %356 = vmatprep.mubr.f32.mxu0 0.0
  %357 = vmatmul.mubr.f32.gmra.mrb[0].mxu0 %v163
  %v358 = vpop.f32.mrb[0].mxu0
  %v359 = vadd.f32 0.0, %v358
  %v360 = vpop.f32.mrb[0].mxu0
  %v361 = vadd.f32 0.0, %v360
  %362 = vmatprep.mubr.f32.mxu0 0.0
  %363 = vmatmul.mubr.f32.gmra.mrb[0].mxu0 %v166
  %v364 = vpop.f32.mrb[0].mxu0
  %v365 = vadd.f32 0.0, %v364
  %v366 = vpop.f32.mrb[0].mxu0
  %v367 = vadd.f32 0.0, %v366
  %368 = vmatprep.mubr.f32.mxu0 0.0
  %369 = vmatmul.mubr.f32.gmra.mrb[0].mxu0 %v169
  %v370 = vpop.f32.mrb[0].mxu0
  %v371 = vadd.f32 0.0, %v370
  %v372 = vpop.f32.mrb[0].mxu0
  %v373 = vadd.f32 0.0, %v372
  %374 = vmatprep.mubr.f32.mxu0 0.0
  %375 = vmatmul.mubr.f32.gmra.mrb[0].mxu0 %v172
  %v376 = vpop.f32.mrb[0].mxu0
  %v377 = vadd.f32 0.0, %v376
  %v378 = vpop.f32.mrb[0].mxu0
  %v379 = vadd.f32 0.0, %v378
  %380 = vmatprep.mubr.f32.mxu0 0.0
  %381 = vmatmul.mubr.f32.gmra.mrb[0].mxu0 %v175
  %v382 = vpop.f32.mrb[0].mxu0
  %v383 = vadd.f32 0.0, %v382
  %v384 = vpop.f32.mrb[0].mxu0
  %v385 = vadd.f32 0.0, %v384
  %386 = vmatprep.mubr.f32.mxu0 0.0
  %387 = vmatmul.mubr.f32.gmra.mrb[0].mxu0 %v178
  %v388 = vpop.f32.mrb[0].mxu0
  %v389 = vadd.f32 0.0, %v388
  %v390 = vpop.f32.mrb[0].mxu0
  %v391 = vadd.f32 0.0, %v390
  %392 = vmatprep.mubr.f32.mxu0 0.0
  %393 = vmatmul.mubr.f32.gmra.mrb[0].mxu0 %v181
  %v394 = vpop.f32.mrb[0].mxu0
  %v395 = vadd.f32 0.0, %v394
  %v396 = vpop.f32.mrb[0].mxu0
  %v397 = vadd.f32 0.0, %v396
  %398 = vdwg.mxu0
  %v400 = vsel %vm110, %v44, 0
  %v403 = vsel %vm110, %v45, 0
  %v406 = vsel %vm110, %v46, 0
  %v409 = vsel %vm110, %v47, 0
  %v412 = vsel %vm110, %v48, 0
  %v415 = vsel %vm110, %v49, 0
  %v418 = vsel %vm110, %v50, 0
  %v421 = vsel %vm110, %v51, 0
  %v424 = vsel %vm110, %v52, 0
  %v427 = vsel %vm110, %v53, 0
  %v430 = vsel %vm110, %v54, 0
  %v433 = vsel %vm110, %v55, 0
  %v436 = vsel %vm110, %v56, 0
  %v439 = vsel %vm110, %v57, 0
  %v442 = vsel %vm110, %v58, 0
  %v445 = vsel %vm110, %v59, 0
  %v448 = vsel %vm110, %v60, 0
  %v451 = vsel %vm110, %v61, 0
  %v454 = vsel %vm110, %v62, 0
  %v457 = vsel %vm110, %v63, 0
  %v460 = vsel %vm110, %v64, 0
  %v463 = vsel %vm110, %v65, 0
  %v466 = vsel %vm110, %v66, 0
  %v469 = vsel %vm110, %v67, 0
  %v472 = vsel %vm183, %v74, 0
  %v475 = vsel %vm183, %v75, 0
  %477 = vmatprep.subr.mxu0 %v69
  %478 = vmatpush1.msra.mxu0 %v68
  %479 = vmatprep.subr.mxu0 %v71
  %480 = vmatpush1.msra.mxu0 %v70
  %481 = vmatprep.subr.mxu0 %v73
  %482 = vmatpush1.msra.mxu0 %v72
  %483 = vmatprep.subr.mxu0 %v475
  %484 = vmatpush1.msra.mxu0 %v472
  %485 = vmatprep.subr.mxu0 0.0
  %486 = vmatpush1.msra.mxu0 0.0
  %487 = vmatprep.subr.mxu0 0.0
  %488 = vmatpush1.msra.mxu0 0.0
  %489 = vmatprep.subr.mxu0 0.0
  %490 = vmatpush1.msra.mxu0 0.0
  %491 = vmatprep.subr.mxu0 0.0
  %492 = vmatpush1.msra.mxu0 0.0
  %493 = vmatprep.subr.mxu0 0.0
  %494 = vmatpush1.msra.mxu0 0.0
  %495 = vmatprep.subr.mxu0 0.0
  %496 = vmatpush1.msra.mxu0 0.0
  %497 = vmatprep.subr.mxu0 0.0
  %498 = vmatpush1.msra.mxu0 0.0
  %499 = vmatprep.subr.mxu0 0.0
  %500 = vmatpush1.msra.mxu0 0.0
  %501 = vmatprep.subr.mxu0 0.0
  %502 = vmatpush1.msra.mxu0 0.0
  %503 = vmatprep.subr.mxu0 0.0
  %504 = vmatpush1.msra.mxu0 0.0
  %505 = vmatprep.subr.mxu0 0.0
  %506 = vmatpush1.msra.mxu0 0.0
  %507 = vmatprep.subr.mxu0 0.0
  %508 = vmatpush1.msra.mxu0 0.0
  %509 = vmatprep.subr.mxu0 0.0
  %510 = vmatpush1.msra.mxu0 0.0
  %511 = vmatprep.subr.mxu0 0.0
  %512 = vmatpush1.msra.mxu0 0.0
  %513 = vmatprep.subr.mxu0 0.0
  %514 = vmatpush1.msra.mxu0 0.0
  %515 = vmatprep.subr.mxu0 0.0
  %516 = vmatpush1.msra.mxu0 0.0
  %517 = vmatprep.subr.mxu0 0.0
  %518 = vmatpush1.msra.mxu0 0.0
  %519 = vmatprep.subr.mxu0 0.0
  %520 = vmatpush1.msra.mxu0 0.0
  %521 = vmatprep.subr.mxu0 0.0
  %522 = vmatpush1.msra.mxu0 0.0
  %523 = vmatprep.subr.mxu0 0.0
  %524 = vmatpush1.msra.mxu0 0.0
  %525 = vmatprep.subr.mxu0 0.0
  %526 = vmatpush1.msra.mxu0 0.0
  %527 = vmatprep.subr.mxu0 0.0
  %528 = vmatpush1.msra.mxu0 0.0
  %529 = vmatprep.subr.mxu0 0.0
  %530 = vmatpush1.msra.mxu0 0.0
  %531 = vmatprep.subr.mxu0 0.0
  %532 = vmatpush1.msra.mxu0 0.0
  %533 = vmatprep.subr.mxu0 0.0
  %534 = vmatpush1.msra.mxu0 0.0
  %535 = vmatprep.subr.mxu0 0.0
  %536 = vmatpush1.msra.mxu0 0.0
  %537 = vmatprep.subr.mxu0 0.0
  %538 = vmatpush1.msra.mxu0 0.0
  %539 = vmatprep.subr.mxu0 0.0
  %540 = vmatpush1.msra.mxu0 0.0
  %541 = vmatprep.mubr.f32.mxu0 0.0
  %542 = vmatmul.mubr.f32.gmra.mrb[0].mxu0 %v400
  %v543 = vpop.f32.mrb[0].mxu0
  %v544 = vadd.f32 %v257, %v543
  %v545 = vpop.f32.mrb[0].mxu0
  %v546 = vadd.f32 %v259, %v545
  %547 = vmatprep.mubr.f32.mxu0 0.0
  %548 = vmatmul.mubr.f32.gmra.mrb[0].mxu0 %v403
  %v549 = vpop.f32.mrb[0].mxu0
  %v550 = vadd.f32 %v263, %v549
  %v551 = vpop.f32.mrb[0].mxu0
  %v552 = vadd.f32 %v265, %v551
  %553 = vmatprep.mubr.f32.mxu0 0.0
  %554 = vmatmul.mubr.f32.gmra.mrb[0].mxu0 %v406
  %v555 = vpop.f32.mrb[0].mxu0
  %v556 = vadd.f32 %v269, %v555
  %v557 = vpop.f32.mrb[0].mxu0
  %v558 = vadd.f32 %v271, %v557
  %559 = vmatprep.mubr.f32.mxu0 0.0
  %560 = vmatmul.mubr.f32.gmra.mrb[0].mxu0 %v409
  %v561 = vpop.f32.mrb[0].mxu0
  %v562 = vadd.f32 %v275, %v561
  %v563 = vpop.f32.mrb[0].mxu0
  %v564 = vadd.f32 %v277, %v563
  %565 = vmatprep.mubr.f32.mxu0 0.0
  %566 = vmatmul.mubr.f32.gmra.mrb[0].mxu0 %v412
  %v567 = vpop.f32.mrb[0].mxu0
  %v568 = vadd.f32 %v281, %v567
  %v569 = vpop.f32.mrb[0].mxu0
  %v570 = vadd.f32 %v283, %v569
  %571 = vmatprep.mubr.f32.mxu0 0.0
  %572 = vmatmul.mubr.f32.gmra.mrb[0].mxu0 %v415
  %v573 = vpop.f32.mrb[0].mxu0
  %v574 = vadd.f32 %v287, %v573
  %v575 = vpop.f32.mrb[0].mxu0
  %v576 = vadd.f32 %v289, %v575
  %577 = vmatprep.mubr.f32.mxu0 0.0
  %578 = vmatmul.mubr.f32.gmra.mrb[0].mxu0 %v418
  %v579 = vpop.f32.mrb[0].mxu0
  %v580 = vadd.f32 %v293, %v579
  %v581 = vpop.f32.mrb[0].mxu0
  %v582 = vadd.f32 %v295, %v581
  %583 = vmatprep.mubr.f32.mxu0 0.0
  %584 = vmatmul.mubr.f32.gmra.mrb[0].mxu0 %v421
  %v585 = vpop.f32.mrb[0].mxu0
  %v586 = vadd.f32 %v299, %v585
  %v587 = vpop.f32.mrb[0].mxu0
  %v588 = vadd.f32 %v301, %v587
  %589 = vmatprep.mubr.f32.mxu0 0.0
  %590 = vmatmul.mubr.f32.gmra.mrb[0].mxu0 %v424
  %v591 = vpop.f32.mrb[0].mxu0
  %v592 = vadd.f32 %v305, %v591
  %v593 = vpop.f32.mrb[0].mxu0
  %v594 = vadd.f32 %v307, %v593
  %595 = vmatprep.mubr.f32.mxu0 0.0
  %596 = vmatmul.mubr.f32.gmra.mrb[0].mxu0 %v427
  %v597 = vpop.f32.mrb[0].mxu0
  %v598 = vadd.f32 %v311, %v597
  %v599 = vpop.f32.mrb[0].mxu0
  %v600 = vadd.f32 %v313, %v599
  %601 = vmatprep.mubr.f32.mxu0 0.0
  %602 = vmatmul.mubr.f32.gmra.mrb[0].mxu0 %v430
  %v603 = vpop.f32.mrb[0].mxu0
  %v604 = vadd.f32 %v317, %v603
  %v605 = vpop.f32.mrb[0].mxu0
  %v606 = vadd.f32 %v319, %v605
  %607 = vmatprep.mubr.f32.mxu0 0.0
  %608 = vmatmul.mubr.f32.gmra.mrb[0].mxu0 %v433
  %v609 = vpop.f32.mrb[0].mxu0
  %v610 = vadd.f32 %v323, %v609
  %v611 = vpop.f32.mrb[0].mxu0
  %v612 = vadd.f32 %v325, %v611
  %613 = vmatprep.mubr.f32.mxu0 0.0
  %614 = vmatmul.mubr.f32.gmra.mrb[0].mxu0 %v436
  %v615 = vpop.f32.mrb[0].mxu0
  %v616 = vadd.f32 %v329, %v615
  %v617 = vpop.f32.mrb[0].mxu0
  %v618 = vadd.f32 %v331, %v617
  %619 = vmatprep.mubr.f32.mxu0 0.0
  %620 = vmatmul.mubr.f32.gmra.mrb[0].mxu0 %v439
  %v621 = vpop.f32.mrb[0].mxu0
  %v622 = vadd.f32 %v335, %v621
  %v623 = vpop.f32.mrb[0].mxu0
  %v624 = vadd.f32 %v337, %v623
  %625 = vmatprep.mubr.f32.mxu0 0.0
  %626 = vmatmul.mubr.f32.gmra.mrb[0].mxu0 %v442
  %v627 = vpop.f32.mrb[0].mxu0
  %v628 = vadd.f32 %v341, %v627
  %v629 = vpop.f32.mrb[0].mxu0
  %v630 = vadd.f32 %v343, %v629
  %631 = vmatprep.mubr.f32.mxu0 0.0
  %632 = vmatmul.mubr.f32.gmra.mrb[0].mxu0 %v445
  %v633 = vpop.f32.mrb[0].mxu0
  %v634 = vadd.f32 %v347, %v633
  %v635 = vpop.f32.mrb[0].mxu0
  %v636 = vadd.f32 %v349, %v635
  %637 = vmatprep.mubr.f32.mxu0 0.0
  %638 = vmatmul.mubr.f32.gmra.mrb[0].mxu0 %v448
  %v639 = vpop.f32.mrb[0].mxu0
  %v640 = vadd.f32 %v353, %v639
  %v641 = vpop.f32.mrb[0].mxu0
  %v642 = vadd.f32 %v355, %v641
  %643 = vmatprep.mubr.f32.mxu0 0.0
  %644 = vmatmul.mubr.f32.gmra.mrb[0].mxu0 %v451
  %v645 = vpop.f32.mrb[0].mxu0
  %v646 = vadd.f32 %v359, %v645
  %v647 = vpop.f32.mrb[0].mxu0
  %v648 = vadd.f32 %v361, %v647
  %649 = vmatprep.mubr.f32.mxu0 0.0
  %650 = vmatmul.mubr.f32.gmra.mrb[0].mxu0 %v454
  %v651 = vpop.f32.mrb[0].mxu0
  %v652 = vadd.f32 %v365, %v651
  %v653 = vpop.f32.mrb[0].mxu0
  %v654 = vadd.f32 %v367, %v653
  %655 = vmatprep.mubr.f32.mxu0 0.0
  %656 = vmatmul.mubr.f32.gmra.mrb[0].mxu0 %v457
  %v657 = vpop.f32.mrb[0].mxu0
  %v658 = vadd.f32 %v371, %v657
  %v659 = vpop.f32.mrb[0].mxu0
  %v660 = vadd.f32 %v373, %v659
  %661 = vmatprep.mubr.f32.mxu0 0.0
  %662 = vmatmul.mubr.f32.gmra.mrb[0].mxu0 %v460
  %v663 = vpop.f32.mrb[0].mxu0
  %v664 = vadd.f32 %v377, %v663
  %v665 = vpop.f32.mrb[0].mxu0
  %v666 = vadd.f32 %v379, %v665
  %667 = vmatprep.mubr.f32.mxu0 0.0
  %668 = vmatmul.mubr.f32.gmra.mrb[0].mxu0 %v463
  %v669 = vpop.f32.mrb[0].mxu0
  %v670 = vadd.f32 %v383, %v669
  %v671 = vpop.f32.mrb[0].mxu0
  %v672 = vadd.f32 %v385, %v671
  %673 = vmatprep.mubr.f32.mxu0 0.0
  %674 = vmatmul.mubr.f32.gmra.mrb[0].mxu0 %v466
  %v675 = vpop.f32.mrb[0].mxu0
  %v676 = vadd.f32 %v389, %v675
  %v677 = vpop.f32.mrb[0].mxu0
  %v678 = vadd.f32 %v391, %v677
  %679 = vmatprep.mubr.f32.mxu0 0.0
  %680 = vmatmul.mubr.f32.gmra.mrb[0].mxu0 %v469
  %v681 = vpop.f32.mrb[0].mxu0
  %v682 = vadd.f32 %v395, %v681
  %v683 = vpop.f32.mrb[0].mxu0
  %v684 = vadd.f32 %v397, %v683
  %685 = vdwg.mxu0
  %s686 = scalar_lea.vmem %s0, 448
  %v687 = vld [vmem:[%s686] sm:$0xff]
  %v688 = vld [vmem:[%s686 + $0x8] sm:$0xff]
  %v689 = vld [vmem:[%s686 + $0x10] sm:$0xff]
  %v690 = vld [vmem:[%s686 + $0x18] sm:$0xff]
  %v691 = vld [vmem:[%s686 + $0x20] sm:$0xff]
  %v692 = vld [vmem:[%s686 + $0x28] sm:$0xff]
  %v693 = vld [vmem:[%s686 + $0x30] sm:$0xff]
  %v694 = vld [vmem:[%s686 + $0x38] sm:$0xff]
  %v695 = vld [vmem:[%s686 + $0x40] sm:$0xff]
  %v696 = vld [vmem:[%s686 + $0x48] sm:$0xff]
  %v697 = vld [vmem:[%s686 + $0x50] sm:$0xff]
  %v698 = vld [vmem:[%s686 + $0x58] sm:$0xff]
  %v699 = vld [vmem:[%s686 + $0x60] sm:$0xff]
  %v700 = vld [vmem:[%s686 + $0x68] sm:$0xff]
  %v701 = vld [vmem:[%s686 + $0x70] sm:$0xff]
  %v702 = vld [vmem:[%s686 + $0x78] sm:$0xff]
  %v703 = vld [vmem:[%s686 + $0x80] sm:$0xff]
  %v704 = vld [vmem:[%s686 + $0x88] sm:$0xff]
  %v705 = vld [vmem:[%s686 + $0x90] sm:$0xff]
  %v706 = vld [vmem:[%s686 + $0x98] sm:$0xff]
  %v707 = vld [vmem:[%s686 + $0xa0] sm:$0xff]
  %v708 = vld [vmem:[%s686 + $0xa8] sm:$0xff]
  %v709 = vld [vmem:[%s686 + $0xb0] sm:$0xff]
  %v710 = vld [vmem:[%s686 + $0xb8] sm:$0xff]
  %s711 = scalar_lea.vmem %s1, 128
  %v712 = vld [vmem:[%s711] sm:$0xff]
  %v713 = vld [vmem:[%s711 + $0x8] sm:$0xff]
  %v714 = vld [vmem:[%s711 + $0x10] sm:$0xff]
  %v715 = vld [vmem:[%s711 + $0x18] sm:$0xff]
  %v716 = vld [vmem:[%s711 + $0x20] sm:$0xff]
  %v717 = vld [vmem:[%s711 + $0x28] sm:$0xff]
  %v718 = vld [vmem:[%s711 + $0x30] sm:$0xf]
  %v719 = vld [vmem:[%s711 + $0x38] sm:$0xf]
  %v721 = vsel %vm110, %v687, 0
  %v724 = vsel %vm110, %v688, 0
  %v727 = vsel %vm110, %v689, 0
  %v730 = vsel %vm110, %v690, 0
  %v733 = vsel %vm110, %v691, 0
  %v736 = vsel %vm110, %v692, 0
  %v739 = vsel %vm110, %v693, 0
  %v742 = vsel %vm110, %v694, 0
  %v745 = vsel %vm110, %v695, 0
  %v748 = vsel %vm110, %v696, 0
  %v751 = vsel %vm110, %v697, 0
  %v754 = vsel %vm110, %v698, 0
  %v757 = vsel %vm110, %v699, 0
  %v760 = vsel %vm110, %v700, 0
  %v763 = vsel %vm110, %v701, 0
  %v766 = vsel %vm110, %v702, 0
  %v769 = vsel %vm110, %v703, 0
  %v772 = vsel %vm110, %v704, 0
  %v775 = vsel %vm110, %v705, 0
  %v778 = vsel %vm110, %v706, 0
  %v781 = vsel %vm110, %v707, 0
  %v784 = vsel %vm110, %v708, 0
  %v787 = vsel %vm110, %v709, 0
  %v790 = vsel %vm110, %v710, 0
  %v793 = vsel %vm183, %v718, 0
  %v796 = vsel %vm183, %v719, 0
  %798 = vmatprep.subr.mxu0 %v713
  %799 = vmatpush1.msra.mxu0 %v712
  %800 = vmatprep.subr.mxu0 %v715
  %801 = vmatpush1.msra.mxu0 %v714
  %802 = vmatprep.subr.mxu0 %v717
  %803 = vmatpush1.msra.mxu0 %v716
  %804 = vmatprep.subr.mxu0 %v796
  %805 = vmatpush1.msra.mxu0 %v793
  %806 = vmatprep.subr.mxu0 0.0
  %807 = vmatpush1.msra.mxu0 0.0
  %808 = vmatprep.subr.mxu0 0.0
  %809 = vmatpush1.msra.mxu0 0.0
  %810 = vmatprep.subr.mxu0 0.0
  %811 = vmatpush1.msra.mxu0 0.0
  %812 = vmatprep.subr.mxu0 0.0
  %813 = vmatpush1.msra.mxu0 0.0
  %814 = vmatprep.subr.mxu0 0.0
  %815 = vmatpush1.msra.mxu0 0.0
  %816 = vmatprep.subr.mxu0 0.0
  %817 = vmatpush1.msra.mxu0 0.0
  %818 = vmatprep.subr.mxu0 0.0
  %819 = vmatpush1.msra.mxu0 0.0
  %820 = vmatprep.subr.mxu0 0.0
  %821 = vmatpush1.msra.mxu0 0.0
  %822 = vmatprep.subr.mxu0 0.0
  %823 = vmatpush1.msra.mxu0 0.0
  %824 = vmatprep.subr.mxu0 0.0
  %825 = vmatpush1.msra.mxu0 0.0
  %826 = vmatprep.subr.mxu0 0.0
  %827 = vmatpush1.msra.mxu0 0.0
  %828 = vmatprep.subr.mxu0 0.0
  %829 = vmatpush1.msra.mxu0 0.0
  %830 = vmatprep.subr.mxu0 0.0
  %831 = vmatpush1.msra.mxu0 0.0
  %832 = vmatprep.subr.mxu0 0.0
  %833 = vmatpush1.msra.mxu0 0.0
  %834 = vmatprep.subr.mxu0 0.0
  %835 = vmatpush1.msra.mxu0 0.0
  %836 = vmatprep.subr.mxu0 0.0
  %837 = vmatpush1.msra.mxu0 0.0
  %838 = vmatprep.subr.mxu0 0.0
  %839 = vmatpush1.msra.mxu0 0.0
  %840 = vmatprep.subr.mxu0 0.0
  %841 = vmatpush1.msra.mxu0 0.0
  %842 = vmatprep.subr.mxu0 0.0
  %843 = vmatpush1.msra.mxu0 0.0
  %844 = vmatprep.subr.mxu0 0.0
  %845 = vmatpush1.msra.mxu0 0.0
  %846 = vmatprep.subr.mxu0 0.0
  %847 = vmatpush1.msra.mxu0 0.0
  %848 = vmatprep.subr.mxu0 0.0
  %849 = vmatpush1.msra.mxu0 0.0
  %850 = vmatprep.subr.mxu0 0.0
  %851 = vmatpush1.msra.mxu0 0.0
  %852 = vmatprep.subr.mxu0 0.0
  %853 = vmatpush1.msra.mxu0 0.0
  %854 = vmatprep.subr.mxu0 0.0
  %855 = vmatpush1.msra.mxu0 0.0
  %856 = vmatprep.subr.mxu0 0.0
  %857 = vmatpush1.msra.mxu0 0.0
  %858 = vmatprep.subr.mxu0 0.0
  %859 = vmatpush1.msra.mxu0 0.0
  %860 = vmatprep.subr.mxu0 0.0
  %861 = vmatpush1.msra.mxu0 0.0
  %862 = vmatprep.mubr.f32.mxu0 0.0
  %863 = vmatmul.mubr.f32.gmra.mrb[0].mxu0 %v721
  %v864 = vpop.f32.mrb[0].mxu0
  %v865 = vadd.f32 0.0, %v864
  %v866 = vpop.f32.mrb[0].mxu0
  %v867 = vadd.f32 0.0, %v866
  %868 = vmatprep.mubr.f32.mxu0 0.0
  %869 = vmatmul.mubr.f32.gmra.mrb[0].mxu0 %v724
  %v870 = vpop.f32.mrb[0].mxu0
  %v871 = vadd.f32 0.0, %v870
  %v872 = vpop.f32.mrb[0].mxu0
  %v873 = vadd.f32 0.0, %v872
  %874 = vmatprep.mubr.f32.mxu0 0.0
  %875 = vmatmul.mubr.f32.gmra.mrb[0].mxu0 %v727
  %v876 = vpop.f32.mrb[0].mxu0
  %v877 = vadd.f32 0.0, %v876
  %v878 = vpop.f32.mrb[0].mxu0
  %v879 = vadd.f32 0.0, %v878
  %880 = vmatprep.mubr.f32.mxu0 0.0
  %881 = vmatmul.mubr.f32.gmra.mrb[0].mxu0 %v730
  %v882 = vpop.f32.mrb[0].mxu0
  %v883 = vadd.f32 0.0, %v882
  %v884 = vpop.f32.mrb[0].mxu0
  %v885 = vadd.f32 0.0, %v884
  %886 = vmatprep.mubr.f32.mxu0 0.0
  %887 = vmatmul.mubr.f32.gmra.mrb[0].mxu0 %v733
  %v888 = vpop.f32.mrb[0].mxu0
  %v889 = vadd.f32 0.0, %v888
  %v890 = vpop.f32.mrb[0].mxu0
  %v891 = vadd.f32 0.0, %v890
  %892 = vmatprep.mubr.f32.mxu0 0.0
  %893 = vmatmul.mubr.f32.gmra.mrb[0].mxu0 %v736
  %v894 = vpop.f32.mrb[0].mxu0
  %v895 = vadd.f32 0.0, %v894
  %v896 = vpop.f32.mrb[0].mxu0
  %v897 = vadd.f32 0.0, %v896
  %898 = vmatprep.mubr.f32.mxu0 0.0
  %899 = vmatmul.mubr.f32.gmra.mrb[0].mxu0 %v739
  %v900 = vpop.f32.mrb[0].mxu0
  %v901 = vadd.f32 0.0, %v900
  %v902 = vpop.f32.mrb[0].mxu0
  %v903 = vadd.f32 0.0, %v902
  %904 = vmatprep.mubr.f32.mxu0 0.0
  %905 = vmatmul.mubr.f32.gmra.mrb[0].mxu0 %v742
  %v906 = vpop.f32.mrb[0].mxu0
  %v907 = vadd.f32 0.0, %v906
  %v908 = vpop.f32.mrb[0].mxu0
  %v909 = vadd.f32 0.0, %v908
  %910 = vmatprep.mubr.f32.mxu0 0.0
  %911 = vmatmul.mubr.f32.gmra.mrb[0].mxu0 %v745
  %v912 = vpop.f32.mrb[0].mxu0
  %v913 = vadd.f32 0.0, %v912
  %v914 = vpop.f32.mrb[0].mxu0
  %v915 = vadd.f32 0.0, %v914
  %916 = vmatprep.mubr.f32.mxu0 0.0
  %917 = vmatmul.mubr.f32.gmra.mrb[0].mxu0 %v748
  %v918 = vpop.f32.mrb[0].mxu0
  %v919 = vadd.f32 0.0, %v918
  %v920 = vpop.f32.mrb[0].mxu0
  %v921 = vadd.f32 0.0, %v920
  %922 = vmatprep.mubr.f32.mxu0 0.0
  %923 = vmatmul.mubr.f32.gmra.mrb[0].mxu0 %v751
  %v924 = vpop.f32.mrb[0].mxu0
  %v925 = vadd.f32 0.0, %v924
  %v926 = vpop.f32.mrb[0].mxu0
  %v927 = vadd.f32 0.0, %v926
  %928 = vmatprep.mubr.f32.mxu0 0.0
  %929 = vmatmul.mubr.f32.gmra.mrb[0].mxu0 %v754
  %v930 = vpop.f32.mrb[0].mxu0
  %v931 = vadd.f32 0.0, %v930
  %v932 = vpop.f32.mrb[0].mxu0
  %v933 = vadd.f32 0.0, %v932
  %934 = vmatprep.mubr.f32.mxu0 0.0
  %935 = vmatmul.mubr.f32.gmra.mrb[0].mxu0 %v757
  %v936 = vpop.f32.mrb[0].mxu0
  %v937 = vadd.f32 0.0, %v936
  %v938 = vpop.f32.mrb[0].mxu0
  %v939 = vadd.f32 0.0, %v938
  %940 = vmatprep.mubr.f32.mxu0 0.0
  %941 = vmatmul.mubr.f32.gmra.mrb[0].mxu0 %v760
  %v942 = vpop.f32.mrb[0].mxu0
  %v943 = vadd.f32 0.0, %v942
  %v944 = vpop.f32.mrb[0].mxu0
  %v945 = vadd.f32 0.0, %v944
  %946 = vmatprep.mubr.f32.mxu0 0.0
  %947 = vmatmul.mubr.f32.gmra.mrb[0].mxu0 %v763
  %v948 = vpop.f32.mrb[0].mxu0
  %v949 = vadd.f32 0.0, %v948
  %v950 = vpop.f32.mrb[0].mxu0
  %v951 = vadd.f32 0.0, %v950
  %952 = vmatprep.mubr.f32.mxu0 0.0
  %953 = vmatmul.mubr.f32.gmra.mrb[0].mxu0 %v766
  %v954 = vpop.f32.mrb[0].mxu0
  %v955 = vadd.f32 0.0, %v954
  %v956 = vpop.f32.mrb[0].mxu0
  %v957 = vadd.f32 0.0, %v956
  %958 = vmatprep.mubr.f32.mxu0 0.0
  %959 = vmatmul.mubr.f32.gmra.mrb[0].mxu0 %v769
  %v960 = vpop.f32.mrb[0].mxu0
  %v961 = vadd.f32 0.0, %v960
  %v962 = vpop.f32.mrb[0].mxu0
  %v963 = vadd.f32 0.0, %v962
  %964 = vmatprep.mubr.f32.mxu0 0.0
  %965 = vmatmul.mubr.f32.gmra.mrb[0].mxu0 %v772
  %v966 = vpop.f32.mrb[0].mxu0
  %v967 = vadd.f32 0.0, %v966
  %v968 = vpop.f32.mrb[0].mxu0
  %v969 = vadd.f32 0.0, %v968
  %970 = vmatprep.mubr.f32.mxu0 0.0
  %971 = vmatmul.mubr.f32.gmra.mrb[0].mxu0 %v775
  %v972 = vpop.f32.mrb[0].mxu0
  %v973 = vadd.f32 0.0, %v972
  %v974 = vpop.f32.mrb[0].mxu0
  %v975 = vadd.f32 0.0, %v974
  %976 = vmatprep.mubr.f32.mxu0 0.0
  %977 = vmatmul.mubr.f32.gmra.mrb[0].mxu0 %v778
  %v978 = vpop.f32.mrb[0].mxu0
  %v979 = vadd.f32 0.0, %v978
  %v980 = vpop.f32.mrb[0].mxu0
  %v981 = vadd.f32 0.0, %v980
  %982 = vmatprep.mubr.f32.mxu0 0.0
  %983 = vmatmul.mubr.f32.gmra.mrb[0].mxu0 %v781
  %v984 = vpop.f32.mrb[0].mxu0
  %v985 = vadd.f32 0.0, %v984
  %v986 = vpop.f32.mrb[0].mxu0
  %v987 = vadd.f32 0.0, %v986
  %988 = vmatprep.mubr.f32.mxu0 0.0
  %989 = vmatmul.mubr.f32.gmra.mrb[0].mxu0 %v784
  %v990 = vpop.f32.mrb[0].mxu0
  %v991 = vadd.f32 0.0, %v990
  %v992 = vpop.f32.mrb[0].mxu0
  %v993 = vadd.f32 0.0, %v992
  %994 = vmatprep.mubr.f32.mxu0 0.0
  %995 = vmatmul.mubr.f32.gmra.mrb[0].mxu0 %v787
  %v996 = vpop.f32.mrb[0].mxu0
  %v997 = vadd.f32 0.0, %v996
  %v998 = vpop.f32.mrb[0].mxu0
  %v999 = vadd.f32 0.0, %v998
  %1000 = vmatprep.mubr.f32.mxu0 0.0
  %1001 = vmatmul.mubr.f32.gmra.mrb[0].mxu0 %v790
  %v1002 = vpop.f32.mrb[0].mxu0
  %v1003 = vadd.f32 0.0, %v1002
  %v1004 = vpop.f32.mrb[0].mxu0
  %v1005 = vadd.f32 0.0, %v1004
  %1006 = vdwg.mxu0
  %v1007 = vadd.f32 %v544, %v865
  %v1008 = vadd.f32 %v546, %v867
  %v1009 = vadd.f32 %v550, %v871
  %v1010 = vadd.f32 %v552, %v873
  %v1011 = vadd.f32 %v556, %v877
  %v1012 = vadd.f32 %v558, %v879
  %v1013 = vadd.f32 %v562, %v883
  %v1014 = vadd.f32 %v564, %v885
  %v1015 = vadd.f32 %v568, %v889
  %v1016 = vadd.f32 %v570, %v891
  %v1017 = vadd.f32 %v574, %v895
  %v1018 = vadd.f32 %v576, %v897
  %v1019 = vadd.f32 %v580, %v901
  %v1020 = vadd.f32 %v582, %v903
  %v1021 = vadd.f32 %v586, %v907
  %v1022 = vadd.f32 %v588, %v909
  %v1023 = vadd.f32 %v592, %v913
  %v1024 = vadd.f32 %v594, %v915
  %v1025 = vadd.f32 %v598, %v919
  %v1026 = vadd.f32 %v600, %v921
  %v1027 = vadd.f32 %v604, %v925
  %v1028 = vadd.f32 %v606, %v927
  %v1029 = vadd.f32 %v610, %v931
  %v1030 = vadd.f32 %v612, %v933
  %v1031 = vadd.f32 %v616, %v937
  %v1032 = vadd.f32 %v618, %v939
  %v1033 = vadd.f32 %v622, %v943
  %v1034 = vadd.f32 %v624, %v945
  %v1035 = vadd.f32 %v628, %v949
  %v1036 = vadd.f32 %v630, %v951
  %v1037 = vadd.f32 %v634, %v955
  %v1038 = vadd.f32 %v636, %v957
  %v1039 = vadd.f32 %v640, %v961
  %v1040 = vadd.f32 %v642, %v963
  %v1041 = vadd.f32 %v646, %v967
  %v1042 = vadd.f32 %v648, %v969
  %v1043 = vadd.f32 %v652, %v973
  %v1044 = vadd.f32 %v654, %v975
  %v1045 = vadd.f32 %v658, %v979
  %v1046 = vadd.f32 %v660, %v981
  %v1047 = vadd.f32 %v664, %v985
  %v1048 = vadd.f32 %v666, %v987
  %v1049 = vadd.f32 %v670, %v991
  %v1050 = vadd.f32 %v672, %v993
  %v1051 = vadd.f32 %v676, %v997
  %v1052 = vadd.f32 %v678, %v999
  %v1053 = vadd.f32 %v682, %v1003
  %v1054 = vadd.f32 %v684, %v1005
  %s1055 = scalar_lea.vmem %s0, 672
  %v1056 = vld [vmem:[%s1055] sm:$0xff]
  %v1057 = vld [vmem:[%s1055 + $0x8] sm:$0xff]
  %v1058 = vld [vmem:[%s1055 + $0x10] sm:$0xff]
  %v1059 = vld [vmem:[%s1055 + $0x18] sm:$0xff]
  %v1060 = vld [vmem:[%s1055 + $0x20] sm:$0xff]
  %v1061 = vld [vmem:[%s1055 + $0x28] sm:$0xff]
  %v1062 = vld [vmem:[%s1055 + $0x30] sm:$0xff]
  %v1063 = vld [vmem:[%s1055 + $0x38] sm:$0xff]
  %v1064 = vld [vmem:[%s1055 + $0x40] sm:$0xff]
  %v1065 = vld [vmem:[%s1055 + $0x48] sm:$0xff]
  %v1066 = vld [vmem:[%s1055 + $0x50] sm:$0xff]
  %v1067 = vld [vmem:[%s1055 + $0x58] sm:$0xff]
  %v1068 = vld [vmem:[%s1055 + $0x60] sm:$0xff]
  %v1069 = vld [vmem:[%s1055 + $0x68] sm:$0xff]
  %v1070 = vld [vmem:[%s1055 + $0x70] sm:$0xff]
  %v1071 = vld [vmem:[%s1055 + $0x78] sm:$0xff]
  %v1072 = vld [vmem:[%s1055 + $0x80] sm:$0xff]
  %v1073 = vld [vmem:[%s1055 + $0x88] sm:$0xff]
  %v1074 = vld [vmem:[%s1055 + $0x90] sm:$0xff]
  %v1075 = vld [vmem:[%s1055 + $0x98] sm:$0xff]
  %v1076 = vld [vmem:[%s1055 + $0xa0] sm:$0xff]
  %v1077 = vld [vmem:[%s1055 + $0xa8] sm:$0xff]
  %v1078 = vld [vmem:[%s1055 + $0xb0] sm:$0xff]
  %v1079 = vld [vmem:[%s1055 + $0xb8] sm:$0xff]
  %s1080 = scalar_lea.vmem %s1, 192
  %v1081 = vld [vmem:[%s1080] sm:$0xff]
  %v1082 = vld [vmem:[%s1080 + $0x8] sm:$0xff]
  %v1083 = vld [vmem:[%s1080 + $0x10] sm:$0xff]
  %v1084 = vld [vmem:[%s1080 + $0x18] sm:$0xff]
  %v1085 = vld [vmem:[%s1080 + $0x20] sm:$0xff]
  %v1086 = vld [vmem:[%s1080 + $0x28] sm:$0xff]
  %v1087 = vld [vmem:[%s1080 + $0x30] sm:$0xf]
  %v1088 = vld [vmem:[%s1080 + $0x38] sm:$0xf]
  %v1090 = vsel %vm110, %v1056, 0
  %v1093 = vsel %vm110, %v1057, 0
  %v1096 = vsel %vm110, %v1058, 0
  %v1099 = vsel %vm110, %v1059, 0
  %v1102 = vsel %vm110, %v1060, 0
  %v1105 = vsel %vm110, %v1061, 0
  %v1108 = vsel %vm110, %v1062, 0
  %v1111 = vsel %vm110, %v1063, 0
  %v1114 = vsel %vm110, %v1064, 0
  %v1117 = vsel %vm110, %v1065, 0
  %v1120 = vsel %vm110, %v1066, 0
  %v1123 = vsel %vm110, %v1067, 0
  %v1126 = vsel %vm110, %v1068, 0
  %v1129 = vsel %vm110, %v1069, 0
  %v1132 = vsel %vm110, %v1070, 0
  %v1135 = vsel %vm110, %v1071, 0
  %v1138 = vsel %vm110, %v1072, 0
  %v1141 = vsel %vm110, %v1073, 0
  %v1144 = vsel %vm110, %v1074, 0
  %v1147 = vsel %vm110, %v1075, 0
  %v1150 = vsel %vm110, %v1076, 0
  %v1153 = vsel %vm110, %v1077, 0
  %v1156 = vsel %vm110, %v1078, 0
  %v1159 = vsel %vm110, %v1079, 0
  %v1162 = vsel %vm183, %v1087, 0
  %v1165 = vsel %vm183, %v1088, 0
  %1167 = vmatprep.subr.mxu0 %v1082
  %1168 = vmatpush1.msra.mxu0 %v1081
  %1169 = vmatprep.subr.mxu0 %v1084
  %1170 = vmatpush1.msra.mxu0 %v1083
  %1171 = vmatprep.subr.mxu0 %v1086
  %1172 = vmatpush1.msra.mxu0 %v1085
  %1173 = vmatprep.subr.mxu0 %v1165
  %1174 = vmatpush1.msra.mxu0 %v1162
  %1175 = vmatprep.subr.mxu0 0.0
  %1176 = vmatpush1.msra.mxu0 0.0
  %1177 = vmatprep.subr.mxu0 0.0
  %1178 = vmatpush1.msra.mxu0 0.0
  %1179 = vmatprep.subr.mxu0 0.0
  %1180 = vmatpush1.msra.mxu0 0.0
  %1181 = vmatprep.subr.mxu0 0.0
  %1182 = vmatpush1.msra.mxu0 0.0
  %1183 = vmatprep.subr.mxu0 0.0
  %1184 = vmatpush1.msra.mxu0 0.0
  %1185 = vmatprep.subr.mxu0 0.0
  %1186 = vmatpush1.msra.mxu0 0.0
  %1187 = vmatprep.subr.mxu0 0.0
  %1188 = vmatpush1.msra.mxu0 0.0
  %1189 = vmatprep.subr.mxu0 0.0
  %1190 = vmatpush1.msra.mxu0 0.0
  %1191 = vmatprep.subr.mxu0 0.0
  %1192 = vmatpush1.msra.mxu0 0.0
  %1193 = vmatprep.subr.mxu0 0.0
  %1194 = vmatpush1.msra.mxu0 0.0
  %1195 = vmatprep.subr.mxu0 0.0
  %1196 = vmatpush1.msra.mxu0 0.0
  %1197 = vmatprep.subr.mxu0 0.0
  %1198 = vmatpush1.msra.mxu0 0.0
  %1199 = vmatprep.subr.mxu0 0.0
  %1200 = vmatpush1.msra.mxu0 0.0
  %1201 = vmatprep.subr.mxu0 0.0
  %1202 = vmatpush1.msra.mxu0 0.0
  %1203 = vmatprep.subr.mxu0 0.0
  %1204 = vmatpush1.msra.mxu0 0.0
  %1205 = vmatprep.subr.mxu0 0.0
  %1206 = vmatpush1.msra.mxu0 0.0
  %1207 = vmatprep.subr.mxu0 0.0
  %1208 = vmatpush1.msra.mxu0 0.0
  %1209 = vmatprep.subr.mxu0 0.0
  %1210 = vmatpush1.msra.mxu0 0.0
  %1211 = vmatprep.subr.mxu0 0.0
  %1212 = vmatpush1.msra.mxu0 0.0
  %1213 = vmatprep.subr.mxu0 0.0
  %1214 = vmatpush1.msra.mxu0 0.0
  %1215 = vmatprep.subr.mxu0 0.0
  %1216 = vmatpush1.msra.mxu0 0.0
  %1217 = vmatprep.subr.mxu0 0.0
  %1218 = vmatpush1.msra.mxu0 0.0
  %1219 = vmatprep.subr.mxu0 0.0
  %1220 = vmatpush1.msra.mxu0 0.0
  %1221 = vmatprep.subr.mxu0 0.0
  %1222 = vmatpush1.msra.mxu0 0.0
  %1223 = vmatprep.subr.mxu0 0.0
  %1224 = vmatpush1.msra.mxu0 0.0
  %1225 = vmatprep.subr.mxu0 0.0
  %1226 = vmatpush1.msra.mxu0 0.0
  %1227 = vmatprep.subr.mxu0 0.0
  %1228 = vmatpush1.msra.mxu0 0.0
  %1229 = vmatprep.subr.mxu0 0.0
  %1230 = vmatpush1.msra.mxu0 0.0
  %1231 = vmatprep.mubr.f32.mxu0 0.0
  %1232 = vmatmul.mubr.f32.gmra.mrb[0].mxu0 %v1090
  %v1233 = vpop.f32.mrb[0].mxu0
  %v1234 = vadd.f32 0.0, %v1233
  %v1235 = vpop.f32.mrb[0].mxu0
  %v1236 = vadd.f32 0.0, %v1235
  %1237 = vmatprep.mubr.f32.mxu0 0.0
  %1238 = vmatmul.mubr.f32.gmra.mrb[0].mxu0 %v1093
  %v1239 = vpop.f32.mrb[0].mxu0
  %v1240 = vadd.f32 0.0, %v1239
  %v1241 = vpop.f32.mrb[0].mxu0
  %v1242 = vadd.f32 0.0, %v1241
  %1243 = vmatprep.mubr.f32.mxu0 0.0
  %1244 = vmatmul.mubr.f32.gmra.mrb[0].mxu0 %v1096
  %v1245 = vpop.f32.mrb[0].mxu0
  %v1246 = vadd.f32 0.0, %v1245
  %v1247 = vpop.f32.mrb[0].mxu0
  %v1248 = vadd.f32 0.0, %v1247
  %1249 = vmatprep.mubr.f32.mxu0 0.0
  %1250 = vmatmul.mubr.f32.gmra.mrb[0].mxu0 %v1099
  %v1251 = vpop.f32.mrb[0].mxu0
  %v1252 = vadd.f32 0.0, %v1251
  %v1253 = vpop.f32.mrb[0].mxu0
  %v1254 = vadd.f32 0.0, %v1253
  %1255 = vmatprep.mubr.f32.mxu0 0.0
  %1256 = vmatmul.mubr.f32.gmra.mrb[0].mxu0 %v1102
  %v1257 = vpop.f32.mrb[0].mxu0
  %v1258 = vadd.f32 0.0, %v1257
  %v1259 = vpop.f32.mrb[0].mxu0
  %v1260 = vadd.f32 0.0, %v1259
  %1261 = vmatprep.mubr.f32.mxu0 0.0
  %1262 = vmatmul.mubr.f32.gmra.mrb[0].mxu0 %v1105
  %v1263 = vpop.f32.mrb[0].mxu0
  %v1264 = vadd.f32 0.0, %v1263
  %v1265 = vpop.f32.mrb[0].mxu0
  %v1266 = vadd.f32 0.0, %v1265
  %1267 = vmatprep.mubr.f32.mxu0 0.0
  %1268 = vmatmul.mubr.f32.gmra.mrb[0].mxu0 %v1108
  %v1269 = vpop.f32.mrb[0].mxu0
  %v1270 = vadd.f32 0.0, %v1269
  %v1271 = vpop.f32.mrb[0].mxu0
  %v1272 = vadd.f32 0.0, %v1271
  %1273 = vmatprep.mubr.f32.mxu0 0.0
  %1274 = vmatmul.mubr.f32.gmra.mrb[0].mxu0 %v1111
  %v1275 = vpop.f32.mrb[0].mxu0
  %v1276 = vadd.f32 0.0, %v1275
  %v1277 = vpop.f32.mrb[0].mxu0
  %v1278 = vadd.f32 0.0, %v1277
  %1279 = vmatprep.mubr.f32.mxu0 0.0
  %1280 = vmatmul.mubr.f32.gmra.mrb[0].mxu0 %v1114
  %v1281 = vpop.f32.mrb[0].mxu0
  %v1282 = vadd.f32 0.0, %v1281
  %v1283 = vpop.f32.mrb[0].mxu0
  %v1284 = vadd.f32 0.0, %v1283
  %1285 = vmatprep.mubr.f32.mxu0 0.0
  %1286 = vmatmul.mubr.f32.gmra.mrb[0].mxu0 %v1117
  %v1287 = vpop.f32.mrb[0].mxu0
  %v1288 = vadd.f32 0.0, %v1287
  %v1289 = vpop.f32.mrb[0].mxu0
  %v1290 = vadd.f32 0.0, %v1289
  %1291 = vmatprep.mubr.f32.mxu0 0.0
  %1292 = vmatmul.mubr.f32.gmra.mrb[0].mxu0 %v1120
  %v1293 = vpop.f32.mrb[0].mxu0
  %v1294 = vadd.f32 0.0, %v1293
  %v1295 = vpop.f32.mrb[0].mxu0
  %v1296 = vadd.f32 0.0, %v1295
  %1297 = vmatprep.mubr.f32.mxu0 0.0
  %1298 = vmatmul.mubr.f32.gmra.mrb[0].mxu0 %v1123
  %v1299 = vpop.f32.mrb[0].mxu0
  %v1300 = vadd.f32 0.0, %v1299
  %v1301 = vpop.f32.mrb[0].mxu0
  %v1302 = vadd.f32 0.0, %v1301
  %1303 = vmatprep.mubr.f32.mxu0 0.0
  %1304 = vmatmul.mubr.f32.gmra.mrb[0].mxu0 %v1126
  %v1305 = vpop.f32.mrb[0].mxu0
  %v1306 = vadd.f32 0.0, %v1305
  %v1307 = vpop.f32.mrb[0].mxu0
  %v1308 = vadd.f32 0.0, %v1307
  %1309 = vmatprep.mubr.f32.mxu0 0.0
  %1310 = vmatmul.mubr.f32.gmra.mrb[0].mxu0 %v1129
  %v1311 = vpop.f32.mrb[0].mxu0
  %v1312 = vadd.f32 0.0, %v1311
  %v1313 = vpop.f32.mrb[0].mxu0
  %v1314 = vadd.f32 0.0, %v1313
  %1315 = vmatprep.mubr.f32.mxu0 0.0
  %1316 = vmatmul.mubr.f32.gmra.mrb[0].mxu0 %v1132
  %v1317 = vpop.f32.mrb[0].mxu0
  %v1318 = vadd.f32 0.0, %v1317
  %v1319 = vpop.f32.mrb[0].mxu0
  %v1320 = vadd.f32 0.0, %v1319
  %1321 = vmatprep.mubr.f32.mxu0 0.0
  %1322 = vmatmul.mubr.f32.gmra.mrb[0].mxu0 %v1135
  %v1323 = vpop.f32.mrb[0].mxu0
  %v1324 = vadd.f32 0.0, %v1323
  %v1325 = vpop.f32.mrb[0].mxu0
  %v1326 = vadd.f32 0.0, %v1325
  %1327 = vmatprep.mubr.f32.mxu0 0.0
  %1328 = vmatmul.mubr.f32.gmra.mrb[0].mxu0 %v1138
  %v1329 = vpop.f32.mrb[0].mxu0
  %v1330 = vadd.f32 0.0, %v1329
  %v1331 = vpop.f32.mrb[0].mxu0
  %v1332 = vadd.f32 0.0, %v1331
  %1333 = vmatprep.mubr.f32.mxu0 0.0
  %1334 = vmatmul.mubr.f32.gmra.mrb[0].mxu0 %v1141
  %v1335 = vpop.f32.mrb[0].mxu0
  %v1336 = vadd.f32 0.0, %v1335
  %v1337 = vpop.f32.mrb[0].mxu0
  %v1338 = vadd.f32 0.0, %v1337
  %1339 = vmatprep.mubr.f32.mxu0 0.0
  %1340 = vmatmul.mubr.f32.gmra.mrb[0].mxu0 %v1144
  %v1341 = vpop.f32.mrb[0].mxu0
  %v1342 = vadd.f32 0.0, %v1341
  %v1343 = vpop.f32.mrb[0].mxu0
  %v1344 = vadd.f32 0.0, %v1343
  %1345 = vmatprep.mubr.f32.mxu0 0.0
  %1346 = vmatmul.mubr.f32.gmra.mrb[0].mxu0 %v1147
  %v1347 = vpop.f32.mrb[0].mxu0
  %v1348 = vadd.f32 0.0, %v1347
  %v1349 = vpop.f32.mrb[0].mxu0
  %v1350 = vadd.f32 0.0, %v1349
  %1351 = vmatprep.mubr.f32.mxu0 0.0
  %1352 = vmatmul.mubr.f32.gmra.mrb[0].mxu0 %v1150
  %v1353 = vpop.f32.mrb[0].mxu0
  %v1354 = vadd.f32 0.0, %v1353
  %v1355 = vpop.f32.mrb[0].mxu0
  %v1356 = vadd.f32 0.0, %v1355
  %1357 = vmatprep.mubr.f32.mxu0 0.0
  %1358 = vmatmul.mubr.f32.gmra.mrb[0].mxu0 %v1153
  %v1359 = vpop.f32.mrb[0].mxu0
  %v1360 = vadd.f32 0.0, %v1359
  %v1361 = vpop.f32.mrb[0].mxu0
  %v1362 = vadd.f32 0.0, %v1361
  %1363 = vmatprep.mubr.f32.mxu0 0.0
  %1364 = vmatmul.mubr.f32.gmra.mrb[0].mxu0 %v1156
  %v1365 = vpop.f32.mrb[0].mxu0
  %v1366 = vadd.f32 0.0, %v1365
  %v1367 = vpop.f32.mrb[0].mxu0
  %v1368 = vadd.f32 0.0, %v1367
  %1369 = vmatprep.mubr.f32.mxu0 0.0
  %1370 = vmatmul.mubr.f32.gmra.mrb[0].mxu0 %v1159
  %v1371 = vpop.f32.mrb[0].mxu0
  %v1372 = vadd.f32 0.0, %v1371
  %v1373 = vpop.f32.mrb[0].mxu0
  %v1374 = vadd.f32 0.0, %v1373
  %1375 = vdwg.mxu0
  %v1376 = vadd.f32 %v1007, %v1234
  %v1377 = vadd.f32 %v1008, %v1236
  %v1378 = vadd.f32 %v1009, %v1240
  %v1379 = vadd.f32 %v1010, %v1242
  %v1380 = vadd.f32 %v1011, %v1246
  %v1381 = vadd.f32 %v1012, %v1248
  %v1382 = vadd.f32 %v1013, %v1252
  %v1383 = vadd.f32 %v1014, %v1254
  %v1384 = vadd.f32 %v1015, %v1258
  %v1385 = vadd.f32 %v1016, %v1260
  %v1386 = vadd.f32 %v1017, %v1264
  %v1387 = vadd.f32 %v1018, %v1266
  %v1388 = vadd.f32 %v1019, %v1270
  %v1389 = vadd.f32 %v1020, %v1272
  %v1390 = vadd.f32 %v1021, %v1276
  %v1391 = vadd.f32 %v1022, %v1278
  %v1392 = vadd.f32 %v1023, %v1282
  %v1393 = vadd.f32 %v1024, %v1284
  %v1394 = vadd.f32 %v1025, %v1288
  %v1395 = vadd.f32 %v1026, %v1290
  %v1396 = vadd.f32 %v1027, %v1294
  %v1397 = vadd.f32 %v1028, %v1296
  %v1398 = vadd.f32 %v1029, %v1300
  %v1399 = vadd.f32 %v1030, %v1302
  %v1400 = vadd.f32 %v1031, %v1306
  %v1401 = vadd.f32 %v1032, %v1308
  %v1402 = vadd.f32 %v1033, %v1312
  %v1403 = vadd.f32 %v1034, %v1314
  %v1404 = vadd.f32 %v1035, %v1318
  %v1405 = vadd.f32 %v1036, %v1320
  %v1406 = vadd.f32 %v1037, %v1324
  %v1407 = vadd.f32 %v1038, %v1326
  %v1408 = vadd.f32 %v1039, %v1330
  %v1409 = vadd.f32 %v1040, %v1332
  %v1410 = vadd.f32 %v1041, %v1336
  %v1411 = vadd.f32 %v1042, %v1338
  %v1412 = vadd.f32 %v1043, %v1342
  %v1413 = vadd.f32 %v1044, %v1344
  %v1414 = vadd.f32 %v1045, %v1348
  %v1415 = vadd.f32 %v1046, %v1350
  %v1416 = vadd.f32 %v1047, %v1354
  %v1417 = vadd.f32 %v1048, %v1356
  %v1418 = vadd.f32 %v1049, %v1360
  %v1419 = vadd.f32 %v1050, %v1362
  %v1420 = vadd.f32 %v1051, %v1366
  %v1421 = vadd.f32 %v1052, %v1368
  %v1422 = vadd.f32 %v1053, %v1372
  %v1423 = vadd.f32 %v1054, %v1374
  %s1424 = scalar_lea.vmem %s0, 32
  %v1425 = vld [vmem:[%s1424] sm:$0xff]
  %v1426 = vld [vmem:[%s1424 + $0x8] sm:$0xff]
  %v1427 = vld [vmem:[%s1424 + $0x10] sm:$0xff]
  %v1428 = vld [vmem:[%s1424 + $0x18] sm:$0xff]
  %v1429 = vld [vmem:[%s1424 + $0x20] sm:$0xff]
  %v1430 = vld [vmem:[%s1424 + $0x28] sm:$0xff]
  %v1431 = vld [vmem:[%s1424 + $0x30] sm:$0xff]
  %v1432 = vld [vmem:[%s1424 + $0x38] sm:$0xff]
  %v1433 = vld [vmem:[%s1424 + $0x40] sm:$0xff]
  %v1434 = vld [vmem:[%s1424 + $0x48] sm:$0xff]
  %v1435 = vld [vmem:[%s1424 + $0x50] sm:$0xff]
  %v1436 = vld [vmem:[%s1424 + $0x58] sm:$0xff]
  %v1437 = vld [vmem:[%s1424 + $0x60] sm:$0xff]
  %v1438 = vld [vmem:[%s1424 + $0x68] sm:$0xff]
  %v1439 = vld [vmem:[%s1424 + $0x70] sm:$0xff]
  %v1440 = vld [vmem:[%s1424 + $0x78] sm:$0xff]
  %v1441 = vld [vmem:[%s1424 + $0x80] sm:$0xff]
  %v1442 = vld [vmem:[%s1424 + $0x88] sm:$0xff]
  %v1443 = vld [vmem:[%s1424 + $0x90] sm:$0xff]
  %v1444 = vld [vmem:[%s1424 + $0x98] sm:$0xff]
  %v1445 = vld [vmem:[%s1424 + $0xa0] sm:$0xff]
  %v1446 = vld [vmem:[%s1424 + $0xa8] sm:$0xff]
  %v1447 = vld [vmem:[%s1424 + $0xb0] sm:$0xff]
  %v1448 = vld [vmem:[%s1424 + $0xb8] sm:$0xff]
  %s1449 = scalar_lea.vmem %s1, 256
  %v1450 = vld [vmem:[%s1449] sm:$0xff]
  %v1451 = vld [vmem:[%s1449 + $0x8] sm:$0xff]
  %v1452 = vld [vmem:[%s1449 + $0x10] sm:$0xff]
  %v1453 = vld [vmem:[%s1449 + $0x18] sm:$0xff]
  %v1454 = vld [vmem:[%s1449 + $0x20] sm:$0xff]
  %v1455 = vld [vmem:[%s1449 + $0x28] sm:$0xff]
  %v1456 = vld [vmem:[%s1449 + $0x30] sm:$0xf]
  %v1457 = vld [vmem:[%s1449 + $0x38] sm:$0xf]
  %v1459 = vsel %vm110, %v1425, 0
  %v1462 = vsel %vm110, %v1426, 0
  %v1465 = vsel %vm110, %v1427, 0
  %v1468 = vsel %vm110, %v1428, 0
  %v1471 = vsel %vm110, %v1429, 0
  %v1474 = vsel %vm110, %v1430, 0
  %v1477 = vsel %vm110, %v1431, 0
  %v1480 = vsel %vm110, %v1432, 0
  %v1483 = vsel %vm110, %v1433, 0
  %v1486 = vsel %vm110, %v1434, 0
  %v1489 = vsel %vm110, %v1435, 0
  %v1492 = vsel %vm110, %v1436, 0
  %v1495 = vsel %vm110, %v1437, 0
  %v1498 = vsel %vm110, %v1438, 0
  %v1501 = vsel %vm110, %v1439, 0
  %v1504 = vsel %vm110, %v1440, 0
  %v1507 = vsel %vm110, %v1441, 0
  %v1510 = vsel %vm110, %v1442, 0
  %v1513 = vsel %vm110, %v1443, 0
  %v1516 = vsel %vm110, %v1444, 0
  %v1519 = vsel %vm110, %v1445, 0
  %v1522 = vsel %vm110, %v1446, 0
  %v1525 = vsel %vm110, %v1447, 0
  %v1528 = vsel %vm110, %v1448, 0
  %v1531 = vsel %vm183, %v1456, 0
  %v1534 = vsel %vm183, %v1457, 0
  %1536 = vmatprep.subr.mxu0 %v1451
  %1537 = vmatpush1.msra.mxu0 %v1450
  %1538 = vmatprep.subr.mxu0 %v1453
  %1539 = vmatpush1.msra.mxu0 %v1452
  %1540 = vmatprep.subr.mxu0 %v1455
  %1541 = vmatpush1.msra.mxu0 %v1454
  %1542 = vmatprep.subr.mxu0 %v1534
  %1543 = vmatpush1.msra.mxu0 %v1531
  %1544 = vmatprep.subr.mxu0 0.0
  %1545 = vmatpush1.msra.mxu0 0.0
  %1546 = vmatprep.subr.mxu0 0.0
  %1547 = vmatpush1.msra.mxu0 0.0
  %1548 = vmatprep.subr.mxu0 0.0
  %1549 = vmatpush1.msra.mxu0 0.0
  %1550 = vmatprep.subr.mxu0 0.0
  %1551 = vmatpush1.msra.mxu0 0.0
  %1552 = vmatprep.subr.mxu0 0.0
  %1553 = vmatpush1.msra.mxu0 0.0
  %1554 = vmatprep.subr.mxu0 0.0
  %1555 = vmatpush1.msra.mxu0 0.0
  %1556 = vmatprep.subr.mxu0 0.0
  %1557 = vmatpush1.msra.mxu0 0.0
  %1558 = vmatprep.subr.mxu0 0.0
  %1559 = vmatpush1.msra.mxu0 0.0
  %1560 = vmatprep.subr.mxu0 0.0
  %1561 = vmatpush1.msra.mxu0 0.0
  %1562 = vmatprep.subr.mxu0 0.0
  %1563 = vmatpush1.msra.mxu0 0.0
  %1564 = vmatprep.subr.mxu0 0.0
  %1565 = vmatpush1.msra.mxu0 0.0
  %1566 = vmatprep.subr.mxu0 0.0
  %1567 = vmatpush1.msra.mxu0 0.0
  %1568 = vmatprep.subr.mxu0 0.0
  %1569 = vmatpush1.msra.mxu0 0.0
  %1570 = vmatprep.subr.mxu0 0.0
  %1571 = vmatpush1.msra.mxu0 0.0
  %1572 = vmatprep.subr.mxu0 0.0
  %1573 = vmatpush1.msra.mxu0 0.0
  %1574 = vmatprep.subr.mxu0 0.0
  %1575 = vmatpush1.msra.mxu0 0.0
  %1576 = vmatprep.subr.mxu0 0.0
  %1577 = vmatpush1.msra.mxu0 0.0
  %1578 = vmatprep.subr.mxu0 0.0
  %1579 = vmatpush1.msra.mxu0 0.0
  %1580 = vmatprep.subr.mxu0 0.0
  %1581 = vmatpush1.msra.mxu0 0.0
  %1582 = vmatprep.subr.mxu0 0.0
  %1583 = vmatpush1.msra.mxu0 0.0
  %1584 = vmatprep.subr.mxu0 0.0
  %1585 = vmatpush1.msra.mxu0 0.0
  %1586 = vmatprep.subr.mxu0 0.0
  %1587 = vmatpush1.msra.mxu0 0.0
  %1588 = vmatprep.subr.mxu0 0.0
  %1589 = vmatpush1.msra.mxu0 0.0
  %1590 = vmatprep.subr.mxu0 0.0
  %1591 = vmatpush1.msra.mxu0 0.0
  %1592 = vmatprep.subr.mxu0 0.0
  %1593 = vmatpush1.msra.mxu0 0.0
  %1594 = vmatprep.subr.mxu0 0.0
  %1595 = vmatpush1.msra.mxu0 0.0
  %1596 = vmatprep.subr.mxu0 0.0
  %1597 = vmatpush1.msra.mxu0 0.0
  %1598 = vmatprep.subr.mxu0 0.0
  %1599 = vmatpush1.msra.mxu0 0.0
  %1600 = vmatprep.mubr.f32.mxu0 0.0
  %1601 = vmatmul.mubr.f32.gmra.mrb[0].mxu0 %v1459
  %v1602 = vpop.f32.mrb[0].mxu0
  %v1603 = vadd.f32 0.0, %v1602
  %v1604 = vpop.f32.mrb[0].mxu0
  %v1605 = vadd.f32 0.0, %v1604
  %1606 = vmatprep.mubr.f32.mxu0 0.0
  %1607 = vmatmul.mubr.f32.gmra.mrb[0].mxu0 %v1462
  %v1608 = vpop.f32.mrb[0].mxu0
  %v1609 = vadd.f32 0.0, %v1608
  %v1610 = vpop.f32.mrb[0].mxu0
  %v1611 = vadd.f32 0.0, %v1610
  %1612 = vmatprep.mubr.f32.mxu0 0.0
  %1613 = vmatmul.mubr.f32.gmra.mrb[0].mxu0 %v1465
  %v1614 = vpop.f32.mrb[0].mxu0
  %v1615 = vadd.f32 0.0, %v1614
  %v1616 = vpop.f32.mrb[0].mxu0
  %v1617 = vadd.f32 0.0, %v1616
  %1618 = vmatprep.mubr.f32.mxu0 0.0
  %1619 = vmatmul.mubr.f32.gmra.mrb[0].mxu0 %v1468
  %v1620 = vpop.f32.mrb[0].mxu0
  %v1621 = vadd.f32 0.0, %v1620
  %v1622 = vpop.f32.mrb[0].mxu0
  %v1623 = vadd.f32 0.0, %v1622
  %1624 = vmatprep.mubr.f32.mxu0 0.0
  %1625 = vmatmul.mubr.f32.gmra.mrb[0].mxu0 %v1471
  %v1626 = vpop.f32.mrb[0].mxu0
  %v1627 = vadd.f32 0.0, %v1626
  %v1628 = vpop.f32.mrb[0].mxu0
  %v1629 = vadd.f32 0.0, %v1628
  %1630 = vmatprep.mubr.f32.mxu0 0.0
  %1631 = vmatmul.mubr.f32.gmra.mrb[0].mxu0 %v1474
  %v1632 = vpop.f32.mrb[0].mxu0
  %v1633 = vadd.f32 0.0, %v1632
  %v1634 = vpop.f32.mrb[0].mxu0
  %v1635 = vadd.f32 0.0, %v1634
  %1636 = vmatprep.mubr.f32.mxu0 0.0
  %1637 = vmatmul.mubr.f32.gmra.mrb[0].mxu0 %v1477
  %v1638 = vpop.f32.mrb[0].mxu0
  %v1639 = vadd.f32 0.0, %v1638
  %v1640 = vpop.f32.mrb[0].mxu0
  %v1641 = vadd.f32 0.0, %v1640
  %1642 = vmatprep.mubr.f32.mxu0 0.0
  %1643 = vmatmul.mubr.f32.gmra.mrb[0].mxu0 %v1480
  %v1644 = vpop.f32.mrb[0].mxu0
  %v1645 = vadd.f32 0.0, %v1644
  %v1646 = vpop.f32.mrb[0].mxu0
  %v1647 = vadd.f32 0.0, %v1646
  %1648 = vmatprep.mubr.f32.mxu0 0.0
  %1649 = vmatmul.mubr.f32.gmra.mrb[0].mxu0 %v1483
  %v1650 = vpop.f32.mrb[0].mxu0
  %v1651 = vadd.f32 0.0, %v1650
  %v1652 = vpop.f32.mrb[0].mxu0
  %v1653 = vadd.f32 0.0, %v1652
  %1654 = vmatprep.mubr.f32.mxu0 0.0
  %1655 = vmatmul.mubr.f32.gmra.mrb[0].mxu0 %v1486
  %v1656 = vpop.f32.mrb[0].mxu0
  %v1657 = vadd.f32 0.0, %v1656
  %v1658 = vpop.f32.mrb[0].mxu0
  %v1659 = vadd.f32 0.0, %v1658
  %1660 = vmatprep.mubr.f32.mxu0 0.0
  %1661 = vmatmul.mubr.f32.gmra.mrb[0].mxu0 %v1489
  %v1662 = vpop.f32.mrb[0].mxu0
  %v1663 = vadd.f32 0.0, %v1662
  %v1664 = vpop.f32.mrb[0].mxu0
  %v1665 = vadd.f32 0.0, %v1664
  %1666 = vmatprep.mubr.f32.mxu0 0.0
  %1667 = vmatmul.mubr.f32.gmra.mrb[0].mxu0 %v1492
  %v1668 = vpop.f32.mrb[0].mxu0
  %v1669 = vadd.f32 0.0, %v1668
  %v1670 = vpop.f32.mrb[0].mxu0
  %v1671 = vadd.f32 0.0, %v1670
  %1672 = vmatprep.mubr.f32.mxu0 0.0
  %1673 = vmatmul.mubr.f32.gmra.mrb[0].mxu0 %v1495
  %v1674 = vpop.f32.mrb[0].mxu0
  %v1675 = vadd.f32 0.0, %v1674
  %v1676 = vpop.f32.mrb[0].mxu0
  %v1677 = vadd.f32 0.0, %v1676
  %1678 = vmatprep.mubr.f32.mxu0 0.0
  %1679 = vmatmul.mubr.f32.gmra.mrb[0].mxu0 %v1498
  %v1680 = vpop.f32.mrb[0].mxu0
  %v1681 = vadd.f32 0.0, %v1680
  %v1682 = vpop.f32.mrb[0].mxu0
  %v1683 = vadd.f32 0.0, %v1682
  %1684 = vmatprep.mubr.f32.mxu0 0.0
  %1685 = vmatmul.mubr.f32.gmra.mrb[0].mxu0 %v1501
  %v1686 = vpop.f32.mrb[0].mxu0
  %v1687 = vadd.f32 0.0, %v1686
  %v1688 = vpop.f32.mrb[0].mxu0
  %v1689 = vadd.f32 0.0, %v1688
  %1690 = vmatprep.mubr.f32.mxu0 0.0
  %1691 = vmatmul.mubr.f32.gmra.mrb[0].mxu0 %v1504
  %v1692 = vpop.f32.mrb[0].mxu0
  %v1693 = vadd.f32 0.0, %v1692
  %v1694 = vpop.f32.mrb[0].mxu0
  %v1695 = vadd.f32 0.0, %v1694
  %1696 = vmatprep.mubr.f32.mxu0 0.0
  %1697 = vmatmul.mubr.f32.gmra.mrb[0].mxu0 %v1507
  %v1698 = vpop.f32.mrb[0].mxu0
  %v1699 = vadd.f32 0.0, %v1698
  %v1700 = vpop.f32.mrb[0].mxu0
  %v1701 = vadd.f32 0.0, %v1700
  %1702 = vmatprep.mubr.f32.mxu0 0.0
  %1703 = vmatmul.mubr.f32.gmra.mrb[0].mxu0 %v1510
  %v1704 = vpop.f32.mrb[0].mxu0
  %v1705 = vadd.f32 0.0, %v1704
  %v1706 = vpop.f32.mrb[0].mxu0
  %v1707 = vadd.f32 0.0, %v1706
  %1708 = vmatprep.mubr.f32.mxu0 0.0
  %1709 = vmatmul.mubr.f32.gmra.mrb[0].mxu0 %v1513
  %v1710 = vpop.f32.mrb[0].mxu0
  %v1711 = vadd.f32 0.0, %v1710
  %v1712 = vpop.f32.mrb[0].mxu0
  %v1713 = vadd.f32 0.0, %v1712
  %1714 = vmatprep.mubr.f32.mxu0 0.0
  %1715 = vmatmul.mubr.f32.gmra.mrb[0].mxu0 %v1516
  %v1716 = vpop.f32.mrb[0].mxu0
  %v1717 = vadd.f32 0.0, %v1716
  %v1718 = vpop.f32.mrb[0].mxu0
  %v1719 = vadd.f32 0.0, %v1718
  %1720 = vmatprep.mubr.f32.mxu0 0.0
  %1721 = vmatmul.mubr.f32.gmra.mrb[0].mxu0 %v1519
  %v1722 = vpop.f32.mrb[0].mxu0
  %v1723 = vadd.f32 0.0, %v1722
  %v1724 = vpop.f32.mrb[0].mxu0
  %v1725 = vadd.f32 0.0, %v1724
  %1726 = vmatprep.mubr.f32.mxu0 0.0
  %1727 = vmatmul.mubr.f32.gmra.mrb[0].mxu0 %v1522
  %v1728 = vpop.f32.mrb[0].mxu0
  %v1729 = vadd.f32 0.0, %v1728
  %v1730 = vpop.f32.mrb[0].mxu0
  %v1731 = vadd.f32 0.0, %v1730
  %1732 = vmatprep.mubr.f32.mxu0 0.0
  %1733 = vmatmul.mubr.f32.gmra.mrb[0].mxu0 %v1525
  %v1734 = vpop.f32.mrb[0].mxu0
  %v1735 = vadd.f32 0.0, %v1734
  %v1736 = vpop.f32.mrb[0].mxu0
  %v1737 = vadd.f32 0.0, %v1736
  %1738 = vmatprep.mubr.f32.mxu0 0.0
  %1739 = vmatmul.mubr.f32.gmra.mrb[0].mxu0 %v1528
  %v1740 = vpop.f32.mrb[0].mxu0
  %v1741 = vadd.f32 0.0, %v1740
  %v1742 = vpop.f32.mrb[0].mxu0
  %v1743 = vadd.f32 0.0, %v1742
  %1744 = vdwg.mxu0
  %v1745 = vadd.f32 %v1376, %v1603
  %v1746 = vadd.f32 %v1377, %v1605
  %v1747 = vadd.f32 %v1378, %v1609
  %v1748 = vadd.f32 %v1379, %v1611
  %v1749 = vadd.f32 %v1380, %v1615
  %v1750 = vadd.f32 %v1381, %v1617
  %v1751 = vadd.f32 %v1382, %v1621
  %v1752 = vadd.f32 %v1383, %v1623
  %v1753 = vadd.f32 %v1384, %v1627
  %v1754 = vadd.f32 %v1385, %v1629
  %v1755 = vadd.f32 %v1386, %v1633
  %v1756 = vadd.f32 %v1387, %v1635
  %v1757 = vadd.f32 %v1388, %v1639
  %v1758 = vadd.f32 %v1389, %v1641
  %v1759 = vadd.f32 %v1390, %v1645
  %v1760 = vadd.f32 %v1391, %v1647
  %v1761 = vadd.f32 %v1392, %v1651
  %v1762 = vadd.f32 %v1393, %v1653
  %v1763 = vadd.f32 %v1394, %v1657
  %v1764 = vadd.f32 %v1395, %v1659
  %v1765 = vadd.f32 %v1396, %v1663
  %v1766 = vadd.f32 %v1397, %v1665
  %v1767 = vadd.f32 %v1398, %v1669
  %v1768 = vadd.f32 %v1399, %v1671
  %v1769 = vadd.f32 %v1400, %v1675
  %v1770 = vadd.f32 %v1401, %v1677
  %v1771 = vadd.f32 %v1402, %v1681
  %v1772 = vadd.f32 %v1403, %v1683
  %v1773 = vadd.f32 %v1404, %v1687
  %v1774 = vadd.f32 %v1405, %v1689
  %v1775 = vadd.f32 %v1406, %v1693
  %v1776 = vadd.f32 %v1407, %v1695
  %v1777 = vadd.f32 %v1408, %v1699
  %v1778 = vadd.f32 %v1409, %v1701
  %v1779 = vadd.f32 %v1410, %v1705
  %v1780 = vadd.f32 %v1411, %v1707
  %v1781 = vadd.f32 %v1412, %v1711
  %v1782 = vadd.f32 %v1413, %v1713
  %v1783 = vadd.f32 %v1414, %v1717
  %v1784 = vadd.f32 %v1415, %v1719
  %v1785 = vadd.f32 %v1416, %v1723
  %v1786 = vadd.f32 %v1417, %v1725
  %v1787 = vadd.f32 %v1418, %v1729
  %v1788 = vadd.f32 %v1419, %v1731
  %v1789 = vadd.f32 %v1420, %v1735
  %v1790 = vadd.f32 %v1421, %v1737
  %v1791 = vadd.f32 %v1422, %v1741
  %v1792 = vadd.f32 %v1423, %v1743
  %v1793 = vld [vmem:[%s2] sm:$0x3]
  %v1795 = vlaneseq
  %v1796 = vshrl.u32 %v1795, 7
  %v1797 = vsub.s32 0, %v1796
  %v1798 = vrot.slane %v1793, %v1797
  %v1799 = vlaneseq
  %v1800 = vshrl.u32 %v1799, 7
  %v1801 = vsub.s32 1, %v1800
  %v1802 = vrot.slane %v1793, %v1801
  %v1805 = vadd.f32 %v1745, %v1798
  %v1806 = vadd.f32 %v1746, %v1802
  %v1807 = vadd.f32 %v1747, %v1798
  %v1808 = vadd.f32 %v1748, %v1802
  %v1809 = vadd.f32 %v1749, %v1798
  %v1810 = vadd.f32 %v1750, %v1802
  %v1811 = vadd.f32 %v1751, %v1798
  %v1812 = vadd.f32 %v1752, %v1802
  %v1813 = vadd.f32 %v1753, %v1798
  %v1814 = vadd.f32 %v1754, %v1802
  %v1815 = vadd.f32 %v1755, %v1798
  %v1816 = vadd.f32 %v1756, %v1802
  %v1817 = vadd.f32 %v1757, %v1798
  %v1818 = vadd.f32 %v1758, %v1802
  %v1819 = vadd.f32 %v1759, %v1798
  %v1820 = vadd.f32 %v1760, %v1802
  %v1821 = vadd.f32 %v1761, %v1798
  %v1822 = vadd.f32 %v1762, %v1802
  %v1823 = vadd.f32 %v1763, %v1798
  %v1824 = vadd.f32 %v1764, %v1802
  %v1825 = vadd.f32 %v1765, %v1798
  %v1826 = vadd.f32 %v1766, %v1802
  %v1827 = vadd.f32 %v1767, %v1798
  %v1828 = vadd.f32 %v1768, %v1802
  %v1829 = vadd.f32 %v1769, %v1798
  %v1830 = vadd.f32 %v1770, %v1802
  %v1831 = vadd.f32 %v1771, %v1798
  %v1832 = vadd.f32 %v1772, %v1802
  %v1833 = vadd.f32 %v1773, %v1798
  %v1834 = vadd.f32 %v1774, %v1802
  %v1835 = vadd.f32 %v1775, %v1798
  %v1836 = vadd.f32 %v1776, %v1802
  %v1837 = vadd.f32 %v1777, %v1798
  %v1838 = vadd.f32 %v1778, %v1802
  %v1839 = vadd.f32 %v1779, %v1798
  %v1840 = vadd.f32 %v1780, %v1802
  %v1841 = vadd.f32 %v1781, %v1798
  %v1842 = vadd.f32 %v1782, %v1802
  %v1843 = vadd.f32 %v1783, %v1798
  %v1844 = vadd.f32 %v1784, %v1802
  %v1845 = vadd.f32 %v1785, %v1798
  %v1846 = vadd.f32 %v1786, %v1802
  %v1847 = vadd.f32 %v1787, %v1798
  %v1848 = vadd.f32 %v1788, %v1802
  %v1849 = vadd.f32 %v1789, %v1798
  %v1850 = vadd.f32 %v1790, %v1802
  %v1851 = vadd.f32 %v1791, %v1798
  %v1852 = vadd.f32 %v1792, %v1802
  %v1853 = vtanh.pop %v1805
  %v1854 = vtanh.pop %v1806
  %v1855 = vtanh.pop %v1807
  %v1856 = vtanh.pop %v1808
  %v1857 = vtanh.pop %v1809
  %v1858 = vtanh.pop %v1810
  %v1859 = vtanh.pop %v1811
  %v1860 = vtanh.pop %v1812
  %v1861 = vtanh.pop %v1813
  %v1862 = vtanh.pop %v1814
  %v1863 = vtanh.pop %v1815
  %v1864 = vtanh.pop %v1816
  %v1865 = vtanh.pop %v1817
  %v1866 = vtanh.pop %v1818
  %v1867 = vtanh.pop %v1819
  %v1868 = vtanh.pop %v1820
  %v1869 = vtanh.pop %v1821
  %v1870 = vtanh.pop %v1822
  %v1871 = vtanh.pop %v1823
  %v1872 = vtanh.pop %v1824
  %v1873 = vtanh.pop %v1825
  %v1874 = vtanh.pop %v1826
  %v1875 = vtanh.pop %v1827
  %v1876 = vtanh.pop %v1828
  %v1877 = vtanh.pop %v1829
  %v1878 = vtanh.pop %v1830
  %v1879 = vtanh.pop %v1831
  %v1880 = vtanh.pop %v1832
  %v1881 = vtanh.pop %v1833
  %v1882 = vtanh.pop %v1834
  %v1883 = vtanh.pop %v1835
  %v1884 = vtanh.pop %v1836
  %v1885 = vtanh.pop %v1837
  %v1886 = vtanh.pop %v1838
  %v1887 = vtanh.pop %v1839
  %v1888 = vtanh.pop %v1840
  %v1889 = vtanh.pop %v1841
  %v1890 = vtanh.pop %v1842
  %v1891 = vtanh.pop %v1843
  %v1892 = vtanh.pop %v1844
  %v1893 = vtanh.pop %v1845
  %v1894 = vtanh.pop %v1846
  %v1895 = vtanh.pop %v1847
  %v1896 = vtanh.pop %v1848
  %v1897 = vtanh.pop %v1849
  %v1898 = vtanh.pop %v1850
  %v1899 = vtanh.pop %v1851
  %v1900 = vtanh.pop %v1852
  %v1901 = vld [vmem:[%s3] sm:$0xff]
  %v1902 = vld [vmem:[%s3 + $0x8] sm:$0xff]
  %v1903 = vld [vmem:[%s3 + $0x10] sm:$0xff]
  %v1904 = vld [vmem:[%s3 + $0x18] sm:$0xff]
  %v1905 = vld [vmem:[%s3 + $0x20] sm:$0xff]
  %v1906 = vld [vmem:[%s3 + $0x28] sm:$0xff]
  %v1907 = vld [vmem:[%s3 + $0x30] sm:$0xff]
  %v1908 = vld [vmem:[%s3 + $0x38] sm:$0xff]
  %v1909 = vld [vmem:[%s3 + $0x40] sm:$0xff]
  %v1910 = vld [vmem:[%s3 + $0x48] sm:$0xff]
  %v1911 = vld [vmem:[%s3 + $0x50] sm:$0xff]
  %v1912 = vld [vmem:[%s3 + $0x58] sm:$0xff]
  %v1913 = vld [vmem:[%s3 + $0x60] sm:$0xff]
  %v1914 = vld [vmem:[%s3 + $0x68] sm:$0xff]
  %v1915 = vld [vmem:[%s3 + $0x70] sm:$0xff]
  %v1916 = vld [vmem:[%s3 + $0x78] sm:$0xff]
  %v1917 = vld [vmem:[%s3 + $0x80] sm:$0xff]
  %v1918 = vld [vmem:[%s3 + $0x88] sm:$0xff]
  %1919 = vmatprep.subr.mxu0 %v103
  %1920 = vmatpush1.msra.mxu0 %v102
  %1921 = vmatprep.subr.mxu0 %v105
  %1922 = vmatpush1.msra.mxu0 %v104
  %1923 = vmatprep.subr.mxu0 %v107
  %1924 = vmatpush1.msra.mxu0 %v106
  %1925 = vmatprep.subr.mxu0 %v188
  %1926 = vmatpush1.msra.mxu0 %v185
  %1927 = vmatprep.subr.mxu0 0.0
  %1928 = vmatpush1.msra.mxu0 0.0
  %1929 = vmatprep.subr.mxu0 0.0
  %1930 = vmatpush1.msra.mxu0 0.0
  %1931 = vmatprep.subr.mxu0 0.0
  %1932 = vmatpush1.msra.mxu0 0.0
  %1933 = vmatprep.subr.mxu0 0.0
  %1934 = vmatpush1.msra.mxu0 0.0
  %1935 = vmatprep.subr.mxu0 0.0
  %1936 = vmatpush1.msra.mxu0 0.0
  %1937 = vmatprep.subr.mxu0 0.0
  %1938 = vmatpush1.msra.mxu0 0.0
  %1939 = vmatprep.subr.mxu0 0.0
  %1940 = vmatpush1.msra.mxu0 0.0
  %1941 = vmatprep.subr.mxu0 0.0
  %1942 = vmatpush1.msra.mxu0 0.0
  %1943 = vmatprep.subr.mxu0 0.0
  %1944 = vmatpush1.msra.mxu0 0.0
  %1945 = vmatprep.subr.mxu0 0.0
  %1946 = vmatpush1.msra.mxu0 0.0
  %1947 = vmatprep.subr.mxu0 0.0
  %1948 = vmatpush1.msra.mxu0 0.0
  %1949 = vmatprep.subr.mxu0 0.0
  %1950 = vmatpush1.msra.mxu0 0.0
  %1951 = vmatprep.subr.mxu0 0.0
  %1952 = vmatpush1.msra.mxu0 0.0
  %1953 = vmatprep.subr.mxu0 0.0
  %1954 = vmatpush1.msra.mxu0 0.0
  %1955 = vmatprep.subr.mxu0 0.0
  %1956 = vmatpush1.msra.mxu0 0.0
  %1957 = vmatprep.subr.mxu0 0.0
  %1958 = vmatpush1.msra.mxu0 0.0
  %1959 = vmatprep.subr.mxu0 0.0
  %1960 = vmatpush1.msra.mxu0 0.0
  %1961 = vmatprep.subr.mxu0 0.0
  %1962 = vmatpush1.msra.mxu0 0.0
  %1963 = vmatprep.subr.mxu0 0.0
  %1964 = vmatpush1.msra.mxu0 0.0
  %1965 = vmatprep.subr.mxu0 0.0
  %1966 = vmatpush1.msra.mxu0 0.0
  %1967 = vmatprep.subr.mxu0 0.0
  %1968 = vmatpush1.msra.mxu0 0.0
  %1969 = vmatprep.subr.mxu0 0.0
  %1970 = vmatpush1.msra.mxu0 0.0
  %1971 = vmatprep.subr.mxu0 0.0
  %1972 = vmatpush1.msra.mxu0 0.0
  %1973 = vmatprep.subr.mxu0 0.0
  %1974 = vmatpush1.msra.mxu0 0.0
  %1975 = vmatprep.subr.mxu0 0.0
  %1976 = vmatpush1.msra.mxu0 0.0
  %1977 = vmatprep.subr.mxu0 0.0
  %1978 = vmatpush1.msra.mxu0 0.0
  %1979 = vmatprep.subr.mxu0 0.0
  %1980 = vmatpush1.msra.mxu0 0.0
  %1981 = vmatprep.subr.mxu0 0.0
  %1982 = vmatpush1.msra.mxu0 0.0
  %1983 = vmatprep.mubr.f32.mxu0 0.0
  %1984 = vmatmul.mubr.f32.gmra.mrb[0].mxu0 %v721
  %v1985 = vpop.f32.mrb[0].mxu0
  %v1986 = vadd.f32 0.0, %v1985
  %v1987 = vpop.f32.mrb[0].mxu0
  %v1988 = vadd.f32 0.0, %v1987
  %1989 = vmatprep.mubr.f32.mxu0 0.0
  %1990 = vmatmul.mubr.f32.gmra.mrb[0].mxu0 %v724
  %v1991 = vpop.f32.mrb[0].mxu0
  %v1992 = vadd.f32 0.0, %v1991
  %v1993 = vpop.f32.mrb[0].mxu0
  %v1994 = vadd.f32 0.0, %v1993
  %1995 = vmatprep.mubr.f32.mxu0 0.0
  %1996 = vmatmul.mubr.f32.gmra.mrb[0].mxu0 %v727
  %v1997 = vpop.f32.mrb[0].mxu0
  %v1998 = vadd.f32 0.0, %v1997
  %v1999 = vpop.f32.mrb[0].mxu0
  %v2000 = vadd.f32 0.0, %v1999
  %2001 = vmatprep.mubr.f32.mxu0 0.0
  %2002 = vmatmul.mubr.f32.gmra.mrb[0].mxu0 %v730
  %v2003 = vpop.f32.mrb[0].mxu0
  %v2004 = vadd.f32 0.0, %v2003
  %v2005 = vpop.f32.mrb[0].mxu0
  %v2006 = vadd.f32 0.0, %v2005
  %2007 = vmatprep.mubr.f32.mxu0 0.0
  %2008 = vmatmul.mubr.f32.gmra.mrb[0].mxu0 %v733
  %v2009 = vpop.f32.mrb[0].mxu0
  %v2010 = vadd.f32 0.0, %v2009
  %v2011 = vpop.f32.mrb[0].mxu0
  %v2012 = vadd.f32 0.0, %v2011
  %2013 = vmatprep.mubr.f32.mxu0 0.0
  %2014 = vmatmul.mubr.f32.gmra.mrb[0].mxu0 %v736
  %v2015 = vpop.f32.mrb[0].mxu0
  %v2016 = vadd.f32 0.0, %v2015
  %v2017 = vpop.f32.mrb[0].mxu0
  %v2018 = vadd.f32 0.0, %v2017
  %2019 = vmatprep.mubr.f32.mxu0 0.0
  %2020 = vmatmul.mubr.f32.gmra.mrb[0].mxu0 %v739
  %v2021 = vpop.f32.mrb[0].mxu0
  %v2022 = vadd.f32 0.0, %v2021
  %v2023 = vpop.f32.mrb[0].mxu0
  %v2024 = vadd.f32 0.0, %v2023
  %2025 = vmatprep.mubr.f32.mxu0 0.0
  %2026 = vmatmul.mubr.f32.gmra.mrb[0].mxu0 %v742
  %v2027 = vpop.f32.mrb[0].mxu0
  %v2028 = vadd.f32 0.0, %v2027
  %v2029 = vpop.f32.mrb[0].mxu0
  %v2030 = vadd.f32 0.0, %v2029
  %2031 = vmatprep.mubr.f32.mxu0 0.0
  %2032 = vmatmul.mubr.f32.gmra.mrb[0].mxu0 %v745
  %v2033 = vpop.f32.mrb[0].mxu0
  %v2034 = vadd.f32 0.0, %v2033
  %v2035 = vpop.f32.mrb[0].mxu0
  %v2036 = vadd.f32 0.0, %v2035
  %2037 = vmatprep.mubr.f32.mxu0 0.0
  %2038 = vmatmul.mubr.f32.gmra.mrb[0].mxu0 %v748
  %v2039 = vpop.f32.mrb[0].mxu0
  %v2040 = vadd.f32 0.0, %v2039
  %v2041 = vpop.f32.mrb[0].mxu0
  %v2042 = vadd.f32 0.0, %v2041
  %2043 = vmatprep.mubr.f32.mxu0 0.0
  %2044 = vmatmul.mubr.f32.gmra.mrb[0].mxu0 %v751
  %v2045 = vpop.f32.mrb[0].mxu0
  %v2046 = vadd.f32 0.0, %v2045
  %v2047 = vpop.f32.mrb[0].mxu0
  %v2048 = vadd.f32 0.0, %v2047
  %2049 = vmatprep.mubr.f32.mxu0 0.0
  %2050 = vmatmul.mubr.f32.gmra.mrb[0].mxu0 %v754
  %v2051 = vpop.f32.mrb[0].mxu0
  %v2052 = vadd.f32 0.0, %v2051
  %v2053 = vpop.f32.mrb[0].mxu0
  %v2054 = vadd.f32 0.0, %v2053
  %2055 = vmatprep.mubr.f32.mxu0 0.0
  %2056 = vmatmul.mubr.f32.gmra.mrb[0].mxu0 %v757
  %v2057 = vpop.f32.mrb[0].mxu0
  %v2058 = vadd.f32 0.0, %v2057
  %v2059 = vpop.f32.mrb[0].mxu0
  %v2060 = vadd.f32 0.0, %v2059
  %2061 = vmatprep.mubr.f32.mxu0 0.0
  %2062 = vmatmul.mubr.f32.gmra.mrb[0].mxu0 %v760
  %v2063 = vpop.f32.mrb[0].mxu0
  %v2064 = vadd.f32 0.0, %v2063
  %v2065 = vpop.f32.mrb[0].mxu0
  %v2066 = vadd.f32 0.0, %v2065
  %2067 = vmatprep.mubr.f32.mxu0 0.0
  %2068 = vmatmul.mubr.f32.gmra.mrb[0].mxu0 %v763
  %v2069 = vpop.f32.mrb[0].mxu0
  %v2070 = vadd.f32 0.0, %v2069
  %v2071 = vpop.f32.mrb[0].mxu0
  %v2072 = vadd.f32 0.0, %v2071
  %2073 = vmatprep.mubr.f32.mxu0 0.0
  %2074 = vmatmul.mubr.f32.gmra.mrb[0].mxu0 %v766
  %v2075 = vpop.f32.mrb[0].mxu0
  %v2076 = vadd.f32 0.0, %v2075
  %v2077 = vpop.f32.mrb[0].mxu0
  %v2078 = vadd.f32 0.0, %v2077
  %2079 = vmatprep.mubr.f32.mxu0 0.0
  %2080 = vmatmul.mubr.f32.gmra.mrb[0].mxu0 %v769
  %v2081 = vpop.f32.mrb[0].mxu0
  %v2082 = vadd.f32 0.0, %v2081
  %v2083 = vpop.f32.mrb[0].mxu0
  %v2084 = vadd.f32 0.0, %v2083
  %2085 = vmatprep.mubr.f32.mxu0 0.0
  %2086 = vmatmul.mubr.f32.gmra.mrb[0].mxu0 %v772
  %v2087 = vpop.f32.mrb[0].mxu0
  %v2088 = vadd.f32 0.0, %v2087
  %v2089 = vpop.f32.mrb[0].mxu0
  %v2090 = vadd.f32 0.0, %v2089
  %2091 = vmatprep.mubr.f32.mxu0 0.0
  %2092 = vmatmul.mubr.f32.gmra.mrb[0].mxu0 %v775
  %v2093 = vpop.f32.mrb[0].mxu0
  %v2094 = vadd.f32 0.0, %v2093
  %v2095 = vpop.f32.mrb[0].mxu0
  %v2096 = vadd.f32 0.0, %v2095
  %2097 = vmatprep.mubr.f32.mxu0 0.0
  %2098 = vmatmul.mubr.f32.gmra.mrb[0].mxu0 %v778
  %v2099 = vpop.f32.mrb[0].mxu0
  %v2100 = vadd.f32 0.0, %v2099
  %v2101 = vpop.f32.mrb[0].mxu0
  %v2102 = vadd.f32 0.0, %v2101
  %2103 = vmatprep.mubr.f32.mxu0 0.0
  %2104 = vmatmul.mubr.f32.gmra.mrb[0].mxu0 %v781
  %v2105 = vpop.f32.mrb[0].mxu0
  %v2106 = vadd.f32 0.0, %v2105
  %v2107 = vpop.f32.mrb[0].mxu0
  %v2108 = vadd.f32 0.0, %v2107
  %2109 = vmatprep.mubr.f32.mxu0 0.0
  %2110 = vmatmul.mubr.f32.gmra.mrb[0].mxu0 %v784
  %v2111 = vpop.f32.mrb[0].mxu0
  %v2112 = vadd.f32 0.0, %v2111
  %v2113 = vpop.f32.mrb[0].mxu0
  %v2114 = vadd.f32 0.0, %v2113
  %2115 = vmatprep.mubr.f32.mxu0 0.0
  %2116 = vmatmul.mubr.f32.gmra.mrb[0].mxu0 %v787
  %v2117 = vpop.f32.mrb[0].mxu0
  %v2118 = vadd.f32 0.0, %v2117
  %v2119 = vpop.f32.mrb[0].mxu0
  %v2120 = vadd.f32 0.0, %v2119
  %2121 = vmatprep.mubr.f32.mxu0 0.0
  %2122 = vmatmul.mubr.f32.gmra.mrb[0].mxu0 %v790
  %v2123 = vpop.f32.mrb[0].mxu0
  %v2124 = vadd.f32 0.0, %v2123
  %v2125 = vpop.f32.mrb[0].mxu0
  %v2126 = vadd.f32 0.0, %v2125
  %2127 = vdwg.mxu0
  %2128 = vmatprep.subr.mxu0 %v69
  %2129 = vmatpush1.msra.mxu0 %v68
  %2130 = vmatprep.subr.mxu0 %v71
  %2131 = vmatpush1.msra.mxu0 %v70
  %2132 = vmatprep.subr.mxu0 %v73
  %2133 = vmatpush1.msra.mxu0 %v72
  %2134 = vmatprep.subr.mxu0 %v475
  %2135 = vmatpush1.msra.mxu0 %v472
  %2136 = vmatprep.subr.mxu0 0.0
  %2137 = vmatpush1.msra.mxu0 0.0
  %2138 = vmatprep.subr.mxu0 0.0
  %2139 = vmatpush1.msra.mxu0 0.0
  %2140 = vmatprep.subr.mxu0 0.0
  %2141 = vmatpush1.msra.mxu0 0.0
  %2142 = vmatprep.subr.mxu0 0.0
  %2143 = vmatpush1.msra.mxu0 0.0
  %2144 = vmatprep.subr.mxu0 0.0
  %2145 = vmatpush1.msra.mxu0 0.0
  %2146 = vmatprep.subr.mxu0 0.0
  %2147 = vmatpush1.msra.mxu0 0.0
  %2148 = vmatprep.subr.mxu0 0.0
  %2149 = vmatpush1.msra.mxu0 0.0
  %2150 = vmatprep.subr.mxu0 0.0
  %2151 = vmatpush1.msra.mxu0 0.0
  %2152 = vmatprep.subr.mxu0 0.0
  %2153 = vmatpush1.msra.mxu0 0.0
  %2154 = vmatprep.subr.mxu0 0.0
  %2155 = vmatpush1.msra.mxu0 0.0
  %2156 = vmatprep.subr.mxu0 0.0
  %2157 = vmatpush1.msra.mxu0 0.0
  %2158 = vmatprep.subr.mxu0 0.0
  %2159 = vmatpush1.msra.mxu0 0.0
  %2160 = vmatprep.subr.mxu0 0.0
  %2161 = vmatpush1.msra.mxu0 0.0
  %2162 = vmatprep.subr.mxu0 0.0
  %2163 = vmatpush1.msra.mxu0 0.0
  %2164 = vmatprep.subr.mxu0 0.0
  %2165 = vmatpush1.msra.mxu0 0.0
  %2166 = vmatprep.subr.mxu0 0.0
  %2167 = vmatpush1.msra.mxu0 0.0
  %2168 = vmatprep.subr.mxu0 0.0
  %2169 = vmatpush1.msra.mxu0 0.0
  %2170 = vmatprep.subr.mxu0 0.0
  %2171 = vmatpush1.msra.mxu0 0.0
  %2172 = vmatprep.subr.mxu0 0.0
  %2173 = vmatpush1.msra.mxu0 0.0
  %2174 = vmatprep.subr.mxu0 0.0
  %2175 = vmatpush1.msra.mxu0 0.0
  %2176 = vmatprep.subr.mxu0 0.0
  %2177 = vmatpush1.msra.mxu0 0.0
  %2178 = vmatprep.subr.mxu0 0.0
  %2179 = vmatpush1.msra.mxu0 0.0
  %2180 = vmatprep.subr.mxu0 0.0
  %2181 = vmatpush1.msra.mxu0 0.0
  %2182 = vmatprep.subr.mxu0 0.0
  %2183 = vmatpush1.msra.mxu0 0.0
  %2184 = vmatprep.subr.mxu0 0.0
  %2185 = vmatpush1.msra.mxu0 0.0
  %2186 = vmatprep.subr.mxu0 0.0
  %2187 = vmatpush1.msra.mxu0 0.0
  %2188 = vmatprep.subr.mxu0 0.0
  %2189 = vmatpush1.msra.mxu0 0.0
  %2190 = vmatprep.subr.mxu0 0.0
  %2191 = vmatpush1.msra.mxu0 0.0
  %2192 = vmatprep.mubr.f32.mxu0 0.0
  %2193 = vmatmul.mubr.f32.gmra.mrb[0].mxu0 %v112
  %v2194 = vpop.f32.mrb[0].mxu0
  %v2195 = vadd.f32 %v1986, %v2194
  %v2196 = vpop.f32.mrb[0].mxu0
  %v2197 = vadd.f32 %v1988, %v2196
  %2198 = vmatprep.mubr.f32.mxu0 0.0
  %2199 = vmatmul.mubr.f32.gmra.mrb[0].mxu0 %v115
  %v2200 = vpop.f32.mrb[0].mxu0
  %v2201 = vadd.f32 %v1992, %v2200
  %v2202 = vpop.f32.mrb[0].mxu0
  %v2203 = vadd.f32 %v1994, %v2202
  %2204 = vmatprep.mubr.f32.mxu0 0.0
  %2205 = vmatmul.mubr.f32.gmra.mrb[0].mxu0 %v118
  %v2206 = vpop.f32.mrb[0].mxu0
  %v2207 = vadd.f32 %v1998, %v2206
  %v2208 = vpop.f32.mrb[0].mxu0
  %v2209 = vadd.f32 %v2000, %v2208
  %2210 = vmatprep.mubr.f32.mxu0 0.0
  %2211 = vmatmul.mubr.f32.gmra.mrb[0].mxu0 %v121
  %v2212 = vpop.f32.mrb[0].mxu0
  %v2213 = vadd.f32 %v2004, %v2212
  %v2214 = vpop.f32.mrb[0].mxu0
  %v2215 = vadd.f32 %v2006, %v2214
  %2216 = vmatprep.mubr.f32.mxu0 0.0
  %2217 = vmatmul.mubr.f32.gmra.mrb[0].mxu0 %v124
  %v2218 = vpop.f32.mrb[0].mxu0
  %v2219 = vadd.f32 %v2010, %v2218
  %v2220 = vpop.f32.mrb[0].mxu0
  %v2221 = vadd.f32 %v2012, %v2220
  %2222 = vmatprep.mubr.f32.mxu0 0.0
  %2223 = vmatmul.mubr.f32.gmra.mrb[0].mxu0 %v127
  %v2224 = vpop.f32.mrb[0].mxu0
  %v2225 = vadd.f32 %v2016, %v2224
  %v2226 = vpop.f32.mrb[0].mxu0
  %v2227 = vadd.f32 %v2018, %v2226
  %2228 = vmatprep.mubr.f32.mxu0 0.0
  %2229 = vmatmul.mubr.f32.gmra.mrb[0].mxu0 %v130
  %v2230 = vpop.f32.mrb[0].mxu0
  %v2231 = vadd.f32 %v2022, %v2230
  %v2232 = vpop.f32.mrb[0].mxu0
  %v2233 = vadd.f32 %v2024, %v2232
  %2234 = vmatprep.mubr.f32.mxu0 0.0
  %2235 = vmatmul.mubr.f32.gmra.mrb[0].mxu0 %v133
  %v2236 = vpop.f32.mrb[0].mxu0
  %v2237 = vadd.f32 %v2028, %v2236
  %v2238 = vpop.f32.mrb[0].mxu0
  %v2239 = vadd.f32 %v2030, %v2238
  %2240 = vmatprep.mubr.f32.mxu0 0.0
  %2241 = vmatmul.mubr.f32.gmra.mrb[0].mxu0 %v136
  %v2242 = vpop.f32.mrb[0].mxu0
  %v2243 = vadd.f32 %v2034, %v2242
  %v2244 = vpop.f32.mrb[0].mxu0
  %v2245 = vadd.f32 %v2036, %v2244
  %2246 = vmatprep.mubr.f32.mxu0 0.0
  %2247 = vmatmul.mubr.f32.gmra.mrb[0].mxu0 %v139
  %v2248 = vpop.f32.mrb[0].mxu0
  %v2249 = vadd.f32 %v2040, %v2248
  %v2250 = vpop.f32.mrb[0].mxu0
  %v2251 = vadd.f32 %v2042, %v2250
  %2252 = vmatprep.mubr.f32.mxu0 0.0
  %2253 = vmatmul.mubr.f32.gmra.mrb[0].mxu0 %v142
  %v2254 = vpop.f32.mrb[0].mxu0
  %v2255 = vadd.f32 %v2046, %v2254
  %v2256 = vpop.f32.mrb[0].mxu0
  %v2257 = vadd.f32 %v2048, %v2256
  %2258 = vmatprep.mubr.f32.mxu0 0.0
  %2259 = vmatmul.mubr.f32.gmra.mrb[0].mxu0 %v145
  %v2260 = vpop.f32.mrb[0].mxu0
  %v2261 = vadd.f32 %v2052, %v2260
  %v2262 = vpop.f32.mrb[0].mxu0
  %v2263 = vadd.f32 %v2054, %v2262
  %2264 = vmatprep.mubr.f32.mxu0 0.0
  %2265 = vmatmul.mubr.f32.gmra.mrb[0].mxu0 %v148
  %v2266 = vpop.f32.mrb[0].mxu0
  %v2267 = vadd.f32 %v2058, %v2266
  %v2268 = vpop.f32.mrb[0].mxu0
  %v2269 = vadd.f32 %v2060, %v2268
  %2270 = vmatprep.mubr.f32.mxu0 0.0
  %2271 = vmatmul.mubr.f32.gmra.mrb[0].mxu0 %v151
  %v2272 = vpop.f32.mrb[0].mxu0
  %v2273 = vadd.f32 %v2064, %v2272
  %v2274 = vpop.f32.mrb[0].mxu0
  %v2275 = vadd.f32 %v2066, %v2274
  %2276 = vmatprep.mubr.f32.mxu0 0.0
  %2277 = vmatmul.mubr.f32.gmra.mrb[0].mxu0 %v154
  %v2278 = vpop.f32.mrb[0].mxu0
  %v2279 = vadd.f32 %v2070, %v2278
  %v2280 = vpop.f32.mrb[0].mxu0
  %v2281 = vadd.f32 %v2072, %v2280
  %2282 = vmatprep.mubr.f32.mxu0 0.0
  %2283 = vmatmul.mubr.f32.gmra.mrb[0].mxu0 %v157
  %v2284 = vpop.f32.mrb[0].mxu0
  %v2285 = vadd.f32 %v2076, %v2284
  %v2286 = vpop.f32.mrb[0].mxu0
  %v2287 = vadd.f32 %v2078, %v2286
  %2288 = vmatprep.mubr.f32.mxu0 0.0
  %2289 = vmatmul.mubr.f32.gmra.mrb[0].mxu0 %v160
  %v2290 = vpop.f32.mrb[0].mxu0
  %v2291 = vadd.f32 %v2082, %v2290
  %v2292 = vpop.f32.mrb[0].mxu0
  %v2293 = vadd.f32 %v2084, %v2292
  %2294 = vmatprep.mubr.f32.mxu0 0.0
  %2295 = vmatmul.mubr.f32.gmra.mrb[0].mxu0 %v163
  %v2296 = vpop.f32.mrb[0].mxu0
  %v2297 = vadd.f32 %v2088, %v2296
  %v2298 = vpop.f32.mrb[0].mxu0
  %v2299 = vadd.f32 %v2090, %v2298
  %2300 = vmatprep.mubr.f32.mxu0 0.0
  %2301 = vmatmul.mubr.f32.gmra.mrb[0].mxu0 %v166
  %v2302 = vpop.f32.mrb[0].mxu0
  %v2303 = vadd.f32 %v2094, %v2302
  %v2304 = vpop.f32.mrb[0].mxu0
  %v2305 = vadd.f32 %v2096, %v2304
  %2306 = vmatprep.mubr.f32.mxu0 0.0
  %2307 = vmatmul.mubr.f32.gmra.mrb[0].mxu0 %v169
  %v2308 = vpop.f32.mrb[0].mxu0
  %v2309 = vadd.f32 %v2100, %v2308
  %v2310 = vpop.f32.mrb[0].mxu0
  %v2311 = vadd.f32 %v2102, %v2310
  %2312 = vmatprep.mubr.f32.mxu0 0.0
  %2313 = vmatmul.mubr.f32.gmra.mrb[0].mxu0 %v172
  %v2314 = vpop.f32.mrb[0].mxu0
  %v2315 = vadd.f32 %v2106, %v2314
  %v2316 = vpop.f32.mrb[0].mxu0
  %v2317 = vadd.f32 %v2108, %v2316
  %2318 = vmatprep.mubr.f32.mxu0 0.0
  %2319 = vmatmul.mubr.f32.gmra.mrb[0].mxu0 %v175
  %v2320 = vpop.f32.mrb[0].mxu0
  %v2321 = vadd.f32 %v2112, %v2320
  %v2322 = vpop.f32.mrb[0].mxu0
  %v2323 = vadd.f32 %v2114, %v2322
  %2324 = vmatprep.mubr.f32.mxu0 0.0
  %2325 = vmatmul.mubr.f32.gmra.mrb[0].mxu0 %v178
  %v2326 = vpop.f32.mrb[0].mxu0
  %v2327 = vadd.f32 %v2118, %v2326
  %v2328 = vpop.f32.mrb[0].mxu0
  %v2329 = vadd.f32 %v2120, %v2328
  %2330 = vmatprep.mubr.f32.mxu0 0.0
  %2331 = vmatmul.mubr.f32.gmra.mrb[0].mxu0 %v181
  %v2332 = vpop.f32.mrb[0].mxu0
  %v2333 = vadd.f32 %v2124, %v2332
  %v2334 = vpop.f32.mrb[0].mxu0
  %v2335 = vadd.f32 %v2126, %v2334
  %2336 = vdwg.mxu0
  %2337 = vmatprep.subr.mxu0 %v713
  %2338 = vmatpush1.msra.mxu0 %v712
  %2339 = vmatprep.subr.mxu0 %v715
  %2340 = vmatpush1.msra.mxu0 %v714
  %2341 = vmatprep.subr.mxu0 %v717
  %2342 = vmatpush1.msra.mxu0 %v716
  %2343 = vmatprep.subr.mxu0 %v796
  %2344 = vmatpush1.msra.mxu0 %v793
  %2345 = vmatprep.subr.mxu0 0.0
  %2346 = vmatpush1.msra.mxu0 0.0
  %2347 = vmatprep.subr.mxu0 0.0
  %2348 = vmatpush1.msra.mxu0 0.0
  %2349 = vmatprep.subr.mxu0 0.0
  %2350 = vmatpush1.msra.mxu0 0.0
  %2351 = vmatprep.subr.mxu0 0.0
  %2352 = vmatpush1.msra.mxu0 0.0
  %2353 = vmatprep.subr.mxu0 0.0
  %2354 = vmatpush1.msra.mxu0 0.0
  %2355 = vmatprep.subr.mxu0 0.0
  %2356 = vmatpush1.msra.mxu0 0.0
  %2357 = vmatprep.subr.mxu0 0.0
  %2358 = vmatpush1.msra.mxu0 0.0
  %2359 = vmatprep.subr.mxu0 0.0
  %2360 = vmatpush1.msra.mxu0 0.0
  %2361 = vmatprep.subr.mxu0 0.0
  %2362 = vmatpush1.msra.mxu0 0.0
  %2363 = vmatprep.subr.mxu0 0.0
  %2364 = vmatpush1.msra.mxu0 0.0
  %2365 = vmatprep.subr.mxu0 0.0
  %2366 = vmatpush1.msra.mxu0 0.0
  %2367 = vmatprep.subr.mxu0 0.0
  %2368 = vmatpush1.msra.mxu0 0.0
  %2369 = vmatprep.subr.mxu0 0.0
  %2370 = vmatpush1.msra.mxu0 0.0
  %2371 = vmatprep.subr.mxu0 0.0
  %2372 = vmatpush1.msra.mxu0 0.0
  %2373 = vmatprep.subr.mxu0 0.0
  %2374 = vmatpush1.msra.mxu0 0.0
  %2375 = vmatprep.subr.mxu0 0.0
  %2376 = vmatpush1.msra.mxu0 0.0
  %2377 = vmatprep.subr.mxu0 0.0
  %2378 = vmatpush1.msra.mxu0 0.0
  %2379 = vmatprep.subr.mxu0 0.0
  %2380 = vmatpush1.msra.mxu0 0.0
  %2381 = vmatprep.subr.mxu0 0.0
  %2382 = vmatpush1.msra.mxu0 0.0
  %2383 = vmatprep.subr.mxu0 0.0
  %2384 = vmatpush1.msra.mxu0 0.0
  %2385 = vmatprep.subr.mxu0 0.0
  %2386 = vmatpush1.msra.mxu0 0.0
  %2387 = vmatprep.subr.mxu0 0.0
  %2388 = vmatpush1.msra.mxu0 0.0
  %2389 = vmatprep.subr.mxu0 0.0
  %2390 = vmatpush1.msra.mxu0 0.0
  %2391 = vmatprep.subr.mxu0 0.0
  %2392 = vmatpush1.msra.mxu0 0.0
  %2393 = vmatprep.subr.mxu0 0.0
  %2394 = vmatpush1.msra.mxu0 0.0
  %2395 = vmatprep.subr.mxu0 0.0
  %2396 = vmatpush1.msra.mxu0 0.0
  %2397 = vmatprep.subr.mxu0 0.0
  %2398 = vmatpush1.msra.mxu0 0.0
  %2399 = vmatprep.subr.mxu0 0.0
  %2400 = vmatpush1.msra.mxu0 0.0
  %2401 = vmatprep.mubr.f32.mxu0 0.0
  %2402 = vmatmul.mubr.f32.gmra.mrb[0].mxu0 %v1090
  %v2403 = vpop.f32.mrb[0].mxu0
  %v2404 = vadd.f32 0.0, %v2403
  %v2405 = vpop.f32.mrb[0].mxu0
  %v2406 = vadd.f32 0.0, %v2405
  %2407 = vmatprep.mubr.f32.mxu0 0.0
  %2408 = vmatmul.mubr.f32.gmra.mrb[0].mxu0 %v1093
  %v2409 = vpop.f32.mrb[0].mxu0
  %v2410 = vadd.f32 0.0, %v2409
  %v2411 = vpop.f32.mrb[0].mxu0
  %v2412 = vadd.f32 0.0, %v2411
  %2413 = vmatprep.mubr.f32.mxu0 0.0
  %2414 = vmatmul.mubr.f32.gmra.mrb[0].mxu0 %v1096
  %v2415 = vpop.f32.mrb[0].mxu0
  %v2416 = vadd.f32 0.0, %v2415
  %v2417 = vpop.f32.mrb[0].mxu0
  %v2418 = vadd.f32 0.0, %v2417
  %2419 = vmatprep.mubr.f32.mxu0 0.0
  %2420 = vmatmul.mubr.f32.gmra.mrb[0].mxu0 %v1099
  %v2421 = vpop.f32.mrb[0].mxu0
  %v2422 = vadd.f32 0.0, %v2421
  %v2423 = vpop.f32.mrb[0].mxu0
  %v2424 = vadd.f32 0.0, %v2423
  %2425 = vmatprep.mubr.f32.mxu0 0.0
  %2426 = vmatmul.mubr.f32.gmra.mrb[0].mxu0 %v1102
  %v2427 = vpop.f32.mrb[0].mxu0
  %v2428 = vadd.f32 0.0, %v2427
  %v2429 = vpop.f32.mrb[0].mxu0
  %v2430 = vadd.f32 0.0, %v2429
  %2431 = vmatprep.mubr.f32.mxu0 0.0
  %2432 = vmatmul.mubr.f32.gmra.mrb[0].mxu0 %v1105
  %v2433 = vpop.f32.mrb[0].mxu0
  %v2434 = vadd.f32 0.0, %v2433
  %v2435 = vpop.f32.mrb[0].mxu0
  %v2436 = vadd.f32 0.0, %v2435
  %2437 = vmatprep.mubr.f32.mxu0 0.0
  %2438 = vmatmul.mubr.f32.gmra.mrb[0].mxu0 %v1108
  %v2439 = vpop.f32.mrb[0].mxu0
  %v2440 = vadd.f32 0.0, %v2439
  %v2441 = vpop.f32.mrb[0].mxu0
  %v2442 = vadd.f32 0.0, %v2441
  %2443 = vmatprep.mubr.f32.mxu0 0.0
  %2444 = vmatmul.mubr.f32.gmra.mrb[0].mxu0 %v1111
  %v2445 = vpop.f32.mrb[0].mxu0
  %v2446 = vadd.f32 0.0, %v2445
  %v2447 = vpop.f32.mrb[0].mxu0
  %v2448 = vadd.f32 0.0, %v2447
  %2449 = vmatprep.mubr.f32.mxu0 0.0
  %2450 = vmatmul.mubr.f32.gmra.mrb[0].mxu0 %v1114
  %v2451 = vpop.f32.mrb[0].mxu0
  %v2452 = vadd.f32 0.0, %v2451
  %v2453 = vpop.f32.mrb[0].mxu0
  %v2454 = vadd.f32 0.0, %v2453
  %2455 = vmatprep.mubr.f32.mxu0 0.0
  %2456 = vmatmul.mubr.f32.gmra.mrb[0].mxu0 %v1117
  %v2457 = vpop.f32.mrb[0].mxu0
  %v2458 = vadd.f32 0.0, %v2457
  %v2459 = vpop.f32.mrb[0].mxu0
  %v2460 = vadd.f32 0.0, %v2459
  %2461 = vmatprep.mubr.f32.mxu0 0.0
  %2462 = vmatmul.mubr.f32.gmra.mrb[0].mxu0 %v1120
  %v2463 = vpop.f32.mrb[0].mxu0
  %v2464 = vadd.f32 0.0, %v2463
  %v2465 = vpop.f32.mrb[0].mxu0
  %v2466 = vadd.f32 0.0, %v2465
  %2467 = vmatprep.mubr.f32.mxu0 0.0
  %2468 = vmatmul.mubr.f32.gmra.mrb[0].mxu0 %v1123
  %v2469 = vpop.f32.mrb[0].mxu0
  %v2470 = vadd.f32 0.0, %v2469
  %v2471 = vpop.f32.mrb[0].mxu0
  %v2472 = vadd.f32 0.0, %v2471
  %2473 = vmatprep.mubr.f32.mxu0 0.0
  %2474 = vmatmul.mubr.f32.gmra.mrb[0].mxu0 %v1126
  %v2475 = vpop.f32.mrb[0].mxu0
  %v2476 = vadd.f32 0.0, %v2475
  %v2477 = vpop.f32.mrb[0].mxu0
  %v2478 = vadd.f32 0.0, %v2477
  %2479 = vmatprep.mubr.f32.mxu0 0.0
  %2480 = vmatmul.mubr.f32.gmra.mrb[0].mxu0 %v1129
  %v2481 = vpop.f32.mrb[0].mxu0
  %v2482 = vadd.f32 0.0, %v2481
  %v2483 = vpop.f32.mrb[0].mxu0
  %v2484 = vadd.f32 0.0, %v2483
  %2485 = vmatprep.mubr.f32.mxu0 0.0
  %2486 = vmatmul.mubr.f32.gmra.mrb[0].mxu0 %v1132
  %v2487 = vpop.f32.mrb[0].mxu0
  %v2488 = vadd.f32 0.0, %v2487
  %v2489 = vpop.f32.mrb[0].mxu0
  %v2490 = vadd.f32 0.0, %v2489
  %2491 = vmatprep.mubr.f32.mxu0 0.0
  %2492 = vmatmul.mubr.f32.gmra.mrb[0].mxu0 %v1135
  %v2493 = vpop.f32.mrb[0].mxu0
  %v2494 = vadd.f32 0.0, %v2493
  %v2495 = vpop.f32.mrb[0].mxu0
  %v2496 = vadd.f32 0.0, %v2495
  %2497 = vmatprep.mubr.f32.mxu0 0.0
  %2498 = vmatmul.mubr.f32.gmra.mrb[0].mxu0 %v1138
  %v2499 = vpop.f32.mrb[0].mxu0
  %v2500 = vadd.f32 0.0, %v2499
  %v2501 = vpop.f32.mrb[0].mxu0
  %v2502 = vadd.f32 0.0, %v2501
  %2503 = vmatprep.mubr.f32.mxu0 0.0
  %2504 = vmatmul.mubr.f32.gmra.mrb[0].mxu0 %v1141
  %v2505 = vpop.f32.mrb[0].mxu0
  %v2506 = vadd.f32 0.0, %v2505
  %v2507 = vpop.f32.mrb[0].mxu0
  %v2508 = vadd.f32 0.0, %v2507
  %2509 = vmatprep.mubr.f32.mxu0 0.0
  %2510 = vmatmul.mubr.f32.gmra.mrb[0].mxu0 %v1144
  %v2511 = vpop.f32.mrb[0].mxu0
  %v2512 = vadd.f32 0.0, %v2511
  %v2513 = vpop.f32.mrb[0].mxu0
  %v2514 = vadd.f32 0.0, %v2513
  %2515 = vmatprep.mubr.f32.mxu0 0.0
  %2516 = vmatmul.mubr.f32.gmra.mrb[0].mxu0 %v1147
  %v2517 = vpop.f32.mrb[0].mxu0
  %v2518 = vadd.f32 0.0, %v2517
  %v2519 = vpop.f32.mrb[0].mxu0
  %v2520 = vadd.f32 0.0, %v2519
  %2521 = vmatprep.mubr.f32.mxu0 0.0
  %2522 = vmatmul.mubr.f32.gmra.mrb[0].mxu0 %v1150
  %v2523 = vpop.f32.mrb[0].mxu0
  %v2524 = vadd.f32 0.0, %v2523
  %v2525 = vpop.f32.mrb[0].mxu0
  %v2526 = vadd.f32 0.0, %v2525
  %2527 = vmatprep.mubr.f32.mxu0 0.0
  %2528 = vmatmul.mubr.f32.gmra.mrb[0].mxu0 %v1153
  %v2529 = vpop.f32.mrb[0].mxu0
  %v2530 = vadd.f32 0.0, %v2529
  %v2531 = vpop.f32.mrb[0].mxu0
  %v2532 = vadd.f32 0.0, %v2531
  %2533 = vmatprep.mubr.f32.mxu0 0.0
  %2534 = vmatmul.mubr.f32.gmra.mrb[0].mxu0 %v1156
  %v2535 = vpop.f32.mrb[0].mxu0
  %v2536 = vadd.f32 0.0, %v2535
  %v2537 = vpop.f32.mrb[0].mxu0
  %v2538 = vadd.f32 0.0, %v2537
  %2539 = vmatprep.mubr.f32.mxu0 0.0
  %2540 = vmatmul.mubr.f32.gmra.mrb[0].mxu0 %v1159
  %v2541 = vpop.f32.mrb[0].mxu0
  %v2542 = vadd.f32 0.0, %v2541
  %v2543 = vpop.f32.mrb[0].mxu0
  %v2544 = vadd.f32 0.0, %v2543
  %2545 = vdwg.mxu0
  %v2546 = vadd.f32 %v2195, %v2404
  %v2547 = vadd.f32 %v2197, %v2406
  %v2548 = vadd.f32 %v2201, %v2410
  %v2549 = vadd.f32 %v2203, %v2412
  %v2550 = vadd.f32 %v2207, %v2416
  %v2551 = vadd.f32 %v2209, %v2418
  %v2552 = vadd.f32 %v2213, %v2422
  %v2553 = vadd.f32 %v2215, %v2424
  %v2554 = vadd.f32 %v2219, %v2428
  %v2555 = vadd.f32 %v2221, %v2430
  %v2556 = vadd.f32 %v2225, %v2434
  %v2557 = vadd.f32 %v2227, %v2436
  %v2558 = vadd.f32 %v2231, %v2440
  %v2559 = vadd.f32 %v2233, %v2442
  %v2560 = vadd.f32 %v2237, %v2446
  %v2561 = vadd.f32 %v2239, %v2448
  %v2562 = vadd.f32 %v2243, %v2452
  %v2563 = vadd.f32 %v2245, %v2454
  %v2564 = vadd.f32 %v2249, %v2458
  %v2565 = vadd.f32 %v2251, %v2460
  %v2566 = vadd.f32 %v2255, %v2464
  %v2567 = vadd.f32 %v2257, %v2466
  %v2568 = vadd.f32 %v2261, %v2470
  %v2569 = vadd.f32 %v2263, %v2472
  %v2570 = vadd.f32 %v2267, %v2476
  %v2571 = vadd.f32 %v2269, %v2478
  %v2572 = vadd.f32 %v2273, %v2482
  %v2573 = vadd.f32 %v2275, %v2484
  %v2574 = vadd.f32 %v2279, %v2488
  %v2575 = vadd.f32 %v2281, %v2490
  %v2576 = vadd.f32 %v2285, %v2494
  %v2577 = vadd.f32 %v2287, %v2496
  %v2578 = vadd.f32 %v2291, %v2500
  %v2579 = vadd.f32 %v2293, %v2502
  %v2580 = vadd.f32 %v2297, %v2506
  %v2581 = vadd.f32 %v2299, %v2508
  %v2582 = vadd.f32 %v2303, %v2512
  %v2583 = vadd.f32 %v2305, %v2514
  %v2584 = vadd.f32 %v2309, %v2518
  %v2585 = vadd.f32 %v2311, %v2520
  %v2586 = vadd.f32 %v2315, %v2524
  %v2587 = vadd.f32 %v2317, %v2526
  %v2588 = vadd.f32 %v2321, %v2530
  %v2589 = vadd.f32 %v2323, %v2532
  %v2590 = vadd.f32 %v2327, %v2536
  %v2591 = vadd.f32 %v2329, %v2538
  %v2592 = vadd.f32 %v2333, %v2542
  %v2593 = vadd.f32 %v2335, %v2544
  %2594 = vmatprep.subr.mxu0 %v1082
  %2595 = vmatpush1.msra.mxu0 %v1081
  %2596 = vmatprep.subr.mxu0 %v1084
  %2597 = vmatpush1.msra.mxu0 %v1083
  %2598 = vmatprep.subr.mxu0 %v1086
  %2599 = vmatpush1.msra.mxu0 %v1085
  %2600 = vmatprep.subr.mxu0 %v1165
  %2601 = vmatpush1.msra.mxu0 %v1162
  %2602 = vmatprep.subr.mxu0 0.0
  %2603 = vmatpush1.msra.mxu0 0.0
  %2604 = vmatprep.subr.mxu0 0.0
  %2605 = vmatpush1.msra.mxu0 0.0
  %2606 = vmatprep.subr.mxu0 0.0
  %2607 = vmatpush1.msra.mxu0 0.0
  %2608 = vmatprep.subr.mxu0 0.0
  %2609 = vmatpush1.msra.mxu0 0.0
  %2610 = vmatprep.subr.mxu0 0.0
  %2611 = vmatpush1.msra.mxu0 0.0
  %2612 = vmatprep.subr.mxu0 0.0
  %2613 = vmatpush1.msra.mxu0 0.0
  %2614 = vmatprep.subr.mxu0 0.0
  %2615 = vmatpush1.msra.mxu0 0.0
  %2616 = vmatprep.subr.mxu0 0.0
  %2617 = vmatpush1.msra.mxu0 0.0
  %2618 = vmatprep.subr.mxu0 0.0
  %2619 = vmatpush1.msra.mxu0 0.0
  %2620 = vmatprep.subr.mxu0 0.0
  %2621 = vmatpush1.msra.mxu0 0.0
  %2622 = vmatprep.subr.mxu0 0.0
  %2623 = vmatpush1.msra.mxu0 0.0
  %2624 = vmatprep.subr.mxu0 0.0
  %2625 = vmatpush1.msra.mxu0 0.0
  %2626 = vmatprep.subr.mxu0 0.0
  %2627 = vmatpush1.msra.mxu0 0.0
  %2628 = vmatprep.subr.mxu0 0.0
  %2629 = vmatpush1.msra.mxu0 0.0
  %2630 = vmatprep.subr.mxu0 0.0
  %2631 = vmatpush1.msra.mxu0 0.0
  %2632 = vmatprep.subr.mxu0 0.0
  %2633 = vmatpush1.msra.mxu0 0.0
  %2634 = vmatprep.subr.mxu0 0.0
  %2635 = vmatpush1.msra.mxu0 0.0
  %2636 = vmatprep.subr.mxu0 0.0
  %2637 = vmatpush1.msra.mxu0 0.0
  %2638 = vmatprep.subr.mxu0 0.0
  %2639 = vmatpush1.msra.mxu0 0.0
  %2640 = vmatprep.subr.mxu0 0.0
  %2641 = vmatpush1.msra.mxu0 0.0
  %2642 = vmatprep.subr.mxu0 0.0
  %2643 = vmatpush1.msra.mxu0 0.0
  %2644 = vmatprep.subr.mxu0 0.0
  %2645 = vmatpush1.msra.mxu0 0.0
  %2646 = vmatprep.subr.mxu0 0.0
  %2647 = vmatpush1.msra.mxu0 0.0
  %2648 = vmatprep.subr.mxu0 0.0
  %2649 = vmatpush1.msra.mxu0 0.0
  %2650 = vmatprep.subr.mxu0 0.0
  %2651 = vmatpush1.msra.mxu0 0.0
  %2652 = vmatprep.subr.mxu0 0.0
  %2653 = vmatpush1.msra.mxu0 0.0
  %2654 = vmatprep.subr.mxu0 0.0
  %2655 = vmatpush1.msra.mxu0 0.0
  %2656 = vmatprep.subr.mxu0 0.0
  %2657 = vmatpush1.msra.mxu0 0.0
  %2658 = vmatprep.mubr.f32.mxu0 0.0
  %2659 = vmatmul.mubr.f32.gmra.mrb[0].mxu0 %v1459
  %v2660 = vpop.f32.mrb[0].mxu0
  %v2661 = vadd.f32 0.0, %v2660
  %v2662 = vpop.f32.mrb[0].mxu0
  %v2663 = vadd.f32 0.0, %v2662
  %2664 = vmatprep.mubr.f32.mxu0 0.0
  %2665 = vmatmul.mubr.f32.gmra.mrb[0].mxu0 %v1462
  %v2666 = vpop.f32.mrb[0].mxu0
  %v2667 = vadd.f32 0.0, %v2666
  %v2668 = vpop.f32.mrb[0].mxu0
  %v2669 = vadd.f32 0.0, %v2668
  %2670 = vmatprep.mubr.f32.mxu0 0.0
  %2671 = vmatmul.mubr.f32.gmra.mrb[0].mxu0 %v1465
  %v2672 = vpop.f32.mrb[0].mxu0
  %v2673 = vadd.f32 0.0, %v2672
  %v2674 = vpop.f32.mrb[0].mxu0
  %v2675 = vadd.f32 0.0, %v2674
  %2676 = vmatprep.mubr.f32.mxu0 0.0
  %2677 = vmatmul.mubr.f32.gmra.mrb[0].mxu0 %v1468
  %v2678 = vpop.f32.mrb[0].mxu0
  %v2679 = vadd.f32 0.0, %v2678
  %v2680 = vpop.f32.mrb[0].mxu0
  %v2681 = vadd.f32 0.0, %v2680
  %2682 = vmatprep.mubr.f32.mxu0 0.0
  %2683 = vmatmul.mubr.f32.gmra.mrb[0].mxu0 %v1471
  %v2684 = vpop.f32.mrb[0].mxu0
  %v2685 = vadd.f32 0.0, %v2684
  %v2686 = vpop.f32.mrb[0].mxu0
  %v2687 = vadd.f32 0.0, %v2686
  %2688 = vmatprep.mubr.f32.mxu0 0.0
  %2689 = vmatmul.mubr.f32.gmra.mrb[0].mxu0 %v1474
  %v2690 = vpop.f32.mrb[0].mxu0
  %v2691 = vadd.f32 0.0, %v2690
  %v2692 = vpop.f32.mrb[0].mxu0
  %v2693 = vadd.f32 0.0, %v2692
  %2694 = vmatprep.mubr.f32.mxu0 0.0
  %2695 = vmatmul.mubr.f32.gmra.mrb[0].mxu0 %v1477
  %v2696 = vpop.f32.mrb[0].mxu0
  %v2697 = vadd.f32 0.0, %v2696
  %v2698 = vpop.f32.mrb[0].mxu0
  %v2699 = vadd.f32 0.0, %v2698
  %2700 = vmatprep.mubr.f32.mxu0 0.0
  %2701 = vmatmul.mubr.f32.gmra.mrb[0].mxu0 %v1480
  %v2702 = vpop.f32.mrb[0].mxu0
  %v2703 = vadd.f32 0.0, %v2702
  %v2704 = vpop.f32.mrb[0].mxu0
  %v2705 = vadd.f32 0.0, %v2704
  %2706 = vmatprep.mubr.f32.mxu0 0.0
  %2707 = vmatmul.mubr.f32.gmra.mrb[0].mxu0 %v1483
  %v2708 = vpop.f32.mrb[0].mxu0
  %v2709 = vadd.f32 0.0, %v2708
  %v2710 = vpop.f32.mrb[0].mxu0
  %v2711 = vadd.f32 0.0, %v2710
  %2712 = vmatprep.mubr.f32.mxu0 0.0
  %2713 = vmatmul.mubr.f32.gmra.mrb[0].mxu0 %v1486
  %v2714 = vpop.f32.mrb[0].mxu0
  %v2715 = vadd.f32 0.0, %v2714
  %v2716 = vpop.f32.mrb[0].mxu0
  %v2717 = vadd.f32 0.0, %v2716
  %2718 = vmatprep.mubr.f32.mxu0 0.0
  %2719 = vmatmul.mubr.f32.gmra.mrb[0].mxu0 %v1489
  %v2720 = vpop.f32.mrb[0].mxu0
  %v2721 = vadd.f32 0.0, %v2720
  %v2722 = vpop.f32.mrb[0].mxu0
  %v2723 = vadd.f32 0.0, %v2722
  %2724 = vmatprep.mubr.f32.mxu0 0.0
  %2725 = vmatmul.mubr.f32.gmra.mrb[0].mxu0 %v1492
  %v2726 = vpop.f32.mrb[0].mxu0
  %v2727 = vadd.f32 0.0, %v2726
  %v2728 = vpop.f32.mrb[0].mxu0
  %v2729 = vadd.f32 0.0, %v2728
  %2730 = vmatprep.mubr.f32.mxu0 0.0
  %2731 = vmatmul.mubr.f32.gmra.mrb[0].mxu0 %v1495
  %v2732 = vpop.f32.mrb[0].mxu0
  %v2733 = vadd.f32 0.0, %v2732
  %v2734 = vpop.f32.mrb[0].mxu0
  %v2735 = vadd.f32 0.0, %v2734
  %2736 = vmatprep.mubr.f32.mxu0 0.0
  %2737 = vmatmul.mubr.f32.gmra.mrb[0].mxu0 %v1498
  %v2738 = vpop.f32.mrb[0].mxu0
  %v2739 = vadd.f32 0.0, %v2738
  %v2740 = vpop.f32.mrb[0].mxu0
  %v2741 = vadd.f32 0.0, %v2740
  %2742 = vmatprep.mubr.f32.mxu0 0.0
  %2743 = vmatmul.mubr.f32.gmra.mrb[0].mxu0 %v1501
  %v2744 = vpop.f32.mrb[0].mxu0
  %v2745 = vadd.f32 0.0, %v2744
  %v2746 = vpop.f32.mrb[0].mxu0
  %v2747 = vadd.f32 0.0, %v2746
  %2748 = vmatprep.mubr.f32.mxu0 0.0
  %2749 = vmatmul.mubr.f32.gmra.mrb[0].mxu0 %v1504
  %v2750 = vpop.f32.mrb[0].mxu0
  %v2751 = vadd.f32 0.0, %v2750
  %v2752 = vpop.f32.mrb[0].mxu0
  %v2753 = vadd.f32 0.0, %v2752
  %2754 = vmatprep.mubr.f32.mxu0 0.0
  %2755 = vmatmul.mubr.f32.gmra.mrb[0].mxu0 %v1507
  %v2756 = vpop.f32.mrb[0].mxu0
  %v2757 = vadd.f32 0.0, %v2756
  %v2758 = vpop.f32.mrb[0].mxu0
  %v2759 = vadd.f32 0.0, %v2758
  %2760 = vmatprep.mubr.f32.mxu0 0.0
  %2761 = vmatmul.mubr.f32.gmra.mrb[0].mxu0 %v1510
  %v2762 = vpop.f32.mrb[0].mxu0
  %v2763 = vadd.f32 0.0, %v2762
  %v2764 = vpop.f32.mrb[0].mxu0
  %v2765 = vadd.f32 0.0, %v2764
  %2766 = vmatprep.mubr.f32.mxu0 0.0
  %2767 = vmatmul.mubr.f32.gmra.mrb[0].mxu0 %v1513
  %v2768 = vpop.f32.mrb[0].mxu0
  %v2769 = vadd.f32 0.0, %v2768
  %v2770 = vpop.f32.mrb[0].mxu0
  %v2771 = vadd.f32 0.0, %v2770
  %2772 = vmatprep.mubr.f32.mxu0 0.0
  %2773 = vmatmul.mubr.f32.gmra.mrb[0].mxu0 %v1516
  %v2774 = vpop.f32.mrb[0].mxu0
  %v2775 = vadd.f32 0.0, %v2774
  %v2776 = vpop.f32.mrb[0].mxu0
  %v2777 = vadd.f32 0.0, %v2776
  %2778 = vmatprep.mubr.f32.mxu0 0.0
  %2779 = vmatmul.mubr.f32.gmra.mrb[0].mxu0 %v1519
  %v2780 = vpop.f32.mrb[0].mxu0
  %v2781 = vadd.f32 0.0, %v2780
  %v2782 = vpop.f32.mrb[0].mxu0
  %v2783 = vadd.f32 0.0, %v2782
  %2784 = vmatprep.mubr.f32.mxu0 0.0
  %2785 = vmatmul.mubr.f32.gmra.mrb[0].mxu0 %v1522
  %v2786 = vpop.f32.mrb[0].mxu0
  %v2787 = vadd.f32 0.0, %v2786
  %v2788 = vpop.f32.mrb[0].mxu0
  %v2789 = vadd.f32 0.0, %v2788
  %2790 = vmatprep.mubr.f32.mxu0 0.0
  %2791 = vmatmul.mubr.f32.gmra.mrb[0].mxu0 %v1525
  %v2792 = vpop.f32.mrb[0].mxu0
  %v2793 = vadd.f32 0.0, %v2792
  %v2794 = vpop.f32.mrb[0].mxu0
  %v2795 = vadd.f32 0.0, %v2794
  %2796 = vmatprep.mubr.f32.mxu0 0.0
  %2797 = vmatmul.mubr.f32.gmra.mrb[0].mxu0 %v1528
  %v2798 = vpop.f32.mrb[0].mxu0
  %v2799 = vadd.f32 0.0, %v2798
  %v2800 = vpop.f32.mrb[0].mxu0
  %v2801 = vadd.f32 0.0, %v2800
  %2802 = vdwg.mxu0
  %v2803 = vadd.f32 %v2546, %v2661
  %v2804 = vadd.f32 %v2547, %v2663
  %v2805 = vadd.f32 %v2548, %v2667
  %v2806 = vadd.f32 %v2549, %v2669
  %v2807 = vadd.f32 %v2550, %v2673
  %v2808 = vadd.f32 %v2551, %v2675
  %v2809 = vadd.f32 %v2552, %v2679
  %v2810 = vadd.f32 %v2553, %v2681
  %v2811 = vadd.f32 %v2554, %v2685
  %v2812 = vadd.f32 %v2555, %v2687
  %v2813 = vadd.f32 %v2556, %v2691
  %v2814 = vadd.f32 %v2557, %v2693
  %v2815 = vadd.f32 %v2558, %v2697
  %v2816 = vadd.f32 %v2559, %v2699
  %v2817 = vadd.f32 %v2560, %v2703
  %v2818 = vadd.f32 %v2561, %v2705
  %v2819 = vadd.f32 %v2562, %v2709
  %v2820 = vadd.f32 %v2563, %v2711
  %v2821 = vadd.f32 %v2564, %v2715
  %v2822 = vadd.f32 %v2565, %v2717
  %v2823 = vadd.f32 %v2566, %v2721
  %v2824 = vadd.f32 %v2567, %v2723
  %v2825 = vadd.f32 %v2568, %v2727
  %v2826 = vadd.f32 %v2569, %v2729
  %v2827 = vadd.f32 %v2570, %v2733
  %v2828 = vadd.f32 %v2571, %v2735
  %v2829 = vadd.f32 %v2572, %v2739
  %v2830 = vadd.f32 %v2573, %v2741
  %v2831 = vadd.f32 %v2574, %v2745
  %v2832 = vadd.f32 %v2575, %v2747
  %v2833 = vadd.f32 %v2576, %v2751
  %v2834 = vadd.f32 %v2577, %v2753
  %v2835 = vadd.f32 %v2578, %v2757
  %v2836 = vadd.f32 %v2579, %v2759
  %v2837 = vadd.f32 %v2580, %v2763
  %v2838 = vadd.f32 %v2581, %v2765
  %v2839 = vadd.f32 %v2582, %v2769
  %v2840 = vadd.f32 %v2583, %v2771
  %v2841 = vadd.f32 %v2584, %v2775
  %v2842 = vadd.f32 %v2585, %v2777
  %v2843 = vadd.f32 %v2586, %v2781
  %v2844 = vadd.f32 %v2587, %v2783
  %v2845 = vadd.f32 %v2588, %v2787
  %v2846 = vadd.f32 %v2589, %v2789
  %v2847 = vadd.f32 %v2590, %v2793
  %v2848 = vadd.f32 %v2591, %v2795
  %v2849 = vadd.f32 %v2592, %v2799
  %v2850 = vadd.f32 %v2593, %v2801
  %s2851 = scalar_lea.vmem %s0, 256
  %v2852 = vld [vmem:[%s2851] sm:$0xff]
  %v2853 = vld [vmem:[%s2851 + $0x8] sm:$0xff]
  %v2854 = vld [vmem:[%s2851 + $0x10] sm:$0xff]
  %v2855 = vld [vmem:[%s2851 + $0x18] sm:$0xff]
  %v2856 = vld [vmem:[%s2851 + $0x20] sm:$0xff]
  %v2857 = vld [vmem:[%s2851 + $0x28] sm:$0xff]
  %v2858 = vld [vmem:[%s2851 + $0x30] sm:$0xff]
  %v2859 = vld [vmem:[%s2851 + $0x38] sm:$0xff]
  %v2860 = vld [vmem:[%s2851 + $0x40] sm:$0xff]
  %v2861 = vld [vmem:[%s2851 + $0x48] sm:$0xff]
  %v2862 = vld [vmem:[%s2851 + $0x50] sm:$0xff]
  %v2863 = vld [vmem:[%s2851 + $0x58] sm:$0xff]
  %v2864 = vld [vmem:[%s2851 + $0x60] sm:$0xff]
  %v2865 = vld [vmem:[%s2851 + $0x68] sm:$0xff]
  %v2866 = vld [vmem:[%s2851 + $0x70] sm:$0xff]
  %v2867 = vld [vmem:[%s2851 + $0x78] sm:$0xff]
  %v2868 = vld [vmem:[%s2851 + $0x80] sm:$0xff]
  %v2869 = vld [vmem:[%s2851 + $0x88] sm:$0xff]
  %v2870 = vld [vmem:[%s2851 + $0x90] sm:$0xff]
  %v2871 = vld [vmem:[%s2851 + $0x98] sm:$0xff]
  %v2872 = vld [vmem:[%s2851 + $0xa0] sm:$0xff]
  %v2873 = vld [vmem:[%s2851 + $0xa8] sm:$0xff]
  %v2874 = vld [vmem:[%s2851 + $0xb0] sm:$0xff]
  %v2875 = vld [vmem:[%s2851 + $0xb8] sm:$0xff]
  %v2877 = vsel %vm110, %v2852, 0
  %v2880 = vsel %vm110, %v2853, 0
  %v2883 = vsel %vm110, %v2854, 0
  %v2886 = vsel %vm110, %v2855, 0
  %v2889 = vsel %vm110, %v2856, 0
  %v2892 = vsel %vm110, %v2857, 0
  %v2895 = vsel %vm110, %v2858, 0
  %v2898 = vsel %vm110, %v2859, 0
  %v2901 = vsel %vm110, %v2860, 0
  %v2904 = vsel %vm110, %v2861, 0
  %v2907 = vsel %vm110, %v2862, 0
  %v2910 = vsel %vm110, %v2863, 0
  %v2913 = vsel %vm110, %v2864, 0
  %v2916 = vsel %vm110, %v2865, 0
  %v2919 = vsel %vm110, %v2866, 0
  %v2922 = vsel %vm110, %v2867, 0
  %v2925 = vsel %vm110, %v2868, 0
  %v2928 = vsel %vm110, %v2869, 0
  %v2931 = vsel %vm110, %v2870, 0
  %v2934 = vsel %vm110, %v2871, 0
  %v2937 = vsel %vm110, %v2872, 0
  %v2940 = vsel %vm110, %v2873, 0
  %v2943 = vsel %vm110, %v2874, 0
  %v2946 = vsel %vm110, %v2875, 0
  %2948 = vmatprep.subr.mxu0 %v1451
  %2949 = vmatpush1.msra.mxu0 %v1450
  %2950 = vmatprep.subr.mxu0 %v1453
  %2951 = vmatpush1.msra.mxu0 %v1452
  %2952 = vmatprep.subr.mxu0 %v1455
  %2953 = vmatpush1.msra.mxu0 %v1454
  %2954 = vmatprep.subr.mxu0 %v1534
  %2955 = vmatpush1.msra.mxu0 %v1531
  %2956 = vmatprep.subr.mxu0 0.0
  %2957 = vmatpush1.msra.mxu0 0.0
  %2958 = vmatprep.subr.mxu0 0.0
  %2959 = vmatpush1.msra.mxu0 0.0
  %2960 = vmatprep.subr.mxu0 0.0
  %2961 = vmatpush1.msra.mxu0 0.0
  %2962 = vmatprep.subr.mxu0 0.0
  %2963 = vmatpush1.msra.mxu0 0.0
  %2964 = vmatprep.subr.mxu0 0.0
  %2965 = vmatpush1.msra.mxu0 0.0
  %2966 = vmatprep.subr.mxu0 0.0
  %2967 = vmatpush1.msra.mxu0 0.0
  %2968 = vmatprep.subr.mxu0 0.0
  %2969 = vmatpush1.msra.mxu0 0.0
  %2970 = vmatprep.subr.mxu0 0.0
  %2971 = vmatpush1.msra.mxu0 0.0
  %2972 = vmatprep.subr.mxu0 0.0
  %2973 = vmatpush1.msra.mxu0 0.0
  %2974 = vmatprep.subr.mxu0 0.0
  %2975 = vmatpush1.msra.mxu0 0.0
  %2976 = vmatprep.subr.mxu0 0.0
  %2977 = vmatpush1.msra.mxu0 0.0
  %2978 = vmatprep.subr.mxu0 0.0
  %2979 = vmatpush1.msra.mxu0 0.0
  %2980 = vmatprep.subr.mxu0 0.0
  %2981 = vmatpush1.msra.mxu0 0.0
  %2982 = vmatprep.subr.mxu0 0.0
  %2983 = vmatpush1.msra.mxu0 0.0
  %2984 = vmatprep.subr.mxu0 0.0
  %2985 = vmatpush1.msra.mxu0 0.0
  %2986 = vmatprep.subr.mxu0 0.0
  %2987 = vmatpush1.msra.mxu0 0.0
  %2988 = vmatprep.subr.mxu0 0.0
  %2989 = vmatpush1.msra.mxu0 0.0
  %2990 = vmatprep.subr.mxu0 0.0
  %2991 = vmatpush1.msra.mxu0 0.0
  %2992 = vmatprep.subr.mxu0 0.0
  %2993 = vmatpush1.msra.mxu0 0.0
  %2994 = vmatprep.subr.mxu0 0.0
  %2995 = vmatpush1.msra.mxu0 0.0
  %2996 = vmatprep.subr.mxu0 0.0
  %2997 = vmatpush1.msra.mxu0 0.0
  %2998 = vmatprep.subr.mxu0 0.0
  %2999 = vmatpush1.msra.mxu0 0.0
  %3000 = vmatprep.subr.mxu0 0.0
  %3001 = vmatpush1.msra.mxu0 0.0
  %3002 = vmatprep.subr.mxu0 0.0
  %3003 = vmatpush1.msra.mxu0 0.0
  %3004 = vmatprep.subr.mxu0 0.0
  %3005 = vmatpush1.msra.mxu0 0.0
  %3006 = vmatprep.subr.mxu0 0.0
  %3007 = vmatpush1.msra.mxu0 0.0
  %3008 = vmatprep.subr.mxu0 0.0
  %3009 = vmatpush1.msra.mxu0 0.0
  %3010 = vmatprep.subr.mxu0 0.0
  %3011 = vmatpush1.msra.mxu0 0.0
  %3012 = vmatprep.mubr.f32.mxu0 0.0
  %3013 = vmatmul.mubr.f32.gmra.mrb[0].mxu0 %v2877
  %v3014 = vpop.f32.mrb[0].mxu0
  %v3015 = vadd.f32 0.0, %v3014
  %v3016 = vpop.f32.mrb[0].mxu0
  %v3017 = vadd.f32 0.0, %v3016
  %3018 = vmatprep.mubr.f32.mxu0 0.0
  %3019 = vmatmul.mubr.f32.gmra.mrb[0].mxu0 %v2880
  %v3020 = vpop.f32.mrb[0].mxu0
  %v3021 = vadd.f32 0.0, %v3020
  %v3022 = vpop.f32.mrb[0].mxu0
  %v3023 = vadd.f32 0.0, %v3022
  %3024 = vmatprep.mubr.f32.mxu0 0.0
  %3025 = vmatmul.mubr.f32.gmra.mrb[0].mxu0 %v2883
  %v3026 = vpop.f32.mrb[0].mxu0
  %v3027 = vadd.f32 0.0, %v3026
  %v3028 = vpop.f32.mrb[0].mxu0
  %v3029 = vadd.f32 0.0, %v3028
  %3030 = vmatprep.mubr.f32.mxu0 0.0
  %3031 = vmatmul.mubr.f32.gmra.mrb[0].mxu0 %v2886
  %v3032 = vpop.f32.mrb[0].mxu0
  %v3033 = vadd.f32 0.0, %v3032
  %v3034 = vpop.f32.mrb[0].mxu0
  %v3035 = vadd.f32 0.0, %v3034
  %3036 = vmatprep.mubr.f32.mxu0 0.0
  %3037 = vmatmul.mubr.f32.gmra.mrb[0].mxu0 %v2889
  %v3038 = vpop.f32.mrb[0].mxu0
  %v3039 = vadd.f32 0.0, %v3038
  %v3040 = vpop.f32.mrb[0].mxu0
  %v3041 = vadd.f32 0.0, %v3040
  %3042 = vmatprep.mubr.f32.mxu0 0.0
  %3043 = vmatmul.mubr.f32.gmra.mrb[0].mxu0 %v2892
  %v3044 = vpop.f32.mrb[0].mxu0
  %v3045 = vadd.f32 0.0, %v3044
  %v3046 = vpop.f32.mrb[0].mxu0
  %v3047 = vadd.f32 0.0, %v3046
  %3048 = vmatprep.mubr.f32.mxu0 0.0
  %3049 = vmatmul.mubr.f32.gmra.mrb[0].mxu0 %v2895
  %v3050 = vpop.f32.mrb[0].mxu0
  %v3051 = vadd.f32 0.0, %v3050
  %v3052 = vpop.f32.mrb[0].mxu0
  %v3053 = vadd.f32 0.0, %v3052
  %3054 = vmatprep.mubr.f32.mxu0 0.0
  %3055 = vmatmul.mubr.f32.gmra.mrb[0].mxu0 %v2898
  %v3056 = vpop.f32.mrb[0].mxu0
  %v3057 = vadd.f32 0.0, %v3056
  %v3058 = vpop.f32.mrb[0].mxu0
  %v3059 = vadd.f32 0.0, %v3058
  %3060 = vmatprep.mubr.f32.mxu0 0.0
  %3061 = vmatmul.mubr.f32.gmra.mrb[0].mxu0 %v2901
  %v3062 = vpop.f32.mrb[0].mxu0
  %v3063 = vadd.f32 0.0, %v3062
  %v3064 = vpop.f32.mrb[0].mxu0
  %v3065 = vadd.f32 0.0, %v3064
  %3066 = vmatprep.mubr.f32.mxu0 0.0
  %3067 = vmatmul.mubr.f32.gmra.mrb[0].mxu0 %v2904
  %v3068 = vpop.f32.mrb[0].mxu0
  %v3069 = vadd.f32 0.0, %v3068
  %v3070 = vpop.f32.mrb[0].mxu0
  %v3071 = vadd.f32 0.0, %v3070
  %3072 = vmatprep.mubr.f32.mxu0 0.0
  %3073 = vmatmul.mubr.f32.gmra.mrb[0].mxu0 %v2907
  %v3074 = vpop.f32.mrb[0].mxu0
  %v3075 = vadd.f32 0.0, %v3074
  %v3076 = vpop.f32.mrb[0].mxu0
  %v3077 = vadd.f32 0.0, %v3076
  %3078 = vmatprep.mubr.f32.mxu0 0.0
  %3079 = vmatmul.mubr.f32.gmra.mrb[0].mxu0 %v2910
  %v3080 = vpop.f32.mrb[0].mxu0
  %v3081 = vadd.f32 0.0, %v3080
  %v3082 = vpop.f32.mrb[0].mxu0
  %v3083 = vadd.f32 0.0, %v3082
  %3084 = vmatprep.mubr.f32.mxu0 0.0
  %3085 = vmatmul.mubr.f32.gmra.mrb[0].mxu0 %v2913
  %v3086 = vpop.f32.mrb[0].mxu0
  %v3087 = vadd.f32 0.0, %v3086
  %v3088 = vpop.f32.mrb[0].mxu0
  %v3089 = vadd.f32 0.0, %v3088
  %3090 = vmatprep.mubr.f32.mxu0 0.0
  %3091 = vmatmul.mubr.f32.gmra.mrb[0].mxu0 %v2916
  %v3092 = vpop.f32.mrb[0].mxu0
  %v3093 = vadd.f32 0.0, %v3092
  %v3094 = vpop.f32.mrb[0].mxu0
  %v3095 = vadd.f32 0.0, %v3094
  %3096 = vmatprep.mubr.f32.mxu0 0.0
  %3097 = vmatmul.mubr.f32.gmra.mrb[0].mxu0 %v2919
  %v3098 = vpop.f32.mrb[0].mxu0
  %v3099 = vadd.f32 0.0, %v3098
  %v3100 = vpop.f32.mrb[0].mxu0
  %v3101 = vadd.f32 0.0, %v3100
  %3102 = vmatprep.mubr.f32.mxu0 0.0
  %3103 = vmatmul.mubr.f32.gmra.mrb[0].mxu0 %v2922
  %v3104 = vpop.f32.mrb[0].mxu0
  %v3105 = vadd.f32 0.0, %v3104
  %v3106 = vpop.f32.mrb[0].mxu0
  %v3107 = vadd.f32 0.0, %v3106
  %3108 = vmatprep.mubr.f32.mxu0 0.0
  %3109 = vmatmul.mubr.f32.gmra.mrb[0].mxu0 %v2925
  %v3110 = vpop.f32.mrb[0].mxu0
  %v3111 = vadd.f32 0.0, %v3110
  %v3112 = vpop.f32.mrb[0].mxu0
  %v3113 = vadd.f32 0.0, %v3112
  %3114 = vmatprep.mubr.f32.mxu0 0.0
  %3115 = vmatmul.mubr.f32.gmra.mrb[0].mxu0 %v2928
  %v3116 = vpop.f32.mrb[0].mxu0
  %v3117 = vadd.f32 0.0, %v3116
  %v3118 = vpop.f32.mrb[0].mxu0
  %v3119 = vadd.f32 0.0, %v3118
  %3120 = vmatprep.mubr.f32.mxu0 0.0
  %3121 = vmatmul.mubr.f32.gmra.mrb[0].mxu0 %v2931
  %v3122 = vpop.f32.mrb[0].mxu0
  %v3123 = vadd.f32 0.0, %v3122
  %v3124 = vpop.f32.mrb[0].mxu0
  %v3125 = vadd.f32 0.0, %v3124
  %3126 = vmatprep.mubr.f32.mxu0 0.0
  %3127 = vmatmul.mubr.f32.gmra.mrb[0].mxu0 %v2934
  %v3128 = vpop.f32.mrb[0].mxu0
  %v3129 = vadd.f32 0.0, %v3128
  %v3130 = vpop.f32.mrb[0].mxu0
  %v3131 = vadd.f32 0.0, %v3130
  %3132 = vmatprep.mubr.f32.mxu0 0.0
  %3133 = vmatmul.mubr.f32.gmra.mrb[0].mxu0 %v2937
  %v3134 = vpop.f32.mrb[0].mxu0
  %v3135 = vadd.f32 0.0, %v3134
  %v3136 = vpop.f32.mrb[0].mxu0
  %v3137 = vadd.f32 0.0, %v3136
  %3138 = vmatprep.mubr.f32.mxu0 0.0
  %3139 = vmatmul.mubr.f32.gmra.mrb[0].mxu0 %v2940
  %v3140 = vpop.f32.mrb[0].mxu0
  %v3141 = vadd.f32 0.0, %v3140
  %v3142 = vpop.f32.mrb[0].mxu0
  %v3143 = vadd.f32 0.0, %v3142
  %3144 = vmatprep.mubr.f32.mxu0 0.0
  %3145 = vmatmul.mubr.f32.gmra.mrb[0].mxu0 %v2943
  %v3146 = vpop.f32.mrb[0].mxu0
  %v3147 = vadd.f32 0.0, %v3146
  %v3148 = vpop.f32.mrb[0].mxu0
  %v3149 = vadd.f32 0.0, %v3148
  %3150 = vmatprep.mubr.f32.mxu0 0.0
  %3151 = vmatmul.mubr.f32.gmra.mrb[0].mxu0 %v2946
  %v3152 = vpop.f32.mrb[0].mxu0
  %v3153 = vadd.f32 0.0, %v3152
  %v3154 = vpop.f32.mrb[0].mxu0
  %v3155 = vadd.f32 0.0, %v3154
  %3156 = vdwg.mxu0
  %v3157 = vadd.f32 %v2803, %v3015
  %v3158 = vadd.f32 %v2804, %v3017
  %v3159 = vadd.f32 %v2805, %v3021
  %v3160 = vadd.f32 %v2806, %v3023
  %v3161 = vadd.f32 %v2807, %v3027
  %v3162 = vadd.f32 %v2808, %v3029
  %v3163 = vadd.f32 %v2809, %v3033
  %v3164 = vadd.f32 %v2810, %v3035
  %v3165 = vadd.f32 %v2811, %v3039
  %v3166 = vadd.f32 %v2812, %v3041
  %v3167 = vadd.f32 %v2813, %v3045
  %v3168 = vadd.f32 %v2814, %v3047
  %v3169 = vadd.f32 %v2815, %v3051
  %v3170 = vadd.f32 %v2816, %v3053
  %v3171 = vadd.f32 %v2817, %v3057
  %v3172 = vadd.f32 %v2818, %v3059
  %v3173 = vadd.f32 %v2819, %v3063
  %v3174 = vadd.f32 %v2820, %v3065
  %v3175 = vadd.f32 %v2821, %v3069
  %v3176 = vadd.f32 %v2822, %v3071
  %v3177 = vadd.f32 %v2823, %v3075
  %v3178 = vadd.f32 %v2824, %v3077
  %v3179 = vadd.f32 %v2825, %v3081
  %v3180 = vadd.f32 %v2826, %v3083
  %v3181 = vadd.f32 %v2827, %v3087
  %v3182 = vadd.f32 %v2828, %v3089
  %v3183 = vadd.f32 %v2829, %v3093
  %v3184 = vadd.f32 %v2830, %v3095
  %v3185 = vadd.f32 %v2831, %v3099
  %v3186 = vadd.f32 %v2832, %v3101
  %v3187 = vadd.f32 %v2833, %v3105
  %v3188 = vadd.f32 %v2834, %v3107
  %v3189 = vadd.f32 %v2835, %v3111
  %v3190 = vadd.f32 %v2836, %v3113
  %v3191 = vadd.f32 %v2837, %v3117
  %v3192 = vadd.f32 %v2838, %v3119
  %v3193 = vadd.f32 %v2839, %v3123
  %v3194 = vadd.f32 %v2840, %v3125
  %v3195 = vadd.f32 %v2841, %v3129
  %v3196 = vadd.f32 %v2842, %v3131
  %v3197 = vadd.f32 %v2843, %v3135
  %v3198 = vadd.f32 %v2844, %v3137
  %v3199 = vadd.f32 %v2845, %v3141
  %v3200 = vadd.f32 %v2846, %v3143
  %v3201 = vadd.f32 %v2847, %v3147
  %v3202 = vadd.f32 %v2848, %v3149
  %v3203 = vadd.f32 %v2849, %v3153
  %v3204 = vadd.f32 %v2850, %v3155
  %v3205 = vadd.f32 %v3157, %v1798
  %v3206 = vadd.f32 %v3158, %v1802
  %v3207 = vadd.f32 %v3159, %v1798
  %v3208 = vadd.f32 %v3160, %v1802
  %v3209 = vadd.f32 %v3161, %v1798
  %v3210 = vadd.f32 %v3162, %v1802
  %v3211 = vadd.f32 %v3163, %v1798
  %v3212 = vadd.f32 %v3164, %v1802
  %v3213 = vadd.f32 %v3165, %v1798
  %v3214 = vadd.f32 %v3166, %v1802
  %v3215 = vadd.f32 %v3167, %v1798
  %v3216 = vadd.f32 %v3168, %v1802
  %v3217 = vadd.f32 %v3169, %v1798
  %v3218 = vadd.f32 %v3170, %v1802
  %v3219 = vadd.f32 %v3171, %v1798
  %v3220 = vadd.f32 %v3172, %v1802
  %v3221 = vadd.f32 %v3173, %v1798
  %v3222 = vadd.f32 %v3174, %v1802
  %v3223 = vadd.f32 %v3175, %v1798
  %v3224 = vadd.f32 %v3176, %v1802
  %v3225 = vadd.f32 %v3177, %v1798
  %v3226 = vadd.f32 %v3178, %v1802
  %v3227 = vadd.f32 %v3179, %v1798
  %v3228 = vadd.f32 %v3180, %v1802
  %v3229 = vadd.f32 %v3181, %v1798
  %v3230 = vadd.f32 %v3182, %v1802
  %v3231 = vadd.f32 %v3183, %v1798
  %v3232 = vadd.f32 %v3184, %v1802
  %v3233 = vadd.f32 %v3185, %v1798
  %v3234 = vadd.f32 %v3186, %v1802
  %v3235 = vadd.f32 %v3187, %v1798
  %v3236 = vadd.f32 %v3188, %v1802
  %v3237 = vadd.f32 %v3189, %v1798
  %v3238 = vadd.f32 %v3190, %v1802
  %v3239 = vadd.f32 %v3191, %v1798
  %v3240 = vadd.f32 %v3192, %v1802
  %v3241 = vadd.f32 %v3193, %v1798
  %v3242 = vadd.f32 %v3194, %v1802
  %v3243 = vadd.f32 %v3195, %v1798
  %v3244 = vadd.f32 %v3196, %v1802
  %v3245 = vadd.f32 %v3197, %v1798
  %v3246 = vadd.f32 %v3198, %v1802
  %v3247 = vadd.f32 %v3199, %v1798
  %v3248 = vadd.f32 %v3200, %v1802
  %v3249 = vadd.f32 %v3201, %v1798
  %v3250 = vadd.f32 %v3202, %v1802
  %v3251 = vadd.f32 %v3203, %v1798
  %v3252 = vadd.f32 %v3204, %v1802
  %v3253 = vtanh.pop %v3205
  %v3254 = vtanh.pop %v3206
  %v3255 = vtanh.pop %v3207
  %v3256 = vtanh.pop %v3208
  %v3257 = vtanh.pop %v3209
  %v3258 = vtanh.pop %v3210
  %v3259 = vtanh.pop %v3211
  %v3260 = vtanh.pop %v3212
  %v3261 = vtanh.pop %v3213
  %v3262 = vtanh.pop %v3214
  %v3263 = vtanh.pop %v3215
  %v3264 = vtanh.pop %v3216
  %v3265 = vtanh.pop %v3217
  %v3266 = vtanh.pop %v3218
  %v3267 = vtanh.pop %v3219
  %v3268 = vtanh.pop %v3220
  %v3269 = vtanh.pop %v3221
  %v3270 = vtanh.pop %v3222
  %v3271 = vtanh.pop %v3223
  %v3272 = vtanh.pop %v3224
  %v3273 = vtanh.pop %v3225
  %v3274 = vtanh.pop %v3226
  %v3275 = vtanh.pop %v3227
  %v3276 = vtanh.pop %v3228
  %v3277 = vtanh.pop %v3229
  %v3278 = vtanh.pop %v3230
  %v3279 = vtanh.pop %v3231
  %v3280 = vtanh.pop %v3232
  %v3281 = vtanh.pop %v3233
  %v3282 = vtanh.pop %v3234
  %v3283 = vtanh.pop %v3235
  %v3284 = vtanh.pop %v3236
  %v3285 = vtanh.pop %v3237
  %v3286 = vtanh.pop %v3238
  %v3287 = vtanh.pop %v3239
  %v3288 = vtanh.pop %v3240
  %v3289 = vtanh.pop %v3241
  %v3290 = vtanh.pop %v3242
  %v3291 = vtanh.pop %v3243
  %v3292 = vtanh.pop %v3244
  %v3293 = vtanh.pop %v3245
  %v3294 = vtanh.pop %v3246
  %v3295 = vtanh.pop %v3247
  %v3296 = vtanh.pop %v3248
  %v3297 = vtanh.pop %v3249
  %v3298 = vtanh.pop %v3250
  %v3299 = vtanh.pop %v3251
  %v3300 = vtanh.pop %v3252
  %vm3301 = vcmask 130048
  %v3303 = vsel %vm3301, %v3254, 0
  %v3306 = vsel %vm3301, %v3256, 0
  %v3309 = vsel %vm3301, %v3258, 0
  %v3312 = vsel %vm3301, %v3260, 0
  %v3315 = vsel %vm3301, %v3262, 0
  %v3318 = vsel %vm3301, %v3264, 0
  %v3321 = vsel %vm3301, %v3266, 0
  %v3324 = vsel %vm3301, %v3268, 0
  %v3327 = vsel %vm3301, %v3270, 0
  %v3330 = vsel %vm3301, %v3272, 0
  %v3333 = vsel %vm3301, %v3274, 0
  %v3336 = vsel %vm3301, %v3276, 0
  %v3339 = vsel %vm3301, %v3278, 0
  %v3342 = vsel %vm3301, %v3280, 0
  %v3345 = vsel %vm3301, %v3282, 0
  %v3348 = vsel %vm3301, %v3284, 0
  %v3351 = vsel %vm3301, %v3286, 0
  %v3354 = vsel %vm3301, %v3288, 0
  %v3357 = vsel %vm3301, %v3290, 0
  %v3360 = vsel %vm3301, %v3292, 0
  %v3363 = vsel %vm3301, %v3294, 0
  %v3366 = vsel %vm3301, %v3296, 0
  %v3369 = vsel %vm3301, %v3298, 0
  %v3372 = vsel %vm3301, %v3300, 0
  %3374 = vmatprep.subr.mxu0 0.0
  %3375 = vmatpush1.msra.mxu0 %v1901
  %3376 = vmatprep.subr.mxu0 0.0
  %3377 = vmatpush1.msra.mxu0 %v1902
  %3378 = vmatprep.subr.mxu0 0.0
  %3379 = vmatpush1.msra.mxu0 %v1903
  %3380 = vmatprep.subr.mxu0 0.0
  %3381 = vmatpush1.msra.mxu0 %v1904
  %3382 = vmatprep.subr.mxu0 0.0
  %3383 = vmatpush1.msra.mxu0 %v1905
  %3384 = vmatprep.subr.mxu0 0.0
  %3385 = vmatpush1.msra.mxu0 %v1906
  %3386 = vmatprep.subr.mxu0 0.0
  %3387 = vmatpush1.msra.mxu0 %v1907
  %3388 = vmatprep.subr.mxu0 0.0
  %3389 = vmatpush1.msra.mxu0 %v1908
  %3390 = vmatprep.subr.mxu0 0.0
  %3391 = vmatpush1.msra.mxu0 %v1909
  %3392 = vmatprep.subr.mxu0 0.0
  %3393 = vmatpush1.msra.mxu0 %v1910
  %3394 = vmatprep.subr.mxu0 0.0
  %3395 = vmatpush1.msra.mxu0 %v1911
  %3396 = vmatprep.subr.mxu0 0.0
  %3397 = vmatpush1.msra.mxu0 %v1912
  %3398 = vmatprep.subr.mxu0 0.0
  %3399 = vmatpush1.msra.mxu0 %v1913
  %3400 = vmatprep.subr.mxu0 0.0
  %3401 = vmatpush1.msra.mxu0 %v1914
  %3402 = vmatprep.subr.mxu0 0.0
  %3403 = vmatpush1.msra.mxu0 %v1915
  %3404 = vmatprep.subr.mxu0 0.0
  %3405 = vmatpush1.msra.mxu0 %v1916
  %3406 = vmatprep.subr.mxu0 0.0
  %3407 = vmatpush1.msra.mxu0 %v1917
  %3408 = vmatprep.subr.mxu0 0.0
  %3409 = vmatpush1.msra.mxu0 %v1918
  %3410 = vmatprep.subr.mxu0 0.0
  %3411 = vmatpush1.msra.mxu0 0.0
  %3412 = vmatprep.subr.mxu0 0.0
  %3413 = vmatpush1.msra.mxu0 0.0
  %3414 = vmatprep.subr.mxu0 0.0
  %3415 = vmatpush1.msra.mxu0 0.0
  %3416 = vmatprep.subr.mxu0 0.0
  %3417 = vmatpush1.msra.mxu0 0.0
  %3418 = vmatprep.subr.mxu0 0.0
  %3419 = vmatpush1.msra.mxu0 0.0
  %3420 = vmatprep.subr.mxu0 0.0
  %3421 = vmatpush1.msra.mxu0 0.0
  %3422 = vmatprep.subr.mxu0 0.0
  %3423 = vmatpush1.msra.mxu0 0.0
  %3424 = vmatprep.subr.mxu0 0.0
  %3425 = vmatpush1.msra.mxu0 0.0
  %3426 = vmatprep.subr.mxu0 0.0
  %3427 = vmatpush1.msra.mxu0 0.0
  %3428 = vmatprep.subr.mxu0 0.0
  %3429 = vmatpush1.msra.mxu0 0.0
  %3430 = vmatprep.subr.mxu0 0.0
  %3431 = vmatpush1.msra.mxu0 0.0
  %3432 = vmatprep.subr.mxu0 0.0
  %3433 = vmatpush1.msra.mxu0 0.0
  %3434 = vmatprep.subr.mxu0 0.0
  %3435 = vmatpush1.msra.mxu0 0.0
  %3436 = vmatprep.subr.mxu0 0.0
  %3437 = vmatpush1.msra.mxu0 0.0
  %3438 = vmatprep.mubr.f32.mxu0 %v3303
  %3439 = vmatmul.mubr.f32.gmra.mrb[0].mxu0 %v3253
  %v3440 = vpop.f32.mrb[0].mxu0
  %v3441 = vadd.f32 0.0, %v3440
  %v3442 = vpop.f32.mrb[0].mxu0
  %3443 = vmatprep.mubr.f32.mxu0 %v3306
  %3444 = vmatmul.mubr.f32.gmra.mrb[0].mxu0 %v3255
  %v3445 = vpop.f32.mrb[0].mxu0
  %v3446 = vadd.f32 0.0, %v3445
  %v3447 = vpop.f32.mrb[0].mxu0
  %3448 = vmatprep.mubr.f32.mxu0 %v3309
  %3449 = vmatmul.mubr.f32.gmra.mrb[0].mxu0 %v3257
  %v3450 = vpop.f32.mrb[0].mxu0
  %v3451 = vadd.f32 0.0, %v3450
  %v3452 = vpop.f32.mrb[0].mxu0
  %3453 = vmatprep.mubr.f32.mxu0 %v3312
  %3454 = vmatmul.mubr.f32.gmra.mrb[0].mxu0 %v3259
  %v3455 = vpop.f32.mrb[0].mxu0
  %v3456 = vadd.f32 0.0, %v3455
  %v3457 = vpop.f32.mrb[0].mxu0
  %3458 = vmatprep.mubr.f32.mxu0 %v3315
  %3459 = vmatmul.mubr.f32.gmra.mrb[0].mxu0 %v3261
  %v3460 = vpop.f32.mrb[0].mxu0
  %v3461 = vadd.f32 0.0, %v3460
  %v3462 = vpop.f32.mrb[0].mxu0
  %3463 = vmatprep.mubr.f32.mxu0 %v3318
  %3464 = vmatmul.mubr.f32.gmra.mrb[0].mxu0 %v3263
  %v3465 = vpop.f32.mrb[0].mxu0
  %v3466 = vadd.f32 0.0, %v3465
  %v3467 = vpop.f32.mrb[0].mxu0
  %3468 = vmatprep.mubr.f32.mxu0 %v3321
  %3469 = vmatmul.mubr.f32.gmra.mrb[0].mxu0 %v3265
  %v3470 = vpop.f32.mrb[0].mxu0
  %v3471 = vadd.f32 0.0, %v3470
  %v3472 = vpop.f32.mrb[0].mxu0
  %3473 = vmatprep.mubr.f32.mxu0 %v3324
  %3474 = vmatmul.mubr.f32.gmra.mrb[0].mxu0 %v3267
  %v3475 = vpop.f32.mrb[0].mxu0
  %v3476 = vadd.f32 0.0, %v3475
  %v3477 = vpop.f32.mrb[0].mxu0
  %3478 = vmatprep.mubr.f32.mxu0 %v3327
  %3479 = vmatmul.mubr.f32.gmra.mrb[0].mxu0 %v3269
  %v3480 = vpop.f32.mrb[0].mxu0
  %v3481 = vadd.f32 0.0, %v3480
  %v3482 = vpop.f32.mrb[0].mxu0
  %3483 = vmatprep.mubr.f32.mxu0 %v3330
  %3484 = vmatmul.mubr.f32.gmra.mrb[0].mxu0 %v3271
  %v3485 = vpop.f32.mrb[0].mxu0
  %v3486 = vadd.f32 0.0, %v3485
  %v3487 = vpop.f32.mrb[0].mxu0
  %3488 = vmatprep.mubr.f32.mxu0 %v3333
  %3489 = vmatmul.mubr.f32.gmra.mrb[0].mxu0 %v3273
  %v3490 = vpop.f32.mrb[0].mxu0
  %v3491 = vadd.f32 0.0, %v3490
  %v3492 = vpop.f32.mrb[0].mxu0
  %3493 = vmatprep.mubr.f32.mxu0 %v3336
  %3494 = vmatmul.mubr.f32.gmra.mrb[0].mxu0 %v3275
  %v3495 = vpop.f32.mrb[0].mxu0
  %v3496 = vadd.f32 0.0, %v3495
  %v3497 = vpop.f32.mrb[0].mxu0
  %3498 = vmatprep.mubr.f32.mxu0 %v3339
  %3499 = vmatmul.mubr.f32.gmra.mrb[0].mxu0 %v3277
  %v3500 = vpop.f32.mrb[0].mxu0
  %v3501 = vadd.f32 0.0, %v3500
  %v3502 = vpop.f32.mrb[0].mxu0
  %3503 = vmatprep.mubr.f32.mxu0 %v3342
  %3504 = vmatmul.mubr.f32.gmra.mrb[0].mxu0 %v3279
  %v3505 = vpop.f32.mrb[0].mxu0
  %v3506 = vadd.f32 0.0, %v3505
  %v3507 = vpop.f32.mrb[0].mxu0
  %3508 = vmatprep.mubr.f32.mxu0 %v3345
  %3509 = vmatmul.mubr.f32.gmra.mrb[0].mxu0 %v3281
  %v3510 = vpop.f32.mrb[0].mxu0
  %v3511 = vadd.f32 0.0, %v3510
  %v3512 = vpop.f32.mrb[0].mxu0
  %3513 = vmatprep.mubr.f32.mxu0 %v3348
  %3514 = vmatmul.mubr.f32.gmra.mrb[0].mxu0 %v3283
  %v3515 = vpop.f32.mrb[0].mxu0
  %v3516 = vadd.f32 0.0, %v3515
  %v3517 = vpop.f32.mrb[0].mxu0
  %3518 = vmatprep.mubr.f32.mxu0 %v3351
  %3519 = vmatmul.mubr.f32.gmra.mrb[0].mxu0 %v3285
  %v3520 = vpop.f32.mrb[0].mxu0
  %v3521 = vadd.f32 0.0, %v3520
  %v3522 = vpop.f32.mrb[0].mxu0
  %3523 = vmatprep.mubr.f32.mxu0 %v3354
  %3524 = vmatmul.mubr.f32.gmra.mrb[0].mxu0 %v3287
  %v3525 = vpop.f32.mrb[0].mxu0
  %v3526 = vadd.f32 0.0, %v3525
  %v3527 = vpop.f32.mrb[0].mxu0
  %3528 = vmatprep.mubr.f32.mxu0 %v3357
  %3529 = vmatmul.mubr.f32.gmra.mrb[0].mxu0 %v3289
  %v3530 = vpop.f32.mrb[0].mxu0
  %v3531 = vadd.f32 0.0, %v3530
  %v3532 = vpop.f32.mrb[0].mxu0
  %3533 = vmatprep.mubr.f32.mxu0 %v3360
  %3534 = vmatmul.mubr.f32.gmra.mrb[0].mxu0 %v3291
  %v3535 = vpop.f32.mrb[0].mxu0
  %v3536 = vadd.f32 0.0, %v3535
  %v3537 = vpop.f32.mrb[0].mxu0
  %3538 = vmatprep.mubr.f32.mxu0 %v3363
  %3539 = vmatmul.mubr.f32.gmra.mrb[0].mxu0 %v3293
  %v3540 = vpop.f32.mrb[0].mxu0
  %v3541 = vadd.f32 0.0, %v3540
  %v3542 = vpop.f32.mrb[0].mxu0
  %3543 = vmatprep.mubr.f32.mxu0 %v3366
  %3544 = vmatmul.mubr.f32.gmra.mrb[0].mxu0 %v3295
  %v3545 = vpop.f32.mrb[0].mxu0
  %v3546 = vadd.f32 0.0, %v3545
  %v3547 = vpop.f32.mrb[0].mxu0
  %3548 = vmatprep.mubr.f32.mxu0 %v3369
  %3549 = vmatmul.mubr.f32.gmra.mrb[0].mxu0 %v3297
  %v3550 = vpop.f32.mrb[0].mxu0
  %v3551 = vadd.f32 0.0, %v3550
  %v3552 = vpop.f32.mrb[0].mxu0
  %3553 = vmatprep.mubr.f32.mxu0 %v3372
  %3554 = vmatmul.mubr.f32.gmra.mrb[0].mxu0 %v3299
  %v3555 = vpop.f32.mrb[0].mxu0
  %v3556 = vadd.f32 0.0, %v3555
  %v3557 = vpop.f32.mrb[0].mxu0
  %3558 = vdwg.mxu0
  %v3560 = vsel %vm3301, %v1854, 0
  %v3563 = vsel %vm3301, %v1856, 0
  %v3566 = vsel %vm3301, %v1858, 0
  %v3569 = vsel %vm3301, %v1860, 0
  %v3572 = vsel %vm3301, %v1862, 0
  %v3575 = vsel %vm3301, %v1864, 0
  %v3578 = vsel %vm3301, %v1866, 0
  %v3581 = vsel %vm3301, %v1868, 0
  %v3584 = vsel %vm3301, %v1870, 0
  %v3587 = vsel %vm3301, %v1872, 0
  %v3590 = vsel %vm3301, %v1874, 0
  %v3593 = vsel %vm3301, %v1876, 0
  %v3596 = vsel %vm3301, %v1878, 0
  %v3599 = vsel %vm3301, %v1880, 0
  %v3602 = vsel %vm3301, %v1882, 0
  %v3605 = vsel %vm3301, %v1884, 0
  %v3608 = vsel %vm3301, %v1886, 0
  %v3611 = vsel %vm3301, %v1888, 0
  %v3614 = vsel %vm3301, %v1890, 0
  %v3617 = vsel %vm3301, %v1892, 0
  %v3620 = vsel %vm3301, %v1894, 0
  %v3623 = vsel %vm3301, %v1896, 0
  %v3626 = vsel %vm3301, %v1898, 0
  %v3629 = vsel %vm3301, %v1900, 0
  %3631 = vmatprep.subr.mxu0 0.0
  %3632 = vmatpush1.msra.mxu0 %v1901
  %3633 = vmatprep.subr.mxu0 0.0
  %3634 = vmatpush1.msra.mxu0 %v1902
  %3635 = vmatprep.subr.mxu0 0.0
  %3636 = vmatpush1.msra.mxu0 %v1903
  %3637 = vmatprep.subr.mxu0 0.0
  %3638 = vmatpush1.msra.mxu0 %v1904
  %3639 = vmatprep.subr.mxu0 0.0
  %3640 = vmatpush1.msra.mxu0 %v1905
  %3641 = vmatprep.subr.mxu0 0.0
  %3642 = vmatpush1.msra.mxu0 %v1906
  %3643 = vmatprep.subr.mxu0 0.0
  %3644 = vmatpush1.msra.mxu0 %v1907
  %3645 = vmatprep.subr.mxu0 0.0
  %3646 = vmatpush1.msra.mxu0 %v1908
  %3647 = vmatprep.subr.mxu0 0.0
  %3648 = vmatpush1.msra.mxu0 %v1909
  %3649 = vmatprep.subr.mxu0 0.0
  %3650 = vmatpush1.msra.mxu0 %v1910
  %3651 = vmatprep.subr.mxu0 0.0
  %3652 = vmatpush1.msra.mxu0 %v1911
  %3653 = vmatprep.subr.mxu0 0.0
  %3654 = vmatpush1.msra.mxu0 %v1912
  %3655 = vmatprep.subr.mxu0 0.0
  %3656 = vmatpush1.msra.mxu0 %v1913
  %3657 = vmatprep.subr.mxu0 0.0
  %3658 = vmatpush1.msra.mxu0 %v1914
  %3659 = vmatprep.subr.mxu0 0.0
  %3660 = vmatpush1.msra.mxu0 %v1915
  %3661 = vmatprep.subr.mxu0 0.0
  %3662 = vmatpush1.msra.mxu0 %v1916
  %3663 = vmatprep.subr.mxu0 0.0
  %3664 = vmatpush1.msra.mxu0 %v1917
  %3665 = vmatprep.subr.mxu0 0.0
  %3666 = vmatpush1.msra.mxu0 %v1918
  %3667 = vmatprep.subr.mxu0 0.0
  %3668 = vmatpush1.msra.mxu0 0.0
  %3669 = vmatprep.subr.mxu0 0.0
  %3670 = vmatpush1.msra.mxu0 0.0
  %3671 = vmatprep.subr.mxu0 0.0
  %3672 = vmatpush1.msra.mxu0 0.0
  %3673 = vmatprep.subr.mxu0 0.0
  %3674 = vmatpush1.msra.mxu0 0.0
  %3675 = vmatprep.subr.mxu0 0.0
  %3676 = vmatpush1.msra.mxu0 0.0
  %3677 = vmatprep.subr.mxu0 0.0
  %3678 = vmatpush1.msra.mxu0 0.0
  %3679 = vmatprep.subr.mxu0 0.0
  %3680 = vmatpush1.msra.mxu0 0.0
  %3681 = vmatprep.subr.mxu0 0.0
  %3682 = vmatpush1.msra.mxu0 0.0
  %3683 = vmatprep.subr.mxu0 0.0
  %3684 = vmatpush1.msra.mxu0 0.0
  %3685 = vmatprep.subr.mxu0 0.0
  %3686 = vmatpush1.msra.mxu0 0.0
  %3687 = vmatprep.subr.mxu0 0.0
  %3688 = vmatpush1.msra.mxu0 0.0
  %3689 = vmatprep.subr.mxu0 0.0
  %3690 = vmatpush1.msra.mxu0 0.0
  %3691 = vmatprep.subr.mxu0 0.0
  %3692 = vmatpush1.msra.mxu0 0.0
  %3693 = vmatprep.subr.mxu0 0.0
  %3694 = vmatpush1.msra.mxu0 0.0
  %3695 = vmatprep.mubr.f32.mxu0 %v3560
  %3696 = vmatmul.mubr.f32.gmra.mrb[0].mxu0 %v1853
  %v3697 = vpop.f32.mrb[0].mxu0
  %v3698 = vadd.f32 %v3441, %v3697
  %v3699 = vpop.f32.mrb[0].mxu0
  %3700 = vmatprep.mubr.f32.mxu0 %v3563
  %3701 = vmatmul.mubr.f32.gmra.mrb[0].mxu0 %v1855
  %v3702 = vpop.f32.mrb[0].mxu0
  %v3703 = vadd.f32 %v3446, %v3702
  %v3704 = vpop.f32.mrb[0].mxu0
  %3705 = vmatprep.mubr.f32.mxu0 %v3566
  %3706 = vmatmul.mubr.f32.gmra.mrb[0].mxu0 %v1857
  %v3707 = vpop.f32.mrb[0].mxu0
  %v3708 = vadd.f32 %v3451, %v3707
  %v3709 = vpop.f32.mrb[0].mxu0
  %3710 = vmatprep.mubr.f32.mxu0 %v3569
  %3711 = vmatmul.mubr.f32.gmra.mrb[0].mxu0 %v1859
  %v3712 = vpop.f32.mrb[0].mxu0
  %v3713 = vadd.f32 %v3456, %v3712
  %v3714 = vpop.f32.mrb[0].mxu0
  %3715 = vmatprep.mubr.f32.mxu0 %v3572
  %3716 = vmatmul.mubr.f32.gmra.mrb[0].mxu0 %v1861
  %v3717 = vpop.f32.mrb[0].mxu0
  %v3718 = vadd.f32 %v3461, %v3717
  %v3719 = vpop.f32.mrb[0].mxu0
  %3720 = vmatprep.mubr.f32.mxu0 %v3575
  %3721 = vmatmul.mubr.f32.gmra.mrb[0].mxu0 %v1863
  %v3722 = vpop.f32.mrb[0].mxu0
  %v3723 = vadd.f32 %v3466, %v3722
  %v3724 = vpop.f32.mrb[0].mxu0
  %3725 = vmatprep.mubr.f32.mxu0 %v3578
  %3726 = vmatmul.mubr.f32.gmra.mrb[0].mxu0 %v1865
  %v3727 = vpop.f32.mrb[0].mxu0
  %v3728 = vadd.f32 %v3471, %v3727
  %v3729 = vpop.f32.mrb[0].mxu0
  %3730 = vmatprep.mubr.f32.mxu0 %v3581
  %3731 = vmatmul.mubr.f32.gmra.mrb[0].mxu0 %v1867
  %v3732 = vpop.f32.mrb[0].mxu0
  %v3733 = vadd.f32 %v3476, %v3732
  %v3734 = vpop.f32.mrb[0].mxu0
  %3735 = vmatprep.mubr.f32.mxu0 %v3584
  %3736 = vmatmul.mubr.f32.gmra.mrb[0].mxu0 %v1869
  %v3737 = vpop.f32.mrb[0].mxu0
  %v3738 = vadd.f32 %v3481, %v3737
  %v3739 = vpop.f32.mrb[0].mxu0
  %3740 = vmatprep.mubr.f32.mxu0 %v3587
  %3741 = vmatmul.mubr.f32.gmra.mrb[0].mxu0 %v1871
  %v3742 = vpop.f32.mrb[0].mxu0
  %v3743 = vadd.f32 %v3486, %v3742
  %v3744 = vpop.f32.mrb[0].mxu0
  %3745 = vmatprep.mubr.f32.mxu0 %v3590
  %3746 = vmatmul.mubr.f32.gmra.mrb[0].mxu0 %v1873
  %v3747 = vpop.f32.mrb[0].mxu0
  %v3748 = vadd.f32 %v3491, %v3747
  %v3749 = vpop.f32.mrb[0].mxu0
  %3750 = vmatprep.mubr.f32.mxu0 %v3593
  %3751 = vmatmul.mubr.f32.gmra.mrb[0].mxu0 %v1875
  %v3752 = vpop.f32.mrb[0].mxu0
  %v3753 = vadd.f32 %v3496, %v3752
  %v3754 = vpop.f32.mrb[0].mxu0
  %3755 = vmatprep.mubr.f32.mxu0 %v3596
  %3756 = vmatmul.mubr.f32.gmra.mrb[0].mxu0 %v1877
  %v3757 = vpop.f32.mrb[0].mxu0
  %v3758 = vadd.f32 %v3501, %v3757
  %v3759 = vpop.f32.mrb[0].mxu0
  %3760 = vmatprep.mubr.f32.mxu0 %v3599
  %3761 = vmatmul.mubr.f32.gmra.mrb[0].mxu0 %v1879
  %v3762 = vpop.f32.mrb[0].mxu0
  %v3763 = vadd.f32 %v3506, %v3762
  %v3764 = vpop.f32.mrb[0].mxu0
  %3765 = vmatprep.mubr.f32.mxu0 %v3602
  %3766 = vmatmul.mubr.f32.gmra.mrb[0].mxu0 %v1881
  %v3767 = vpop.f32.mrb[0].mxu0
  %v3768 = vadd.f32 %v3511, %v3767
  %v3769 = vpop.f32.mrb[0].mxu0
  %3770 = vmatprep.mubr.f32.mxu0 %v3605
  %3771 = vmatmul.mubr.f32.gmra.mrb[0].mxu0 %v1883
  %v3772 = vpop.f32.mrb[0].mxu0
  %v3773 = vadd.f32 %v3516, %v3772
  %v3774 = vpop.f32.mrb[0].mxu0
  %3775 = vmatprep.mubr.f32.mxu0 %v3608
  %3776 = vmatmul.mubr.f32.gmra.mrb[0].mxu0 %v1885
  %v3777 = vpop.f32.mrb[0].mxu0
  %v3778 = vadd.f32 %v3521, %v3777
  %v3779 = vpop.f32.mrb[0].mxu0
  %3780 = vmatprep.mubr.f32.mxu0 %v3611
  %3781 = vmatmul.mubr.f32.gmra.mrb[0].mxu0 %v1887
  %v3782 = vpop.f32.mrb[0].mxu0
  %v3783 = vadd.f32 %v3526, %v3782
  %v3784 = vpop.f32.mrb[0].mxu0
  %3785 = vmatprep.mubr.f32.mxu0 %v3614
  %3786 = vmatmul.mubr.f32.gmra.mrb[0].mxu0 %v1889
  %v3787 = vpop.f32.mrb[0].mxu0
  %v3788 = vadd.f32 %v3531, %v3787
  %v3789 = vpop.f32.mrb[0].mxu0
  %3790 = vmatprep.mubr.f32.mxu0 %v3617
  %3791 = vmatmul.mubr.f32.gmra.mrb[0].mxu0 %v1891
  %v3792 = vpop.f32.mrb[0].mxu0
  %v3793 = vadd.f32 %v3536, %v3792
  %v3794 = vpop.f32.mrb[0].mxu0
  %3795 = vmatprep.mubr.f32.mxu0 %v3620
  %3796 = vmatmul.mubr.f32.gmra.mrb[0].mxu0 %v1893
  %v3797 = vpop.f32.mrb[0].mxu0
  %v3798 = vadd.f32 %v3541, %v3797
  %v3799 = vpop.f32.mrb[0].mxu0
  %3800 = vmatprep.mubr.f32.mxu0 %v3623
  %3801 = vmatmul.mubr.f32.gmra.mrb[0].mxu0 %v1895
  %v3802 = vpop.f32.mrb[0].mxu0
  %v3803 = vadd.f32 %v3546, %v3802
  %v3804 = vpop.f32.mrb[0].mxu0
  %3805 = vmatprep.mubr.f32.mxu0 %v3626
  %3806 = vmatmul.mubr.f32.gmra.mrb[0].mxu0 %v1897
  %v3807 = vpop.f32.mrb[0].mxu0
  %v3808 = vadd.f32 %v3551, %v3807
  %v3809 = vpop.f32.mrb[0].mxu0
  %3810 = vmatprep.mubr.f32.mxu0 %v3629
  %3811 = vmatmul.mubr.f32.gmra.mrb[0].mxu0 %v1899
  %v3812 = vpop.f32.mrb[0].mxu0
  %v3813 = vadd.f32 %v3556, %v3812
  %v3814 = vpop.f32.mrb[0].mxu0
  %3815 = vdwg.mxu0
  %v3816 = vmul.f32 %v3698, 0.5
  %v3817 = vmul.f32 %v3703, 0.5
  %v3818 = vmul.f32 %v3708, 0.5
  %v3819 = vmul.f32 %v3713, 0.5
  %v3820 = vmul.f32 %v3718, 0.5
  %v3821 = vmul.f32 %v3723, 0.5
  %v3822 = vmul.f32 %v3728, 0.5
  %v3823 = vmul.f32 %v3733, 0.5
  %v3824 = vmul.f32 %v3738, 0.5
  %v3825 = vmul.f32 %v3743, 0.5
  %v3826 = vmul.f32 %v3748, 0.5
  %v3827 = vmul.f32 %v3753, 0.5
  %v3828 = vmul.f32 %v3758, 0.5
  %v3829 = vmul.f32 %v3763, 0.5
  %v3830 = vmul.f32 %v3768, 0.5
  %v3831 = vmul.f32 %v3773, 0.5
  %v3832 = vmul.f32 %v3778, 0.5
  %v3833 = vmul.f32 %v3783, 0.5
  %v3834 = vmul.f32 %v3788, 0.5
  %v3835 = vmul.f32 %v3793, 0.5
  %v3836 = vmul.f32 %v3798, 0.5
  %v3837 = vmul.f32 %v3803, 0.5
  %v3838 = vmul.f32 %v3808, 0.5
  %v3839 = vmul.f32 %v3813, 0.5
  %3840 = vmatprep.subr.mxu0 %v103
  %3841 = vmatpush1.msra.mxu0 %v102
  %3842 = vmatprep.subr.mxu0 %v105
  %3843 = vmatpush1.msra.mxu0 %v104
  %3844 = vmatprep.subr.mxu0 %v107
  %3845 = vmatpush1.msra.mxu0 %v106
  %3846 = vmatprep.subr.mxu0 %v188
  %3847 = vmatpush1.msra.mxu0 %v185
  %3848 = vmatprep.subr.mxu0 0.0
  %3849 = vmatpush1.msra.mxu0 0.0
  %3850 = vmatprep.subr.mxu0 0.0
  %3851 = vmatpush1.msra.mxu0 0.0
  %3852 = vmatprep.subr.mxu0 0.0
  %3853 = vmatpush1.msra.mxu0 0.0
  %3854 = vmatprep.subr.mxu0 0.0
  %3855 = vmatpush1.msra.mxu0 0.0
  %3856 = vmatprep.subr.mxu0 0.0
  %3857 = vmatpush1.msra.mxu0 0.0
  %3858 = vmatprep.subr.mxu0 0.0
  %3859 = vmatpush1.msra.mxu0 0.0
  %3860 = vmatprep.subr.mxu0 0.0
  %3861 = vmatpush1.msra.mxu0 0.0
  %3862 = vmatprep.subr.mxu0 0.0
  %3863 = vmatpush1.msra.mxu0 0.0
  %3864 = vmatprep.subr.mxu0 0.0
  %3865 = vmatpush1.msra.mxu0 0.0
  %3866 = vmatprep.subr.mxu0 0.0
  %3867 = vmatpush1.msra.mxu0 0.0
  %3868 = vmatprep.subr.mxu0 0.0
  %3869 = vmatpush1.msra.mxu0 0.0
  %3870 = vmatprep.subr.mxu0 0.0
  %3871 = vmatpush1.msra.mxu0 0.0
  %3872 = vmatprep.subr.mxu0 0.0
  %3873 = vmatpush1.msra.mxu0 0.0
  %3874 = vmatprep.subr.mxu0 0.0
  %3875 = vmatpush1.msra.mxu0 0.0
  %3876 = vmatprep.subr.mxu0 0.0
  %3877 = vmatpush1.msra.mxu0 0.0
  %3878 = vmatprep.subr.mxu0 0.0
  %3879 = vmatpush1.msra.mxu0 0.0
  %3880 = vmatprep.subr.mxu0 0.0
  %3881 = vmatpush1.msra.mxu0 0.0
  %3882 = vmatprep.subr.mxu0 0.0
  %3883 = vmatpush1.msra.mxu0 0.0
  %3884 = vmatprep.subr.mxu0 0.0
  %3885 = vmatpush1.msra.mxu0 0.0
  %3886 = vmatprep.subr.mxu0 0.0
  %3887 = vmatpush1.msra.mxu0 0.0
  %3888 = vmatprep.subr.mxu0 0.0
  %3889 = vmatpush1.msra.mxu0 0.0
  %3890 = vmatprep.subr.mxu0 0.0
  %3891 = vmatpush1.msra.mxu0 0.0
  %3892 = vmatprep.subr.mxu0 0.0
  %3893 = vmatpush1.msra.mxu0 0.0
  %3894 = vmatprep.subr.mxu0 0.0
  %3895 = vmatpush1.msra.mxu0 0.0
  %3896 = vmatprep.subr.mxu0 0.0
  %3897 = vmatpush1.msra.mxu0 0.0
  %3898 = vmatprep.subr.mxu0 0.0
  %3899 = vmatpush1.msra.mxu0 0.0
  %3900 = vmatprep.subr.mxu0 0.0
  %3901 = vmatpush1.msra.mxu0 0.0
  %3902 = vmatprep.subr.mxu0 0.0
  %3903 = vmatpush1.msra.mxu0 0.0
  %3904 = vmatprep.mubr.f32.mxu0 0.0
  %3905 = vmatmul.mubr.f32.gmra.mrb[0].mxu0 %v1090
  %v3906 = vpop.f32.mrb[0].mxu0
  %v3907 = vadd.f32 0.0, %v3906
  %v3908 = vpop.f32.mrb[0].mxu0
  %v3909 = vadd.f32 0.0, %v3908
  %3910 = vmatprep.mubr.f32.mxu0 0.0
  %3911 = vmatmul.mubr.f32.gmra.mrb[0].mxu0 %v1093
  %v3912 = vpop.f32.mrb[0].mxu0
  %v3913 = vadd.f32 0.0, %v3912
  %v3914 = vpop.f32.mrb[0].mxu0
  %v3915 = vadd.f32 0.0, %v3914
  %3916 = vmatprep.mubr.f32.mxu0 0.0
  %3917 = vmatmul.mubr.f32.gmra.mrb[0].mxu0 %v1096
  %v3918 = vpop.f32.mrb[0].mxu0
  %v3919 = vadd.f32 0.0, %v3918
  %v3920 = vpop.f32.mrb[0].mxu0
  %v3921 = vadd.f32 0.0, %v3920
  %3922 = vmatprep.mubr.f32.mxu0 0.0
  %3923 = vmatmul.mubr.f32.gmra.mrb[0].mxu0 %v1099
  %v3924 = vpop.f32.mrb[0].mxu0
  %v3925 = vadd.f32 0.0, %v3924
  %v3926 = vpop.f32.mrb[0].mxu0
  %v3927 = vadd.f32 0.0, %v3926
  %3928 = vmatprep.mubr.f32.mxu0 0.0
  %3929 = vmatmul.mubr.f32.gmra.mrb[0].mxu0 %v1102
  %v3930 = vpop.f32.mrb[0].mxu0
  %v3931 = vadd.f32 0.0, %v3930
  %v3932 = vpop.f32.mrb[0].mxu0
  %v3933 = vadd.f32 0.0, %v3932
  %3934 = vmatprep.mubr.f32.mxu0 0.0
  %3935 = vmatmul.mubr.f32.gmra.mrb[0].mxu0 %v1105
  %v3936 = vpop.f32.mrb[0].mxu0
  %v3937 = vadd.f32 0.0, %v3936
  %v3938 = vpop.f32.mrb[0].mxu0
  %v3939 = vadd.f32 0.0, %v3938
  %3940 = vmatprep.mubr.f32.mxu0 0.0
  %3941 = vmatmul.mubr.f32.gmra.mrb[0].mxu0 %v1108
  %v3942 = vpop.f32.mrb[0].mxu0
  %v3943 = vadd.f32 0.0, %v3942
  %v3944 = vpop.f32.mrb[0].mxu0
  %v3945 = vadd.f32 0.0, %v3944
  %3946 = vmatprep.mubr.f32.mxu0 0.0
  %3947 = vmatmul.mubr.f32.gmra.mrb[0].mxu0 %v1111
  %v3948 = vpop.f32.mrb[0].mxu0
  %v3949 = vadd.f32 0.0, %v3948
  %v3950 = vpop.f32.mrb[0].mxu0
  %v3951 = vadd.f32 0.0, %v3950
  %3952 = vmatprep.mubr.f32.mxu0 0.0
  %3953 = vmatmul.mubr.f32.gmra.mrb[0].mxu0 %v1114
  %v3954 = vpop.f32.mrb[0].mxu0
  %v3955 = vadd.f32 0.0, %v3954
  %v3956 = vpop.f32.mrb[0].mxu0
  %v3957 = vadd.f32 0.0, %v3956
  %3958 = vmatprep.mubr.f32.mxu0 0.0
  %3959 = vmatmul.mubr.f32.gmra.mrb[0].mxu0 %v1117
  %v3960 = vpop.f32.mrb[0].mxu0
  %v3961 = vadd.f32 0.0, %v3960
  %v3962 = vpop.f32.mrb[0].mxu0
  %v3963 = vadd.f32 0.0, %v3962
  %3964 = vmatprep.mubr.f32.mxu0 0.0
  %3965 = vmatmul.mubr.f32.gmra.mrb[0].mxu0 %v1120
  %v3966 = vpop.f32.mrb[0].mxu0
  %v3967 = vadd.f32 0.0, %v3966
  %v3968 = vpop.f32.mrb[0].mxu0
  %v3969 = vadd.f32 0.0, %v3968
  %3970 = vmatprep.mubr.f32.mxu0 0.0
  %3971 = vmatmul.mubr.f32.gmra.mrb[0].mxu0 %v1123
  %v3972 = vpop.f32.mrb[0].mxu0
  %v3973 = vadd.f32 0.0, %v3972
  %v3974 = vpop.f32.mrb[0].mxu0
  %v3975 = vadd.f32 0.0, %v3974
  %3976 = vmatprep.mubr.f32.mxu0 0.0
  %3977 = vmatmul.mubr.f32.gmra.mrb[0].mxu0 %v1126
  %v3978 = vpop.f32.mrb[0].mxu0
  %v3979 = vadd.f32 0.0, %v3978
  %v3980 = vpop.f32.mrb[0].mxu0
  %v3981 = vadd.f32 0.0, %v3980
  %3982 = vmatprep.mubr.f32.mxu0 0.0
  %3983 = vmatmul.mubr.f32.gmra.mrb[0].mxu0 %v1129
  %v3984 = vpop.f32.mrb[0].mxu0
  %v3985 = vadd.f32 0.0, %v3984
  %v3986 = vpop.f32.mrb[0].mxu0
  %v3987 = vadd.f32 0.0, %v3986
  %3988 = vmatprep.mubr.f32.mxu0 0.0
  %3989 = vmatmul.mubr.f32.gmra.mrb[0].mxu0 %v1132
  %v3990 = vpop.f32.mrb[0].mxu0
  %v3991 = vadd.f32 0.0, %v3990
  %v3992 = vpop.f32.mrb[0].mxu0
  %v3993 = vadd.f32 0.0, %v3992
  %3994 = vmatprep.mubr.f32.mxu0 0.0
  %3995 = vmatmul.mubr.f32.gmra.mrb[0].mxu0 %v1135
  %v3996 = vpop.f32.mrb[0].mxu0
  %v3997 = vadd.f32 0.0, %v3996
  %v3998 = vpop.f32.mrb[0].mxu0
  %v3999 = vadd.f32 0.0, %v3998
  %4000 = vmatprep.mubr.f32.mxu0 0.0
  %4001 = vmatmul.mubr.f32.gmra.mrb[0].mxu0 %v1138
  %v4002 = vpop.f32.mrb[0].mxu0
  %v4003 = vadd.f32 0.0, %v4002
  %v4004 = vpop.f32.mrb[0].mxu0
  %v4005 = vadd.f32 0.0, %v4004
  %4006 = vmatprep.mubr.f32.mxu0 0.0
  %4007 = vmatmul.mubr.f32.gmra.mrb[0].mxu0 %v1141
  %v4008 = vpop.f32.mrb[0].mxu0
  %v4009 = vadd.f32 0.0, %v4008
  %v4010 = vpop.f32.mrb[0].mxu0
  %v4011 = vadd.f32 0.0, %v4010
  %4012 = vmatprep.mubr.f32.mxu0 0.0
  %4013 = vmatmul.mubr.f32.gmra.mrb[0].mxu0 %v1144
  %v4014 = vpop.f32.mrb[0].mxu0
  %v4015 = vadd.f32 0.0, %v4014
  %v4016 = vpop.f32.mrb[0].mxu0
  %v4017 = vadd.f32 0.0, %v4016
  %4018 = vmatprep.mubr.f32.mxu0 0.0
  %4019 = vmatmul.mubr.f32.gmra.mrb[0].mxu0 %v1147
  %v4020 = vpop.f32.mrb[0].mxu0
  %v4021 = vadd.f32 0.0, %v4020
  %v4022 = vpop.f32.mrb[0].mxu0
  %v4023 = vadd.f32 0.0, %v4022
  %4024 = vmatprep.mubr.f32.mxu0 0.0
  %4025 = vmatmul.mubr.f32.gmra.mrb[0].mxu0 %v1150
  %v4026 = vpop.f32.mrb[0].mxu0
  %v4027 = vadd.f32 0.0, %v4026
  %v4028 = vpop.f32.mrb[0].mxu0
  %v4029 = vadd.f32 0.0, %v4028
  %4030 = vmatprep.mubr.f32.mxu0 0.0
  %4031 = vmatmul.mubr.f32.gmra.mrb[0].mxu0 %v1153
  %v4032 = vpop.f32.mrb[0].mxu0
  %v4033 = vadd.f32 0.0, %v4032
  %v4034 = vpop.f32.mrb[0].mxu0
  %v4035 = vadd.f32 0.0, %v4034
  %4036 = vmatprep.mubr.f32.mxu0 0.0
  %4037 = vmatmul.mubr.f32.gmra.mrb[0].mxu0 %v1156
  %v4038 = vpop.f32.mrb[0].mxu0
  %v4039 = vadd.f32 0.0, %v4038
  %v4040 = vpop.f32.mrb[0].mxu0
  %v4041 = vadd.f32 0.0, %v4040
  %4042 = vmatprep.mubr.f32.mxu0 0.0
  %4043 = vmatmul.mubr.f32.gmra.mrb[0].mxu0 %v1159
  %v4044 = vpop.f32.mrb[0].mxu0
  %v4045 = vadd.f32 0.0, %v4044
  %v4046 = vpop.f32.mrb[0].mxu0
  %v4047 = vadd.f32 0.0, %v4046
  %4048 = vdwg.mxu0
  %4049 = vmatprep.subr.mxu0 %v69
  %4050 = vmatpush1.msra.mxu0 %v68
  %4051 = vmatprep.subr.mxu0 %v71
  %4052 = vmatpush1.msra.mxu0 %v70
  %4053 = vmatprep.subr.mxu0 %v73
  %4054 = vmatpush1.msra.mxu0 %v72
  %4055 = vmatprep.subr.mxu0 %v475
  %4056 = vmatpush1.msra.mxu0 %v472
  %4057 = vmatprep.subr.mxu0 0.0
  %4058 = vmatpush1.msra.mxu0 0.0
  %4059 = vmatprep.subr.mxu0 0.0
  %4060 = vmatpush1.msra.mxu0 0.0
  %4061 = vmatprep.subr.mxu0 0.0
  %4062 = vmatpush1.msra.mxu0 0.0
  %4063 = vmatprep.subr.mxu0 0.0
  %4064 = vmatpush1.msra.mxu0 0.0
  %4065 = vmatprep.subr.mxu0 0.0
  %4066 = vmatpush1.msra.mxu0 0.0
  %4067 = vmatprep.subr.mxu0 0.0
  %4068 = vmatpush1.msra.mxu0 0.0
  %4069 = vmatprep.subr.mxu0 0.0
  %4070 = vmatpush1.msra.mxu0 0.0
  %4071 = vmatprep.subr.mxu0 0.0
  %4072 = vmatpush1.msra.mxu0 0.0
  %4073 = vmatprep.subr.mxu0 0.0
  %4074 = vmatpush1.msra.mxu0 0.0
  %4075 = vmatprep.subr.mxu0 0.0
  %4076 = vmatpush1.msra.mxu0 0.0
  %4077 = vmatprep.subr.mxu0 0.0
  %4078 = vmatpush1.msra.mxu0 0.0
  %4079 = vmatprep.subr.mxu0 0.0
  %4080 = vmatpush1.msra.mxu0 0.0
  %4081 = vmatprep.subr.mxu0 0.0
  %4082 = vmatpush1.msra.mxu0 0.0
  %4083 = vmatprep.subr.mxu0 0.0
  %4084 = vmatpush1.msra.mxu0 0.0
  %4085 = vmatprep.subr.mxu0 0.0
  %4086 = vmatpush1.msra.mxu0 0.0
  %4087 = vmatprep.subr.mxu0 0.0
  %4088 = vmatpush1.msra.mxu0 0.0
  %4089 = vmatprep.subr.mxu0 0.0
  %4090 = vmatpush1.msra.mxu0 0.0
  %4091 = vmatprep.subr.mxu0 0.0
  %4092 = vmatpush1.msra.mxu0 0.0
  %4093 = vmatprep.subr.mxu0 0.0
  %4094 = vmatpush1.msra.mxu0 0.0
  %4095 = vmatprep.subr.mxu0 0.0
  %4096 = vmatpush1.msra.mxu0 0.0
  %4097 = vmatprep.subr.mxu0 0.0
  %4098 = vmatpush1.msra.mxu0 0.0
  %4099 = vmatprep.subr.mxu0 0.0
  %4100 = vmatpush1.msra.mxu0 0.0
  %4101 = vmatprep.subr.mxu0 0.0
  %4102 = vmatpush1.msra.mxu0 0.0
  %4103 = vmatprep.subr.mxu0 0.0
  %4104 = vmatpush1.msra.mxu0 0.0
  %4105 = vmatprep.subr.mxu0 0.0
  %4106 = vmatpush1.msra.mxu0 0.0
  %4107 = vmatprep.subr.mxu0 0.0
  %4108 = vmatpush1.msra.mxu0 0.0
  %4109 = vmatprep.subr.mxu0 0.0
  %4110 = vmatpush1.msra.mxu0 0.0
  %4111 = vmatprep.subr.mxu0 0.0
  %4112 = vmatpush1.msra.mxu0 0.0
  %4113 = vmatprep.mubr.f32.mxu0 0.0
  %4114 = vmatmul.mubr.f32.gmra.mrb[0].mxu0 %v721
  %v4115 = vpop.f32.mrb[0].mxu0
  %v4116 = vadd.f32 %v3907, %v4115
  %v4117 = vpop.f32.mrb[0].mxu0
  %v4118 = vadd.f32 %v3909, %v4117
  %4119 = vmatprep.mubr.f32.mxu0 0.0
  %4120 = vmatmul.mubr.f32.gmra.mrb[0].mxu0 %v724
  %v4121 = vpop.f32.mrb[0].mxu0
  %v4122 = vadd.f32 %v3913, %v4121
  %v4123 = vpop.f32.mrb[0].mxu0
  %v4124 = vadd.f32 %v3915, %v4123
  %4125 = vmatprep.mubr.f32.mxu0 0.0
  %4126 = vmatmul.mubr.f32.gmra.mrb[0].mxu0 %v727
  %v4127 = vpop.f32.mrb[0].mxu0
  %v4128 = vadd.f32 %v3919, %v4127
  %v4129 = vpop.f32.mrb[0].mxu0
  %v4130 = vadd.f32 %v3921, %v4129
  %4131 = vmatprep.mubr.f32.mxu0 0.0
  %4132 = vmatmul.mubr.f32.gmra.mrb[0].mxu0 %v730
  %v4133 = vpop.f32.mrb[0].mxu0
  %v4134 = vadd.f32 %v3925, %v4133
  %v4135 = vpop.f32.mrb[0].mxu0
  %v4136 = vadd.f32 %v3927, %v4135
  %4137 = vmatprep.mubr.f32.mxu0 0.0
  %4138 = vmatmul.mubr.f32.gmra.mrb[0].mxu0 %v733
  %v4139 = vpop.f32.mrb[0].mxu0
  %v4140 = vadd.f32 %v3931, %v4139
  %v4141 = vpop.f32.mrb[0].mxu0
  %v4142 = vadd.f32 %v3933, %v4141
  %4143 = vmatprep.mubr.f32.mxu0 0.0
  %4144 = vmatmul.mubr.f32.gmra.mrb[0].mxu0 %v736
  %v4145 = vpop.f32.mrb[0].mxu0
  %v4146 = vadd.f32 %v3937, %v4145
  %v4147 = vpop.f32.mrb[0].mxu0
  %v4148 = vadd.f32 %v3939, %v4147
  %4149 = vmatprep.mubr.f32.mxu0 0.0
  %4150 = vmatmul.mubr.f32.gmra.mrb[0].mxu0 %v739
  %v4151 = vpop.f32.mrb[0].mxu0
  %v4152 = vadd.f32 %v3943, %v4151
  %v4153 = vpop.f32.mrb[0].mxu0
  %v4154 = vadd.f32 %v3945, %v4153
  %4155 = vmatprep.mubr.f32.mxu0 0.0
  %4156 = vmatmul.mubr.f32.gmra.mrb[0].mxu0 %v742
  %v4157 = vpop.f32.mrb[0].mxu0
  %v4158 = vadd.f32 %v3949, %v4157
  %v4159 = vpop.f32.mrb[0].mxu0
  %v4160 = vadd.f32 %v3951, %v4159
  %4161 = vmatprep.mubr.f32.mxu0 0.0
  %4162 = vmatmul.mubr.f32.gmra.mrb[0].mxu0 %v745
  %v4163 = vpop.f32.mrb[0].mxu0
  %v4164 = vadd.f32 %v3955, %v4163
  %v4165 = vpop.f32.mrb[0].mxu0
  %v4166 = vadd.f32 %v3957, %v4165
  %4167 = vmatprep.mubr.f32.mxu0 0.0
  %4168 = vmatmul.mubr.f32.gmra.mrb[0].mxu0 %v748
  %v4169 = vpop.f32.mrb[0].mxu0
  %v4170 = vadd.f32 %v3961, %v4169
  %v4171 = vpop.f32.mrb[0].mxu0
  %v4172 = vadd.f32 %v3963, %v4171
  %4173 = vmatprep.mubr.f32.mxu0 0.0
  %4174 = vmatmul.mubr.f32.gmra.mrb[0].mxu0 %v751
  %v4175 = vpop.f32.mrb[0].mxu0
  %v4176 = vadd.f32 %v3967, %v4175
  %v4177 = vpop.f32.mrb[0].mxu0
  %v4178 = vadd.f32 %v3969, %v4177
  %4179 = vmatprep.mubr.f32.mxu0 0.0
  %4180 = vmatmul.mubr.f32.gmra.mrb[0].mxu0 %v754
  %v4181 = vpop.f32.mrb[0].mxu0
  %v4182 = vadd.f32 %v3973, %v4181
  %v4183 = vpop.f32.mrb[0].mxu0
  %v4184 = vadd.f32 %v3975, %v4183
  %4185 = vmatprep.mubr.f32.mxu0 0.0
  %4186 = vmatmul.mubr.f32.gmra.mrb[0].mxu0 %v757
  %v4187 = vpop.f32.mrb[0].mxu0
  %v4188 = vadd.f32 %v3979, %v4187
  %v4189 = vpop.f32.mrb[0].mxu0
  %v4190 = vadd.f32 %v3981, %v4189
  %4191 = vmatprep.mubr.f32.mxu0 0.0
  %4192 = vmatmul.mubr.f32.gmra.mrb[0].mxu0 %v760
  %v4193 = vpop.f32.mrb[0].mxu0
  %v4194 = vadd.f32 %v3985, %v4193
  %v4195 = vpop.f32.mrb[0].mxu0
  %v4196 = vadd.f32 %v3987, %v4195
  %4197 = vmatprep.mubr.f32.mxu0 0.0
  %4198 = vmatmul.mubr.f32.gmra.mrb[0].mxu0 %v763
  %v4199 = vpop.f32.mrb[0].mxu0
  %v4200 = vadd.f32 %v3991, %v4199
  %v4201 = vpop.f32.mrb[0].mxu0
  %v4202 = vadd.f32 %v3993, %v4201
  %4203 = vmatprep.mubr.f32.mxu0 0.0
  %4204 = vmatmul.mubr.f32.gmra.mrb[0].mxu0 %v766
  %v4205 = vpop.f32.mrb[0].mxu0
  %v4206 = vadd.f32 %v3997, %v4205
  %v4207 = vpop.f32.mrb[0].mxu0
  %v4208 = vadd.f32 %v3999, %v4207
  %4209 = vmatprep.mubr.f32.mxu0 0.0
  %4210 = vmatmul.mubr.f32.gmra.mrb[0].mxu0 %v769
  %v4211 = vpop.f32.mrb[0].mxu0
  %v4212 = vadd.f32 %v4003, %v4211
  %v4213 = vpop.f32.mrb[0].mxu0
  %v4214 = vadd.f32 %v4005, %v4213
  %4215 = vmatprep.mubr.f32.mxu0 0.0
  %4216 = vmatmul.mubr.f32.gmra.mrb[0].mxu0 %v772
  %v4217 = vpop.f32.mrb[0].mxu0
  %v4218 = vadd.f32 %v4009, %v4217
  %v4219 = vpop.f32.mrb[0].mxu0
  %v4220 = vadd.f32 %v4011, %v4219
  %4221 = vmatprep.mubr.f32.mxu0 0.0
  %4222 = vmatmul.mubr.f32.gmra.mrb[0].mxu0 %v775
  %v4223 = vpop.f32.mrb[0].mxu0
  %v4224 = vadd.f32 %v4015, %v4223
  %v4225 = vpop.f32.mrb[0].mxu0
  %v4226 = vadd.f32 %v4017, %v4225
  %4227 = vmatprep.mubr.f32.mxu0 0.0
  %4228 = vmatmul.mubr.f32.gmra.mrb[0].mxu0 %v778
  %v4229 = vpop.f32.mrb[0].mxu0
  %v4230 = vadd.f32 %v4021, %v4229
  %v4231 = vpop.f32.mrb[0].mxu0
  %v4232 = vadd.f32 %v4023, %v4231
  %4233 = vmatprep.mubr.f32.mxu0 0.0
  %4234 = vmatmul.mubr.f32.gmra.mrb[0].mxu0 %v781
  %v4235 = vpop.f32.mrb[0].mxu0
  %v4236 = vadd.f32 %v4027, %v4235
  %v4237 = vpop.f32.mrb[0].mxu0
  %v4238 = vadd.f32 %v4029, %v4237
  %4239 = vmatprep.mubr.f32.mxu0 0.0
  %4240 = vmatmul.mubr.f32.gmra.mrb[0].mxu0 %v784
  %v4241 = vpop.f32.mrb[0].mxu0
  %v4242 = vadd.f32 %v4033, %v4241
  %v4243 = vpop.f32.mrb[0].mxu0
  %v4244 = vadd.f32 %v4035, %v4243
  %4245 = vmatprep.mubr.f32.mxu0 0.0
  %4246 = vmatmul.mubr.f32.gmra.mrb[0].mxu0 %v787
  %v4247 = vpop.f32.mrb[0].mxu0
  %v4248 = vadd.f32 %v4039, %v4247
  %v4249 = vpop.f32.mrb[0].mxu0
  %v4250 = vadd.f32 %v4041, %v4249
  %4251 = vmatprep.mubr.f32.mxu0 0.0
  %4252 = vmatmul.mubr.f32.gmra.mrb[0].mxu0 %v790
  %v4253 = vpop.f32.mrb[0].mxu0
  %v4254 = vadd.f32 %v4045, %v4253
  %v4255 = vpop.f32.mrb[0].mxu0
  %v4256 = vadd.f32 %v4047, %v4255
  %4257 = vdwg.mxu0
  %4258 = vmatprep.subr.mxu0 %v713
  %4259 = vmatpush1.msra.mxu0 %v712
  %4260 = vmatprep.subr.mxu0 %v715
  %4261 = vmatpush1.msra.mxu0 %v714
  %4262 = vmatprep.subr.mxu0 %v717
  %4263 = vmatpush1.msra.mxu0 %v716
  %4264 = vmatprep.subr.mxu0 %v796
  %4265 = vmatpush1.msra.mxu0 %v793
  %4266 = vmatprep.subr.mxu0 0.0
  %4267 = vmatpush1.msra.mxu0 0.0
  %4268 = vmatprep.subr.mxu0 0.0
  %4269 = vmatpush1.msra.mxu0 0.0
  %4270 = vmatprep.subr.mxu0 0.0
  %4271 = vmatpush1.msra.mxu0 0.0
  %4272 = vmatprep.subr.mxu0 0.0
  %4273 = vmatpush1.msra.mxu0 0.0
  %4274 = vmatprep.subr.mxu0 0.0
  %4275 = vmatpush1.msra.mxu0 0.0
  %4276 = vmatprep.subr.mxu0 0.0
  %4277 = vmatpush1.msra.mxu0 0.0
  %4278 = vmatprep.subr.mxu0 0.0
  %4279 = vmatpush1.msra.mxu0 0.0
  %4280 = vmatprep.subr.mxu0 0.0
  %4281 = vmatpush1.msra.mxu0 0.0
  %4282 = vmatprep.subr.mxu0 0.0
  %4283 = vmatpush1.msra.mxu0 0.0
  %4284 = vmatprep.subr.mxu0 0.0
  %4285 = vmatpush1.msra.mxu0 0.0
  %4286 = vmatprep.subr.mxu0 0.0
  %4287 = vmatpush1.msra.mxu0 0.0
  %4288 = vmatprep.subr.mxu0 0.0
  %4289 = vmatpush1.msra.mxu0 0.0
  %4290 = vmatprep.subr.mxu0 0.0
  %4291 = vmatpush1.msra.mxu0 0.0
  %4292 = vmatprep.subr.mxu0 0.0
  %4293 = vmatpush1.msra.mxu0 0.0
  %4294 = vmatprep.subr.mxu0 0.0
  %4295 = vmatpush1.msra.mxu0 0.0
  %4296 = vmatprep.subr.mxu0 0.0
  %4297 = vmatpush1.msra.mxu0 0.0
  %4298 = vmatprep.subr.mxu0 0.0
  %4299 = vmatpush1.msra.mxu0 0.0
  %4300 = vmatprep.subr.mxu0 0.0
  %4301 = vmatpush1.msra.mxu0 0.0
  %4302 = vmatprep.subr.mxu0 0.0
  %4303 = vmatpush1.msra.mxu0 0.0
  %4304 = vmatprep.subr.mxu0 0.0
  %4305 = vmatpush1.msra.mxu0 0.0
  %4306 = vmatprep.subr.mxu0 0.0
  %4307 = vmatpush1.msra.mxu0 0.0
  %4308 = vmatprep.subr.mxu0 0.0
  %4309 = vmatpush1.msra.mxu0 0.0
  %4310 = vmatprep.subr.mxu0 0.0
  %4311 = vmatpush1.msra.mxu0 0.0
  %4312 = vmatprep.subr.mxu0 0.0
  %4313 = vmatpush1.msra.mxu0 0.0
  %4314 = vmatprep.subr.mxu0 0.0
  %4315 = vmatpush1.msra.mxu0 0.0
  %4316 = vmatprep.subr.mxu0 0.0
  %4317 = vmatpush1.msra.mxu0 0.0
  %4318 = vmatprep.subr.mxu0 0.0
  %4319 = vmatpush1.msra.mxu0 0.0
  %4320 = vmatprep.subr.mxu0 0.0
  %4321 = vmatpush1.msra.mxu0 0.0
  %4322 = vmatprep.mubr.f32.mxu0 0.0
  %4323 = vmatmul.mubr.f32.gmra.mrb[0].mxu0 %v1459
  %v4324 = vpop.f32.mrb[0].mxu0
  %v4325 = vadd.f32 0.0, %v4324
  %v4326 = vpop.f32.mrb[0].mxu0
  %v4327 = vadd.f32 0.0, %v4326
  %4328 = vmatprep.mubr.f32.mxu0 0.0
  %4329 = vmatmul.mubr.f32.gmra.mrb[0].mxu0 %v1462
  %v4330 = vpop.f32.mrb[0].mxu0
  %v4331 = vadd.f32 0.0, %v4330
  %v4332 = vpop.f32.mrb[0].mxu0
  %v4333 = vadd.f32 0.0, %v4332
  %4334 = vmatprep.mubr.f32.mxu0 0.0
  %4335 = vmatmul.mubr.f32.gmra.mrb[0].mxu0 %v1465
  %v4336 = vpop.f32.mrb[0].mxu0
  %v4337 = vadd.f32 0.0, %v4336
  %v4338 = vpop.f32.mrb[0].mxu0
  %v4339 = vadd.f32 0.0, %v4338
  %4340 = vmatprep.mubr.f32.mxu0 0.0
  %4341 = vmatmul.mubr.f32.gmra.mrb[0].mxu0 %v1468
  %v4342 = vpop.f32.mrb[0].mxu0
  %v4343 = vadd.f32 0.0, %v4342
  %v4344 = vpop.f32.mrb[0].mxu0
  %v4345 = vadd.f32 0.0, %v4344
  %4346 = vmatprep.mubr.f32.mxu0 0.0
  %4347 = vmatmul.mubr.f32.gmra.mrb[0].mxu0 %v1471
  %v4348 = vpop.f32.mrb[0].mxu0
  %v4349 = vadd.f32 0.0, %v4348
  %v4350 = vpop.f32.mrb[0].mxu0
  %v4351 = vadd.f32 0.0, %v4350
  %4352 = vmatprep.mubr.f32.mxu0 0.0
  %4353 = vmatmul.mubr.f32.gmra.mrb[0].mxu0 %v1474
  %v4354 = vpop.f32.mrb[0].mxu0
  %v4355 = vadd.f32 0.0, %v4354
  %v4356 = vpop.f32.mrb[0].mxu0
  %v4357 = vadd.f32 0.0, %v4356
  %4358 = vmatprep.mubr.f32.mxu0 0.0
  %4359 = vmatmul.mubr.f32.gmra.mrb[0].mxu0 %v1477
  %v4360 = vpop.f32.mrb[0].mxu0
  %v4361 = vadd.f32 0.0, %v4360
  %v4362 = vpop.f32.mrb[0].mxu0
  %v4363 = vadd.f32 0.0, %v4362
  %4364 = vmatprep.mubr.f32.mxu0 0.0
  %4365 = vmatmul.mubr.f32.gmra.mrb[0].mxu0 %v1480
  %v4366 = vpop.f32.mrb[0].mxu0
  %v4367 = vadd.f32 0.0, %v4366
  %v4368 = vpop.f32.mrb[0].mxu0
  %v4369 = vadd.f32 0.0, %v4368
  %4370 = vmatprep.mubr.f32.mxu0 0.0
  %4371 = vmatmul.mubr.f32.gmra.mrb[0].mxu0 %v1483
  %v4372 = vpop.f32.mrb[0].mxu0
  %v4373 = vadd.f32 0.0, %v4372
  %v4374 = vpop.f32.mrb[0].mxu0
  %v4375 = vadd.f32 0.0, %v4374
  %4376 = vmatprep.mubr.f32.mxu0 0.0
  %4377 = vmatmul.mubr.f32.gmra.mrb[0].mxu0 %v1486
  %v4378 = vpop.f32.mrb[0].mxu0
  %v4379 = vadd.f32 0.0, %v4378
  %v4380 = vpop.f32.mrb[0].mxu0
  %v4381 = vadd.f32 0.0, %v4380
  %4382 = vmatprep.mubr.f32.mxu0 0.0
  %4383 = vmatmul.mubr.f32.gmra.mrb[0].mxu0 %v1489
  %v4384 = vpop.f32.mrb[0].mxu0
  %v4385 = vadd.f32 0.0, %v4384
  %v4386 = vpop.f32.mrb[0].mxu0
  %v4387 = vadd.f32 0.0, %v4386
  %4388 = vmatprep.mubr.f32.mxu0 0.0
  %4389 = vmatmul.mubr.f32.gmra.mrb[0].mxu0 %v1492
  %v4390 = vpop.f32.mrb[0].mxu0
  %v4391 = vadd.f32 0.0, %v4390
  %v4392 = vpop.f32.mrb[0].mxu0
  %v4393 = vadd.f32 0.0, %v4392
  %4394 = vmatprep.mubr.f32.mxu0 0.0
  %4395 = vmatmul.mubr.f32.gmra.mrb[0].mxu0 %v1495
  %v4396 = vpop.f32.mrb[0].mxu0
  %v4397 = vadd.f32 0.0, %v4396
  %v4398 = vpop.f32.mrb[0].mxu0
  %v4399 = vadd.f32 0.0, %v4398
  %4400 = vmatprep.mubr.f32.mxu0 0.0
  %4401 = vmatmul.mubr.f32.gmra.mrb[0].mxu0 %v1498
  %v4402 = vpop.f32.mrb[0].mxu0
  %v4403 = vadd.f32 0.0, %v4402
  %v4404 = vpop.f32.mrb[0].mxu0
  %v4405 = vadd.f32 0.0, %v4404
  %4406 = vmatprep.mubr.f32.mxu0 0.0
  %4407 = vmatmul.mubr.f32.gmra.mrb[0].mxu0 %v1501
  %v4408 = vpop.f32.mrb[0].mxu0
  %v4409 = vadd.f32 0.0, %v4408
  %v4410 = vpop.f32.mrb[0].mxu0
  %v4411 = vadd.f32 0.0, %v4410
  %4412 = vmatprep.mubr.f32.mxu0 0.0
  %4413 = vmatmul.mubr.f32.gmra.mrb[0].mxu0 %v1504
  %v4414 = vpop.f32.mrb[0].mxu0
  %v4415 = vadd.f32 0.0, %v4414
  %v4416 = vpop.f32.mrb[0].mxu0
  %v4417 = vadd.f32 0.0, %v4416
  %4418 = vmatprep.mubr.f32.mxu0 0.0
  %4419 = vmatmul.mubr.f32.gmra.mrb[0].mxu0 %v1507
  %v4420 = vpop.f32.mrb[0].mxu0
  %v4421 = vadd.f32 0.0, %v4420
  %v4422 = vpop.f32.mrb[0].mxu0
  %v4423 = vadd.f32 0.0, %v4422
  %4424 = vmatprep.mubr.f32.mxu0 0.0
  %4425 = vmatmul.mubr.f32.gmra.mrb[0].mxu0 %v1510
  %v4426 = vpop.f32.mrb[0].mxu0
  %v4427 = vadd.f32 0.0, %v4426
  %v4428 = vpop.f32.mrb[0].mxu0
  %v4429 = vadd.f32 0.0, %v4428
  %4430 = vmatprep.mubr.f32.mxu0 0.0
  %4431 = vmatmul.mubr.f32.gmra.mrb[0].mxu0 %v1513
  %v4432 = vpop.f32.mrb[0].mxu0
  %v4433 = vadd.f32 0.0, %v4432
  %v4434 = vpop.f32.mrb[0].mxu0
  %v4435 = vadd.f32 0.0, %v4434
  %4436 = vmatprep.mubr.f32.mxu0 0.0
  %4437 = vmatmul.mubr.f32.gmra.mrb[0].mxu0 %v1516
  %v4438 = vpop.f32.mrb[0].mxu0
  %v4439 = vadd.f32 0.0, %v4438
  %v4440 = vpop.f32.mrb[0].mxu0
  %v4441 = vadd.f32 0.0, %v4440
  %4442 = vmatprep.mubr.f32.mxu0 0.0
  %4443 = vmatmul.mubr.f32.gmra.mrb[0].mxu0 %v1519
  %v4444 = vpop.f32.mrb[0].mxu0
  %v4445 = vadd.f32 0.0, %v4444
  %v4446 = vpop.f32.mrb[0].mxu0
  %v4447 = vadd.f32 0.0, %v4446
  %4448 = vmatprep.mubr.f32.mxu0 0.0
  %4449 = vmatmul.mubr.f32.gmra.mrb[0].mxu0 %v1522
  %v4450 = vpop.f32.mrb[0].mxu0
  %v4451 = vadd.f32 0.0, %v4450
  %v4452 = vpop.f32.mrb[0].mxu0
  %v4453 = vadd.f32 0.0, %v4452
  %4454 = vmatprep.mubr.f32.mxu0 0.0
  %4455 = vmatmul.mubr.f32.gmra.mrb[0].mxu0 %v1525
  %v4456 = vpop.f32.mrb[0].mxu0
  %v4457 = vadd.f32 0.0, %v4456
  %v4458 = vpop.f32.mrb[0].mxu0
  %v4459 = vadd.f32 0.0, %v4458
  %4460 = vmatprep.mubr.f32.mxu0 0.0
  %4461 = vmatmul.mubr.f32.gmra.mrb[0].mxu0 %v1528
  %v4462 = vpop.f32.mrb[0].mxu0
  %v4463 = vadd.f32 0.0, %v4462
  %v4464 = vpop.f32.mrb[0].mxu0
  %v4465 = vadd.f32 0.0, %v4464
  %4466 = vdwg.mxu0
  %v4467 = vadd.f32 %v4116, %v4325
  %v4468 = vadd.f32 %v4118, %v4327
  %v4469 = vadd.f32 %v4122, %v4331
  %v4470 = vadd.f32 %v4124, %v4333
  %v4471 = vadd.f32 %v4128, %v4337
  %v4472 = vadd.f32 %v4130, %v4339
  %v4473 = vadd.f32 %v4134, %v4343
  %v4474 = vadd.f32 %v4136, %v4345
  %v4475 = vadd.f32 %v4140, %v4349
  %v4476 = vadd.f32 %v4142, %v4351
  %v4477 = vadd.f32 %v4146, %v4355
  %v4478 = vadd.f32 %v4148, %v4357
  %v4479 = vadd.f32 %v4152, %v4361
  %v4480 = vadd.f32 %v4154, %v4363
  %v4481 = vadd.f32 %v4158, %v4367
  %v4482 = vadd.f32 %v4160, %v4369
  %v4483 = vadd.f32 %v4164, %v4373
  %v4484 = vadd.f32 %v4166, %v4375
  %v4485 = vadd.f32 %v4170, %v4379
  %v4486 = vadd.f32 %v4172, %v4381
  %v4487 = vadd.f32 %v4176, %v4385
  %v4488 = vadd.f32 %v4178, %v4387
  %v4489 = vadd.f32 %v4182, %v4391
  %v4490 = vadd.f32 %v4184, %v4393
  %v4491 = vadd.f32 %v4188, %v4397
  %v4492 = vadd.f32 %v4190, %v4399
  %v4493 = vadd.f32 %v4194, %v4403
  %v4494 = vadd.f32 %v4196, %v4405
  %v4495 = vadd.f32 %v4200, %v4409
  %v4496 = vadd.f32 %v4202, %v4411
  %v4497 = vadd.f32 %v4206, %v4415
  %v4498 = vadd.f32 %v4208, %v4417
  %v4499 = vadd.f32 %v4212, %v4421
  %v4500 = vadd.f32 %v4214, %v4423
  %v4501 = vadd.f32 %v4218, %v4427
  %v4502 = vadd.f32 %v4220, %v4429
  %v4503 = vadd.f32 %v4224, %v4433
  %v4504 = vadd.f32 %v4226, %v4435
  %v4505 = vadd.f32 %v4230, %v4439
  %v4506 = vadd.f32 %v4232, %v4441
  %v4507 = vadd.f32 %v4236, %v4445
  %v4508 = vadd.f32 %v4238, %v4447
  %v4509 = vadd.f32 %v4242, %v4451
  %v4510 = vadd.f32 %v4244, %v4453
  %v4511 = vadd.f32 %v4248, %v4457
  %v4512 = vadd.f32 %v4250, %v4459
  %v4513 = vadd.f32 %v4254, %v4463
  %v4514 = vadd.f32 %v4256, %v4465
  %4515 = vmatprep.subr.mxu0 %v1082
  %4516 = vmatpush1.msra.mxu0 %v1081
  %4517 = vmatprep.subr.mxu0 %v1084
  %4518 = vmatpush1.msra.mxu0 %v1083
  %4519 = vmatprep.subr.mxu0 %v1086
  %4520 = vmatpush1.msra.mxu0 %v1085
  %4521 = vmatprep.subr.mxu0 %v1165
  %4522 = vmatpush1.msra.mxu0 %v1162
  %4523 = vmatprep.subr.mxu0 0.0
  %4524 = vmatpush1.msra.mxu0 0.0
  %4525 = vmatprep.subr.mxu0 0.0
  %4526 = vmatpush1.msra.mxu0 0.0
  %4527 = vmatprep.subr.mxu0 0.0
  %4528 = vmatpush1.msra.mxu0 0.0
  %4529 = vmatprep.subr.mxu0 0.0
  %4530 = vmatpush1.msra.mxu0 0.0
  %4531 = vmatprep.subr.mxu0 0.0
  %4532 = vmatpush1.msra.mxu0 0.0
  %4533 = vmatprep.subr.mxu0 0.0
  %4534 = vmatpush1.msra.mxu0 0.0
  %4535 = vmatprep.subr.mxu0 0.0
  %4536 = vmatpush1.msra.mxu0 0.0
  %4537 = vmatprep.subr.mxu0 0.0
  %4538 = vmatpush1.msra.mxu0 0.0
  %4539 = vmatprep.subr.mxu0 0.0
  %4540 = vmatpush1.msra.mxu0 0.0
  %4541 = vmatprep.subr.mxu0 0.0
  %4542 = vmatpush1.msra.mxu0 0.0
  %4543 = vmatprep.subr.mxu0 0.0
  %4544 = vmatpush1.msra.mxu0 0.0
  %4545 = vmatprep.subr.mxu0 0.0
  %4546 = vmatpush1.msra.mxu0 0.0
  %4547 = vmatprep.subr.mxu0 0.0
  %4548 = vmatpush1.msra.mxu0 0.0
  %4549 = vmatprep.subr.mxu0 0.0
  %4550 = vmatpush1.msra.mxu0 0.0
  %4551 = vmatprep.subr.mxu0 0.0
  %4552 = vmatpush1.msra.mxu0 0.0
  %4553 = vmatprep.subr.mxu0 0.0
  %4554 = vmatpush1.msra.mxu0 0.0
  %4555 = vmatprep.subr.mxu0 0.0
  %4556 = vmatpush1.msra.mxu0 0.0
  %4557 = vmatprep.subr.mxu0 0.0
  %4558 = vmatpush1.msra.mxu0 0.0
  %4559 = vmatprep.subr.mxu0 0.0
  %4560 = vmatpush1.msra.mxu0 0.0
  %4561 = vmatprep.subr.mxu0 0.0
  %4562 = vmatpush1.msra.mxu0 0.0
  %4563 = vmatprep.subr.mxu0 0.0
  %4564 = vmatpush1.msra.mxu0 0.0
  %4565 = vmatprep.subr.mxu0 0.0
  %4566 = vmatpush1.msra.mxu0 0.0
  %4567 = vmatprep.subr.mxu0 0.0
  %4568 = vmatpush1.msra.mxu0 0.0
  %4569 = vmatprep.subr.mxu0 0.0
  %4570 = vmatpush1.msra.mxu0 0.0
  %4571 = vmatprep.subr.mxu0 0.0
  %4572 = vmatpush1.msra.mxu0 0.0
  %4573 = vmatprep.subr.mxu0 0.0
  %4574 = vmatpush1.msra.mxu0 0.0
  %4575 = vmatprep.subr.mxu0 0.0
  %4576 = vmatpush1.msra.mxu0 0.0
  %4577 = vmatprep.subr.mxu0 0.0
  %4578 = vmatpush1.msra.mxu0 0.0
  %4579 = vmatprep.mubr.f32.mxu0 0.0
  %4580 = vmatmul.mubr.f32.gmra.mrb[0].mxu0 %v2877
  %v4581 = vpop.f32.mrb[0].mxu0
  %v4582 = vadd.f32 0.0, %v4581
  %v4583 = vpop.f32.mrb[0].mxu0
  %v4584 = vadd.f32 0.0, %v4583
  %4585 = vmatprep.mubr.f32.mxu0 0.0
  %4586 = vmatmul.mubr.f32.gmra.mrb[0].mxu0 %v2880
  %v4587 = vpop.f32.mrb[0].mxu0
  %v4588 = vadd.f32 0.0, %v4587
  %v4589 = vpop.f32.mrb[0].mxu0
  %v4590 = vadd.f32 0.0, %v4589
  %4591 = vmatprep.mubr.f32.mxu0 0.0
  %4592 = vmatmul.mubr.f32.gmra.mrb[0].mxu0 %v2883
  %v4593 = vpop.f32.mrb[0].mxu0
  %v4594 = vadd.f32 0.0, %v4593
  %v4595 = vpop.f32.mrb[0].mxu0
  %v4596 = vadd.f32 0.0, %v4595
  %4597 = vmatprep.mubr.f32.mxu0 0.0
  %4598 = vmatmul.mubr.f32.gmra.mrb[0].mxu0 %v2886
  %v4599 = vpop.f32.mrb[0].mxu0
  %v4600 = vadd.f32 0.0, %v4599
  %v4601 = vpop.f32.mrb[0].mxu0
  %v4602 = vadd.f32 0.0, %v4601
  %4603 = vmatprep.mubr.f32.mxu0 0.0
  %4604 = vmatmul.mubr.f32.gmra.mrb[0].mxu0 %v2889
  %v4605 = vpop.f32.mrb[0].mxu0
  %v4606 = vadd.f32 0.0, %v4605
  %v4607 = vpop.f32.mrb[0].mxu0
  %v4608 = vadd.f32 0.0, %v4607
  %4609 = vmatprep.mubr.f32.mxu0 0.0
  %4610 = vmatmul.mubr.f32.gmra.mrb[0].mxu0 %v2892
  %v4611 = vpop.f32.mrb[0].mxu0
  %v4612 = vadd.f32 0.0, %v4611
  %v4613 = vpop.f32.mrb[0].mxu0
  %v4614 = vadd.f32 0.0, %v4613
  %4615 = vmatprep.mubr.f32.mxu0 0.0
  %4616 = vmatmul.mubr.f32.gmra.mrb[0].mxu0 %v2895
  %v4617 = vpop.f32.mrb[0].mxu0
  %v4618 = vadd.f32 0.0, %v4617
  %v4619 = vpop.f32.mrb[0].mxu0
  %v4620 = vadd.f32 0.0, %v4619
  %4621 = vmatprep.mubr.f32.mxu0 0.0
  %4622 = vmatmul.mubr.f32.gmra.mrb[0].mxu0 %v2898
  %v4623 = vpop.f32.mrb[0].mxu0
  %v4624 = vadd.f32 0.0, %v4623
  %v4625 = vpop.f32.mrb[0].mxu0
  %v4626 = vadd.f32 0.0, %v4625
  %4627 = vmatprep.mubr.f32.mxu0 0.0
  %4628 = vmatmul.mubr.f32.gmra.mrb[0].mxu0 %v2901
  %v4629 = vpop.f32.mrb[0].mxu0
  %v4630 = vadd.f32 0.0, %v4629
  %v4631 = vpop.f32.mrb[0].mxu0
  %v4632 = vadd.f32 0.0, %v4631
  %4633 = vmatprep.mubr.f32.mxu0 0.0
  %4634 = vmatmul.mubr.f32.gmra.mrb[0].mxu0 %v2904
  %v4635 = vpop.f32.mrb[0].mxu0
  %v4636 = vadd.f32 0.0, %v4635
  %v4637 = vpop.f32.mrb[0].mxu0
  %v4638 = vadd.f32 0.0, %v4637
  %4639 = vmatprep.mubr.f32.mxu0 0.0
  %4640 = vmatmul.mubr.f32.gmra.mrb[0].mxu0 %v2907
  %v4641 = vpop.f32.mrb[0].mxu0
  %v4642 = vadd.f32 0.0, %v4641
  %v4643 = vpop.f32.mrb[0].mxu0
  %v4644 = vadd.f32 0.0, %v4643
  %4645 = vmatprep.mubr.f32.mxu0 0.0
  %4646 = vmatmul.mubr.f32.gmra.mrb[0].mxu0 %v2910
  %v4647 = vpop.f32.mrb[0].mxu0
  %v4648 = vadd.f32 0.0, %v4647
  %v4649 = vpop.f32.mrb[0].mxu0
  %v4650 = vadd.f32 0.0, %v4649
  %4651 = vmatprep.mubr.f32.mxu0 0.0
  %4652 = vmatmul.mubr.f32.gmra.mrb[0].mxu0 %v2913
  %v4653 = vpop.f32.mrb[0].mxu0
  %v4654 = vadd.f32 0.0, %v4653
  %v4655 = vpop.f32.mrb[0].mxu0
  %v4656 = vadd.f32 0.0, %v4655
  %4657 = vmatprep.mubr.f32.mxu0 0.0
  %4658 = vmatmul.mubr.f32.gmra.mrb[0].mxu0 %v2916
  %v4659 = vpop.f32.mrb[0].mxu0
  %v4660 = vadd.f32 0.0, %v4659
  %v4661 = vpop.f32.mrb[0].mxu0
  %v4662 = vadd.f32 0.0, %v4661
  %4663 = vmatprep.mubr.f32.mxu0 0.0
  %4664 = vmatmul.mubr.f32.gmra.mrb[0].mxu0 %v2919
  %v4665 = vpop.f32.mrb[0].mxu0
  %v4666 = vadd.f32 0.0, %v4665
  %v4667 = vpop.f32.mrb[0].mxu0
  %v4668 = vadd.f32 0.0, %v4667
  %4669 = vmatprep.mubr.f32.mxu0 0.0
  %4670 = vmatmul.mubr.f32.gmra.mrb[0].mxu0 %v2922
  %v4671 = vpop.f32.mrb[0].mxu0
  %v4672 = vadd.f32 0.0, %v4671
  %v4673 = vpop.f32.mrb[0].mxu0
  %v4674 = vadd.f32 0.0, %v4673
  %4675 = vmatprep.mubr.f32.mxu0 0.0
  %4676 = vmatmul.mubr.f32.gmra.mrb[0].mxu0 %v2925
  %v4677 = vpop.f32.mrb[0].mxu0
  %v4678 = vadd.f32 0.0, %v4677
  %v4679 = vpop.f32.mrb[0].mxu0
  %v4680 = vadd.f32 0.0, %v4679
  %4681 = vmatprep.mubr.f32.mxu0 0.0
  %4682 = vmatmul.mubr.f32.gmra.mrb[0].mxu0 %v2928
  %v4683 = vpop.f32.mrb[0].mxu0
  %v4684 = vadd.f32 0.0, %v4683
  %v4685 = vpop.f32.mrb[0].mxu0
  %v4686 = vadd.f32 0.0, %v4685
  %4687 = vmatprep.mubr.f32.mxu0 0.0
  %4688 = vmatmul.mubr.f32.gmra.mrb[0].mxu0 %v2931
  %v4689 = vpop.f32.mrb[0].mxu0
  %v4690 = vadd.f32 0.0, %v4689
  %v4691 = vpop.f32.mrb[0].mxu0
  %v4692 = vadd.f32 0.0, %v4691
  %4693 = vmatprep.mubr.f32.mxu0 0.0
  %4694 = vmatmul.mubr.f32.gmra.mrb[0].mxu0 %v2934
  %v4695 = vpop.f32.mrb[0].mxu0
  %v4696 = vadd.f32 0.0, %v4695
  %v4697 = vpop.f32.mrb[0].mxu0
  %v4698 = vadd.f32 0.0, %v4697
  %4699 = vmatprep.mubr.f32.mxu0 0.0
  %4700 = vmatmul.mubr.f32.gmra.mrb[0].mxu0 %v2937
  %v4701 = vpop.f32.mrb[0].mxu0
  %v4702 = vadd.f32 0.0, %v4701
  %v4703 = vpop.f32.mrb[0].mxu0
  %v4704 = vadd.f32 0.0, %v4703
  %4705 = vmatprep.mubr.f32.mxu0 0.0
  %4706 = vmatmul.mubr.f32.gmra.mrb[0].mxu0 %v2940
  %v4707 = vpop.f32.mrb[0].mxu0
  %v4708 = vadd.f32 0.0, %v4707
  %v4709 = vpop.f32.mrb[0].mxu0
  %v4710 = vadd.f32 0.0, %v4709
  %4711 = vmatprep.mubr.f32.mxu0 0.0
  %4712 = vmatmul.mubr.f32.gmra.mrb[0].mxu0 %v2943
  %v4713 = vpop.f32.mrb[0].mxu0
  %v4714 = vadd.f32 0.0, %v4713
  %v4715 = vpop.f32.mrb[0].mxu0
  %v4716 = vadd.f32 0.0, %v4715
  %4717 = vmatprep.mubr.f32.mxu0 0.0
  %4718 = vmatmul.mubr.f32.gmra.mrb[0].mxu0 %v2946
  %v4719 = vpop.f32.mrb[0].mxu0
  %v4720 = vadd.f32 0.0, %v4719
  %v4721 = vpop.f32.mrb[0].mxu0
  %v4722 = vadd.f32 0.0, %v4721
  %4723 = vdwg.mxu0
  %v4724 = vadd.f32 %v4467, %v4582
  %v4725 = vadd.f32 %v4468, %v4584
  %v4726 = vadd.f32 %v4469, %v4588
  %v4727 = vadd.f32 %v4470, %v4590
  %v4728 = vadd.f32 %v4471, %v4594
  %v4729 = vadd.f32 %v4472, %v4596
  %v4730 = vadd.f32 %v4473, %v4600
  %v4731 = vadd.f32 %v4474, %v4602
  %v4732 = vadd.f32 %v4475, %v4606
  %v4733 = vadd.f32 %v4476, %v4608
  %v4734 = vadd.f32 %v4477, %v4612
  %v4735 = vadd.f32 %v4478, %v4614
  %v4736 = vadd.f32 %v4479, %v4618
  %v4737 = vadd.f32 %v4480, %v4620
  %v4738 = vadd.f32 %v4481, %v4624
  %v4739 = vadd.f32 %v4482, %v4626
  %v4740 = vadd.f32 %v4483, %v4630
  %v4741 = vadd.f32 %v4484, %v4632
  %v4742 = vadd.f32 %v4485, %v4636
  %v4743 = vadd.f32 %v4486, %v4638
  %v4744 = vadd.f32 %v4487, %v4642
  %v4745 = vadd.f32 %v4488, %v4644
  %v4746 = vadd.f32 %v4489, %v4648
  %v4747 = vadd.f32 %v4490, %v4650
  %v4748 = vadd.f32 %v4491, %v4654
  %v4749 = vadd.f32 %v4492, %v4656
  %v4750 = vadd.f32 %v4493, %v4660
  %v4751 = vadd.f32 %v4494, %v4662
  %v4752 = vadd.f32 %v4495, %v4666
  %v4753 = vadd.f32 %v4496, %v4668
  %v4754 = vadd.f32 %v4497, %v4672
  %v4755 = vadd.f32 %v4498, %v4674
  %v4756 = vadd.f32 %v4499, %v4678
  %v4757 = vadd.f32 %v4500, %v4680
  %v4758 = vadd.f32 %v4501, %v4684
  %v4759 = vadd.f32 %v4502, %v4686
  %v4760 = vadd.f32 %v4503, %v4690
  %v4761 = vadd.f32 %v4504, %v4692
  %v4762 = vadd.f32 %v4505, %v4696
  %v4763 = vadd.f32 %v4506, %v4698
  %v4764 = vadd.f32 %v4507, %v4702
  %v4765 = vadd.f32 %v4508, %v4704
  %v4766 = vadd.f32 %v4509, %v4708
  %v4767 = vadd.f32 %v4510, %v4710
  %v4768 = vadd.f32 %v4511, %v4714
  %v4769 = vadd.f32 %v4512, %v4716
  %v4770 = vadd.f32 %v4513, %v4720
  %v4771 = vadd.f32 %v4514, %v4722
  %s4772 = scalar_lea.vmem %s0, 480
  %v4773 = vld [vmem:[%s4772] sm:$0xff]
  %v4774 = vld [vmem:[%s4772 + $0x8] sm:$0xff]
  %v4775 = vld [vmem:[%s4772 + $0x10] sm:$0xff]
  %v4776 = vld [vmem:[%s4772 + $0x18] sm:$0xff]
  %v4777 = vld [vmem:[%s4772 + $0x20] sm:$0xff]
  %v4778 = vld [vmem:[%s4772 + $0x28] sm:$0xff]
  %v4779 = vld [vmem:[%s4772 + $0x30] sm:$0xff]
  %v4780 = vld [vmem:[%s4772 + $0x38] sm:$0xff]
  %v4781 = vld [vmem:[%s4772 + $0x40] sm:$0xff]
  %v4782 = vld [vmem:[%s4772 + $0x48] sm:$0xff]
  %v4783 = vld [vmem:[%s4772 + $0x50] sm:$0xff]
  %v4784 = vld [vmem:[%s4772 + $0x58] sm:$0xff]
  %v4785 = vld [vmem:[%s4772 + $0x60] sm:$0xff]
  %v4786 = vld [vmem:[%s4772 + $0x68] sm:$0xff]
  %v4787 = vld [vmem:[%s4772 + $0x70] sm:$0xff]
  %v4788 = vld [vmem:[%s4772 + $0x78] sm:$0xff]
  %v4789 = vld [vmem:[%s4772 + $0x80] sm:$0xff]
  %v4790 = vld [vmem:[%s4772 + $0x88] sm:$0xff]
  %v4791 = vld [vmem:[%s4772 + $0x90] sm:$0xff]
  %v4792 = vld [vmem:[%s4772 + $0x98] sm:$0xff]
  %v4793 = vld [vmem:[%s4772 + $0xa0] sm:$0xff]
  %v4794 = vld [vmem:[%s4772 + $0xa8] sm:$0xff]
  %v4795 = vld [vmem:[%s4772 + $0xb0] sm:$0xff]
  %v4796 = vld [vmem:[%s4772 + $0xb8] sm:$0xff]
  %v4798 = vsel %vm110, %v4773, 0
  %v4801 = vsel %vm110, %v4774, 0
  %v4804 = vsel %vm110, %v4775, 0
  %v4807 = vsel %vm110, %v4776, 0
  %v4810 = vsel %vm110, %v4777, 0
  %v4813 = vsel %vm110, %v4778, 0
  %v4816 = vsel %vm110, %v4779, 0
  %v4819 = vsel %vm110, %v4780, 0
  %v4822 = vsel %vm110, %v4781, 0
  %v4825 = vsel %vm110, %v4782, 0
  %v4828 = vsel %vm110, %v4783, 0
  %v4831 = vsel %vm110, %v4784, 0
  %v4834 = vsel %vm110, %v4785, 0
  %v4837 = vsel %vm110, %v4786, 0
  %v4840 = vsel %vm110, %v4787, 0
  %v4843 = vsel %vm110, %v4788, 0
  %v4846 = vsel %vm110, %v4789, 0
  %v4849 = vsel %vm110, %v4790, 0
  %v4852 = vsel %vm110, %v4791, 0
  %v4855 = vsel %vm110, %v4792, 0
  %v4858 = vsel %vm110, %v4793, 0
  %v4861 = vsel %vm110, %v4794, 0
  %v4864 = vsel %vm110, %v4795, 0
  %v4867 = vsel %vm110, %v4796, 0
  %4869 = vmatprep.subr.mxu0 %v1451
  %4870 = vmatpush1.msra.mxu0 %v1450
  %4871 = vmatprep.subr.mxu0 %v1453
  %4872 = vmatpush1.msra.mxu0 %v1452
  %4873 = vmatprep.subr.mxu0 %v1455
  %4874 = vmatpush1.msra.mxu0 %v1454
  %4875 = vmatprep.subr.mxu0 %v1534
  %4876 = vmatpush1.msra.mxu0 %v1531
  %4877 = vmatprep.subr.mxu0 0.0
  %4878 = vmatpush1.msra.mxu0 0.0
  %4879 = vmatprep.subr.mxu0 0.0
  %4880 = vmatpush1.msra.mxu0 0.0
  %4881 = vmatprep.subr.mxu0 0.0
  %4882 = vmatpush1.msra.mxu0 0.0
  %4883 = vmatprep.subr.mxu0 0.0
  %4884 = vmatpush1.msra.mxu0 0.0
  %4885 = vmatprep.subr.mxu0 0.0
  %4886 = vmatpush1.msra.mxu0 0.0
  %4887 = vmatprep.subr.mxu0 0.0
  %4888 = vmatpush1.msra.mxu0 0.0
  %4889 = vmatprep.subr.mxu0 0.0
  %4890 = vmatpush1.msra.mxu0 0.0
  %4891 = vmatprep.subr.mxu0 0.0
  %4892 = vmatpush1.msra.mxu0 0.0
  %4893 = vmatprep.subr.mxu0 0.0
  %4894 = vmatpush1.msra.mxu0 0.0
  %4895 = vmatprep.subr.mxu0 0.0
  %4896 = vmatpush1.msra.mxu0 0.0
  %4897 = vmatprep.subr.mxu0 0.0
  %4898 = vmatpush1.msra.mxu0 0.0
  %4899 = vmatprep.subr.mxu0 0.0
  %4900 = vmatpush1.msra.mxu0 0.0
  %4901 = vmatprep.subr.mxu0 0.0
  %4902 = vmatpush1.msra.mxu0 0.0
  %4903 = vmatprep.subr.mxu0 0.0
  %4904 = vmatpush1.msra.mxu0 0.0
  %4905 = vmatprep.subr.mxu0 0.0
  %4906 = vmatpush1.msra.mxu0 0.0
  %4907 = vmatprep.subr.mxu0 0.0
  %4908 = vmatpush1.msra.mxu0 0.0
  %4909 = vmatprep.subr.mxu0 0.0
  %4910 = vmatpush1.msra.mxu0 0.0
  %4911 = vmatprep.subr.mxu0 0.0
  %4912 = vmatpush1.msra.mxu0 0.0
  %4913 = vmatprep.subr.mxu0 0.0
  %4914 = vmatpush1.msra.mxu0 0.0
  %4915 = vmatprep.subr.mxu0 0.0
  %4916 = vmatpush1.msra.mxu0 0.0
  %4917 = vmatprep.subr.mxu0 0.0
  %4918 = vmatpush1.msra.mxu0 0.0
  %4919 = vmatprep.subr.mxu0 0.0
  %4920 = vmatpush1.msra.mxu0 0.0
  %4921 = vmatprep.subr.mxu0 0.0
  %4922 = vmatpush1.msra.mxu0 0.0
  %4923 = vmatprep.subr.mxu0 0.0
  %4924 = vmatpush1.msra.mxu0 0.0
  %4925 = vmatprep.subr.mxu0 0.0
  %4926 = vmatpush1.msra.mxu0 0.0
  %4927 = vmatprep.subr.mxu0 0.0
  %4928 = vmatpush1.msra.mxu0 0.0
  %4929 = vmatprep.subr.mxu0 0.0
  %4930 = vmatpush1.msra.mxu0 0.0
  %4931 = vmatprep.subr.mxu0 0.0
  %4932 = vmatpush1.msra.mxu0 0.0
  %4933 = vmatprep.mubr.f32.mxu0 0.0
  %4934 = vmatmul.mubr.f32.gmra.mrb[0].mxu0 %v4798
  %v4935 = vpop.f32.mrb[0].mxu0
  %v4936 = vadd.f32 0.0, %v4935
  %v4937 = vpop.f32.mrb[0].mxu0
  %v4938 = vadd.f32 0.0, %v4937
  %4939 = vmatprep.mubr.f32.mxu0 0.0
  %4940 = vmatmul.mubr.f32.gmra.mrb[0].mxu0 %v4801
  %v4941 = vpop.f32.mrb[0].mxu0
  %v4942 = vadd.f32 0.0, %v4941
  %v4943 = vpop.f32.mrb[0].mxu0
  %v4944 = vadd.f32 0.0, %v4943
  %4945 = vmatprep.mubr.f32.mxu0 0.0
  %4946 = vmatmul.mubr.f32.gmra.mrb[0].mxu0 %v4804
  %v4947 = vpop.f32.mrb[0].mxu0
  %v4948 = vadd.f32 0.0, %v4947
  %v4949 = vpop.f32.mrb[0].mxu0
  %v4950 = vadd.f32 0.0, %v4949
  %4951 = vmatprep.mubr.f32.mxu0 0.0
  %4952 = vmatmul.mubr.f32.gmra.mrb[0].mxu0 %v4807
  %v4953 = vpop.f32.mrb[0].mxu0
  %v4954 = vadd.f32 0.0, %v4953
  %v4955 = vpop.f32.mrb[0].mxu0
  %v4956 = vadd.f32 0.0, %v4955
  %4957 = vmatprep.mubr.f32.mxu0 0.0
  %4958 = vmatmul.mubr.f32.gmra.mrb[0].mxu0 %v4810
  %v4959 = vpop.f32.mrb[0].mxu0
  %v4960 = vadd.f32 0.0, %v4959
  %v4961 = vpop.f32.mrb[0].mxu0
  %v4962 = vadd.f32 0.0, %v4961
  %4963 = vmatprep.mubr.f32.mxu0 0.0
  %4964 = vmatmul.mubr.f32.gmra.mrb[0].mxu0 %v4813
  %v4965 = vpop.f32.mrb[0].mxu0
  %v4966 = vadd.f32 0.0, %v4965
  %v4967 = vpop.f32.mrb[0].mxu0
  %v4968 = vadd.f32 0.0, %v4967
  %4969 = vmatprep.mubr.f32.mxu0 0.0
  %4970 = vmatmul.mubr.f32.gmra.mrb[0].mxu0 %v4816
  %v4971 = vpop.f32.mrb[0].mxu0
  %v4972 = vadd.f32 0.0, %v4971
  %v4973 = vpop.f32.mrb[0].mxu0
  %v4974 = vadd.f32 0.0, %v4973
  %4975 = vmatprep.mubr.f32.mxu0 0.0
  %4976 = vmatmul.mubr.f32.gmra.mrb[0].mxu0 %v4819
  %v4977 = vpop.f32.mrb[0].mxu0
  %v4978 = vadd.f32 0.0, %v4977
  %v4979 = vpop.f32.mrb[0].mxu0
  %v4980 = vadd.f32 0.0, %v4979
  %4981 = vmatprep.mubr.f32.mxu0 0.0
  %4982 = vmatmul.mubr.f32.gmra.mrb[0].mxu0 %v4822
  %v4983 = vpop.f32.mrb[0].mxu0
  %v4984 = vadd.f32 0.0, %v4983
  %v4985 = vpop.f32.mrb[0].mxu0
  %v4986 = vadd.f32 0.0, %v4985
  %4987 = vmatprep.mubr.f32.mxu0 0.0
  %4988 = vmatmul.mubr.f32.gmra.mrb[0].mxu0 %v4825
  %v4989 = vpop.f32.mrb[0].mxu0
  %v4990 = vadd.f32 0.0, %v4989
  %v4991 = vpop.f32.mrb[0].mxu0
  %v4992 = vadd.f32 0.0, %v4991
  %4993 = vmatprep.mubr.f32.mxu0 0.0
  %4994 = vmatmul.mubr.f32.gmra.mrb[0].mxu0 %v4828
  %v4995 = vpop.f32.mrb[0].mxu0
  %v4996 = vadd.f32 0.0, %v4995
  %v4997 = vpop.f32.mrb[0].mxu0
  %v4998 = vadd.f32 0.0, %v4997
  %4999 = vmatprep.mubr.f32.mxu0 0.0
  %5000 = vmatmul.mubr.f32.gmra.mrb[0].mxu0 %v4831
  %v5001 = vpop.f32.mrb[0].mxu0
  %v5002 = vadd.f32 0.0, %v5001
  %v5003 = vpop.f32.mrb[0].mxu0
  %v5004 = vadd.f32 0.0, %v5003
  %5005 = vmatprep.mubr.f32.mxu0 0.0
  %5006 = vmatmul.mubr.f32.gmra.mrb[0].mxu0 %v4834
  %v5007 = vpop.f32.mrb[0].mxu0
  %v5008 = vadd.f32 0.0, %v5007
  %v5009 = vpop.f32.mrb[0].mxu0
  %v5010 = vadd.f32 0.0, %v5009
  %5011 = vmatprep.mubr.f32.mxu0 0.0
  %5012 = vmatmul.mubr.f32.gmra.mrb[0].mxu0 %v4837
  %v5013 = vpop.f32.mrb[0].mxu0
  %v5014 = vadd.f32 0.0, %v5013
  %v5015 = vpop.f32.mrb[0].mxu0
  %v5016 = vadd.f32 0.0, %v5015
  %5017 = vmatprep.mubr.f32.mxu0 0.0
  %5018 = vmatmul.mubr.f32.gmra.mrb[0].mxu0 %v4840
  %v5019 = vpop.f32.mrb[0].mxu0
  %v5020 = vadd.f32 0.0, %v5019
  %v5021 = vpop.f32.mrb[0].mxu0
  %v5022 = vadd.f32 0.0, %v5021
  %5023 = vmatprep.mubr.f32.mxu0 0.0
  %5024 = vmatmul.mubr.f32.gmra.mrb[0].mxu0 %v4843
  %v5025 = vpop.f32.mrb[0].mxu0
  %v5026 = vadd.f32 0.0, %v5025
  %v5027 = vpop.f32.mrb[0].mxu0
  %v5028 = vadd.f32 0.0, %v5027
  %5029 = vmatprep.mubr.f32.mxu0 0.0
  %5030 = vmatmul.mubr.f32.gmra.mrb[0].mxu0 %v4846
  %v5031 = vpop.f32.mrb[0].mxu0
  %v5032 = vadd.f32 0.0, %v5031
  %v5033 = vpop.f32.mrb[0].mxu0
  %v5034 = vadd.f32 0.0, %v5033
  %5035 = vmatprep.mubr.f32.mxu0 0.0
  %5036 = vmatmul.mubr.f32.gmra.mrb[0].mxu0 %v4849
  %v5037 = vpop.f32.mrb[0].mxu0
  %v5038 = vadd.f32 0.0, %v5037
  %v5039 = vpop.f32.mrb[0].mxu0
  %v5040 = vadd.f32 0.0, %v5039
  %5041 = vmatprep.mubr.f32.mxu0 0.0
  %5042 = vmatmul.mubr.f32.gmra.mrb[0].mxu0 %v4852
  %v5043 = vpop.f32.mrb[0].mxu0
  %v5044 = vadd.f32 0.0, %v5043
  %v5045 = vpop.f32.mrb[0].mxu0
  %v5046 = vadd.f32 0.0, %v5045
  %5047 = vmatprep.mubr.f32.mxu0 0.0
  %5048 = vmatmul.mubr.f32.gmra.mrb[0].mxu0 %v4855
  %v5049 = vpop.f32.mrb[0].mxu0
  %v5050 = vadd.f32 0.0, %v5049
  %v5051 = vpop.f32.mrb[0].mxu0
  %v5052 = vadd.f32 0.0, %v5051
  %5053 = vmatprep.mubr.f32.mxu0 0.0
  %5054 = vmatmul.mubr.f32.gmra.mrb[0].mxu0 %v4858
  %v5055 = vpop.f32.mrb[0].mxu0
  %v5056 = vadd.f32 0.0, %v5055
  %v5057 = vpop.f32.mrb[0].mxu0
  %v5058 = vadd.f32 0.0, %v5057
  %5059 = vmatprep.mubr.f32.mxu0 0.0
  %5060 = vmatmul.mubr.f32.gmra.mrb[0].mxu0 %v4861
  %v5061 = vpop.f32.mrb[0].mxu0
  %v5062 = vadd.f32 0.0, %v5061
  %v5063 = vpop.f32.mrb[0].mxu0
  %v5064 = vadd.f32 0.0, %v5063
  %5065 = vmatprep.mubr.f32.mxu0 0.0
  %5066 = vmatmul.mubr.f32.gmra.mrb[0].mxu0 %v4864
  %v5067 = vpop.f32.mrb[0].mxu0
  %v5068 = vadd.f32 0.0, %v5067
  %v5069 = vpop.f32.mrb[0].mxu0
  %v5070 = vadd.f32 0.0, %v5069
  %5071 = vmatprep.mubr.f32.mxu0 0.0
  %5072 = vmatmul.mubr.f32.gmra.mrb[0].mxu0 %v4867
  %v5073 = vpop.f32.mrb[0].mxu0
  %v5074 = vadd.f32 0.0, %v5073
  %v5075 = vpop.f32.mrb[0].mxu0
  %v5076 = vadd.f32 0.0, %v5075
  %5077 = vdwg.mxu0
  %v5078 = vadd.f32 %v4724, %v4936
  %v5079 = vadd.f32 %v4725, %v4938
  %v5080 = vadd.f32 %v4726, %v4942
  %v5081 = vadd.f32 %v4727, %v4944
  %v5082 = vadd.f32 %v4728, %v4948
  %v5083 = vadd.f32 %v4729, %v4950
  %v5084 = vadd.f32 %v4730, %v4954
  %v5085 = vadd.f32 %v4731, %v4956
  %v5086 = vadd.f32 %v4732, %v4960
  %v5087 = vadd.f32 %v4733, %v4962
  %v5088 = vadd.f32 %v4734, %v4966
  %v5089 = vadd.f32 %v4735, %v4968
  %v5090 = vadd.f32 %v4736, %v4972
  %v5091 = vadd.f32 %v4737, %v4974
  %v5092 = vadd.f32 %v4738, %v4978
  %v5093 = vadd.f32 %v4739, %v4980
  %v5094 = vadd.f32 %v4740, %v4984
  %v5095 = vadd.f32 %v4741, %v4986
  %v5096 = vadd.f32 %v4742, %v4990
  %v5097 = vadd.f32 %v4743, %v4992
  %v5098 = vadd.f32 %v4744, %v4996
  %v5099 = vadd.f32 %v4745, %v4998
  %v5100 = vadd.f32 %v4746, %v5002
  %v5101 = vadd.f32 %v4747, %v5004
  %v5102 = vadd.f32 %v4748, %v5008
  %v5103 = vadd.f32 %v4749, %v5010
  %v5104 = vadd.f32 %v4750, %v5014
  %v5105 = vadd.f32 %v4751, %v5016
  %v5106 = vadd.f32 %v4752, %v5020
  %v5107 = vadd.f32 %v4753, %v5022
  %v5108 = vadd.f32 %v4754, %v5026
  %v5109 = vadd.f32 %v4755, %v5028
  %v5110 = vadd.f32 %v4756, %v5032
  %v5111 = vadd.f32 %v4757, %v5034
  %v5112 = vadd.f32 %v4758, %v5038
  %v5113 = vadd.f32 %v4759, %v5040
  %v5114 = vadd.f32 %v4760, %v5044
  %v5115 = vadd.f32 %v4761, %v5046
  %v5116 = vadd.f32 %v4762, %v5050
  %v5117 = vadd.f32 %v4763, %v5052
  %v5118 = vadd.f32 %v4764, %v5056
  %v5119 = vadd.f32 %v4765, %v5058
  %v5120 = vadd.f32 %v4766, %v5062
  %v5121 = vadd.f32 %v4767, %v5064
  %v5122 = vadd.f32 %v4768, %v5068
  %v5123 = vadd.f32 %v4769, %v5070
  %v5124 = vadd.f32 %v4770, %v5074
  %v5125 = vadd.f32 %v4771, %v5076
  %v5126 = vadd.f32 %v5078, %v1798
  %v5127 = vadd.f32 %v5079, %v1802
  %v5128 = vadd.f32 %v5080, %v1798
  %v5129 = vadd.f32 %v5081, %v1802
  %v5130 = vadd.f32 %v5082, %v1798
  %v5131 = vadd.f32 %v5083, %v1802
  %v5132 = vadd.f32 %v5084, %v1798
  %v5133 = vadd.f32 %v5085, %v1802
  %v5134 = vadd.f32 %v5086, %v1798
  %v5135 = vadd.f32 %v5087, %v1802
  %v5136 = vadd.f32 %v5088, %v1798
  %v5137 = vadd.f32 %v5089, %v1802
  %v5138 = vadd.f32 %v5090, %v1798
  %v5139 = vadd.f32 %v5091, %v1802
  %v5140 = vadd.f32 %v5092, %v1798
  %v5141 = vadd.f32 %v5093, %v1802
  %v5142 = vadd.f32 %v5094, %v1798
  %v5143 = vadd.f32 %v5095, %v1802
  %v5144 = vadd.f32 %v5096, %v1798
  %v5145 = vadd.f32 %v5097, %v1802
  %v5146 = vadd.f32 %v5098, %v1798
  %v5147 = vadd.f32 %v5099, %v1802
  %v5148 = vadd.f32 %v5100, %v1798
  %v5149 = vadd.f32 %v5101, %v1802
  %v5150 = vadd.f32 %v5102, %v1798
  %v5151 = vadd.f32 %v5103, %v1802
  %v5152 = vadd.f32 %v5104, %v1798
  %v5153 = vadd.f32 %v5105, %v1802
  %v5154 = vadd.f32 %v5106, %v1798
  %v5155 = vadd.f32 %v5107, %v1802
  %v5156 = vadd.f32 %v5108, %v1798
  %v5157 = vadd.f32 %v5109, %v1802
  %v5158 = vadd.f32 %v5110, %v1798
  %v5159 = vadd.f32 %v5111, %v1802
  %v5160 = vadd.f32 %v5112, %v1798
  %v5161 = vadd.f32 %v5113, %v1802
  %v5162 = vadd.f32 %v5114, %v1798
  %v5163 = vadd.f32 %v5115, %v1802
  %v5164 = vadd.f32 %v5116, %v1798
  %v5165 = vadd.f32 %v5117, %v1802
  %v5166 = vadd.f32 %v5118, %v1798
  %v5167 = vadd.f32 %v5119, %v1802
  %v5168 = vadd.f32 %v5120, %v1798
  %v5169 = vadd.f32 %v5121, %v1802
  %v5170 = vadd.f32 %v5122, %v1798
  %v5171 = vadd.f32 %v5123, %v1802
  %v5172 = vadd.f32 %v5124, %v1798
  %v5173 = vadd.f32 %v5125, %v1802
  %v5174 = vtanh.pop %v5126
  %v5175 = vtanh.pop %v5127
  %v5176 = vtanh.pop %v5128
  %v5177 = vtanh.pop %v5129
  %v5178 = vtanh.pop %v5130
  %v5179 = vtanh.pop %v5131
  %v5180 = vtanh.pop %v5132
  %v5181 = vtanh.pop %v5133
  %v5182 = vtanh.pop %v5134
  %v5183 = vtanh.pop %v5135
  %v5184 = vtanh.pop %v5136
  %v5185 = vtanh.pop %v5137
  %v5186 = vtanh.pop %v5138
  %v5187 = vtanh.pop %v5139
  %v5188 = vtanh.pop %v5140
  %v5189 = vtanh.pop %v5141
  %v5190 = vtanh.pop %v5142
  %v5191 = vtanh.pop %v5143
  %v5192 = vtanh.pop %v5144
  %v5193 = vtanh.pop %v5145
  %v5194 = vtanh.pop %v5146
  %v5195 = vtanh.pop %v5147
  %v5196 = vtanh.pop %v5148
  %v5197 = vtanh.pop %v5149
  %v5198 = vtanh.pop %v5150
  %v5199 = vtanh.pop %v5151
  %v5200 = vtanh.pop %v5152
  %v5201 = vtanh.pop %v5153
  %v5202 = vtanh.pop %v5154
  %v5203 = vtanh.pop %v5155
  %v5204 = vtanh.pop %v5156
  %v5205 = vtanh.pop %v5157
  %v5206 = vtanh.pop %v5158
  %v5207 = vtanh.pop %v5159
  %v5208 = vtanh.pop %v5160
  %v5209 = vtanh.pop %v5161
  %v5210 = vtanh.pop %v5162
  %v5211 = vtanh.pop %v5163
  %v5212 = vtanh.pop %v5164
  %v5213 = vtanh.pop %v5165
  %v5214 = vtanh.pop %v5166
  %v5215 = vtanh.pop %v5167
  %v5216 = vtanh.pop %v5168
  %v5217 = vtanh.pop %v5169
  %v5218 = vtanh.pop %v5170
  %v5219 = vtanh.pop %v5171
  %v5220 = vtanh.pop %v5172
  %v5221 = vtanh.pop %v5173
  %5222 = vmatprep.subr.mxu0 %v103
  %5223 = vmatpush1.msra.mxu0 %v102
  %5224 = vmatprep.subr.mxu0 %v105
  %5225 = vmatpush1.msra.mxu0 %v104
  %5226 = vmatprep.subr.mxu0 %v107
  %5227 = vmatpush1.msra.mxu0 %v106
  %5228 = vmatprep.subr.mxu0 %v188
  %5229 = vmatpush1.msra.mxu0 %v185
  %5230 = vmatprep.subr.mxu0 0.0
  %5231 = vmatpush1.msra.mxu0 0.0
  %5232 = vmatprep.subr.mxu0 0.0
  %5233 = vmatpush1.msra.mxu0 0.0
  %5234 = vmatprep.subr.mxu0 0.0
  %5235 = vmatpush1.msra.mxu0 0.0
  %5236 = vmatprep.subr.mxu0 0.0
  %5237 = vmatpush1.msra.mxu0 0.0
  %5238 = vmatprep.subr.mxu0 0.0
  %5239 = vmatpush1.msra.mxu0 0.0
  %5240 = vmatprep.subr.mxu0 0.0
  %5241 = vmatpush1.msra.mxu0 0.0
  %5242 = vmatprep.subr.mxu0 0.0
  %5243 = vmatpush1.msra.mxu0 0.0
  %5244 = vmatprep.subr.mxu0 0.0
  %5245 = vmatpush1.msra.mxu0 0.0
  %5246 = vmatprep.subr.mxu0 0.0
  %5247 = vmatpush1.msra.mxu0 0.0
  %5248 = vmatprep.subr.mxu0 0.0
  %5249 = vmatpush1.msra.mxu0 0.0
  %5250 = vmatprep.subr.mxu0 0.0
  %5251 = vmatpush1.msra.mxu0 0.0
  %5252 = vmatprep.subr.mxu0 0.0
  %5253 = vmatpush1.msra.mxu0 0.0
  %5254 = vmatprep.subr.mxu0 0.0
  %5255 = vmatpush1.msra.mxu0 0.0
  %5256 = vmatprep.subr.mxu0 0.0
  %5257 = vmatpush1.msra.mxu0 0.0
  %5258 = vmatprep.subr.mxu0 0.0
  %5259 = vmatpush1.msra.mxu0 0.0
  %5260 = vmatprep.subr.mxu0 0.0
  %5261 = vmatpush1.msra.mxu0 0.0
  %5262 = vmatprep.subr.mxu0 0.0
  %5263 = vmatpush1.msra.mxu0 0.0
  %5264 = vmatprep.subr.mxu0 0.0
  %5265 = vmatpush1.msra.mxu0 0.0
  %5266 = vmatprep.subr.mxu0 0.0
  %5267 = vmatpush1.msra.mxu0 0.0
  %5268 = vmatprep.subr.mxu0 0.0
  %5269 = vmatpush1.msra.mxu0 0.0
  %5270 = vmatprep.subr.mxu0 0.0
  %5271 = vmatpush1.msra.mxu0 0.0
  %5272 = vmatprep.subr.mxu0 0.0
  %5273 = vmatpush1.msra.mxu0 0.0
  %5274 = vmatprep.subr.mxu0 0.0
  %5275 = vmatpush1.msra.mxu0 0.0
  %5276 = vmatprep.subr.mxu0 0.0
  %5277 = vmatpush1.msra.mxu0 0.0
  %5278 = vmatprep.subr.mxu0 0.0
  %5279 = vmatpush1.msra.mxu0 0.0
  %5280 = vmatprep.subr.mxu0 0.0
  %5281 = vmatpush1.msra.mxu0 0.0
  %5282 = vmatprep.subr.mxu0 0.0
  %5283 = vmatpush1.msra.mxu0 0.0
  %5284 = vmatprep.subr.mxu0 0.0
  %5285 = vmatpush1.msra.mxu0 0.0
  %5286 = vmatprep.mubr.f32.mxu0 0.0
  %5287 = vmatmul.mubr.f32.gmra.mrb[0].mxu0 %v1459
  %v5288 = vpop.f32.mrb[0].mxu0
  %v5289 = vadd.f32 0.0, %v5288
  %v5290 = vpop.f32.mrb[0].mxu0
  %v5291 = vadd.f32 0.0, %v5290
  %5292 = vmatprep.mubr.f32.mxu0 0.0
  %5293 = vmatmul.mubr.f32.gmra.mrb[0].mxu0 %v1462
  %v5294 = vpop.f32.mrb[0].mxu0
  %v5295 = vadd.f32 0.0, %v5294
  %v5296 = vpop.f32.mrb[0].mxu0
  %v5297 = vadd.f32 0.0, %v5296
  %5298 = vmatprep.mubr.f32.mxu0 0.0
  %5299 = vmatmul.mubr.f32.gmra.mrb[0].mxu0 %v1465
  %v5300 = vpop.f32.mrb[0].mxu0
  %v5301 = vadd.f32 0.0, %v5300
  %v5302 = vpop.f32.mrb[0].mxu0
  %v5303 = vadd.f32 0.0, %v5302
  %5304 = vmatprep.mubr.f32.mxu0 0.0
  %5305 = vmatmul.mubr.f32.gmra.mrb[0].mxu0 %v1468
  %v5306 = vpop.f32.mrb[0].mxu0
  %v5307 = vadd.f32 0.0, %v5306
  %v5308 = vpop.f32.mrb[0].mxu0
  %v5309 = vadd.f32 0.0, %v5308
  %5310 = vmatprep.mubr.f32.mxu0 0.0
  %5311 = vmatmul.mubr.f32.gmra.mrb[0].mxu0 %v1471
  %v5312 = vpop.f32.mrb[0].mxu0
  %v5313 = vadd.f32 0.0, %v5312
  %v5314 = vpop.f32.mrb[0].mxu0
  %v5315 = vadd.f32 0.0, %v5314
  %5316 = vmatprep.mubr.f32.mxu0 0.0
  %5317 = vmatmul.mubr.f32.gmra.mrb[0].mxu0 %v1474
  %v5318 = vpop.f32.mrb[0].mxu0
  %v5319 = vadd.f32 0.0, %v5318
  %v5320 = vpop.f32.mrb[0].mxu0
  %v5321 = vadd.f32 0.0, %v5320
  %5322 = vmatprep.mubr.f32.mxu0 0.0
  %5323 = vmatmul.mubr.f32.gmra.mrb[0].mxu0 %v1477
  %v5324 = vpop.f32.mrb[0].mxu0
  %v5325 = vadd.f32 0.0, %v5324
  %v5326 = vpop.f32.mrb[0].mxu0
  %v5327 = vadd.f32 0.0, %v5326
  %5328 = vmatprep.mubr.f32.mxu0 0.0
  %5329 = vmatmul.mubr.f32.gmra.mrb[0].mxu0 %v1480
  %v5330 = vpop.f32.mrb[0].mxu0
  %v5331 = vadd.f32 0.0, %v5330
  %v5332 = vpop.f32.mrb[0].mxu0
  %v5333 = vadd.f32 0.0, %v5332
  %5334 = vmatprep.mubr.f32.mxu0 0.0
  %5335 = vmatmul.mubr.f32.gmra.mrb[0].mxu0 %v1483
  %v5336 = vpop.f32.mrb[0].mxu0
  %v5337 = vadd.f32 0.0, %v5336
  %v5338 = vpop.f32.mrb[0].mxu0
  %v5339 = vadd.f32 0.0, %v5338
  %5340 = vmatprep.mubr.f32.mxu0 0.0
  %5341 = vmatmul.mubr.f32.gmra.mrb[0].mxu0 %v1486
  %v5342 = vpop.f32.mrb[0].mxu0
  %v5343 = vadd.f32 0.0, %v5342
  %v5344 = vpop.f32.mrb[0].mxu0
  %v5345 = vadd.f32 0.0, %v5344
  %5346 = vmatprep.mubr.f32.mxu0 0.0
  %5347 = vmatmul.mubr.f32.gmra.mrb[0].mxu0 %v1489
  %v5348 = vpop.f32.mrb[0].mxu0
  %v5349 = vadd.f32 0.0, %v5348
  %v5350 = vpop.f32.mrb[0].mxu0
  %v5351 = vadd.f32 0.0, %v5350
  %5352 = vmatprep.mubr.f32.mxu0 0.0
  %5353 = vmatmul.mubr.f32.gmra.mrb[0].mxu0 %v1492
  %v5354 = vpop.f32.mrb[0].mxu0
  %v5355 = vadd.f32 0.0, %v5354
  %v5356 = vpop.f32.mrb[0].mxu0
  %v5357 = vadd.f32 0.0, %v5356
  %5358 = vmatprep.mubr.f32.mxu0 0.0
  %5359 = vmatmul.mubr.f32.gmra.mrb[0].mxu0 %v1495
  %v5360 = vpop.f32.mrb[0].mxu0
  %v5361 = vadd.f32 0.0, %v5360
  %v5362 = vpop.f32.mrb[0].mxu0
  %v5363 = vadd.f32 0.0, %v5362
  %5364 = vmatprep.mubr.f32.mxu0 0.0
  %5365 = vmatmul.mubr.f32.gmra.mrb[0].mxu0 %v1498
  %v5366 = vpop.f32.mrb[0].mxu0
  %v5367 = vadd.f32 0.0, %v5366
  %v5368 = vpop.f32.mrb[0].mxu0
  %v5369 = vadd.f32 0.0, %v5368
  %5370 = vmatprep.mubr.f32.mxu0 0.0
  %5371 = vmatmul.mubr.f32.gmra.mrb[0].mxu0 %v1501
  %v5372 = vpop.f32.mrb[0].mxu0
  %v5373 = vadd.f32 0.0, %v5372
  %v5374 = vpop.f32.mrb[0].mxu0
  %v5375 = vadd.f32 0.0, %v5374
  %5376 = vmatprep.mubr.f32.mxu0 0.0
  %5377 = vmatmul.mubr.f32.gmra.mrb[0].mxu0 %v1504
  %v5378 = vpop.f32.mrb[0].mxu0
  %v5379 = vadd.f32 0.0, %v5378
  %v5380 = vpop.f32.mrb[0].mxu0
  %v5381 = vadd.f32 0.0, %v5380
  %5382 = vmatprep.mubr.f32.mxu0 0.0
  %5383 = vmatmul.mubr.f32.gmra.mrb[0].mxu0 %v1507
  %v5384 = vpop.f32.mrb[0].mxu0
  %v5385 = vadd.f32 0.0, %v5384
  %v5386 = vpop.f32.mrb[0].mxu0
  %v5387 = vadd.f32 0.0, %v5386
  %5388 = vmatprep.mubr.f32.mxu0 0.0
  %5389 = vmatmul.mubr.f32.gmra.mrb[0].mxu0 %v1510
  %v5390 = vpop.f32.mrb[0].mxu0
  %v5391 = vadd.f32 0.0, %v5390
  %v5392 = vpop.f32.mrb[0].mxu0
  %v5393 = vadd.f32 0.0, %v5392
  %5394 = vmatprep.mubr.f32.mxu0 0.0
  %5395 = vmatmul.mubr.f32.gmra.mrb[0].mxu0 %v1513
  %v5396 = vpop.f32.mrb[0].mxu0
  %v5397 = vadd.f32 0.0, %v5396
  %v5398 = vpop.f32.mrb[0].mxu0
  %v5399 = vadd.f32 0.0, %v5398
  %5400 = vmatprep.mubr.f32.mxu0 0.0
  %5401 = vmatmul.mubr.f32.gmra.mrb[0].mxu0 %v1516
  %v5402 = vpop.f32.mrb[0].mxu0
  %v5403 = vadd.f32 0.0, %v5402
  %v5404 = vpop.f32.mrb[0].mxu0
  %v5405 = vadd.f32 0.0, %v5404
  %5406 = vmatprep.mubr.f32.mxu0 0.0
  %5407 = vmatmul.mubr.f32.gmra.mrb[0].mxu0 %v1519
  %v5408 = vpop.f32.mrb[0].mxu0
  %v5409 = vadd.f32 0.0, %v5408
  %v5410 = vpop.f32.mrb[0].mxu0
  %v5411 = vadd.f32 0.0, %v5410
  %5412 = vmatprep.mubr.f32.mxu0 0.0
  %5413 = vmatmul.mubr.f32.gmra.mrb[0].mxu0 %v1522
  %v5414 = vpop.f32.mrb[0].mxu0
  %v5415 = vadd.f32 0.0, %v5414
  %v5416 = vpop.f32.mrb[0].mxu0
  %v5417 = vadd.f32 0.0, %v5416
  %5418 = vmatprep.mubr.f32.mxu0 0.0
  %5419 = vmatmul.mubr.f32.gmra.mrb[0].mxu0 %v1525
  %v5420 = vpop.f32.mrb[0].mxu0
  %v5421 = vadd.f32 0.0, %v5420
  %v5422 = vpop.f32.mrb[0].mxu0
  %v5423 = vadd.f32 0.0, %v5422
  %5424 = vmatprep.mubr.f32.mxu0 0.0
  %5425 = vmatmul.mubr.f32.gmra.mrb[0].mxu0 %v1528
  %v5426 = vpop.f32.mrb[0].mxu0
  %v5427 = vadd.f32 0.0, %v5426
  %v5428 = vpop.f32.mrb[0].mxu0
  %v5429 = vadd.f32 0.0, %v5428
  %5430 = vdwg.mxu0
  %5431 = vmatprep.subr.mxu0 %v69
  %5432 = vmatpush1.msra.mxu0 %v68
  %5433 = vmatprep.subr.mxu0 %v71
  %5434 = vmatpush1.msra.mxu0 %v70
  %5435 = vmatprep.subr.mxu0 %v73
  %5436 = vmatpush1.msra.mxu0 %v72
  %5437 = vmatprep.subr.mxu0 %v475
  %5438 = vmatpush1.msra.mxu0 %v472
  %5439 = vmatprep.subr.mxu0 0.0
  %5440 = vmatpush1.msra.mxu0 0.0
  %5441 = vmatprep.subr.mxu0 0.0
  %5442 = vmatpush1.msra.mxu0 0.0
  %5443 = vmatprep.subr.mxu0 0.0
  %5444 = vmatpush1.msra.mxu0 0.0
  %5445 = vmatprep.subr.mxu0 0.0
  %5446 = vmatpush1.msra.mxu0 0.0
  %5447 = vmatprep.subr.mxu0 0.0
  %5448 = vmatpush1.msra.mxu0 0.0
  %5449 = vmatprep.subr.mxu0 0.0
  %5450 = vmatpush1.msra.mxu0 0.0
  %5451 = vmatprep.subr.mxu0 0.0
  %5452 = vmatpush1.msra.mxu0 0.0
  %5453 = vmatprep.subr.mxu0 0.0
  %5454 = vmatpush1.msra.mxu0 0.0
  %5455 = vmatprep.subr.mxu0 0.0
  %5456 = vmatpush1.msra.mxu0 0.0
  %5457 = vmatprep.subr.mxu0 0.0
  %5458 = vmatpush1.msra.mxu0 0.0
  %5459 = vmatprep.subr.mxu0 0.0
  %5460 = vmatpush1.msra.mxu0 0.0
  %5461 = vmatprep.subr.mxu0 0.0
  %5462 = vmatpush1.msra.mxu0 0.0
  %5463 = vmatprep.subr.mxu0 0.0
  %5464 = vmatpush1.msra.mxu0 0.0
  %5465 = vmatprep.subr.mxu0 0.0
  %5466 = vmatpush1.msra.mxu0 0.0
  %5467 = vmatprep.subr.mxu0 0.0
  %5468 = vmatpush1.msra.mxu0 0.0
  %5469 = vmatprep.subr.mxu0 0.0
  %5470 = vmatpush1.msra.mxu0 0.0
  %5471 = vmatprep.subr.mxu0 0.0
  %5472 = vmatpush1.msra.mxu0 0.0
  %5473 = vmatprep.subr.mxu0 0.0
  %5474 = vmatpush1.msra.mxu0 0.0
  %5475 = vmatprep.subr.mxu0 0.0
  %5476 = vmatpush1.msra.mxu0 0.0
  %5477 = vmatprep.subr.mxu0 0.0
  %5478 = vmatpush1.msra.mxu0 0.0
  %5479 = vmatprep.subr.mxu0 0.0
  %5480 = vmatpush1.msra.mxu0 0.0
  %5481 = vmatprep.subr.mxu0 0.0
  %5482 = vmatpush1.msra.mxu0 0.0
  %5483 = vmatprep.subr.mxu0 0.0
  %5484 = vmatpush1.msra.mxu0 0.0
  %5485 = vmatprep.subr.mxu0 0.0
  %5486 = vmatpush1.msra.mxu0 0.0
  %5487 = vmatprep.subr.mxu0 0.0
  %5488 = vmatpush1.msra.mxu0 0.0
  %5489 = vmatprep.subr.mxu0 0.0
  %5490 = vmatpush1.msra.mxu0 0.0
  %5491 = vmatprep.subr.mxu0 0.0
  %5492 = vmatpush1.msra.mxu0 0.0
  %5493 = vmatprep.subr.mxu0 0.0
  %5494 = vmatpush1.msra.mxu0 0.0
  %5495 = vmatprep.mubr.f32.mxu0 0.0
  %5496 = vmatmul.mubr.f32.gmra.mrb[0].mxu0 %v1090
  %v5497 = vpop.f32.mrb[0].mxu0
  %v5498 = vadd.f32 %v5289, %v5497
  %v5499 = vpop.f32.mrb[0].mxu0
  %v5500 = vadd.f32 %v5291, %v5499
  %5501 = vmatprep.mubr.f32.mxu0 0.0
  %5502 = vmatmul.mubr.f32.gmra.mrb[0].mxu0 %v1093
  %v5503 = vpop.f32.mrb[0].mxu0
  %v5504 = vadd.f32 %v5295, %v5503
  %v5505 = vpop.f32.mrb[0].mxu0
  %v5506 = vadd.f32 %v5297, %v5505
  %5507 = vmatprep.mubr.f32.mxu0 0.0
  %5508 = vmatmul.mubr.f32.gmra.mrb[0].mxu0 %v1096
  %v5509 = vpop.f32.mrb[0].mxu0
  %v5510 = vadd.f32 %v5301, %v5509
  %v5511 = vpop.f32.mrb[0].mxu0
  %v5512 = vadd.f32 %v5303, %v5511
  %5513 = vmatprep.mubr.f32.mxu0 0.0
  %5514 = vmatmul.mubr.f32.gmra.mrb[0].mxu0 %v1099
  %v5515 = vpop.f32.mrb[0].mxu0
  %v5516 = vadd.f32 %v5307, %v5515
  %v5517 = vpop.f32.mrb[0].mxu0
  %v5518 = vadd.f32 %v5309, %v5517
  %5519 = vmatprep.mubr.f32.mxu0 0.0
  %5520 = vmatmul.mubr.f32.gmra.mrb[0].mxu0 %v1102
  %v5521 = vpop.f32.mrb[0].mxu0
  %v5522 = vadd.f32 %v5313, %v5521
  %v5523 = vpop.f32.mrb[0].mxu0
  %v5524 = vadd.f32 %v5315, %v5523
  %5525 = vmatprep.mubr.f32.mxu0 0.0
  %5526 = vmatmul.mubr.f32.gmra.mrb[0].mxu0 %v1105
  %v5527 = vpop.f32.mrb[0].mxu0
  %v5528 = vadd.f32 %v5319, %v5527
  %v5529 = vpop.f32.mrb[0].mxu0
  %v5530 = vadd.f32 %v5321, %v5529
  %5531 = vmatprep.mubr.f32.mxu0 0.0
  %5532 = vmatmul.mubr.f32.gmra.mrb[0].mxu0 %v1108
  %v5533 = vpop.f32.mrb[0].mxu0
  %v5534 = vadd.f32 %v5325, %v5533
  %v5535 = vpop.f32.mrb[0].mxu0
  %v5536 = vadd.f32 %v5327, %v5535
  %5537 = vmatprep.mubr.f32.mxu0 0.0
  %5538 = vmatmul.mubr.f32.gmra.mrb[0].mxu0 %v1111
  %v5539 = vpop.f32.mrb[0].mxu0
  %v5540 = vadd.f32 %v5331, %v5539
  %v5541 = vpop.f32.mrb[0].mxu0
  %v5542 = vadd.f32 %v5333, %v5541
  %5543 = vmatprep.mubr.f32.mxu0 0.0
  %5544 = vmatmul.mubr.f32.gmra.mrb[0].mxu0 %v1114
  %v5545 = vpop.f32.mrb[0].mxu0
  %v5546 = vadd.f32 %v5337, %v5545
  %v5547 = vpop.f32.mrb[0].mxu0
  %v5548 = vadd.f32 %v5339, %v5547
  %5549 = vmatprep.mubr.f32.mxu0 0.0
  %5550 = vmatmul.mubr.f32.gmra.mrb[0].mxu0 %v1117
  %v5551 = vpop.f32.mrb[0].mxu0
  %v5552 = vadd.f32 %v5343, %v5551
  %v5553 = vpop.f32.mrb[0].mxu0
  %v5554 = vadd.f32 %v5345, %v5553
  %5555 = vmatprep.mubr.f32.mxu0 0.0
  %5556 = vmatmul.mubr.f32.gmra.mrb[0].mxu0 %v1120
  %v5557 = vpop.f32.mrb[0].mxu0
  %v5558 = vadd.f32 %v5349, %v5557
  %v5559 = vpop.f32.mrb[0].mxu0
  %v5560 = vadd.f32 %v5351, %v5559
  %5561 = vmatprep.mubr.f32.mxu0 0.0
  %5562 = vmatmul.mubr.f32.gmra.mrb[0].mxu0 %v1123
  %v5563 = vpop.f32.mrb[0].mxu0
  %v5564 = vadd.f32 %v5355, %v5563
  %v5565 = vpop.f32.mrb[0].mxu0
  %v5566 = vadd.f32 %v5357, %v5565
  %5567 = vmatprep.mubr.f32.mxu0 0.0
  %5568 = vmatmul.mubr.f32.gmra.mrb[0].mxu0 %v1126
  %v5569 = vpop.f32.mrb[0].mxu0
  %v5570 = vadd.f32 %v5361, %v5569
  %v5571 = vpop.f32.mrb[0].mxu0
  %v5572 = vadd.f32 %v5363, %v5571
  %5573 = vmatprep.mubr.f32.mxu0 0.0
  %5574 = vmatmul.mubr.f32.gmra.mrb[0].mxu0 %v1129
  %v5575 = vpop.f32.mrb[0].mxu0
  %v5576 = vadd.f32 %v5367, %v5575
  %v5577 = vpop.f32.mrb[0].mxu0
  %v5578 = vadd.f32 %v5369, %v5577
  %5579 = vmatprep.mubr.f32.mxu0 0.0
  %5580 = vmatmul.mubr.f32.gmra.mrb[0].mxu0 %v1132
  %v5581 = vpop.f32.mrb[0].mxu0
  %v5582 = vadd.f32 %v5373, %v5581
  %v5583 = vpop.f32.mrb[0].mxu0
  %v5584 = vadd.f32 %v5375, %v5583
  %5585 = vmatprep.mubr.f32.mxu0 0.0
  %5586 = vmatmul.mubr.f32.gmra.mrb[0].mxu0 %v1135
  %v5587 = vpop.f32.mrb[0].mxu0
  %v5588 = vadd.f32 %v5379, %v5587
  %v5589 = vpop.f32.mrb[0].mxu0
  %v5590 = vadd.f32 %v5381, %v5589
  %5591 = vmatprep.mubr.f32.mxu0 0.0
  %5592 = vmatmul.mubr.f32.gmra.mrb[0].mxu0 %v1138
  %v5593 = vpop.f32.mrb[0].mxu0
  %v5594 = vadd.f32 %v5385, %v5593
  %v5595 = vpop.f32.mrb[0].mxu0
  %v5596 = vadd.f32 %v5387, %v5595
  %5597 = vmatprep.mubr.f32.mxu0 0.0
  %5598 = vmatmul.mubr.f32.gmra.mrb[0].mxu0 %v1141
  %v5599 = vpop.f32.mrb[0].mxu0
  %v5600 = vadd.f32 %v5391, %v5599
  %v5601 = vpop.f32.mrb[0].mxu0
  %v5602 = vadd.f32 %v5393, %v5601
  %5603 = vmatprep.mubr.f32.mxu0 0.0
  %5604 = vmatmul.mubr.f32.gmra.mrb[0].mxu0 %v1144
  %v5605 = vpop.f32.mrb[0].mxu0
  %v5606 = vadd.f32 %v5397, %v5605
  %v5607 = vpop.f32.mrb[0].mxu0
  %v5608 = vadd.f32 %v5399, %v5607
  %5609 = vmatprep.mubr.f32.mxu0 0.0
  %5610 = vmatmul.mubr.f32.gmra.mrb[0].mxu0 %v1147
  %v5611 = vpop.f32.mrb[0].mxu0
  %v5612 = vadd.f32 %v5403, %v5611
  %v5613 = vpop.f32.mrb[0].mxu0
  %v5614 = vadd.f32 %v5405, %v5613
  %5615 = vmatprep.mubr.f32.mxu0 0.0
  %5616 = vmatmul.mubr.f32.gmra.mrb[0].mxu0 %v1150
  %v5617 = vpop.f32.mrb[0].mxu0
  %v5618 = vadd.f32 %v5409, %v5617
  %v5619 = vpop.f32.mrb[0].mxu0
  %v5620 = vadd.f32 %v5411, %v5619
  %5621 = vmatprep.mubr.f32.mxu0 0.0
  %5622 = vmatmul.mubr.f32.gmra.mrb[0].mxu0 %v1153
  %v5623 = vpop.f32.mrb[0].mxu0
  %v5624 = vadd.f32 %v5415, %v5623
  %v5625 = vpop.f32.mrb[0].mxu0
  %v5626 = vadd.f32 %v5417, %v5625
  %5627 = vmatprep.mubr.f32.mxu0 0.0
  %5628 = vmatmul.mubr.f32.gmra.mrb[0].mxu0 %v1156
  %v5629 = vpop.f32.mrb[0].mxu0
  %v5630 = vadd.f32 %v5421, %v5629
  %v5631 = vpop.f32.mrb[0].mxu0
  %v5632 = vadd.f32 %v5423, %v5631
  %5633 = vmatprep.mubr.f32.mxu0 0.0
  %5634 = vmatmul.mubr.f32.gmra.mrb[0].mxu0 %v1159
  %v5635 = vpop.f32.mrb[0].mxu0
  %v5636 = vadd.f32 %v5427, %v5635
  %v5637 = vpop.f32.mrb[0].mxu0
  %v5638 = vadd.f32 %v5429, %v5637
  %5639 = vdwg.mxu0
  %5640 = vmatprep.subr.mxu0 %v713
  %5641 = vmatpush1.msra.mxu0 %v712
  %5642 = vmatprep.subr.mxu0 %v715
  %5643 = vmatpush1.msra.mxu0 %v714
  %5644 = vmatprep.subr.mxu0 %v717
  %5645 = vmatpush1.msra.mxu0 %v716
  %5646 = vmatprep.subr.mxu0 %v796
  %5647 = vmatpush1.msra.mxu0 %v793
  %5648 = vmatprep.subr.mxu0 0.0
  %5649 = vmatpush1.msra.mxu0 0.0
  %5650 = vmatprep.subr.mxu0 0.0
  %5651 = vmatpush1.msra.mxu0 0.0
  %5652 = vmatprep.subr.mxu0 0.0
  %5653 = vmatpush1.msra.mxu0 0.0
  %5654 = vmatprep.subr.mxu0 0.0
  %5655 = vmatpush1.msra.mxu0 0.0
  %5656 = vmatprep.subr.mxu0 0.0
  %5657 = vmatpush1.msra.mxu0 0.0
  %5658 = vmatprep.subr.mxu0 0.0
  %5659 = vmatpush1.msra.mxu0 0.0
  %5660 = vmatprep.subr.mxu0 0.0
  %5661 = vmatpush1.msra.mxu0 0.0
  %5662 = vmatprep.subr.mxu0 0.0
  %5663 = vmatpush1.msra.mxu0 0.0
  %5664 = vmatprep.subr.mxu0 0.0
  %5665 = vmatpush1.msra.mxu0 0.0
  %5666 = vmatprep.subr.mxu0 0.0
  %5667 = vmatpush1.msra.mxu0 0.0
  %5668 = vmatprep.subr.mxu0 0.0
  %5669 = vmatpush1.msra.mxu0 0.0
  %5670 = vmatprep.subr.mxu0 0.0
  %5671 = vmatpush1.msra.mxu0 0.0
  %5672 = vmatprep.subr.mxu0 0.0
  %5673 = vmatpush1.msra.mxu0 0.0
  %5674 = vmatprep.subr.mxu0 0.0
  %5675 = vmatpush1.msra.mxu0 0.0
  %5676 = vmatprep.subr.mxu0 0.0
  %5677 = vmatpush1.msra.mxu0 0.0
  %5678 = vmatprep.subr.mxu0 0.0
  %5679 = vmatpush1.msra.mxu0 0.0
  %5680 = vmatprep.subr.mxu0 0.0
  %5681 = vmatpush1.msra.mxu0 0.0
  %5682 = vmatprep.subr.mxu0 0.0
  %5683 = vmatpush1.msra.mxu0 0.0
  %5684 = vmatprep.subr.mxu0 0.0
  %5685 = vmatpush1.msra.mxu0 0.0
  %5686 = vmatprep.subr.mxu0 0.0
  %5687 = vmatpush1.msra.mxu0 0.0
  %5688 = vmatprep.subr.mxu0 0.0
  %5689 = vmatpush1.msra.mxu0 0.0
  %5690 = vmatprep.subr.mxu0 0.0
  %5691 = vmatpush1.msra.mxu0 0.0
  %5692 = vmatprep.subr.mxu0 0.0
  %5693 = vmatpush1.msra.mxu0 0.0
  %5694 = vmatprep.subr.mxu0 0.0
  %5695 = vmatpush1.msra.mxu0 0.0
  %5696 = vmatprep.subr.mxu0 0.0
  %5697 = vmatpush1.msra.mxu0 0.0
  %5698 = vmatprep.subr.mxu0 0.0
  %5699 = vmatpush1.msra.mxu0 0.0
  %5700 = vmatprep.subr.mxu0 0.0
  %5701 = vmatpush1.msra.mxu0 0.0
  %5702 = vmatprep.subr.mxu0 0.0
  %5703 = vmatpush1.msra.mxu0 0.0
  %5704 = vmatprep.mubr.f32.mxu0 0.0
  %5705 = vmatmul.mubr.f32.gmra.mrb[0].mxu0 %v2877
  %v5706 = vpop.f32.mrb[0].mxu0
  %v5707 = vadd.f32 0.0, %v5706
  %v5708 = vpop.f32.mrb[0].mxu0
  %v5709 = vadd.f32 0.0, %v5708
  %5710 = vmatprep.mubr.f32.mxu0 0.0
  %5711 = vmatmul.mubr.f32.gmra.mrb[0].mxu0 %v2880
  %v5712 = vpop.f32.mrb[0].mxu0
  %v5713 = vadd.f32 0.0, %v5712
  %v5714 = vpop.f32.mrb[0].mxu0
  %v5715 = vadd.f32 0.0, %v5714
  %5716 = vmatprep.mubr.f32.mxu0 0.0
  %5717 = vmatmul.mubr.f32.gmra.mrb[0].mxu0 %v2883
  %v5718 = vpop.f32.mrb[0].mxu0
  %v5719 = vadd.f32 0.0, %v5718
  %v5720 = vpop.f32.mrb[0].mxu0
  %v5721 = vadd.f32 0.0, %v5720
  %5722 = vmatprep.mubr.f32.mxu0 0.0
  %5723 = vmatmul.mubr.f32.gmra.mrb[0].mxu0 %v2886
  %v5724 = vpop.f32.mrb[0].mxu0
  %v5725 = vadd.f32 0.0, %v5724
  %v5726 = vpop.f32.mrb[0].mxu0
  %v5727 = vadd.f32 0.0, %v5726
  %5728 = vmatprep.mubr.f32.mxu0 0.0
  %5729 = vmatmul.mubr.f32.gmra.mrb[0].mxu0 %v2889
  %v5730 = vpop.f32.mrb[0].mxu0
  %v5731 = vadd.f32 0.0, %v5730
  %v5732 = vpop.f32.mrb[0].mxu0
  %v5733 = vadd.f32 0.0, %v5732
  %5734 = vmatprep.mubr.f32.mxu0 0.0
  %5735 = vmatmul.mubr.f32.gmra.mrb[0].mxu0 %v2892
  %v5736 = vpop.f32.mrb[0].mxu0
  %v5737 = vadd.f32 0.0, %v5736
  %v5738 = vpop.f32.mrb[0].mxu0
  %v5739 = vadd.f32 0.0, %v5738
  %5740 = vmatprep.mubr.f32.mxu0 0.0
  %5741 = vmatmul.mubr.f32.gmra.mrb[0].mxu0 %v2895
  %v5742 = vpop.f32.mrb[0].mxu0
  %v5743 = vadd.f32 0.0, %v5742
  %v5744 = vpop.f32.mrb[0].mxu0
  %v5745 = vadd.f32 0.0, %v5744
  %5746 = vmatprep.mubr.f32.mxu0 0.0
  %5747 = vmatmul.mubr.f32.gmra.mrb[0].mxu0 %v2898
  %v5748 = vpop.f32.mrb[0].mxu0
  %v5749 = vadd.f32 0.0, %v5748
  %v5750 = vpop.f32.mrb[0].mxu0
  %v5751 = vadd.f32 0.0, %v5750
  %5752 = vmatprep.mubr.f32.mxu0 0.0
  %5753 = vmatmul.mubr.f32.gmra.mrb[0].mxu0 %v2901
  %v5754 = vpop.f32.mrb[0].mxu0
  %v5755 = vadd.f32 0.0, %v5754
  %v5756 = vpop.f32.mrb[0].mxu0
  %v5757 = vadd.f32 0.0, %v5756
  %5758 = vmatprep.mubr.f32.mxu0 0.0
  %5759 = vmatmul.mubr.f32.gmra.mrb[0].mxu0 %v2904
  %v5760 = vpop.f32.mrb[0].mxu0
  %v5761 = vadd.f32 0.0, %v5760
  %v5762 = vpop.f32.mrb[0].mxu0
  %v5763 = vadd.f32 0.0, %v5762
  %5764 = vmatprep.mubr.f32.mxu0 0.0
  %5765 = vmatmul.mubr.f32.gmra.mrb[0].mxu0 %v2907
  %v5766 = vpop.f32.mrb[0].mxu0
  %v5767 = vadd.f32 0.0, %v5766
  %v5768 = vpop.f32.mrb[0].mxu0
  %v5769 = vadd.f32 0.0, %v5768
  %5770 = vmatprep.mubr.f32.mxu0 0.0
  %5771 = vmatmul.mubr.f32.gmra.mrb[0].mxu0 %v2910
  %v5772 = vpop.f32.mrb[0].mxu0
  %v5773 = vadd.f32 0.0, %v5772
  %v5774 = vpop.f32.mrb[0].mxu0
  %v5775 = vadd.f32 0.0, %v5774
  %5776 = vmatprep.mubr.f32.mxu0 0.0
  %5777 = vmatmul.mubr.f32.gmra.mrb[0].mxu0 %v2913
  %v5778 = vpop.f32.mrb[0].mxu0
  %v5779 = vadd.f32 0.0, %v5778
  %v5780 = vpop.f32.mrb[0].mxu0
  %v5781 = vadd.f32 0.0, %v5780
  %5782 = vmatprep.mubr.f32.mxu0 0.0
  %5783 = vmatmul.mubr.f32.gmra.mrb[0].mxu0 %v2916
  %v5784 = vpop.f32.mrb[0].mxu0
  %v5785 = vadd.f32 0.0, %v5784
  %v5786 = vpop.f32.mrb[0].mxu0
  %v5787 = vadd.f32 0.0, %v5786
  %5788 = vmatprep.mubr.f32.mxu0 0.0
  %5789 = vmatmul.mubr.f32.gmra.mrb[0].mxu0 %v2919
  %v5790 = vpop.f32.mrb[0].mxu0
  %v5791 = vadd.f32 0.0, %v5790
  %v5792 = vpop.f32.mrb[0].mxu0
  %v5793 = vadd.f32 0.0, %v5792
  %5794 = vmatprep.mubr.f32.mxu0 0.0
  %5795 = vmatmul.mubr.f32.gmra.mrb[0].mxu0 %v2922
  %v5796 = vpop.f32.mrb[0].mxu0
  %v5797 = vadd.f32 0.0, %v5796
  %v5798 = vpop.f32.mrb[0].mxu0
  %v5799 = vadd.f32 0.0, %v5798
  %5800 = vmatprep.mubr.f32.mxu0 0.0
  %5801 = vmatmul.mubr.f32.gmra.mrb[0].mxu0 %v2925
  %v5802 = vpop.f32.mrb[0].mxu0
  %v5803 = vadd.f32 0.0, %v5802
  %v5804 = vpop.f32.mrb[0].mxu0
  %v5805 = vadd.f32 0.0, %v5804
  %5806 = vmatprep.mubr.f32.mxu0 0.0
  %5807 = vmatmul.mubr.f32.gmra.mrb[0].mxu0 %v2928
  %v5808 = vpop.f32.mrb[0].mxu0
  %v5809 = vadd.f32 0.0, %v5808
  %v5810 = vpop.f32.mrb[0].mxu0
  %v5811 = vadd.f32 0.0, %v5810
  %5812 = vmatprep.mubr.f32.mxu0 0.0
  %5813 = vmatmul.mubr.f32.gmra.mrb[0].mxu0 %v2931
  %v5814 = vpop.f32.mrb[0].mxu0
  %v5815 = vadd.f32 0.0, %v5814
  %v5816 = vpop.f32.mrb[0].mxu0
  %v5817 = vadd.f32 0.0, %v5816
  %5818 = vmatprep.mubr.f32.mxu0 0.0
  %5819 = vmatmul.mubr.f32.gmra.mrb[0].mxu0 %v2934
  %v5820 = vpop.f32.mrb[0].mxu0
  %v5821 = vadd.f32 0.0, %v5820
  %v5822 = vpop.f32.mrb[0].mxu0
  %v5823 = vadd.f32 0.0, %v5822
  %5824 = vmatprep.mubr.f32.mxu0 0.0
  %5825 = vmatmul.mubr.f32.gmra.mrb[0].mxu0 %v2937
  %v5826 = vpop.f32.mrb[0].mxu0
  %v5827 = vadd.f32 0.0, %v5826
  %v5828 = vpop.f32.mrb[0].mxu0
  %v5829 = vadd.f32 0.0, %v5828
  %5830 = vmatprep.mubr.f32.mxu0 0.0
  %5831 = vmatmul.mubr.f32.gmra.mrb[0].mxu0 %v2940
  %v5832 = vpop.f32.mrb[0].mxu0
  %v5833 = vadd.f32 0.0, %v5832
  %v5834 = vpop.f32.mrb[0].mxu0
  %v5835 = vadd.f32 0.0, %v5834
  %5836 = vmatprep.mubr.f32.mxu0 0.0
  %5837 = vmatmul.mubr.f32.gmra.mrb[0].mxu0 %v2943
  %v5838 = vpop.f32.mrb[0].mxu0
  %v5839 = vadd.f32 0.0, %v5838
  %v5840 = vpop.f32.mrb[0].mxu0
  %v5841 = vadd.f32 0.0, %v5840
  %5842 = vmatprep.mubr.f32.mxu0 0.0
  %5843 = vmatmul.mubr.f32.gmra.mrb[0].mxu0 %v2946
  %v5844 = vpop.f32.mrb[0].mxu0
  %v5845 = vadd.f32 0.0, %v5844
  %v5846 = vpop.f32.mrb[0].mxu0
  %v5847 = vadd.f32 0.0, %v5846
  %5848 = vdwg.mxu0
  %v5849 = vadd.f32 %v5498, %v5707
  %v5850 = vadd.f32 %v5500, %v5709
  %v5851 = vadd.f32 %v5504, %v5713
  %v5852 = vadd.f32 %v5506, %v5715
  %v5853 = vadd.f32 %v5510, %v5719
  %v5854 = vadd.f32 %v5512, %v5721
  %v5855 = vadd.f32 %v5516, %v5725
  %v5856 = vadd.f32 %v5518, %v5727
  %v5857 = vadd.f32 %v5522, %v5731
  %v5858 = vadd.f32 %v5524, %v5733
  %v5859 = vadd.f32 %v5528, %v5737
  %v5860 = vadd.f32 %v5530, %v5739
  %v5861 = vadd.f32 %v5534, %v5743
  %v5862 = vadd.f32 %v5536, %v5745
  %v5863 = vadd.f32 %v5540, %v5749
  %v5864 = vadd.f32 %v5542, %v5751
  %v5865 = vadd.f32 %v5546, %v5755
  %v5866 = vadd.f32 %v5548, %v5757
  %v5867 = vadd.f32 %v5552, %v5761
  %v5868 = vadd.f32 %v5554, %v5763
  %v5869 = vadd.f32 %v5558, %v5767
  %v5870 = vadd.f32 %v5560, %v5769
  %v5871 = vadd.f32 %v5564, %v5773
  %v5872 = vadd.f32 %v5566, %v5775
  %v5873 = vadd.f32 %v5570, %v5779
  %v5874 = vadd.f32 %v5572, %v5781
  %v5875 = vadd.f32 %v5576, %v5785
  %v5876 = vadd.f32 %v5578, %v5787
  %v5877 = vadd.f32 %v5582, %v5791
  %v5878 = vadd.f32 %v5584, %v5793
  %v5879 = vadd.f32 %v5588, %v5797
  %v5880 = vadd.f32 %v5590, %v5799
  %v5881 = vadd.f32 %v5594, %v5803
  %v5882 = vadd.f32 %v5596, %v5805
  %v5883 = vadd.f32 %v5600, %v5809
  %v5884 = vadd.f32 %v5602, %v5811
  %v5885 = vadd.f32 %v5606, %v5815
  %v5886 = vadd.f32 %v5608, %v5817
  %v5887 = vadd.f32 %v5612, %v5821
  %v5888 = vadd.f32 %v5614, %v5823
  %v5889 = vadd.f32 %v5618, %v5827
  %v5890 = vadd.f32 %v5620, %v5829
  %v5891 = vadd.f32 %v5624, %v5833
  %v5892 = vadd.f32 %v5626, %v5835
  %v5893 = vadd.f32 %v5630, %v5839
  %v5894 = vadd.f32 %v5632, %v5841
  %v5895 = vadd.f32 %v5636, %v5845
  %v5896 = vadd.f32 %v5638, %v5847
  %5897 = vmatprep.subr.mxu0 %v1082
  %5898 = vmatpush1.msra.mxu0 %v1081
  %5899 = vmatprep.subr.mxu0 %v1084
  %5900 = vmatpush1.msra.mxu0 %v1083
  %5901 = vmatprep.subr.mxu0 %v1086
  %5902 = vmatpush1.msra.mxu0 %v1085
  %5903 = vmatprep.subr.mxu0 %v1165
  %5904 = vmatpush1.msra.mxu0 %v1162
  %5905 = vmatprep.subr.mxu0 0.0
  %5906 = vmatpush1.msra.mxu0 0.0
  %5907 = vmatprep.subr.mxu0 0.0
  %5908 = vmatpush1.msra.mxu0 0.0
  %5909 = vmatprep.subr.mxu0 0.0
  %5910 = vmatpush1.msra.mxu0 0.0
  %5911 = vmatprep.subr.mxu0 0.0
  %5912 = vmatpush1.msra.mxu0 0.0
  %5913 = vmatprep.subr.mxu0 0.0
  %5914 = vmatpush1.msra.mxu0 0.0
  %5915 = vmatprep.subr.mxu0 0.0
  %5916 = vmatpush1.msra.mxu0 0.0
  %5917 = vmatprep.subr.mxu0 0.0
  %5918 = vmatpush1.msra.mxu0 0.0
  %5919 = vmatprep.subr.mxu0 0.0
  %5920 = vmatpush1.msra.mxu0 0.0
  %5921 = vmatprep.subr.mxu0 0.0
  %5922 = vmatpush1.msra.mxu0 0.0
  %5923 = vmatprep.subr.mxu0 0.0
  %5924 = vmatpush1.msra.mxu0 0.0
  %5925 = vmatprep.subr.mxu0 0.0
  %5926 = vmatpush1.msra.mxu0 0.0
  %5927 = vmatprep.subr.mxu0 0.0
  %5928 = vmatpush1.msra.mxu0 0.0
  %5929 = vmatprep.subr.mxu0 0.0
  %5930 = vmatpush1.msra.mxu0 0.0
  %5931 = vmatprep.subr.mxu0 0.0
  %5932 = vmatpush1.msra.mxu0 0.0
  %5933 = vmatprep.subr.mxu0 0.0
  %5934 = vmatpush1.msra.mxu0 0.0
  %5935 = vmatprep.subr.mxu0 0.0
  %5936 = vmatpush1.msra.mxu0 0.0
  %5937 = vmatprep.subr.mxu0 0.0
  %5938 = vmatpush1.msra.mxu0 0.0
  %5939 = vmatprep.subr.mxu0 0.0
  %5940 = vmatpush1.msra.mxu0 0.0
  %5941 = vmatprep.subr.mxu0 0.0
  %5942 = vmatpush1.msra.mxu0 0.0
  %5943 = vmatprep.subr.mxu0 0.0
  %5944 = vmatpush1.msra.mxu0 0.0
  %5945 = vmatprep.subr.mxu0 0.0
  %5946 = vmatpush1.msra.mxu0 0.0
  %5947 = vmatprep.subr.mxu0 0.0
  %5948 = vmatpush1.msra.mxu0 0.0
  %5949 = vmatprep.subr.mxu0 0.0
  %5950 = vmatpush1.msra.mxu0 0.0
  %5951 = vmatprep.subr.mxu0 0.0
  %5952 = vmatpush1.msra.mxu0 0.0
  %5953 = vmatprep.subr.mxu0 0.0
  %5954 = vmatpush1.msra.mxu0 0.0
  %5955 = vmatprep.subr.mxu0 0.0
  %5956 = vmatpush1.msra.mxu0 0.0
  %5957 = vmatprep.subr.mxu0 0.0
  %5958 = vmatpush1.msra.mxu0 0.0
  %5959 = vmatprep.subr.mxu0 0.0
  %5960 = vmatpush1.msra.mxu0 0.0
  %5961 = vmatprep.mubr.f32.mxu0 0.0
  %5962 = vmatmul.mubr.f32.gmra.mrb[0].mxu0 %v4798
  %v5963 = vpop.f32.mrb[0].mxu0
  %v5964 = vadd.f32 0.0, %v5963
  %v5965 = vpop.f32.mrb[0].mxu0
  %v5966 = vadd.f32 0.0, %v5965
  %5967 = vmatprep.mubr.f32.mxu0 0.0
  %5968 = vmatmul.mubr.f32.gmra.mrb[0].mxu0 %v4801
  %v5969 = vpop.f32.mrb[0].mxu0
  %v5970 = vadd.f32 0.0, %v5969
  %v5971 = vpop.f32.mrb[0].mxu0
  %v5972 = vadd.f32 0.0, %v5971
  %5973 = vmatprep.mubr.f32.mxu0 0.0
  %5974 = vmatmul.mubr.f32.gmra.mrb[0].mxu0 %v4804
  %v5975 = vpop.f32.mrb[0].mxu0
  %v5976 = vadd.f32 0.0, %v5975
  %v5977 = vpop.f32.mrb[0].mxu0
  %v5978 = vadd.f32 0.0, %v5977
  %5979 = vmatprep.mubr.f32.mxu0 0.0
  %5980 = vmatmul.mubr.f32.gmra.mrb[0].mxu0 %v4807
  %v5981 = vpop.f32.mrb[0].mxu0
  %v5982 = vadd.f32 0.0, %v5981
  %v5983 = vpop.f32.mrb[0].mxu0
  %v5984 = vadd.f32 0.0, %v5983
  %5985 = vmatprep.mubr.f32.mxu0 0.0
  %5986 = vmatmul.mubr.f32.gmra.mrb[0].mxu0 %v4810
  %v5987 = vpop.f32.mrb[0].mxu0
  %v5988 = vadd.f32 0.0, %v5987
  %v5989 = vpop.f32.mrb[0].mxu0
  %v5990 = vadd.f32 0.0, %v5989
  %5991 = vmatprep.mubr.f32.mxu0 0.0
  %5992 = vmatmul.mubr.f32.gmra.mrb[0].mxu0 %v4813
  %v5993 = vpop.f32.mrb[0].mxu0
  %v5994 = vadd.f32 0.0, %v5993
  %v5995 = vpop.f32.mrb[0].mxu0
  %v5996 = vadd.f32 0.0, %v5995
  %5997 = vmatprep.mubr.f32.mxu0 0.0
  %5998 = vmatmul.mubr.f32.gmra.mrb[0].mxu0 %v4816
  %v5999 = vpop.f32.mrb[0].mxu0
  %v6000 = vadd.f32 0.0, %v5999
  %v6001 = vpop.f32.mrb[0].mxu0
  %v6002 = vadd.f32 0.0, %v6001
  %6003 = vmatprep.mubr.f32.mxu0 0.0
  %6004 = vmatmul.mubr.f32.gmra.mrb[0].mxu0 %v4819
  %v6005 = vpop.f32.mrb[0].mxu0
  %v6006 = vadd.f32 0.0, %v6005
  %v6007 = vpop.f32.mrb[0].mxu0
  %v6008 = vadd.f32 0.0, %v6007
  %6009 = vmatprep.mubr.f32.mxu0 0.0
  %6010 = vmatmul.mubr.f32.gmra.mrb[0].mxu0 %v4822
  %v6011 = vpop.f32.mrb[0].mxu0
  %v6012 = vadd.f32 0.0, %v6011
  %v6013 = vpop.f32.mrb[0].mxu0
  %v6014 = vadd.f32 0.0, %v6013
  %6015 = vmatprep.mubr.f32.mxu0 0.0
  %6016 = vmatmul.mubr.f32.gmra.mrb[0].mxu0 %v4825
  %v6017 = vpop.f32.mrb[0].mxu0
  %v6018 = vadd.f32 0.0, %v6017
  %v6019 = vpop.f32.mrb[0].mxu0
  %v6020 = vadd.f32 0.0, %v6019
  %6021 = vmatprep.mubr.f32.mxu0 0.0
  %6022 = vmatmul.mubr.f32.gmra.mrb[0].mxu0 %v4828
  %v6023 = vpop.f32.mrb[0].mxu0
  %v6024 = vadd.f32 0.0, %v6023
  %v6025 = vpop.f32.mrb[0].mxu0
  %v6026 = vadd.f32 0.0, %v6025
  %6027 = vmatprep.mubr.f32.mxu0 0.0
  %6028 = vmatmul.mubr.f32.gmra.mrb[0].mxu0 %v4831
  %v6029 = vpop.f32.mrb[0].mxu0
  %v6030 = vadd.f32 0.0, %v6029
  %v6031 = vpop.f32.mrb[0].mxu0
  %v6032 = vadd.f32 0.0, %v6031
  %6033 = vmatprep.mubr.f32.mxu0 0.0
  %6034 = vmatmul.mubr.f32.gmra.mrb[0].mxu0 %v4834
  %v6035 = vpop.f32.mrb[0].mxu0
  %v6036 = vadd.f32 0.0, %v6035
  %v6037 = vpop.f32.mrb[0].mxu0
  %v6038 = vadd.f32 0.0, %v6037
  %6039 = vmatprep.mubr.f32.mxu0 0.0
  %6040 = vmatmul.mubr.f32.gmra.mrb[0].mxu0 %v4837
  %v6041 = vpop.f32.mrb[0].mxu0
  %v6042 = vadd.f32 0.0, %v6041
  %v6043 = vpop.f32.mrb[0].mxu0
  %v6044 = vadd.f32 0.0, %v6043
  %6045 = vmatprep.mubr.f32.mxu0 0.0
  %6046 = vmatmul.mubr.f32.gmra.mrb[0].mxu0 %v4840
  %v6047 = vpop.f32.mrb[0].mxu0
  %v6048 = vadd.f32 0.0, %v6047
  %v6049 = vpop.f32.mrb[0].mxu0
  %v6050 = vadd.f32 0.0, %v6049
  %6051 = vmatprep.mubr.f32.mxu0 0.0
  %6052 = vmatmul.mubr.f32.gmra.mrb[0].mxu0 %v4843
  %v6053 = vpop.f32.mrb[0].mxu0
  %v6054 = vadd.f32 0.0, %v6053
  %v6055 = vpop.f32.mrb[0].mxu0
  %v6056 = vadd.f32 0.0, %v6055
  %6057 = vmatprep.mubr.f32.mxu0 0.0
  %6058 = vmatmul.mubr.f32.gmra.mrb[0].mxu0 %v4846
  %v6059 = vpop.f32.mrb[0].mxu0
  %v6060 = vadd.f32 0.0, %v6059
  %v6061 = vpop.f32.mrb[0].mxu0
  %v6062 = vadd.f32 0.0, %v6061
  %6063 = vmatprep.mubr.f32.mxu0 0.0
  %6064 = vmatmul.mubr.f32.gmra.mrb[0].mxu0 %v4849
  %v6065 = vpop.f32.mrb[0].mxu0
  %v6066 = vadd.f32 0.0, %v6065
  %v6067 = vpop.f32.mrb[0].mxu0
  %v6068 = vadd.f32 0.0, %v6067
  %6069 = vmatprep.mubr.f32.mxu0 0.0
  %6070 = vmatmul.mubr.f32.gmra.mrb[0].mxu0 %v4852
  %v6071 = vpop.f32.mrb[0].mxu0
  %v6072 = vadd.f32 0.0, %v6071
  %v6073 = vpop.f32.mrb[0].mxu0
  %v6074 = vadd.f32 0.0, %v6073
  %6075 = vmatprep.mubr.f32.mxu0 0.0
  %6076 = vmatmul.mubr.f32.gmra.mrb[0].mxu0 %v4855
  %v6077 = vpop.f32.mrb[0].mxu0
  %v6078 = vadd.f32 0.0, %v6077
  %v6079 = vpop.f32.mrb[0].mxu0
  %v6080 = vadd.f32 0.0, %v6079
  %6081 = vmatprep.mubr.f32.mxu0 0.0
  %6082 = vmatmul.mubr.f32.gmra.mrb[0].mxu0 %v4858
  %v6083 = vpop.f32.mrb[0].mxu0
  %v6084 = vadd.f32 0.0, %v6083
  %v6085 = vpop.f32.mrb[0].mxu0
  %v6086 = vadd.f32 0.0, %v6085
  %6087 = vmatprep.mubr.f32.mxu0 0.0
  %6088 = vmatmul.mubr.f32.gmra.mrb[0].mxu0 %v4861
  %v6089 = vpop.f32.mrb[0].mxu0
  %v6090 = vadd.f32 0.0, %v6089
  %v6091 = vpop.f32.mrb[0].mxu0
  %v6092 = vadd.f32 0.0, %v6091
  %6093 = vmatprep.mubr.f32.mxu0 0.0
  %6094 = vmatmul.mubr.f32.gmra.mrb[0].mxu0 %v4864
  %v6095 = vpop.f32.mrb[0].mxu0
  %v6096 = vadd.f32 0.0, %v6095
  %v6097 = vpop.f32.mrb[0].mxu0
  %v6098 = vadd.f32 0.0, %v6097
  %6099 = vmatprep.mubr.f32.mxu0 0.0
  %6100 = vmatmul.mubr.f32.gmra.mrb[0].mxu0 %v4867
  %v6101 = vpop.f32.mrb[0].mxu0
  %v6102 = vadd.f32 0.0, %v6101
  %v6103 = vpop.f32.mrb[0].mxu0
  %v6104 = vadd.f32 0.0, %v6103
  %6105 = vdwg.mxu0
  %v6106 = vadd.f32 %v5849, %v5964
  %v6107 = vadd.f32 %v5850, %v5966
  %v6108 = vadd.f32 %v5851, %v5970
  %v6109 = vadd.f32 %v5852, %v5972
  %v6110 = vadd.f32 %v5853, %v5976
  %v6111 = vadd.f32 %v5854, %v5978
  %v6112 = vadd.f32 %v5855, %v5982
  %v6113 = vadd.f32 %v5856, %v5984
  %v6114 = vadd.f32 %v5857, %v5988
  %v6115 = vadd.f32 %v5858, %v5990
  %v6116 = vadd.f32 %v5859, %v5994
  %v6117 = vadd.f32 %v5860, %v5996
  %v6118 = vadd.f32 %v5861, %v6000
  %v6119 = vadd.f32 %v5862, %v6002
  %v6120 = vadd.f32 %v5863, %v6006
  %v6121 = vadd.f32 %v5864, %v6008
  %v6122 = vadd.f32 %v5865, %v6012
  %v6123 = vadd.f32 %v5866, %v6014
  %v6124 = vadd.f32 %v5867, %v6018
  %v6125 = vadd.f32 %v5868, %v6020
  %v6126 = vadd.f32 %v5869, %v6024
  %v6127 = vadd.f32 %v5870, %v6026
  %v6128 = vadd.f32 %v5871, %v6030
  %v6129 = vadd.f32 %v5872, %v6032
  %v6130 = vadd.f32 %v5873, %v6036
  %v6131 = vadd.f32 %v5874, %v6038
  %v6132 = vadd.f32 %v5875, %v6042
  %v6133 = vadd.f32 %v5876, %v6044
  %v6134 = vadd.f32 %v5877, %v6048
  %v6135 = vadd.f32 %v5878, %v6050
  %v6136 = vadd.f32 %v5879, %v6054
  %v6137 = vadd.f32 %v5880, %v6056
  %v6138 = vadd.f32 %v5881, %v6060
  %v6139 = vadd.f32 %v5882, %v6062
  %v6140 = vadd.f32 %v5883, %v6066
  %v6141 = vadd.f32 %v5884, %v6068
  %v6142 = vadd.f32 %v5885, %v6072
  %v6143 = vadd.f32 %v5886, %v6074
  %v6144 = vadd.f32 %v5887, %v6078
  %v6145 = vadd.f32 %v5888, %v6080
  %v6146 = vadd.f32 %v5889, %v6084
  %v6147 = vadd.f32 %v5890, %v6086
  %v6148 = vadd.f32 %v5891, %v6090
  %v6149 = vadd.f32 %v5892, %v6092
  %v6150 = vadd.f32 %v5893, %v6096
  %v6151 = vadd.f32 %v5894, %v6098
  %v6152 = vadd.f32 %v5895, %v6102
  %v6153 = vadd.f32 %v5896, %v6104
  %s6154 = scalar_lea.vmem %s0, 704
  %v6155 = vld [vmem:[%s6154] sm:$0xff]
  %v6156 = vld [vmem:[%s6154 + $0x8] sm:$0xff]
  %v6157 = vld [vmem:[%s6154 + $0x10] sm:$0xff]
  %v6158 = vld [vmem:[%s6154 + $0x18] sm:$0xff]
  %v6159 = vld [vmem:[%s6154 + $0x20] sm:$0xff]
  %v6160 = vld [vmem:[%s6154 + $0x28] sm:$0xff]
  %v6161 = vld [vmem:[%s6154 + $0x30] sm:$0xff]
  %v6162 = vld [vmem:[%s6154 + $0x38] sm:$0xff]
  %v6163 = vld [vmem:[%s6154 + $0x40] sm:$0xff]
  %v6164 = vld [vmem:[%s6154 + $0x48] sm:$0xff]
  %v6165 = vld [vmem:[%s6154 + $0x50] sm:$0xff]
  %v6166 = vld [vmem:[%s6154 + $0x58] sm:$0xff]
  %v6167 = vld [vmem:[%s6154 + $0x60] sm:$0xff]
  %v6168 = vld [vmem:[%s6154 + $0x68] sm:$0xff]
  %v6169 = vld [vmem:[%s6154 + $0x70] sm:$0xff]
  %v6170 = vld [vmem:[%s6154 + $0x78] sm:$0xff]
  %v6171 = vld [vmem:[%s6154 + $0x80] sm:$0xff]
  %v6172 = vld [vmem:[%s6154 + $0x88] sm:$0xff]
  %v6173 = vld [vmem:[%s6154 + $0x90] sm:$0xff]
  %v6174 = vld [vmem:[%s6154 + $0x98] sm:$0xff]
  %v6175 = vld [vmem:[%s6154 + $0xa0] sm:$0xff]
  %v6176 = vld [vmem:[%s6154 + $0xa8] sm:$0xff]
  %v6177 = vld [vmem:[%s6154 + $0xb0] sm:$0xff]
  %v6178 = vld [vmem:[%s6154 + $0xb8] sm:$0xff]
  %v6180 = vsel %vm110, %v6155, 0
  %v6183 = vsel %vm110, %v6156, 0
  %v6186 = vsel %vm110, %v6157, 0
  %v6189 = vsel %vm110, %v6158, 0
  %v6192 = vsel %vm110, %v6159, 0
  %v6195 = vsel %vm110, %v6160, 0
  %v6198 = vsel %vm110, %v6161, 0
  %v6201 = vsel %vm110, %v6162, 0
  %v6204 = vsel %vm110, %v6163, 0
  %v6207 = vsel %vm110, %v6164, 0
  %v6210 = vsel %vm110, %v6165, 0
  %v6213 = vsel %vm110, %v6166, 0
  %v6216 = vsel %vm110, %v6167, 0
  %v6219 = vsel %vm110, %v6168, 0
  %v6222 = vsel %vm110, %v6169, 0
  %v6225 = vsel %vm110, %v6170, 0
  %v6228 = vsel %vm110, %v6171, 0
  %v6231 = vsel %vm110, %v6172, 0
  %v6234 = vsel %vm110, %v6173, 0
  %v6237 = vsel %vm110, %v6174, 0
  %v6240 = vsel %vm110, %v6175, 0
  %v6243 = vsel %vm110, %v6176, 0
  %v6246 = vsel %vm110, %v6177, 0
  %v6249 = vsel %vm110, %v6178, 0
  %6251 = vmatprep.subr.mxu0 %v1451
  %6252 = vmatpush1.msra.mxu0 %v1450
  %6253 = vmatprep.subr.mxu0 %v1453
  %6254 = vmatpush1.msra.mxu0 %v1452
  %6255 = vmatprep.subr.mxu0 %v1455
  %6256 = vmatpush1.msra.mxu0 %v1454
  %6257 = vmatprep.subr.mxu0 %v1534
  %6258 = vmatpush1.msra.mxu0 %v1531
  %6259 = vmatprep.subr.mxu0 0.0
  %6260 = vmatpush1.msra.mxu0 0.0
  %6261 = vmatprep.subr.mxu0 0.0
  %6262 = vmatpush1.msra.mxu0 0.0
  %6263 = vmatprep.subr.mxu0 0.0
  %6264 = vmatpush1.msra.mxu0 0.0
  %6265 = vmatprep.subr.mxu0 0.0
  %6266 = vmatpush1.msra.mxu0 0.0
  %6267 = vmatprep.subr.mxu0 0.0
  %6268 = vmatpush1.msra.mxu0 0.0
  %6269 = vmatprep.subr.mxu0 0.0
  %6270 = vmatpush1.msra.mxu0 0.0
  %6271 = vmatprep.subr.mxu0 0.0
  %6272 = vmatpush1.msra.mxu0 0.0
  %6273 = vmatprep.subr.mxu0 0.0
  %6274 = vmatpush1.msra.mxu0 0.0
  %6275 = vmatprep.subr.mxu0 0.0
  %6276 = vmatpush1.msra.mxu0 0.0
  %6277 = vmatprep.subr.mxu0 0.0
  %6278 = vmatpush1.msra.mxu0 0.0
  %6279 = vmatprep.subr.mxu0 0.0
  %6280 = vmatpush1.msra.mxu0 0.0
  %6281 = vmatprep.subr.mxu0 0.0
  %6282 = vmatpush1.msra.mxu0 0.0
  %6283 = vmatprep.subr.mxu0 0.0
  %6284 = vmatpush1.msra.mxu0 0.0
  %6285 = vmatprep.subr.mxu0 0.0
  %6286 = vmatpush1.msra.mxu0 0.0
  %6287 = vmatprep.subr.mxu0 0.0
  %6288 = vmatpush1.msra.mxu0 0.0
  %6289 = vmatprep.subr.mxu0 0.0
  %6290 = vmatpush1.msra.mxu0 0.0
  %6291 = vmatprep.subr.mxu0 0.0
  %6292 = vmatpush1.msra.mxu0 0.0
  %6293 = vmatprep.subr.mxu0 0.0
  %6294 = vmatpush1.msra.mxu0 0.0
  %6295 = vmatprep.subr.mxu0 0.0
  %6296 = vmatpush1.msra.mxu0 0.0
  %6297 = vmatprep.subr.mxu0 0.0
  %6298 = vmatpush1.msra.mxu0 0.0
  %6299 = vmatprep.subr.mxu0 0.0
  %6300 = vmatpush1.msra.mxu0 0.0
  %6301 = vmatprep.subr.mxu0 0.0
  %6302 = vmatpush1.msra.mxu0 0.0
  %6303 = vmatprep.subr.mxu0 0.0
  %6304 = vmatpush1.msra.mxu0 0.0
  %6305 = vmatprep.subr.mxu0 0.0
  %6306 = vmatpush1.msra.mxu0 0.0
  %6307 = vmatprep.subr.mxu0 0.0
  %6308 = vmatpush1.msra.mxu0 0.0
  %6309 = vmatprep.subr.mxu0 0.0
  %6310 = vmatpush1.msra.mxu0 0.0
  %6311 = vmatprep.subr.mxu0 0.0
  %6312 = vmatpush1.msra.mxu0 0.0
  %6313 = vmatprep.subr.mxu0 0.0
  %6314 = vmatpush1.msra.mxu0 0.0
  %6315 = vmatprep.mubr.f32.mxu0 0.0
  %6316 = vmatmul.mubr.f32.gmra.mrb[0].mxu0 %v6180
  %v6317 = vpop.f32.mrb[0].mxu0
  %v6318 = vadd.f32 0.0, %v6317
  %v6319 = vpop.f32.mrb[0].mxu0
  %v6320 = vadd.f32 0.0, %v6319
  %6321 = vmatprep.mubr.f32.mxu0 0.0
  %6322 = vmatmul.mubr.f32.gmra.mrb[0].mxu0 %v6183
  %v6323 = vpop.f32.mrb[0].mxu0
  %v6324 = vadd.f32 0.0, %v6323
  %v6325 = vpop.f32.mrb[0].mxu0
  %v6326 = vadd.f32 0.0, %v6325
  %6327 = vmatprep.mubr.f32.mxu0 0.0
  %6328 = vmatmul.mubr.f32.gmra.mrb[0].mxu0 %v6186
  %v6329 = vpop.f32.mrb[0].mxu0
  %v6330 = vadd.f32 0.0, %v6329
  %v6331 = vpop.f32.mrb[0].mxu0
  %v6332 = vadd.f32 0.0, %v6331
  %6333 = vmatprep.mubr.f32.mxu0 0.0
  %6334 = vmatmul.mubr.f32.gmra.mrb[0].mxu0 %v6189
  %v6335 = vpop.f32.mrb[0].mxu0
  %v6336 = vadd.f32 0.0, %v6335
  %v6337 = vpop.f32.mrb[0].mxu0
  %v6338 = vadd.f32 0.0, %v6337
  %6339 = vmatprep.mubr.f32.mxu0 0.0
  %6340 = vmatmul.mubr.f32.gmra.mrb[0].mxu0 %v6192
  %v6341 = vpop.f32.mrb[0].mxu0
  %v6342 = vadd.f32 0.0, %v6341
  %v6343 = vpop.f32.mrb[0].mxu0
  %v6344 = vadd.f32 0.0, %v6343
  %6345 = vmatprep.mubr.f32.mxu0 0.0
  %6346 = vmatmul.mubr.f32.gmra.mrb[0].mxu0 %v6195
  %v6347 = vpop.f32.mrb[0].mxu0
  %v6348 = vadd.f32 0.0, %v6347
  %v6349 = vpop.f32.mrb[0].mxu0
  %v6350 = vadd.f32 0.0, %v6349
  %6351 = vmatprep.mubr.f32.mxu0 0.0
  %6352 = vmatmul.mubr.f32.gmra.mrb[0].mxu0 %v6198
  %v6353 = vpop.f32.mrb[0].mxu0
  %v6354 = vadd.f32 0.0, %v6353
  %v6355 = vpop.f32.mrb[0].mxu0
  %v6356 = vadd.f32 0.0, %v6355
  %6357 = vmatprep.mubr.f32.mxu0 0.0
  %6358 = vmatmul.mubr.f32.gmra.mrb[0].mxu0 %v6201
  %v6359 = vpop.f32.mrb[0].mxu0
  %v6360 = vadd.f32 0.0, %v6359
  %v6361 = vpop.f32.mrb[0].mxu0
  %v6362 = vadd.f32 0.0, %v6361
  %6363 = vmatprep.mubr.f32.mxu0 0.0
  %6364 = vmatmul.mubr.f32.gmra.mrb[0].mxu0 %v6204
  %v6365 = vpop.f32.mrb[0].mxu0
  %v6366 = vadd.f32 0.0, %v6365
  %v6367 = vpop.f32.mrb[0].mxu0
  %v6368 = vadd.f32 0.0, %v6367
  %6369 = vmatprep.mubr.f32.mxu0 0.0
  %6370 = vmatmul.mubr.f32.gmra.mrb[0].mxu0 %v6207
  %v6371 = vpop.f32.mrb[0].mxu0
  %v6372 = vadd.f32 0.0, %v6371
  %v6373 = vpop.f32.mrb[0].mxu0
  %v6374 = vadd.f32 0.0, %v6373
  %6375 = vmatprep.mubr.f32.mxu0 0.0
  %6376 = vmatmul.mubr.f32.gmra.mrb[0].mxu0 %v6210
  %v6377 = vpop.f32.mrb[0].mxu0
  %v6378 = vadd.f32 0.0, %v6377
  %v6379 = vpop.f32.mrb[0].mxu0
  %v6380 = vadd.f32 0.0, %v6379
  %6381 = vmatprep.mubr.f32.mxu0 0.0
  %6382 = vmatmul.mubr.f32.gmra.mrb[0].mxu0 %v6213
  %v6383 = vpop.f32.mrb[0].mxu0
  %v6384 = vadd.f32 0.0, %v6383
  %v6385 = vpop.f32.mrb[0].mxu0
  %v6386 = vadd.f32 0.0, %v6385
  %6387 = vmatprep.mubr.f32.mxu0 0.0
  %6388 = vmatmul.mubr.f32.gmra.mrb[0].mxu0 %v6216
  %v6389 = vpop.f32.mrb[0].mxu0
  %v6390 = vadd.f32 0.0, %v6389
  %v6391 = vpop.f32.mrb[0].mxu0
  %v6392 = vadd.f32 0.0, %v6391
  %6393 = vmatprep.mubr.f32.mxu0 0.0
  %6394 = vmatmul.mubr.f32.gmra.mrb[0].mxu0 %v6219
  %v6395 = vpop.f32.mrb[0].mxu0
  %v6396 = vadd.f32 0.0, %v6395
  %v6397 = vpop.f32.mrb[0].mxu0
  %v6398 = vadd.f32 0.0, %v6397
  %6399 = vmatprep.mubr.f32.mxu0 0.0
  %6400 = vmatmul.mubr.f32.gmra.mrb[0].mxu0 %v6222
  %v6401 = vpop.f32.mrb[0].mxu0
  %v6402 = vadd.f32 0.0, %v6401
  %v6403 = vpop.f32.mrb[0].mxu0
  %v6404 = vadd.f32 0.0, %v6403
  %6405 = vmatprep.mubr.f32.mxu0 0.0
  %6406 = vmatmul.mubr.f32.gmra.mrb[0].mxu0 %v6225
  %v6407 = vpop.f32.mrb[0].mxu0
  %v6408 = vadd.f32 0.0, %v6407
  %v6409 = vpop.f32.mrb[0].mxu0
  %v6410 = vadd.f32 0.0, %v6409
  %6411 = vmatprep.mubr.f32.mxu0 0.0
  %6412 = vmatmul.mubr.f32.gmra.mrb[0].mxu0 %v6228
  %v6413 = vpop.f32.mrb[0].mxu0
  %v6414 = vadd.f32 0.0, %v6413
  %v6415 = vpop.f32.mrb[0].mxu0
  %v6416 = vadd.f32 0.0, %v6415
  %6417 = vmatprep.mubr.f32.mxu0 0.0
  %6418 = vmatmul.mubr.f32.gmra.mrb[0].mxu0 %v6231
  %v6419 = vpop.f32.mrb[0].mxu0
  %v6420 = vadd.f32 0.0, %v6419
  %v6421 = vpop.f32.mrb[0].mxu0
  %v6422 = vadd.f32 0.0, %v6421
  %6423 = vmatprep.mubr.f32.mxu0 0.0
  %6424 = vmatmul.mubr.f32.gmra.mrb[0].mxu0 %v6234
  %v6425 = vpop.f32.mrb[0].mxu0
  %v6426 = vadd.f32 0.0, %v6425
  %v6427 = vpop.f32.mrb[0].mxu0
  %v6428 = vadd.f32 0.0, %v6427
  %6429 = vmatprep.mubr.f32.mxu0 0.0
  %6430 = vmatmul.mubr.f32.gmra.mrb[0].mxu0 %v6237
  %v6431 = vpop.f32.mrb[0].mxu0
  %v6432 = vadd.f32 0.0, %v6431
  %v6433 = vpop.f32.mrb[0].mxu0
  %v6434 = vadd.f32 0.0, %v6433
  %6435 = vmatprep.mubr.f32.mxu0 0.0
  %6436 = vmatmul.mubr.f32.gmra.mrb[0].mxu0 %v6240
  %v6437 = vpop.f32.mrb[0].mxu0
  %v6438 = vadd.f32 0.0, %v6437
  %v6439 = vpop.f32.mrb[0].mxu0
  %v6440 = vadd.f32 0.0, %v6439
  %6441 = vmatprep.mubr.f32.mxu0 0.0
  %6442 = vmatmul.mubr.f32.gmra.mrb[0].mxu0 %v6243
  %v6443 = vpop.f32.mrb[0].mxu0
  %v6444 = vadd.f32 0.0, %v6443
  %v6445 = vpop.f32.mrb[0].mxu0
  %v6446 = vadd.f32 0.0, %v6445
  %6447 = vmatprep.mubr.f32.mxu0 0.0
  %6448 = vmatmul.mubr.f32.gmra.mrb[0].mxu0 %v6246
  %v6449 = vpop.f32.mrb[0].mxu0
  %v6450 = vadd.f32 0.0, %v6449
  %v6451 = vpop.f32.mrb[0].mxu0
  %v6452 = vadd.f32 0.0, %v6451
  %6453 = vmatprep.mubr.f32.mxu0 0.0
  %6454 = vmatmul.mubr.f32.gmra.mrb[0].mxu0 %v6249
  %v6455 = vpop.f32.mrb[0].mxu0
  %v6456 = vadd.f32 0.0, %v6455
  %v6457 = vpop.f32.mrb[0].mxu0
  %v6458 = vadd.f32 0.0, %v6457
  %6459 = vdwg.mxu0
  %v6460 = vadd.f32 %v6106, %v6318
  %v6461 = vadd.f32 %v6107, %v6320
  %v6462 = vadd.f32 %v6108, %v6324
  %v6463 = vadd.f32 %v6109, %v6326
  %v6464 = vadd.f32 %v6110, %v6330
  %v6465 = vadd.f32 %v6111, %v6332
  %v6466 = vadd.f32 %v6112, %v6336
  %v6467 = vadd.f32 %v6113, %v6338
  %v6468 = vadd.f32 %v6114, %v6342
  %v6469 = vadd.f32 %v6115, %v6344
  %v6470 = vadd.f32 %v6116, %v6348
  %v6471 = vadd.f32 %v6117, %v6350
  %v6472 = vadd.f32 %v6118, %v6354
  %v6473 = vadd.f32 %v6119, %v6356
  %v6474 = vadd.f32 %v6120, %v6360
  %v6475 = vadd.f32 %v6121, %v6362
  %v6476 = vadd.f32 %v6122, %v6366
  %v6477 = vadd.f32 %v6123, %v6368
  %v6478 = vadd.f32 %v6124, %v6372
  %v6479 = vadd.f32 %v6125, %v6374
  %v6480 = vadd.f32 %v6126, %v6378
  %v6481 = vadd.f32 %v6127, %v6380
  %v6482 = vadd.f32 %v6128, %v6384
  %v6483 = vadd.f32 %v6129, %v6386
  %v6484 = vadd.f32 %v6130, %v6390
  %v6485 = vadd.f32 %v6131, %v6392
  %v6486 = vadd.f32 %v6132, %v6396
  %v6487 = vadd.f32 %v6133, %v6398
  %v6488 = vadd.f32 %v6134, %v6402
  %v6489 = vadd.f32 %v6135, %v6404
  %v6490 = vadd.f32 %v6136, %v6408
  %v6491 = vadd.f32 %v6137, %v6410
  %v6492 = vadd.f32 %v6138, %v6414
  %v6493 = vadd.f32 %v6139, %v6416
  %v6494 = vadd.f32 %v6140, %v6420
  %v6495 = vadd.f32 %v6141, %v6422
  %v6496 = vadd.f32 %v6142, %v6426
  %v6497 = vadd.f32 %v6143, %v6428
  %v6498 = vadd.f32 %v6144, %v6432
  %v6499 = vadd.f32 %v6145, %v6434
  %v6500 = vadd.f32 %v6146, %v6438
  %v6501 = vadd.f32 %v6147, %v6440
  %v6502 = vadd.f32 %v6148, %v6444
  %v6503 = vadd.f32 %v6149, %v6446
  %v6504 = vadd.f32 %v6150, %v6450
  %v6505 = vadd.f32 %v6151, %v6452
  %v6506 = vadd.f32 %v6152, %v6456
  %v6507 = vadd.f32 %v6153, %v6458
  %v6508 = vadd.f32 %v6460, %v1798
  %v6509 = vadd.f32 %v6461, %v1802
  %v6510 = vadd.f32 %v6462, %v1798
  %v6511 = vadd.f32 %v6463, %v1802
  %v6512 = vadd.f32 %v6464, %v1798
  %v6513 = vadd.f32 %v6465, %v1802
  %v6514 = vadd.f32 %v6466, %v1798
  %v6515 = vadd.f32 %v6467, %v1802
  %v6516 = vadd.f32 %v6468, %v1798
  %v6517 = vadd.f32 %v6469, %v1802
  %v6518 = vadd.f32 %v6470, %v1798
  %v6519 = vadd.f32 %v6471, %v1802
  %v6520 = vadd.f32 %v6472, %v1798
  %v6521 = vadd.f32 %v6473, %v1802
  %v6522 = vadd.f32 %v6474, %v1798
  %v6523 = vadd.f32 %v6475, %v1802
  %v6524 = vadd.f32 %v6476, %v1798
  %v6525 = vadd.f32 %v6477, %v1802
  %v6526 = vadd.f32 %v6478, %v1798
  %v6527 = vadd.f32 %v6479, %v1802
  %v6528 = vadd.f32 %v6480, %v1798
  %v6529 = vadd.f32 %v6481, %v1802
  %v6530 = vadd.f32 %v6482, %v1798
  %v6531 = vadd.f32 %v6483, %v1802
  %v6532 = vadd.f32 %v6484, %v1798
  %v6533 = vadd.f32 %v6485, %v1802
  %v6534 = vadd.f32 %v6486, %v1798
  %v6535 = vadd.f32 %v6487, %v1802
  %v6536 = vadd.f32 %v6488, %v1798
  %v6537 = vadd.f32 %v6489, %v1802
  %v6538 = vadd.f32 %v6490, %v1798
  %v6539 = vadd.f32 %v6491, %v1802
  %v6540 = vadd.f32 %v6492, %v1798
  %v6541 = vadd.f32 %v6493, %v1802
  %v6542 = vadd.f32 %v6494, %v1798
  %v6543 = vadd.f32 %v6495, %v1802
  %v6544 = vadd.f32 %v6496, %v1798
  %v6545 = vadd.f32 %v6497, %v1802
  %v6546 = vadd.f32 %v6498, %v1798
  %v6547 = vadd.f32 %v6499, %v1802
  %v6548 = vadd.f32 %v6500, %v1798
  %v6549 = vadd.f32 %v6501, %v1802
  %v6550 = vadd.f32 %v6502, %v1798
  %v6551 = vadd.f32 %v6503, %v1802
  %v6552 = vadd.f32 %v6504, %v1798
  %v6553 = vadd.f32 %v6505, %v1802
  %v6554 = vadd.f32 %v6506, %v1798
  %v6555 = vadd.f32 %v6507, %v1802
  %v6556 = vtanh.pop %v6508
  %v6557 = vtanh.pop %v6509
  %v6558 = vtanh.pop %v6510
  %v6559 = vtanh.pop %v6511
  %v6560 = vtanh.pop %v6512
  %v6561 = vtanh.pop %v6513
  %v6562 = vtanh.pop %v6514
  %v6563 = vtanh.pop %v6515
  %v6564 = vtanh.pop %v6516
  %v6565 = vtanh.pop %v6517
  %v6566 = vtanh.pop %v6518
  %v6567 = vtanh.pop %v6519
  %v6568 = vtanh.pop %v6520
  %v6569 = vtanh.pop %v6521
  %v6570 = vtanh.pop %v6522
  %v6571 = vtanh.pop %v6523
  %v6572 = vtanh.pop %v6524
  %v6573 = vtanh.pop %v6525
  %v6574 = vtanh.pop %v6526
  %v6575 = vtanh.pop %v6527
  %v6576 = vtanh.pop %v6528
  %v6577 = vtanh.pop %v6529
  %v6578 = vtanh.pop %v6530
  %v6579 = vtanh.pop %v6531
  %v6580 = vtanh.pop %v6532
  %v6581 = vtanh.pop %v6533
  %v6582 = vtanh.pop %v6534
  %v6583 = vtanh.pop %v6535
  %v6584 = vtanh.pop %v6536
  %v6585 = vtanh.pop %v6537
  %v6586 = vtanh.pop %v6538
  %v6587 = vtanh.pop %v6539
  %v6588 = vtanh.pop %v6540
  %v6589 = vtanh.pop %v6541
  %v6590 = vtanh.pop %v6542
  %v6591 = vtanh.pop %v6543
  %v6592 = vtanh.pop %v6544
  %v6593 = vtanh.pop %v6545
  %v6594 = vtanh.pop %v6546
  %v6595 = vtanh.pop %v6547
  %v6596 = vtanh.pop %v6548
  %v6597 = vtanh.pop %v6549
  %v6598 = vtanh.pop %v6550
  %v6599 = vtanh.pop %v6551
  %v6600 = vtanh.pop %v6552
  %v6601 = vtanh.pop %v6553
  %v6602 = vtanh.pop %v6554
  %v6603 = vtanh.pop %v6555
  %v6605 = vsel %vm3301, %v6557, 0
  %v6608 = vsel %vm3301, %v6559, 0
  %v6611 = vsel %vm3301, %v6561, 0
  %v6614 = vsel %vm3301, %v6563, 0
  %v6617 = vsel %vm3301, %v6565, 0
  %v6620 = vsel %vm3301, %v6567, 0
  %v6623 = vsel %vm3301, %v6569, 0
  %v6626 = vsel %vm3301, %v6571, 0
  %v6629 = vsel %vm3301, %v6573, 0
  %v6632 = vsel %vm3301, %v6575, 0
  %v6635 = vsel %vm3301, %v6577, 0
  %v6638 = vsel %vm3301, %v6579, 0
  %v6641 = vsel %vm3301, %v6581, 0
  %v6644 = vsel %vm3301, %v6583, 0
  %v6647 = vsel %vm3301, %v6585, 0
  %v6650 = vsel %vm3301, %v6587, 0
  %v6653 = vsel %vm3301, %v6589, 0
  %v6656 = vsel %vm3301, %v6591, 0
  %v6659 = vsel %vm3301, %v6593, 0
  %v6662 = vsel %vm3301, %v6595, 0
  %v6665 = vsel %vm3301, %v6597, 0
  %v6668 = vsel %vm3301, %v6599, 0
  %v6671 = vsel %vm3301, %v6601, 0
  %v6674 = vsel %vm3301, %v6603, 0
  %6676 = vmatprep.subr.mxu0 0.0
  %6677 = vmatpush1.msra.mxu0 %v1901
  %6678 = vmatprep.subr.mxu0 0.0
  %6679 = vmatpush1.msra.mxu0 %v1902
  %6680 = vmatprep.subr.mxu0 0.0
  %6681 = vmatpush1.msra.mxu0 %v1903
  %6682 = vmatprep.subr.mxu0 0.0
  %6683 = vmatpush1.msra.mxu0 %v1904
  %6684 = vmatprep.subr.mxu0 0.0
  %6685 = vmatpush1.msra.mxu0 %v1905
  %6686 = vmatprep.subr.mxu0 0.0
  %6687 = vmatpush1.msra.mxu0 %v1906
  %6688 = vmatprep.subr.mxu0 0.0
  %6689 = vmatpush1.msra.mxu0 %v1907
  %6690 = vmatprep.subr.mxu0 0.0
  %6691 = vmatpush1.msra.mxu0 %v1908
  %6692 = vmatprep.subr.mxu0 0.0
  %6693 = vmatpush1.msra.mxu0 %v1909
  %6694 = vmatprep.subr.mxu0 0.0
  %6695 = vmatpush1.msra.mxu0 %v1910
  %6696 = vmatprep.subr.mxu0 0.0
  %6697 = vmatpush1.msra.mxu0 %v1911
  %6698 = vmatprep.subr.mxu0 0.0
  %6699 = vmatpush1.msra.mxu0 %v1912
  %6700 = vmatprep.subr.mxu0 0.0
  %6701 = vmatpush1.msra.mxu0 %v1913
  %6702 = vmatprep.subr.mxu0 0.0
  %6703 = vmatpush1.msra.mxu0 %v1914
  %6704 = vmatprep.subr.mxu0 0.0
  %6705 = vmatpush1.msra.mxu0 %v1915
  %6706 = vmatprep.subr.mxu0 0.0
  %6707 = vmatpush1.msra.mxu0 %v1916
  %6708 = vmatprep.subr.mxu0 0.0
  %6709 = vmatpush1.msra.mxu0 %v1917
  %6710 = vmatprep.subr.mxu0 0.0
  %6711 = vmatpush1.msra.mxu0 %v1918
  %6712 = vmatprep.subr.mxu0 0.0
  %6713 = vmatpush1.msra.mxu0 0.0
  %6714 = vmatprep.subr.mxu0 0.0
  %6715 = vmatpush1.msra.mxu0 0.0
  %6716 = vmatprep.subr.mxu0 0.0
  %6717 = vmatpush1.msra.mxu0 0.0
  %6718 = vmatprep.subr.mxu0 0.0
  %6719 = vmatpush1.msra.mxu0 0.0
  %6720 = vmatprep.subr.mxu0 0.0
  %6721 = vmatpush1.msra.mxu0 0.0
  %6722 = vmatprep.subr.mxu0 0.0
  %6723 = vmatpush1.msra.mxu0 0.0
  %6724 = vmatprep.subr.mxu0 0.0
  %6725 = vmatpush1.msra.mxu0 0.0
  %6726 = vmatprep.subr.mxu0 0.0
  %6727 = vmatpush1.msra.mxu0 0.0
  %6728 = vmatprep.subr.mxu0 0.0
  %6729 = vmatpush1.msra.mxu0 0.0
  %6730 = vmatprep.subr.mxu0 0.0
  %6731 = vmatpush1.msra.mxu0 0.0
  %6732 = vmatprep.subr.mxu0 0.0
  %6733 = vmatpush1.msra.mxu0 0.0
  %6734 = vmatprep.subr.mxu0 0.0
  %6735 = vmatpush1.msra.mxu0 0.0
  %6736 = vmatprep.subr.mxu0 0.0
  %6737 = vmatpush1.msra.mxu0 0.0
  %6738 = vmatprep.subr.mxu0 0.0
  %6739 = vmatpush1.msra.mxu0 0.0
  %6740 = vmatprep.mubr.f32.mxu0 %v6605
  %6741 = vmatmul.mubr.f32.gmra.mrb[0].mxu0 %v6556
  %v6742 = vpop.f32.mrb[0].mxu0
  %v6743 = vadd.f32 0.0, %v6742
  %v6744 = vpop.f32.mrb[0].mxu0
  %6745 = vmatprep.mubr.f32.mxu0 %v6608
  %6746 = vmatmul.mubr.f32.gmra.mrb[0].mxu0 %v6558
  %v6747 = vpop.f32.mrb[0].mxu0
  %v6748 = vadd.f32 0.0, %v6747
  %v6749 = vpop.f32.mrb[0].mxu0
  %6750 = vmatprep.mubr.f32.mxu0 %v6611
  %6751 = vmatmul.mubr.f32.gmra.mrb[0].mxu0 %v6560
  %v6752 = vpop.f32.mrb[0].mxu0
  %v6753 = vadd.f32 0.0, %v6752
  %v6754 = vpop.f32.mrb[0].mxu0
  %6755 = vmatprep.mubr.f32.mxu0 %v6614
  %6756 = vmatmul.mubr.f32.gmra.mrb[0].mxu0 %v6562
  %v6757 = vpop.f32.mrb[0].mxu0
  %v6758 = vadd.f32 0.0, %v6757
  %v6759 = vpop.f32.mrb[0].mxu0
  %6760 = vmatprep.mubr.f32.mxu0 %v6617
  %6761 = vmatmul.mubr.f32.gmra.mrb[0].mxu0 %v6564
  %v6762 = vpop.f32.mrb[0].mxu0
  %v6763 = vadd.f32 0.0, %v6762
  %v6764 = vpop.f32.mrb[0].mxu0
  %6765 = vmatprep.mubr.f32.mxu0 %v6620
  %6766 = vmatmul.mubr.f32.gmra.mrb[0].mxu0 %v6566
  %v6767 = vpop.f32.mrb[0].mxu0
  %v6768 = vadd.f32 0.0, %v6767
  %v6769 = vpop.f32.mrb[0].mxu0
  %6770 = vmatprep.mubr.f32.mxu0 %v6623
  %6771 = vmatmul.mubr.f32.gmra.mrb[0].mxu0 %v6568
  %v6772 = vpop.f32.mrb[0].mxu0
  %v6773 = vadd.f32 0.0, %v6772
  %v6774 = vpop.f32.mrb[0].mxu0
  %6775 = vmatprep.mubr.f32.mxu0 %v6626
  %6776 = vmatmul.mubr.f32.gmra.mrb[0].mxu0 %v6570
  %v6777 = vpop.f32.mrb[0].mxu0
  %v6778 = vadd.f32 0.0, %v6777
  %v6779 = vpop.f32.mrb[0].mxu0
  %6780 = vmatprep.mubr.f32.mxu0 %v6629
  %6781 = vmatmul.mubr.f32.gmra.mrb[0].mxu0 %v6572
  %v6782 = vpop.f32.mrb[0].mxu0
  %v6783 = vadd.f32 0.0, %v6782
  %v6784 = vpop.f32.mrb[0].mxu0
  %6785 = vmatprep.mubr.f32.mxu0 %v6632
  %6786 = vmatmul.mubr.f32.gmra.mrb[0].mxu0 %v6574
  %v6787 = vpop.f32.mrb[0].mxu0
  %v6788 = vadd.f32 0.0, %v6787
  %v6789 = vpop.f32.mrb[0].mxu0
  %6790 = vmatprep.mubr.f32.mxu0 %v6635
  %6791 = vmatmul.mubr.f32.gmra.mrb[0].mxu0 %v6576
  %v6792 = vpop.f32.mrb[0].mxu0
  %v6793 = vadd.f32 0.0, %v6792
  %v6794 = vpop.f32.mrb[0].mxu0
  %6795 = vmatprep.mubr.f32.mxu0 %v6638
  %6796 = vmatmul.mubr.f32.gmra.mrb[0].mxu0 %v6578
  %v6797 = vpop.f32.mrb[0].mxu0
  %v6798 = vadd.f32 0.0, %v6797
  %v6799 = vpop.f32.mrb[0].mxu0
  %6800 = vmatprep.mubr.f32.mxu0 %v6641
  %6801 = vmatmul.mubr.f32.gmra.mrb[0].mxu0 %v6580
  %v6802 = vpop.f32.mrb[0].mxu0
  %v6803 = vadd.f32 0.0, %v6802
  %v6804 = vpop.f32.mrb[0].mxu0
  %6805 = vmatprep.mubr.f32.mxu0 %v6644
  %6806 = vmatmul.mubr.f32.gmra.mrb[0].mxu0 %v6582
  %v6807 = vpop.f32.mrb[0].mxu0
  %v6808 = vadd.f32 0.0, %v6807
  %v6809 = vpop.f32.mrb[0].mxu0
  %6810 = vmatprep.mubr.f32.mxu0 %v6647
  %6811 = vmatmul.mubr.f32.gmra.mrb[0].mxu0 %v6584
  %v6812 = vpop.f32.mrb[0].mxu0
  %v6813 = vadd.f32 0.0, %v6812
  %v6814 = vpop.f32.mrb[0].mxu0
  %6815 = vmatprep.mubr.f32.mxu0 %v6650
  %6816 = vmatmul.mubr.f32.gmra.mrb[0].mxu0 %v6586
  %v6817 = vpop.f32.mrb[0].mxu0
  %v6818 = vadd.f32 0.0, %v6817
  %v6819 = vpop.f32.mrb[0].mxu0
  %6820 = vmatprep.mubr.f32.mxu0 %v6653
  %6821 = vmatmul.mubr.f32.gmra.mrb[0].mxu0 %v6588
  %v6822 = vpop.f32.mrb[0].mxu0
  %v6823 = vadd.f32 0.0, %v6822
  %v6824 = vpop.f32.mrb[0].mxu0
  %6825 = vmatprep.mubr.f32.mxu0 %v6656
  %6826 = vmatmul.mubr.f32.gmra.mrb[0].mxu0 %v6590
  %v6827 = vpop.f32.mrb[0].mxu0
  %v6828 = vadd.f32 0.0, %v6827
  %v6829 = vpop.f32.mrb[0].mxu0
  %6830 = vmatprep.mubr.f32.mxu0 %v6659
  %6831 = vmatmul.mubr.f32.gmra.mrb[0].mxu0 %v6592
  %v6832 = vpop.f32.mrb[0].mxu0
  %v6833 = vadd.f32 0.0, %v6832
  %v6834 = vpop.f32.mrb[0].mxu0
  %6835 = vmatprep.mubr.f32.mxu0 %v6662
  %6836 = vmatmul.mubr.f32.gmra.mrb[0].mxu0 %v6594
  %v6837 = vpop.f32.mrb[0].mxu0
  %v6838 = vadd.f32 0.0, %v6837
  %v6839 = vpop.f32.mrb[0].mxu0
  %6840 = vmatprep.mubr.f32.mxu0 %v6665
  %6841 = vmatmul.mubr.f32.gmra.mrb[0].mxu0 %v6596
  %v6842 = vpop.f32.mrb[0].mxu0
  %v6843 = vadd.f32 0.0, %v6842
  %v6844 = vpop.f32.mrb[0].mxu0
  %6845 = vmatprep.mubr.f32.mxu0 %v6668
  %6846 = vmatmul.mubr.f32.gmra.mrb[0].mxu0 %v6598
  %v6847 = vpop.f32.mrb[0].mxu0
  %v6848 = vadd.f32 0.0, %v6847
  %v6849 = vpop.f32.mrb[0].mxu0
  %6850 = vmatprep.mubr.f32.mxu0 %v6671
  %6851 = vmatmul.mubr.f32.gmra.mrb[0].mxu0 %v6600
  %v6852 = vpop.f32.mrb[0].mxu0
  %v6853 = vadd.f32 0.0, %v6852
  %v6854 = vpop.f32.mrb[0].mxu0
  %6855 = vmatprep.mubr.f32.mxu0 %v6674
  %6856 = vmatmul.mubr.f32.gmra.mrb[0].mxu0 %v6602
  %v6857 = vpop.f32.mrb[0].mxu0
  %v6858 = vadd.f32 0.0, %v6857
  %v6859 = vpop.f32.mrb[0].mxu0
  %6860 = vdwg.mxu0
  %v6862 = vsel %vm3301, %v5175, 0
  %v6865 = vsel %vm3301, %v5177, 0
  %v6868 = vsel %vm3301, %v5179, 0
  %v6871 = vsel %vm3301, %v5181, 0
  %v6874 = vsel %vm3301, %v5183, 0
  %v6877 = vsel %vm3301, %v5185, 0
  %v6880 = vsel %vm3301, %v5187, 0
  %v6883 = vsel %vm3301, %v5189, 0
  %v6886 = vsel %vm3301, %v5191, 0
  %v6889 = vsel %vm3301, %v5193, 0
  %v6892 = vsel %vm3301, %v5195, 0
  %v6895 = vsel %vm3301, %v5197, 0
  %v6898 = vsel %vm3301, %v5199, 0
  %v6901 = vsel %vm3301, %v5201, 0
  %v6904 = vsel %vm3301, %v5203, 0
  %v6907 = vsel %vm3301, %v5205, 0
  %v6910 = vsel %vm3301, %v5207, 0
  %v6913 = vsel %vm3301, %v5209, 0
  %v6916 = vsel %vm3301, %v5211, 0
  %v6919 = vsel %vm3301, %v5213, 0
  %v6922 = vsel %vm3301, %v5215, 0
  %v6925 = vsel %vm3301, %v5217, 0
  %v6928 = vsel %vm3301, %v5219, 0
  %v6931 = vsel %vm3301, %v5221, 0
  %6933 = vmatprep.subr.mxu0 0.0
  %6934 = vmatpush1.msra.mxu0 %v1901
  %6935 = vmatprep.subr.mxu0 0.0
  %6936 = vmatpush1.msra.mxu0 %v1902
  %6937 = vmatprep.subr.mxu0 0.0
  %6938 = vmatpush1.msra.mxu0 %v1903
  %6939 = vmatprep.subr.mxu0 0.0
  %6940 = vmatpush1.msra.mxu0 %v1904
  %6941 = vmatprep.subr.mxu0 0.0
  %6942 = vmatpush1.msra.mxu0 %v1905
  %6943 = vmatprep.subr.mxu0 0.0
  %6944 = vmatpush1.msra.mxu0 %v1906
  %6945 = vmatprep.subr.mxu0 0.0
  %6946 = vmatpush1.msra.mxu0 %v1907
  %6947 = vmatprep.subr.mxu0 0.0
  %6948 = vmatpush1.msra.mxu0 %v1908
  %6949 = vmatprep.subr.mxu0 0.0
  %6950 = vmatpush1.msra.mxu0 %v1909
  %6951 = vmatprep.subr.mxu0 0.0
  %6952 = vmatpush1.msra.mxu0 %v1910
  %6953 = vmatprep.subr.mxu0 0.0
  %6954 = vmatpush1.msra.mxu0 %v1911
  %6955 = vmatprep.subr.mxu0 0.0
  %6956 = vmatpush1.msra.mxu0 %v1912
  %6957 = vmatprep.subr.mxu0 0.0
  %6958 = vmatpush1.msra.mxu0 %v1913
  %6959 = vmatprep.subr.mxu0 0.0
  %6960 = vmatpush1.msra.mxu0 %v1914
  %6961 = vmatprep.subr.mxu0 0.0
  %6962 = vmatpush1.msra.mxu0 %v1915
  %6963 = vmatprep.subr.mxu0 0.0
  %6964 = vmatpush1.msra.mxu0 %v1916
  %6965 = vmatprep.subr.mxu0 0.0
  %6966 = vmatpush1.msra.mxu0 %v1917
  %6967 = vmatprep.subr.mxu0 0.0
  %6968 = vmatpush1.msra.mxu0 %v1918
  %6969 = vmatprep.subr.mxu0 0.0
  %6970 = vmatpush1.msra.mxu0 0.0
  %6971 = vmatprep.subr.mxu0 0.0
  %6972 = vmatpush1.msra.mxu0 0.0
  %6973 = vmatprep.subr.mxu0 0.0
  %6974 = vmatpush1.msra.mxu0 0.0
  %6975 = vmatprep.subr.mxu0 0.0
  %6976 = vmatpush1.msra.mxu0 0.0
  %6977 = vmatprep.subr.mxu0 0.0
  %6978 = vmatpush1.msra.mxu0 0.0
  %6979 = vmatprep.subr.mxu0 0.0
  %6980 = vmatpush1.msra.mxu0 0.0
  %6981 = vmatprep.subr.mxu0 0.0
  %6982 = vmatpush1.msra.mxu0 0.0
  %6983 = vmatprep.subr.mxu0 0.0
  %6984 = vmatpush1.msra.mxu0 0.0
  %6985 = vmatprep.subr.mxu0 0.0
  %6986 = vmatpush1.msra.mxu0 0.0
  %6987 = vmatprep.subr.mxu0 0.0
  %6988 = vmatpush1.msra.mxu0 0.0
  %6989 = vmatprep.subr.mxu0 0.0
  %6990 = vmatpush1.msra.mxu0 0.0
  %6991 = vmatprep.subr.mxu0 0.0
  %6992 = vmatpush1.msra.mxu0 0.0
  %6993 = vmatprep.subr.mxu0 0.0
  %6994 = vmatpush1.msra.mxu0 0.0
  %6995 = vmatprep.subr.mxu0 0.0
  %6996 = vmatpush1.msra.mxu0 0.0
  %6997 = vmatprep.mubr.f32.mxu0 %v6862
  %6998 = vmatmul.mubr.f32.gmra.mrb[0].mxu0 %v5174
  %v6999 = vpop.f32.mrb[0].mxu0
  %v7000 = vadd.f32 %v6743, %v6999
  %v7001 = vpop.f32.mrb[0].mxu0
  %7002 = vmatprep.mubr.f32.mxu0 %v6865
  %7003 = vmatmul.mubr.f32.gmra.mrb[0].mxu0 %v5176
  %v7004 = vpop.f32.mrb[0].mxu0
  %v7005 = vadd.f32 %v6748, %v7004
  %v7006 = vpop.f32.mrb[0].mxu0
  %7007 = vmatprep.mubr.f32.mxu0 %v6868
  %7008 = vmatmul.mubr.f32.gmra.mrb[0].mxu0 %v5178
  %v7009 = vpop.f32.mrb[0].mxu0
  %v7010 = vadd.f32 %v6753, %v7009
  %v7011 = vpop.f32.mrb[0].mxu0
  %7012 = vmatprep.mubr.f32.mxu0 %v6871
  %7013 = vmatmul.mubr.f32.gmra.mrb[0].mxu0 %v5180
  %v7014 = vpop.f32.mrb[0].mxu0
  %v7015 = vadd.f32 %v6758, %v7014
  %v7016 = vpop.f32.mrb[0].mxu0
  %7017 = vmatprep.mubr.f32.mxu0 %v6874
  %7018 = vmatmul.mubr.f32.gmra.mrb[0].mxu0 %v5182
  %v7019 = vpop.f32.mrb[0].mxu0
  %v7020 = vadd.f32 %v6763, %v7019
  %v7021 = vpop.f32.mrb[0].mxu0
  %7022 = vmatprep.mubr.f32.mxu0 %v6877
  %7023 = vmatmul.mubr.f32.gmra.mrb[0].mxu0 %v5184
  %v7024 = vpop.f32.mrb[0].mxu0
  %v7025 = vadd.f32 %v6768, %v7024
  %v7026 = vpop.f32.mrb[0].mxu0
  %7027 = vmatprep.mubr.f32.mxu0 %v6880
  %7028 = vmatmul.mubr.f32.gmra.mrb[0].mxu0 %v5186
  %v7029 = vpop.f32.mrb[0].mxu0
  %v7030 = vadd.f32 %v6773, %v7029
  %v7031 = vpop.f32.mrb[0].mxu0
  %7032 = vmatprep.mubr.f32.mxu0 %v6883
  %7033 = vmatmul.mubr.f32.gmra.mrb[0].mxu0 %v5188
  %v7034 = vpop.f32.mrb[0].mxu0
  %v7035 = vadd.f32 %v6778, %v7034
  %v7036 = vpop.f32.mrb[0].mxu0
  %7037 = vmatprep.mubr.f32.mxu0 %v6886
  %7038 = vmatmul.mubr.f32.gmra.mrb[0].mxu0 %v5190
  %v7039 = vpop.f32.mrb[0].mxu0
  %v7040 = vadd.f32 %v6783, %v7039
  %v7041 = vpop.f32.mrb[0].mxu0
  %7042 = vmatprep.mubr.f32.mxu0 %v6889
  %7043 = vmatmul.mubr.f32.gmra.mrb[0].mxu0 %v5192
  %v7044 = vpop.f32.mrb[0].mxu0
  %v7045 = vadd.f32 %v6788, %v7044
  %v7046 = vpop.f32.mrb[0].mxu0
  %7047 = vmatprep.mubr.f32.mxu0 %v6892
  %7048 = vmatmul.mubr.f32.gmra.mrb[0].mxu0 %v5194
  %v7049 = vpop.f32.mrb[0].mxu0
  %v7050 = vadd.f32 %v6793, %v7049
  %v7051 = vpop.f32.mrb[0].mxu0
  %7052 = vmatprep.mubr.f32.mxu0 %v6895
  %7053 = vmatmul.mubr.f32.gmra.mrb[0].mxu0 %v5196
  %v7054 = vpop.f32.mrb[0].mxu0
  %v7055 = vadd.f32 %v6798, %v7054
  %v7056 = vpop.f32.mrb[0].mxu0
  %7057 = vmatprep.mubr.f32.mxu0 %v6898
  %7058 = vmatmul.mubr.f32.gmra.mrb[0].mxu0 %v5198
  %v7059 = vpop.f32.mrb[0].mxu0
  %v7060 = vadd.f32 %v6803, %v7059
  %v7061 = vpop.f32.mrb[0].mxu0
  %7062 = vmatprep.mubr.f32.mxu0 %v6901
  %7063 = vmatmul.mubr.f32.gmra.mrb[0].mxu0 %v5200
  %v7064 = vpop.f32.mrb[0].mxu0
  %v7065 = vadd.f32 %v6808, %v7064
  %v7066 = vpop.f32.mrb[0].mxu0
  %7067 = vmatprep.mubr.f32.mxu0 %v6904
  %7068 = vmatmul.mubr.f32.gmra.mrb[0].mxu0 %v5202
  %v7069 = vpop.f32.mrb[0].mxu0
  %v7070 = vadd.f32 %v6813, %v7069
  %v7071 = vpop.f32.mrb[0].mxu0
  %7072 = vmatprep.mubr.f32.mxu0 %v6907
  %7073 = vmatmul.mubr.f32.gmra.mrb[0].mxu0 %v5204
  %v7074 = vpop.f32.mrb[0].mxu0
  %v7075 = vadd.f32 %v6818, %v7074
  %v7076 = vpop.f32.mrb[0].mxu0
  %7077 = vmatprep.mubr.f32.mxu0 %v6910
  %7078 = vmatmul.mubr.f32.gmra.mrb[0].mxu0 %v5206
  %v7079 = vpop.f32.mrb[0].mxu0
  %v7080 = vadd.f32 %v6823, %v7079
  %v7081 = vpop.f32.mrb[0].mxu0
  %7082 = vmatprep.mubr.f32.mxu0 %v6913
  %7083 = vmatmul.mubr.f32.gmra.mrb[0].mxu0 %v5208
  %v7084 = vpop.f32.mrb[0].mxu0
  %v7085 = vadd.f32 %v6828, %v7084
  %v7086 = vpop.f32.mrb[0].mxu0
  %7087 = vmatprep.mubr.f32.mxu0 %v6916
  %7088 = vmatmul.mubr.f32.gmra.mrb[0].mxu0 %v5210
  %v7089 = vpop.f32.mrb[0].mxu0
  %v7090 = vadd.f32 %v6833, %v7089
  %v7091 = vpop.f32.mrb[0].mxu0
  %7092 = vmatprep.mubr.f32.mxu0 %v6919
  %7093 = vmatmul.mubr.f32.gmra.mrb[0].mxu0 %v5212
  %v7094 = vpop.f32.mrb[0].mxu0
  %v7095 = vadd.f32 %v6838, %v7094
  %v7096 = vpop.f32.mrb[0].mxu0
  %7097 = vmatprep.mubr.f32.mxu0 %v6922
  %7098 = vmatmul.mubr.f32.gmra.mrb[0].mxu0 %v5214
  %v7099 = vpop.f32.mrb[0].mxu0
  %v7100 = vadd.f32 %v6843, %v7099
  %v7101 = vpop.f32.mrb[0].mxu0
  %7102 = vmatprep.mubr.f32.mxu0 %v6925
  %7103 = vmatmul.mubr.f32.gmra.mrb[0].mxu0 %v5216
  %v7104 = vpop.f32.mrb[0].mxu0
  %v7105 = vadd.f32 %v6848, %v7104
  %v7106 = vpop.f32.mrb[0].mxu0
  %7107 = vmatprep.mubr.f32.mxu0 %v6928
  %7108 = vmatmul.mubr.f32.gmra.mrb[0].mxu0 %v5218
  %v7109 = vpop.f32.mrb[0].mxu0
  %v7110 = vadd.f32 %v6853, %v7109
  %v7111 = vpop.f32.mrb[0].mxu0
  %7112 = vmatprep.mubr.f32.mxu0 %v6931
  %7113 = vmatmul.mubr.f32.gmra.mrb[0].mxu0 %v5220
  %v7114 = vpop.f32.mrb[0].mxu0
  %v7115 = vadd.f32 %v6858, %v7114
  %v7116 = vpop.f32.mrb[0].mxu0
  %7117 = vdwg.mxu0
  %v7118 = vmul.f32 %v7000, 0.5
  %v7119 = vmul.f32 %v7005, 0.5
  %v7120 = vmul.f32 %v7010, 0.5
  %v7121 = vmul.f32 %v7015, 0.5
  %v7122 = vmul.f32 %v7020, 0.5
  %v7123 = vmul.f32 %v7025, 0.5
  %v7124 = vmul.f32 %v7030, 0.5
  %v7125 = vmul.f32 %v7035, 0.5
  %v7126 = vmul.f32 %v7040, 0.5
  %v7127 = vmul.f32 %v7045, 0.5
  %v7128 = vmul.f32 %v7050, 0.5
  %v7129 = vmul.f32 %v7055, 0.5
  %v7130 = vmul.f32 %v7060, 0.5
  %v7131 = vmul.f32 %v7065, 0.5
  %v7132 = vmul.f32 %v7070, 0.5
  %v7133 = vmul.f32 %v7075, 0.5
  %v7134 = vmul.f32 %v7080, 0.5
  %v7135 = vmul.f32 %v7085, 0.5
  %v7136 = vmul.f32 %v7090, 0.5
  %v7137 = vmul.f32 %v7095, 0.5
  %v7138 = vmul.f32 %v7100, 0.5
  %v7139 = vmul.f32 %v7105, 0.5
  %v7140 = vmul.f32 %v7110, 0.5
  %v7141 = vmul.f32 %v7115, 0.5
  %v7142 = vld [vmem:[%s4] sm:$0xff]
  %v7143 = vld [vmem:[%s4 + $0x8] sm:$0xff]
  %v7144 = vld [vmem:[%s4 + $0x10] sm:$0xff]
  %v7145 = vld [vmem:[%s4 + $0x18] sm:$0xff]
  %v7146 = vld [vmem:[%s4 + $0x20] sm:$0xff]
  %v7147 = vld [vmem:[%s4 + $0x28] sm:$0xff]
  %v7148 = vld [vmem:[%s4 + $0x30] sm:$0xff]
  %v7149 = vld [vmem:[%s4 + $0x38] sm:$0xff]
  %v7150 = vld [vmem:[%s4 + $0x40] sm:$0xff]
  %s7151 = scalar_lea.vmem %s4, 72
  %v7152 = vld [vmem:[%s7151] sm:$0xff]
  %v7153 = vld [vmem:[%s7151 + $0x8] sm:$0xff]
  %v7154 = vld [vmem:[%s7151 + $0x10] sm:$0xff]
  %v7155 = vld [vmem:[%s7151 + $0x18] sm:$0xff]
  %v7156 = vld [vmem:[%s7151 + $0x20] sm:$0xff]
  %v7157 = vld [vmem:[%s7151 + $0x28] sm:$0xff]
  %v7158 = vld [vmem:[%s7151 + $0x30] sm:$0xff]
  %v7159 = vld [vmem:[%s7151 + $0x38] sm:$0xff]
  %v7160 = vld [vmem:[%s7151 + $0x40] sm:$0xff]
  %vm7161 = vcmask 588800
  %v7163 = vsel %vm7161, %v7118, 0
  %v7166 = vsel %vm7161, %v7119, 0
  %v7169 = vsel %vm7161, %v7120, 0
  %v7172 = vsel %vm7161, %v7121, 0
  %v7175 = vsel %vm7161, %v7122, 0
  %v7178 = vsel %vm7161, %v7123, 0
  %v7181 = vsel %vm7161, %v7124, 0
  %v7184 = vsel %vm7161, %v7125, 0
  %v7187 = vsel %vm7161, %v7126, 0
  %v7190 = vsel %vm7161, %v7127, 0
  %v7193 = vsel %vm7161, %v7128, 0
  %v7196 = vsel %vm7161, %v7129, 0
  %v7199 = vsel %vm7161, %v7130, 0
  %v7202 = vsel %vm7161, %v7131, 0
  %v7205 = vsel %vm7161, %v7132, 0
  %v7208 = vsel %vm7161, %v7133, 0
  %7210 = vmatprep.subr.mxu0 0.0
  %7211 = vmatpush1.msra.mxu0 %v7152
  %7212 = vmatprep.subr.mxu0 0.0
  %7213 = vmatpush1.msra.mxu0 %v7153
  %7214 = vmatprep.subr.mxu0 0.0
  %7215 = vmatpush1.msra.mxu0 %v7154
  %7216 = vmatprep.subr.mxu0 0.0
  %7217 = vmatpush1.msra.mxu0 %v7155
  %7218 = vmatprep.subr.mxu0 0.0
  %7219 = vmatpush1.msra.mxu0 %v7156
  %7220 = vmatprep.subr.mxu0 0.0
  %7221 = vmatpush1.msra.mxu0 %v7157
  %7222 = vmatprep.subr.mxu0 0.0
  %7223 = vmatpush1.msra.mxu0 %v7158
  %7224 = vmatprep.subr.mxu0 0.0
  %7225 = vmatpush1.msra.mxu0 %v7159
  %7226 = vmatprep.subr.mxu0 0.0
  %7227 = vmatpush1.msra.mxu0 %v7160
  %7228 = vmatprep.subr.mxu0 0.0
  %7229 = vmatpush1.msra.mxu0 0.0
  %7230 = vmatprep.subr.mxu0 0.0
  %7231 = vmatpush1.msra.mxu0 0.0
  %7232 = vmatprep.subr.mxu0 0.0
  %7233 = vmatpush1.msra.mxu0 0.0
  %7234 = vmatprep.subr.mxu0 0.0
  %7235 = vmatpush1.msra.mxu0 0.0
  %7236 = vmatprep.subr.mxu0 0.0
  %7237 = vmatpush1.msra.mxu0 0.0
  %7238 = vmatprep.subr.mxu0 0.0
  %7239 = vmatpush1.msra.mxu0 0.0
  %7240 = vmatprep.subr.mxu0 0.0
  %7241 = vmatpush1.msra.mxu0 0.0
  %7242 = vmatprep.subr.mxu0 0.0
  %7243 = vmatpush1.msra.mxu0 0.0
  %7244 = vmatprep.subr.mxu0 0.0
  %7245 = vmatpush1.msra.mxu0 0.0
  %7246 = vmatprep.subr.mxu0 0.0
  %7247 = vmatpush1.msra.mxu0 0.0
  %7248 = vmatprep.subr.mxu0 0.0
  %7249 = vmatpush1.msra.mxu0 0.0
  %7250 = vmatprep.subr.mxu0 0.0
  %7251 = vmatpush1.msra.mxu0 0.0
  %7252 = vmatprep.subr.mxu0 0.0
  %7253 = vmatpush1.msra.mxu0 0.0
  %7254 = vmatprep.subr.mxu0 0.0
  %7255 = vmatpush1.msra.mxu0 0.0
  %7256 = vmatprep.subr.mxu0 0.0
  %7257 = vmatpush1.msra.mxu0 0.0
  %7258 = vmatprep.subr.mxu0 0.0
  %7259 = vmatpush1.msra.mxu0 0.0
  %7260 = vmatprep.subr.mxu0 0.0
  %7261 = vmatpush1.msra.mxu0 0.0
  %7262 = vmatprep.subr.mxu0 0.0
  %7263 = vmatpush1.msra.mxu0 0.0
  %7264 = vmatprep.subr.mxu0 0.0
  %7265 = vmatpush1.msra.mxu0 0.0
  %7266 = vmatprep.subr.mxu0 0.0
  %7267 = vmatpush1.msra.mxu0 0.0
  %7268 = vmatprep.subr.mxu0 0.0
  %7269 = vmatpush1.msra.mxu0 0.0
  %7270 = vmatprep.subr.mxu0 0.0
  %7271 = vmatpush1.msra.mxu0 0.0
  %7272 = vmatprep.subr.mxu0 0.0
  %7273 = vmatpush1.msra.mxu0 0.0
  %7274 = vmatprep.mubr.f32.mxu0 0.0
  %7275 = vmatmul.mubr.f32.gmra.mrb[0].mxu0 %v7163
  %v7276 = vpop.f32.mrb[0].mxu0
  %v7277 = vadd.f32 0.0, %v7276
  %v7278 = vpop.f32.mrb[0].mxu0
  %7279 = vmatprep.mubr.f32.mxu0 0.0
  %7280 = vmatmul.mubr.f32.gmra.mrb[0].mxu0 %v7166
  %v7281 = vpop.f32.mrb[0].mxu0
  %v7282 = vadd.f32 0.0, %v7281
  %v7283 = vpop.f32.mrb[0].mxu0
  %7284 = vmatprep.mubr.f32.mxu0 0.0
  %7285 = vmatmul.mubr.f32.gmra.mrb[0].mxu0 %v7169
  %v7286 = vpop.f32.mrb[0].mxu0
  %v7287 = vadd.f32 0.0, %v7286
  %v7288 = vpop.f32.mrb[0].mxu0
  %7289 = vmatprep.mubr.f32.mxu0 0.0
  %7290 = vmatmul.mubr.f32.gmra.mrb[0].mxu0 %v7172
  %v7291 = vpop.f32.mrb[0].mxu0
  %v7292 = vadd.f32 0.0, %v7291
  %v7293 = vpop.f32.mrb[0].mxu0
  %7294 = vmatprep.mubr.f32.mxu0 0.0
  %7295 = vmatmul.mubr.f32.gmra.mrb[0].mxu0 %v7175
  %v7296 = vpop.f32.mrb[0].mxu0
  %v7297 = vadd.f32 0.0, %v7296
  %v7298 = vpop.f32.mrb[0].mxu0
  %7299 = vmatprep.mubr.f32.mxu0 0.0
  %7300 = vmatmul.mubr.f32.gmra.mrb[0].mxu0 %v7178
  %v7301 = vpop.f32.mrb[0].mxu0
  %v7302 = vadd.f32 0.0, %v7301
  %v7303 = vpop.f32.mrb[0].mxu0
  %7304 = vmatprep.mubr.f32.mxu0 0.0
  %7305 = vmatmul.mubr.f32.gmra.mrb[0].mxu0 %v7181
  %v7306 = vpop.f32.mrb[0].mxu0
  %v7307 = vadd.f32 0.0, %v7306
  %v7308 = vpop.f32.mrb[0].mxu0
  %7309 = vmatprep.mubr.f32.mxu0 0.0
  %7310 = vmatmul.mubr.f32.gmra.mrb[0].mxu0 %v7184
  %v7311 = vpop.f32.mrb[0].mxu0
  %v7312 = vadd.f32 0.0, %v7311
  %v7313 = vpop.f32.mrb[0].mxu0
  %7314 = vmatprep.mubr.f32.mxu0 0.0
  %7315 = vmatmul.mubr.f32.gmra.mrb[0].mxu0 %v7187
  %v7316 = vpop.f32.mrb[0].mxu0
  %v7317 = vadd.f32 0.0, %v7316
  %v7318 = vpop.f32.mrb[0].mxu0
  %7319 = vmatprep.mubr.f32.mxu0 0.0
  %7320 = vmatmul.mubr.f32.gmra.mrb[0].mxu0 %v7190
  %v7321 = vpop.f32.mrb[0].mxu0
  %v7322 = vadd.f32 0.0, %v7321
  %v7323 = vpop.f32.mrb[0].mxu0
  %7324 = vmatprep.mubr.f32.mxu0 0.0
  %7325 = vmatmul.mubr.f32.gmra.mrb[0].mxu0 %v7193
  %v7326 = vpop.f32.mrb[0].mxu0
  %v7327 = vadd.f32 0.0, %v7326
  %v7328 = vpop.f32.mrb[0].mxu0
  %7329 = vmatprep.mubr.f32.mxu0 0.0
  %7330 = vmatmul.mubr.f32.gmra.mrb[0].mxu0 %v7196
  %v7331 = vpop.f32.mrb[0].mxu0
  %v7332 = vadd.f32 0.0, %v7331
  %v7333 = vpop.f32.mrb[0].mxu0
  %7334 = vmatprep.mubr.f32.mxu0 0.0
  %7335 = vmatmul.mubr.f32.gmra.mrb[0].mxu0 %v7199
  %v7336 = vpop.f32.mrb[0].mxu0
  %v7337 = vadd.f32 0.0, %v7336
  %v7338 = vpop.f32.mrb[0].mxu0
  %7339 = vmatprep.mubr.f32.mxu0 0.0
  %7340 = vmatmul.mubr.f32.gmra.mrb[0].mxu0 %v7202
  %v7341 = vpop.f32.mrb[0].mxu0
  %v7342 = vadd.f32 0.0, %v7341
  %v7343 = vpop.f32.mrb[0].mxu0
  %7344 = vmatprep.mubr.f32.mxu0 0.0
  %7345 = vmatmul.mubr.f32.gmra.mrb[0].mxu0 %v7205
  %v7346 = vpop.f32.mrb[0].mxu0
  %v7347 = vadd.f32 0.0, %v7346
  %v7348 = vpop.f32.mrb[0].mxu0
  %7349 = vmatprep.mubr.f32.mxu0 0.0
  %7350 = vmatmul.mubr.f32.gmra.mrb[0].mxu0 %v7208
  %v7351 = vpop.f32.mrb[0].mxu0
  %v7352 = vadd.f32 0.0, %v7351
  %v7353 = vpop.f32.mrb[0].mxu0
  %7354 = vdwg.mxu0
  %v7356 = vsel %vm7161, %v3816, 0
  %v7359 = vsel %vm7161, %v3817, 0
  %v7362 = vsel %vm7161, %v3818, 0
  %v7365 = vsel %vm7161, %v3819, 0
  %v7368 = vsel %vm7161, %v3820, 0
  %v7371 = vsel %vm7161, %v3821, 0
  %v7374 = vsel %vm7161, %v3822, 0
  %v7377 = vsel %vm7161, %v3823, 0
  %v7380 = vsel %vm7161, %v3824, 0
  %v7383 = vsel %vm7161, %v3825, 0
  %v7386 = vsel %vm7161, %v3826, 0
  %v7389 = vsel %vm7161, %v3827, 0
  %v7392 = vsel %vm7161, %v3828, 0
  %v7395 = vsel %vm7161, %v3829, 0
  %v7398 = vsel %vm7161, %v3830, 0
  %v7401 = vsel %vm7161, %v3831, 0
  %7403 = vmatprep.subr.mxu0 0.0
  %7404 = vmatpush1.msra.mxu0 %v7142
  %7405 = vmatprep.subr.mxu0 0.0
  %7406 = vmatpush1.msra.mxu0 %v7143
  %7407 = vmatprep.subr.mxu0 0.0
  %7408 = vmatpush1.msra.mxu0 %v7144
  %7409 = vmatprep.subr.mxu0 0.0
  %7410 = vmatpush1.msra.mxu0 %v7145
  %7411 = vmatprep.subr.mxu0 0.0
  %7412 = vmatpush1.msra.mxu0 %v7146
  %7413 = vmatprep.subr.mxu0 0.0
  %7414 = vmatpush1.msra.mxu0 %v7147
  %7415 = vmatprep.subr.mxu0 0.0
  %7416 = vmatpush1.msra.mxu0 %v7148
  %7417 = vmatprep.subr.mxu0 0.0
  %7418 = vmatpush1.msra.mxu0 %v7149
  %7419 = vmatprep.subr.mxu0 0.0
  %7420 = vmatpush1.msra.mxu0 %v7150
  %7421 = vmatprep.subr.mxu0 0.0
  %7422 = vmatpush1.msra.mxu0 0.0
  %7423 = vmatprep.subr.mxu0 0.0
  %7424 = vmatpush1.msra.mxu0 0.0
  %7425 = vmatprep.subr.mxu0 0.0
  %7426 = vmatpush1.msra.mxu0 0.0
  %7427 = vmatprep.subr.mxu0 0.0
  %7428 = vmatpush1.msra.mxu0 0.0
  %7429 = vmatprep.subr.mxu0 0.0
  %7430 = vmatpush1.msra.mxu0 0.0
  %7431 = vmatprep.subr.mxu0 0.0
  %7432 = vmatpush1.msra.mxu0 0.0
  %7433 = vmatprep.subr.mxu0 0.0
  %7434 = vmatpush1.msra.mxu0 0.0
  %7435 = vmatprep.subr.mxu0 0.0
  %7436 = vmatpush1.msra.mxu0 0.0
  %7437 = vmatprep.subr.mxu0 0.0
  %7438 = vmatpush1.msra.mxu0 0.0
  %7439 = vmatprep.subr.mxu0 0.0
  %7440 = vmatpush1.msra.mxu0 0.0
  %7441 = vmatprep.subr.mxu0 0.0
  %7442 = vmatpush1.msra.mxu0 0.0
  %7443 = vmatprep.subr.mxu0 0.0
  %7444 = vmatpush1.msra.mxu0 0.0
  %7445 = vmatprep.subr.mxu0 0.0
  %7446 = vmatpush1.msra.mxu0 0.0
  %7447 = vmatprep.subr.mxu0 0.0
  %7448 = vmatpush1.msra.mxu0 0.0
  %7449 = vmatprep.subr.mxu0 0.0
  %7450 = vmatpush1.msra.mxu0 0.0
  %7451 = vmatprep.subr.mxu0 0.0
  %7452 = vmatpush1.msra.mxu0 0.0
  %7453 = vmatprep.subr.mxu0 0.0
  %7454 = vmatpush1.msra.mxu0 0.0
  %7455 = vmatprep.subr.mxu0 0.0
  %7456 = vmatpush1.msra.mxu0 0.0
  %7457 = vmatprep.subr.mxu0 0.0
  %7458 = vmatpush1.msra.mxu0 0.0
  %7459 = vmatprep.subr.mxu0 0.0
  %7460 = vmatpush1.msra.mxu0 0.0
  %7461 = vmatprep.subr.mxu0 0.0
  %7462 = vmatpush1.msra.mxu0 0.0
  %7463 = vmatprep.subr.mxu0 0.0
  %7464 = vmatpush1.msra.mxu0 0.0
  %7465 = vmatprep.subr.mxu0 0.0
  %7466 = vmatpush1.msra.mxu0 0.0
  %7467 = vmatprep.mubr.f32.mxu0 0.0
  %7468 = vmatmul.mubr.f32.gmra.mrb[0].mxu0 %v7356
  %v7469 = vpop.f32.mrb[0].mxu0
  %v7470 = vadd.f32 %v7277, %v7469
  %v7471 = vpop.f32.mrb[0].mxu0
  %7472 = vmatprep.mubr.f32.mxu0 0.0
  %7473 = vmatmul.mubr.f32.gmra.mrb[0].mxu0 %v7359
  %v7474 = vpop.f32.mrb[0].mxu0
  %v7475 = vadd.f32 %v7282, %v7474
  %v7476 = vpop.f32.mrb[0].mxu0
  %7477 = vmatprep.mubr.f32.mxu0 0.0
  %7478 = vmatmul.mubr.f32.gmra.mrb[0].mxu0 %v7362
  %v7479 = vpop.f32.mrb[0].mxu0
  %v7480 = vadd.f32 %v7287, %v7479
  %v7481 = vpop.f32.mrb[0].mxu0
  %7482 = vmatprep.mubr.f32.mxu0 0.0
  %7483 = vmatmul.mubr.f32.gmra.mrb[0].mxu0 %v7365
  %v7484 = vpop.f32.mrb[0].mxu0
  %v7485 = vadd.f32 %v7292, %v7484
  %v7486 = vpop.f32.mrb[0].mxu0
  %7487 = vmatprep.mubr.f32.mxu0 0.0
  %7488 = vmatmul.mubr.f32.gmra.mrb[0].mxu0 %v7368
  %v7489 = vpop.f32.mrb[0].mxu0
  %v7490 = vadd.f32 %v7297, %v7489
  %v7491 = vpop.f32.mrb[0].mxu0
  %7492 = vmatprep.mubr.f32.mxu0 0.0
  %7493 = vmatmul.mubr.f32.gmra.mrb[0].mxu0 %v7371
  %v7494 = vpop.f32.mrb[0].mxu0
  %v7495 = vadd.f32 %v7302, %v7494
  %v7496 = vpop.f32.mrb[0].mxu0
  %7497 = vmatprep.mubr.f32.mxu0 0.0
  %7498 = vmatmul.mubr.f32.gmra.mrb[0].mxu0 %v7374
  %v7499 = vpop.f32.mrb[0].mxu0
  %v7500 = vadd.f32 %v7307, %v7499
  %v7501 = vpop.f32.mrb[0].mxu0
  %7502 = vmatprep.mubr.f32.mxu0 0.0
  %7503 = vmatmul.mubr.f32.gmra.mrb[0].mxu0 %v7377
  %v7504 = vpop.f32.mrb[0].mxu0
  %v7505 = vadd.f32 %v7312, %v7504
  %v7506 = vpop.f32.mrb[0].mxu0
  %7507 = vmatprep.mubr.f32.mxu0 0.0
  %7508 = vmatmul.mubr.f32.gmra.mrb[0].mxu0 %v7380
  %v7509 = vpop.f32.mrb[0].mxu0
  %v7510 = vadd.f32 %v7317, %v7509
  %v7511 = vpop.f32.mrb[0].mxu0
  %7512 = vmatprep.mubr.f32.mxu0 0.0
  %7513 = vmatmul.mubr.f32.gmra.mrb[0].mxu0 %v7383
  %v7514 = vpop.f32.mrb[0].mxu0
  %v7515 = vadd.f32 %v7322, %v7514
  %v7516 = vpop.f32.mrb[0].mxu0
  %7517 = vmatprep.mubr.f32.mxu0 0.0
  %7518 = vmatmul.mubr.f32.gmra.mrb[0].mxu0 %v7386
  %v7519 = vpop.f32.mrb[0].mxu0
  %v7520 = vadd.f32 %v7327, %v7519
  %v7521 = vpop.f32.mrb[0].mxu0
  %7522 = vmatprep.mubr.f32.mxu0 0.0
  %7523 = vmatmul.mubr.f32.gmra.mrb[0].mxu0 %v7389
  %v7524 = vpop.f32.mrb[0].mxu0
  %v7525 = vadd.f32 %v7332, %v7524
  %v7526 = vpop.f32.mrb[0].mxu0
  %7527 = vmatprep.mubr.f32.mxu0 0.0
  %7528 = vmatmul.mubr.f32.gmra.mrb[0].mxu0 %v7392
  %v7529 = vpop.f32.mrb[0].mxu0
  %v7530 = vadd.f32 %v7337, %v7529
  %v7531 = vpop.f32.mrb[0].mxu0
  %7532 = vmatprep.mubr.f32.mxu0 0.0
  %7533 = vmatmul.mubr.f32.gmra.mrb[0].mxu0 %v7395
  %v7534 = vpop.f32.mrb[0].mxu0
  %v7535 = vadd.f32 %v7342, %v7534
  %v7536 = vpop.f32.mrb[0].mxu0
  %7537 = vmatprep.mubr.f32.mxu0 0.0
  %7538 = vmatmul.mubr.f32.gmra.mrb[0].mxu0 %v7398
  %v7539 = vpop.f32.mrb[0].mxu0
  %v7540 = vadd.f32 %v7347, %v7539
  %v7541 = vpop.f32.mrb[0].mxu0
  %7542 = vmatprep.mubr.f32.mxu0 0.0
  %7543 = vmatmul.mubr.f32.gmra.mrb[0].mxu0 %v7401
  %v7544 = vpop.f32.mrb[0].mxu0
  %v7545 = vadd.f32 %v7352, %v7544
  %v7546 = vpop.f32.mrb[0].mxu0
  %7547 = vdwg.mxu0
  %s7548 = scalar_lea.vmem %s4, 144
  %v7549 = vld [vmem:[%s7548] sm:$0xff]
  %v7550 = vld [vmem:[%s7548 + $0x8] sm:$0xff]
  %v7551 = vld [vmem:[%s7548 + $0x10] sm:$0xff]
  %v7552 = vld [vmem:[%s7548 + $0x18] sm:$0xff]
  %v7553 = vld [vmem:[%s7548 + $0x20] sm:$0xff]
  %v7554 = vld [vmem:[%s7548 + $0x28] sm:$0xff]
  %v7555 = vld [vmem:[%s7548 + $0x30] sm:$0xff]
  %v7556 = vld [vmem:[%s7548 + $0x38] sm:$0xff]
  %v7557 = vld [vmem:[%s7548 + $0x40] sm:$0xff]
  %v7559 = vsel %vm7161, %v3832, 0
  %v7562 = vsel %vm7161, %v3833, 0
  %v7565 = vsel %vm7161, %v3834, 0
  %v7568 = vsel %vm7161, %v3835, 0
  %7570 = vmatprep.subr.mxu0 0.0
  %7571 = vmatpush1.msra.mxu0 %v7549
  %7572 = vmatprep.subr.mxu0 0.0
  %7573 = vmatpush1.msra.mxu0 %v7550
  %7574 = vmatprep.subr.mxu0 0.0
  %7575 = vmatpush1.msra.mxu0 %v7551
  %7576 = vmatprep.subr.mxu0 0.0
  %7577 = vmatpush1.msra.mxu0 %v7552
  %7578 = vmatprep.subr.mxu0 0.0
  %7579 = vmatpush1.msra.mxu0 %v7553
  %7580 = vmatprep.subr.mxu0 0.0
  %7581 = vmatpush1.msra.mxu0 %v7554
  %7582 = vmatprep.subr.mxu0 0.0
  %7583 = vmatpush1.msra.mxu0 %v7555
  %7584 = vmatprep.subr.mxu0 0.0
  %7585 = vmatpush1.msra.mxu0 %v7556
  %7586 = vmatprep.subr.mxu0 0.0
  %7587 = vmatpush1.msra.mxu0 %v7557
  %7588 = vmatprep.subr.mxu0 0.0
  %7589 = vmatpush1.msra.mxu0 0.0
  %7590 = vmatprep.subr.mxu0 0.0
  %7591 = vmatpush1.msra.mxu0 0.0
  %7592 = vmatprep.subr.mxu0 0.0
  %7593 = vmatpush1.msra.mxu0 0.0
  %7594 = vmatprep.subr.mxu0 0.0
  %7595 = vmatpush1.msra.mxu0 0.0
  %7596 = vmatprep.subr.mxu0 0.0
  %7597 = vmatpush1.msra.mxu0 0.0
  %7598 = vmatprep.subr.mxu0 0.0
  %7599 = vmatpush1.msra.mxu0 0.0
  %7600 = vmatprep.subr.mxu0 0.0
  %7601 = vmatpush1.msra.mxu0 0.0
  %7602 = vmatprep.subr.mxu0 0.0
  %7603 = vmatpush1.msra.mxu0 0.0
  %7604 = vmatprep.subr.mxu0 0.0
  %7605 = vmatpush1.msra.mxu0 0.0
  %7606 = vmatprep.subr.mxu0 0.0
  %7607 = vmatpush1.msra.mxu0 0.0
  %7608 = vmatprep.subr.mxu0 0.0
  %7609 = vmatpush1.msra.mxu0 0.0
  %7610 = vmatprep.subr.mxu0 0.0
  %7611 = vmatpush1.msra.mxu0 0.0
  %7612 = vmatprep.subr.mxu0 0.0
  %7613 = vmatpush1.msra.mxu0 0.0
  %7614 = vmatprep.subr.mxu0 0.0
  %7615 = vmatpush1.msra.mxu0 0.0
  %7616 = vmatprep.subr.mxu0 0.0
  %7617 = vmatpush1.msra.mxu0 0.0
  %7618 = vmatprep.subr.mxu0 0.0
  %7619 = vmatpush1.msra.mxu0 0.0
  %7620 = vmatprep.subr.mxu0 0.0
  %7621 = vmatpush1.msra.mxu0 0.0
  %7622 = vmatprep.subr.mxu0 0.0
  %7623 = vmatpush1.msra.mxu0 0.0
  %7624 = vmatprep.subr.mxu0 0.0
  %7625 = vmatpush1.msra.mxu0 0.0
  %7626 = vmatprep.subr.mxu0 0.0
  %7627 = vmatpush1.msra.mxu0 0.0
  %7628 = vmatprep.subr.mxu0 0.0
  %7629 = vmatpush1.msra.mxu0 0.0
  %7630 = vmatprep.subr.mxu0 0.0
  %7631 = vmatpush1.msra.mxu0 0.0
  %7632 = vmatprep.subr.mxu0 0.0
  %7633 = vmatpush1.msra.mxu0 0.0
  %7634 = vmatprep.mubr.f32.mxu0 0.0
  %7635 = vmatmul.mubr.f32.gmra.mrb[0].mxu0 %v7368
  %v7636 = vpop.f32.mrb[0].mxu0
  %v7637 = vadd.f32 0.0, %v7636
  %v7638 = vpop.f32.mrb[0].mxu0
  %7639 = vmatprep.mubr.f32.mxu0 0.0
  %7640 = vmatmul.mubr.f32.gmra.mrb[0].mxu0 %v7371
  %v7641 = vpop.f32.mrb[0].mxu0
  %v7642 = vadd.f32 0.0, %v7641
  %v7643 = vpop.f32.mrb[0].mxu0
  %7644 = vmatprep.mubr.f32.mxu0 0.0
  %7645 = vmatmul.mubr.f32.gmra.mrb[0].mxu0 %v7374
  %v7646 = vpop.f32.mrb[0].mxu0
  %v7647 = vadd.f32 0.0, %v7646
  %v7648 = vpop.f32.mrb[0].mxu0
  %7649 = vmatprep.mubr.f32.mxu0 0.0
  %7650 = vmatmul.mubr.f32.gmra.mrb[0].mxu0 %v7377
  %v7651 = vpop.f32.mrb[0].mxu0
  %v7652 = vadd.f32 0.0, %v7651
  %v7653 = vpop.f32.mrb[0].mxu0
  %7654 = vmatprep.mubr.f32.mxu0 0.0
  %7655 = vmatmul.mubr.f32.gmra.mrb[0].mxu0 %v7380
  %v7656 = vpop.f32.mrb[0].mxu0
  %v7657 = vadd.f32 0.0, %v7656
  %v7658 = vpop.f32.mrb[0].mxu0
  %7659 = vmatprep.mubr.f32.mxu0 0.0
  %7660 = vmatmul.mubr.f32.gmra.mrb[0].mxu0 %v7383
  %v7661 = vpop.f32.mrb[0].mxu0
  %v7662 = vadd.f32 0.0, %v7661
  %v7663 = vpop.f32.mrb[0].mxu0
  %7664 = vmatprep.mubr.f32.mxu0 0.0
  %7665 = vmatmul.mubr.f32.gmra.mrb[0].mxu0 %v7386
  %v7666 = vpop.f32.mrb[0].mxu0
  %v7667 = vadd.f32 0.0, %v7666
  %v7668 = vpop.f32.mrb[0].mxu0
  %7669 = vmatprep.mubr.f32.mxu0 0.0
  %7670 = vmatmul.mubr.f32.gmra.mrb[0].mxu0 %v7389
  %v7671 = vpop.f32.mrb[0].mxu0
  %v7672 = vadd.f32 0.0, %v7671
  %v7673 = vpop.f32.mrb[0].mxu0
  %7674 = vmatprep.mubr.f32.mxu0 0.0
  %7675 = vmatmul.mubr.f32.gmra.mrb[0].mxu0 %v7392
  %v7676 = vpop.f32.mrb[0].mxu0
  %v7677 = vadd.f32 0.0, %v7676
  %v7678 = vpop.f32.mrb[0].mxu0
  %7679 = vmatprep.mubr.f32.mxu0 0.0
  %7680 = vmatmul.mubr.f32.gmra.mrb[0].mxu0 %v7395
  %v7681 = vpop.f32.mrb[0].mxu0
  %v7682 = vadd.f32 0.0, %v7681
  %v7683 = vpop.f32.mrb[0].mxu0
  %7684 = vmatprep.mubr.f32.mxu0 0.0
  %7685 = vmatmul.mubr.f32.gmra.mrb[0].mxu0 %v7398
  %v7686 = vpop.f32.mrb[0].mxu0
  %v7687 = vadd.f32 0.0, %v7686
  %v7688 = vpop.f32.mrb[0].mxu0
  %7689 = vmatprep.mubr.f32.mxu0 0.0
  %7690 = vmatmul.mubr.f32.gmra.mrb[0].mxu0 %v7401
  %v7691 = vpop.f32.mrb[0].mxu0
  %v7692 = vadd.f32 0.0, %v7691
  %v7693 = vpop.f32.mrb[0].mxu0
  %7694 = vmatprep.mubr.f32.mxu0 0.0
  %7695 = vmatmul.mubr.f32.gmra.mrb[0].mxu0 %v7559
  %v7696 = vpop.f32.mrb[0].mxu0
  %v7697 = vadd.f32 0.0, %v7696
  %v7698 = vpop.f32.mrb[0].mxu0
  %7699 = vmatprep.mubr.f32.mxu0 0.0
  %7700 = vmatmul.mubr.f32.gmra.mrb[0].mxu0 %v7562
  %v7701 = vpop.f32.mrb[0].mxu0
  %v7702 = vadd.f32 0.0, %v7701
  %v7703 = vpop.f32.mrb[0].mxu0
  %7704 = vmatprep.mubr.f32.mxu0 0.0
  %7705 = vmatmul.mubr.f32.gmra.mrb[0].mxu0 %v7565
  %v7706 = vpop.f32.mrb[0].mxu0
  %v7707 = vadd.f32 0.0, %v7706
  %v7708 = vpop.f32.mrb[0].mxu0
  %7709 = vmatprep.mubr.f32.mxu0 0.0
  %7710 = vmatmul.mubr.f32.gmra.mrb[0].mxu0 %v7568
  %v7711 = vpop.f32.mrb[0].mxu0
  %v7712 = vadd.f32 0.0, %v7711
  %v7713 = vpop.f32.mrb[0].mxu0
  %7714 = vdwg.mxu0
  %v7715 = vadd.f32 %v7470, %v7637
  %v7716 = vadd.f32 %v7475, %v7642
  %v7717 = vadd.f32 %v7480, %v7647
  %v7718 = vadd.f32 %v7485, %v7652
  %v7719 = vadd.f32 %v7490, %v7657
  %v7720 = vadd.f32 %v7495, %v7662
  %v7721 = vadd.f32 %v7500, %v7667
  %v7722 = vadd.f32 %v7505, %v7672
  %v7723 = vadd.f32 %v7510, %v7677
  %v7724 = vadd.f32 %v7515, %v7682
  %v7725 = vadd.f32 %v7520, %v7687
  %v7726 = vadd.f32 %v7525, %v7692
  %v7727 = vadd.f32 %v7530, %v7697
  %v7728 = vadd.f32 %v7535, %v7702
  %v7729 = vadd.f32 %v7540, %v7707
  %v7730 = vadd.f32 %v7545, %v7712
  %s7731 = scalar_lea.vmem %s4, 216
  %v7732 = vld [vmem:[%s7731] sm:$0xff]
  %v7733 = vld [vmem:[%s7731 + $0x8] sm:$0xff]
  %v7734 = vld [vmem:[%s7731 + $0x10] sm:$0xff]
  %v7735 = vld [vmem:[%s7731 + $0x18] sm:$0xff]
  %v7736 = vld [vmem:[%s7731 + $0x20] sm:$0xff]
  %v7737 = vld [vmem:[%s7731 + $0x28] sm:$0xff]
  %v7738 = vld [vmem:[%s7731 + $0x30] sm:$0xff]
  %v7739 = vld [vmem:[%s7731 + $0x38] sm:$0xff]
  %v7740 = vld [vmem:[%s7731 + $0x40] sm:$0xff]
  %v7742 = vsel %vm7161, %v7134, 0
  %v7745 = vsel %vm7161, %v7135, 0
  %v7748 = vsel %vm7161, %v7136, 0
  %v7751 = vsel %vm7161, %v7137, 0
  %7753 = vmatprep.subr.mxu0 0.0
  %7754 = vmatpush1.msra.mxu0 %v7732
  %7755 = vmatprep.subr.mxu0 0.0
  %7756 = vmatpush1.msra.mxu0 %v7733
  %7757 = vmatprep.subr.mxu0 0.0
  %7758 = vmatpush1.msra.mxu0 %v7734
  %7759 = vmatprep.subr.mxu0 0.0
  %7760 = vmatpush1.msra.mxu0 %v7735
  %7761 = vmatprep.subr.mxu0 0.0
  %7762 = vmatpush1.msra.mxu0 %v7736
  %7763 = vmatprep.subr.mxu0 0.0
  %7764 = vmatpush1.msra.mxu0 %v7737
  %7765 = vmatprep.subr.mxu0 0.0
  %7766 = vmatpush1.msra.mxu0 %v7738
  %7767 = vmatprep.subr.mxu0 0.0
  %7768 = vmatpush1.msra.mxu0 %v7739
  %7769 = vmatprep.subr.mxu0 0.0
  %7770 = vmatpush1.msra.mxu0 %v7740
  %7771 = vmatprep.subr.mxu0 0.0
  %7772 = vmatpush1.msra.mxu0 0.0
  %7773 = vmatprep.subr.mxu0 0.0
  %7774 = vmatpush1.msra.mxu0 0.0
  %7775 = vmatprep.subr.mxu0 0.0
  %7776 = vmatpush1.msra.mxu0 0.0
  %7777 = vmatprep.subr.mxu0 0.0
  %7778 = vmatpush1.msra.mxu0 0.0
  %7779 = vmatprep.subr.mxu0 0.0
  %7780 = vmatpush1.msra.mxu0 0.0
  %7781 = vmatprep.subr.mxu0 0.0
  %7782 = vmatpush1.msra.mxu0 0.0
  %7783 = vmatprep.subr.mxu0 0.0
  %7784 = vmatpush1.msra.mxu0 0.0
  %7785 = vmatprep.subr.mxu0 0.0
  %7786 = vmatpush1.msra.mxu0 0.0
  %7787 = vmatprep.subr.mxu0 0.0
  %7788 = vmatpush1.msra.mxu0 0.0
  %7789 = vmatprep.subr.mxu0 0.0
  %7790 = vmatpush1.msra.mxu0 0.0
  %7791 = vmatprep.subr.mxu0 0.0
  %7792 = vmatpush1.msra.mxu0 0.0
  %7793 = vmatprep.subr.mxu0 0.0
  %7794 = vmatpush1.msra.mxu0 0.0
  %7795 = vmatprep.subr.mxu0 0.0
  %7796 = vmatpush1.msra.mxu0 0.0
  %7797 = vmatprep.subr.mxu0 0.0
  %7798 = vmatpush1.msra.mxu0 0.0
  %7799 = vmatprep.subr.mxu0 0.0
  %7800 = vmatpush1.msra.mxu0 0.0
  %7801 = vmatprep.subr.mxu0 0.0
  %7802 = vmatpush1.msra.mxu0 0.0
  %7803 = vmatprep.subr.mxu0 0.0
  %7804 = vmatpush1.msra.mxu0 0.0
  %7805 = vmatprep.subr.mxu0 0.0
  %7806 = vmatpush1.msra.mxu0 0.0
  %7807 = vmatprep.subr.mxu0 0.0
  %7808 = vmatpush1.msra.mxu0 0.0
  %7809 = vmatprep.subr.mxu0 0.0
  %7810 = vmatpush1.msra.mxu0 0.0
  %7811 = vmatprep.subr.mxu0 0.0
  %7812 = vmatpush1.msra.mxu0 0.0
  %7813 = vmatprep.subr.mxu0 0.0
  %7814 = vmatpush1.msra.mxu0 0.0
  %7815 = vmatprep.subr.mxu0 0.0
  %7816 = vmatpush1.msra.mxu0 0.0
  %7817 = vmatprep.mubr.f32.mxu0 0.0
  %7818 = vmatmul.mubr.f32.gmra.mrb[0].mxu0 %v7175
  %v7819 = vpop.f32.mrb[0].mxu0
  %v7820 = vadd.f32 0.0, %v7819
  %v7821 = vpop.f32.mrb[0].mxu0
  %7822 = vmatprep.mubr.f32.mxu0 0.0
  %7823 = vmatmul.mubr.f32.gmra.mrb[0].mxu0 %v7178
  %v7824 = vpop.f32.mrb[0].mxu0
  %v7825 = vadd.f32 0.0, %v7824
  %v7826 = vpop.f32.mrb[0].mxu0
  %7827 = vmatprep.mubr.f32.mxu0 0.0
  %7828 = vmatmul.mubr.f32.gmra.mrb[0].mxu0 %v7181
  %v7829 = vpop.f32.mrb[0].mxu0
  %v7830 = vadd.f32 0.0, %v7829
  %v7831 = vpop.f32.mrb[0].mxu0
  %7832 = vmatprep.mubr.f32.mxu0 0.0
  %7833 = vmatmul.mubr.f32.gmra.mrb[0].mxu0 %v7184
  %v7834 = vpop.f32.mrb[0].mxu0
  %v7835 = vadd.f32 0.0, %v7834
  %v7836 = vpop.f32.mrb[0].mxu0
  %7837 = vmatprep.mubr.f32.mxu0 0.0
  %7838 = vmatmul.mubr.f32.gmra.mrb[0].mxu0 %v7187
  %v7839 = vpop.f32.mrb[0].mxu0
  %v7840 = vadd.f32 0.0, %v7839
  %v7841 = vpop.f32.mrb[0].mxu0
  %7842 = vmatprep.mubr.f32.mxu0 0.0
  %7843 = vmatmul.mubr.f32.gmra.mrb[0].mxu0 %v7190
  %v7844 = vpop.f32.mrb[0].mxu0
  %v7845 = vadd.f32 0.0, %v7844
  %v7846 = vpop.f32.mrb[0].mxu0
  %7847 = vmatprep.mubr.f32.mxu0 0.0
  %7848 = vmatmul.mubr.f32.gmra.mrb[0].mxu0 %v7193
  %v7849 = vpop.f32.mrb[0].mxu0
  %v7850 = vadd.f32 0.0, %v7849
  %v7851 = vpop.f32.mrb[0].mxu0
  %7852 = vmatprep.mubr.f32.mxu0 0.0
  %7853 = vmatmul.mubr.f32.gmra.mrb[0].mxu0 %v7196
  %v7854 = vpop.f32.mrb[0].mxu0
  %v7855 = vadd.f32 0.0, %v7854
  %v7856 = vpop.f32.mrb[0].mxu0
  %7857 = vmatprep.mubr.f32.mxu0 0.0
  %7858 = vmatmul.mubr.f32.gmra.mrb[0].mxu0 %v7199
  %v7859 = vpop.f32.mrb[0].mxu0
  %v7860 = vadd.f32 0.0, %v7859
  %v7861 = vpop.f32.mrb[0].mxu0
  %7862 = vmatprep.mubr.f32.mxu0 0.0
  %7863 = vmatmul.mubr.f32.gmra.mrb[0].mxu0 %v7202
  %v7864 = vpop.f32.mrb[0].mxu0
  %v7865 = vadd.f32 0.0, %v7864
  %v7866 = vpop.f32.mrb[0].mxu0
  %7867 = vmatprep.mubr.f32.mxu0 0.0
  %7868 = vmatmul.mubr.f32.gmra.mrb[0].mxu0 %v7205
  %v7869 = vpop.f32.mrb[0].mxu0
  %v7870 = vadd.f32 0.0, %v7869
  %v7871 = vpop.f32.mrb[0].mxu0
  %7872 = vmatprep.mubr.f32.mxu0 0.0
  %7873 = vmatmul.mubr.f32.gmra.mrb[0].mxu0 %v7208
  %v7874 = vpop.f32.mrb[0].mxu0
  %v7875 = vadd.f32 0.0, %v7874
  %v7876 = vpop.f32.mrb[0].mxu0
  %7877 = vmatprep.mubr.f32.mxu0 0.0
  %7878 = vmatmul.mubr.f32.gmra.mrb[0].mxu0 %v7742
  %v7879 = vpop.f32.mrb[0].mxu0
  %v7880 = vadd.f32 0.0, %v7879
  %v7881 = vpop.f32.mrb[0].mxu0
  %7882 = vmatprep.mubr.f32.mxu0 0.0
  %7883 = vmatmul.mubr.f32.gmra.mrb[0].mxu0 %v7745
  %v7884 = vpop.f32.mrb[0].mxu0
  %v7885 = vadd.f32 0.0, %v7884
  %v7886 = vpop.f32.mrb[0].mxu0
  %7887 = vmatprep.mubr.f32.mxu0 0.0
  %7888 = vmatmul.mubr.f32.gmra.mrb[0].mxu0 %v7748
  %v7889 = vpop.f32.mrb[0].mxu0
  %v7890 = vadd.f32 0.0, %v7889
  %v7891 = vpop.f32.mrb[0].mxu0
  %7892 = vmatprep.mubr.f32.mxu0 0.0
  %7893 = vmatmul.mubr.f32.gmra.mrb[0].mxu0 %v7751
  %v7894 = vpop.f32.mrb[0].mxu0
  %v7895 = vadd.f32 0.0, %v7894
  %v7896 = vpop.f32.mrb[0].mxu0
  %7897 = vdwg.mxu0
  %v7898 = vadd.f32 %v7715, %v7820
  %v7899 = vadd.f32 %v7716, %v7825
  %v7900 = vadd.f32 %v7717, %v7830
  %v7901 = vadd.f32 %v7718, %v7835
  %v7902 = vadd.f32 %v7719, %v7840
  %v7903 = vadd.f32 %v7720, %v7845
  %v7904 = vadd.f32 %v7721, %v7850
  %v7905 = vadd.f32 %v7722, %v7855
  %v7906 = vadd.f32 %v7723, %v7860
  %v7907 = vadd.f32 %v7724, %v7865
  %v7908 = vadd.f32 %v7725, %v7870
  %v7909 = vadd.f32 %v7726, %v7875
  %v7910 = vadd.f32 %v7727, %v7880
  %v7911 = vadd.f32 %v7728, %v7885
  %v7912 = vadd.f32 %v7729, %v7890
  %v7913 = vadd.f32 %v7730, %v7895
  %s7914 = scalar_lea.vmem %s4, 288
  %v7915 = vld [vmem:[%s7914] sm:$0xff]
  %v7916 = vld [vmem:[%s7914 + $0x8] sm:$0xff]
  %v7917 = vld [vmem:[%s7914 + $0x10] sm:$0xff]
  %v7918 = vld [vmem:[%s7914 + $0x18] sm:$0xff]
  %v7919 = vld [vmem:[%s7914 + $0x20] sm:$0xff]
  %v7920 = vld [vmem:[%s7914 + $0x28] sm:$0xff]
  %v7921 = vld [vmem:[%s7914 + $0x30] sm:$0xff]
  %v7922 = vld [vmem:[%s7914 + $0x38] sm:$0xff]
  %v7923 = vld [vmem:[%s7914 + $0x40] sm:$0xff]
  %v7925 = vsel %vm7161, %v3836, 0
  %v7928 = vsel %vm7161, %v3837, 0
  %v7931 = vsel %vm7161, %v3838, 0
  %v7934 = vsel %vm7161, %v3839, 0
  %7936 = vmatprep.subr.mxu0 0.0
  %7937 = vmatpush1.msra.mxu0 %v7915
  %7938 = vmatprep.subr.mxu0 0.0
  %7939 = vmatpush1.msra.mxu0 %v7916
  %7940 = vmatprep.subr.mxu0 0.0
  %7941 = vmatpush1.msra.mxu0 %v7917
  %7942 = vmatprep.subr.mxu0 0.0
  %7943 = vmatpush1.msra.mxu0 %v7918
  %7944 = vmatprep.subr.mxu0 0.0
  %7945 = vmatpush1.msra.mxu0 %v7919
  %7946 = vmatprep.subr.mxu0 0.0
  %7947 = vmatpush1.msra.mxu0 %v7920
  %7948 = vmatprep.subr.mxu0 0.0
  %7949 = vmatpush1.msra.mxu0 %v7921
  %7950 = vmatprep.subr.mxu0 0.0
  %7951 = vmatpush1.msra.mxu0 %v7922
  %7952 = vmatprep.subr.mxu0 0.0
  %7953 = vmatpush1.msra.mxu0 %v7923
  %7954 = vmatprep.subr.mxu0 0.0
  %7955 = vmatpush1.msra.mxu0 0.0
  %7956 = vmatprep.subr.mxu0 0.0
  %7957 = vmatpush1.msra.mxu0 0.0
  %7958 = vmatprep.subr.mxu0 0.0
  %7959 = vmatpush1.msra.mxu0 0.0
  %7960 = vmatprep.subr.mxu0 0.0
  %7961 = vmatpush1.msra.mxu0 0.0
  %7962 = vmatprep.subr.mxu0 0.0
  %7963 = vmatpush1.msra.mxu0 0.0
  %7964 = vmatprep.subr.mxu0 0.0
  %7965 = vmatpush1.msra.mxu0 0.0
  %7966 = vmatprep.subr.mxu0 0.0
  %7967 = vmatpush1.msra.mxu0 0.0
  %7968 = vmatprep.subr.mxu0 0.0
  %7969 = vmatpush1.msra.mxu0 0.0
  %7970 = vmatprep.subr.mxu0 0.0
  %7971 = vmatpush1.msra.mxu0 0.0
  %7972 = vmatprep.subr.mxu0 0.0
  %7973 = vmatpush1.msra.mxu0 0.0
  %7974 = vmatprep.subr.mxu0 0.0
  %7975 = vmatpush1.msra.mxu0 0.0
  %7976 = vmatprep.subr.mxu0 0.0
  %7977 = vmatpush1.msra.mxu0 0.0
  %7978 = vmatprep.subr.mxu0 0.0
  %7979 = vmatpush1.msra.mxu0 0.0
  %7980 = vmatprep.subr.mxu0 0.0
  %7981 = vmatpush1.msra.mxu0 0.0
  %7982 = vmatprep.subr.mxu0 0.0
  %7983 = vmatpush1.msra.mxu0 0.0
  %7984 = vmatprep.subr.mxu0 0.0
  %7985 = vmatpush1.msra.mxu0 0.0
  %7986 = vmatprep.subr.mxu0 0.0
  %7987 = vmatpush1.msra.mxu0 0.0
  %7988 = vmatprep.subr.mxu0 0.0
  %7989 = vmatpush1.msra.mxu0 0.0
  %7990 = vmatprep.subr.mxu0 0.0
  %7991 = vmatpush1.msra.mxu0 0.0
  %7992 = vmatprep.subr.mxu0 0.0
  %7993 = vmatpush1.msra.mxu0 0.0
  %7994 = vmatprep.subr.mxu0 0.0
  %7995 = vmatpush1.msra.mxu0 0.0
  %7996 = vmatprep.subr.mxu0 0.0
  %7997 = vmatpush1.msra.mxu0 0.0
  %7998 = vmatprep.subr.mxu0 0.0
  %7999 = vmatpush1.msra.mxu0 0.0
  %8000 = vmatprep.mubr.f32.mxu0 0.0
  %8001 = vmatmul.mubr.f32.gmra.mrb[0].mxu0 %v7380
  %v8002 = vpop.f32.mrb[0].mxu0
  %v8003 = vadd.f32 0.0, %v8002
  %v8004 = vpop.f32.mrb[0].mxu0
  %8005 = vmatprep.mubr.f32.mxu0 0.0
  %8006 = vmatmul.mubr.f32.gmra.mrb[0].mxu0 %v7383
  %v8007 = vpop.f32.mrb[0].mxu0
  %v8008 = vadd.f32 0.0, %v8007
  %v8009 = vpop.f32.mrb[0].mxu0
  %8010 = vmatprep.mubr.f32.mxu0 0.0
  %8011 = vmatmul.mubr.f32.gmra.mrb[0].mxu0 %v7386
  %v8012 = vpop.f32.mrb[0].mxu0
  %v8013 = vadd.f32 0.0, %v8012
  %v8014 = vpop.f32.mrb[0].mxu0
  %8015 = vmatprep.mubr.f32.mxu0 0.0
  %8016 = vmatmul.mubr.f32.gmra.mrb[0].mxu0 %v7389
  %v8017 = vpop.f32.mrb[0].mxu0
  %v8018 = vadd.f32 0.0, %v8017
  %v8019 = vpop.f32.mrb[0].mxu0
  %8020 = vmatprep.mubr.f32.mxu0 0.0
  %8021 = vmatmul.mubr.f32.gmra.mrb[0].mxu0 %v7392
  %v8022 = vpop.f32.mrb[0].mxu0
  %v8023 = vadd.f32 0.0, %v8022
  %v8024 = vpop.f32.mrb[0].mxu0
  %8025 = vmatprep.mubr.f32.mxu0 0.0
  %8026 = vmatmul.mubr.f32.gmra.mrb[0].mxu0 %v7395
  %v8027 = vpop.f32.mrb[0].mxu0
  %v8028 = vadd.f32 0.0, %v8027
  %v8029 = vpop.f32.mrb[0].mxu0
  %8030 = vmatprep.mubr.f32.mxu0 0.0
  %8031 = vmatmul.mubr.f32.gmra.mrb[0].mxu0 %v7398
  %v8032 = vpop.f32.mrb[0].mxu0
  %v8033 = vadd.f32 0.0, %v8032
  %v8034 = vpop.f32.mrb[0].mxu0
  %8035 = vmatprep.mubr.f32.mxu0 0.0
  %8036 = vmatmul.mubr.f32.gmra.mrb[0].mxu0 %v7401
  %v8037 = vpop.f32.mrb[0].mxu0
  %v8038 = vadd.f32 0.0, %v8037
  %v8039 = vpop.f32.mrb[0].mxu0
  %8040 = vmatprep.mubr.f32.mxu0 0.0
  %8041 = vmatmul.mubr.f32.gmra.mrb[0].mxu0 %v7559
  %v8042 = vpop.f32.mrb[0].mxu0
  %v8043 = vadd.f32 0.0, %v8042
  %v8044 = vpop.f32.mrb[0].mxu0
  %8045 = vmatprep.mubr.f32.mxu0 0.0
  %8046 = vmatmul.mubr.f32.gmra.mrb[0].mxu0 %v7562
  %v8047 = vpop.f32.mrb[0].mxu0
  %v8048 = vadd.f32 0.0, %v8047
  %v8049 = vpop.f32.mrb[0].mxu0
  %8050 = vmatprep.mubr.f32.mxu0 0.0
  %8051 = vmatmul.mubr.f32.gmra.mrb[0].mxu0 %v7565
  %v8052 = vpop.f32.mrb[0].mxu0
  %v8053 = vadd.f32 0.0, %v8052
  %v8054 = vpop.f32.mrb[0].mxu0
  %8055 = vmatprep.mubr.f32.mxu0 0.0
  %8056 = vmatmul.mubr.f32.gmra.mrb[0].mxu0 %v7568
  %v8057 = vpop.f32.mrb[0].mxu0
  %v8058 = vadd.f32 0.0, %v8057
  %v8059 = vpop.f32.mrb[0].mxu0
  %8060 = vmatprep.mubr.f32.mxu0 0.0
  %8061 = vmatmul.mubr.f32.gmra.mrb[0].mxu0 %v7925
  %v8062 = vpop.f32.mrb[0].mxu0
  %v8063 = vadd.f32 0.0, %v8062
  %v8064 = vpop.f32.mrb[0].mxu0
  %8065 = vmatprep.mubr.f32.mxu0 0.0
  %8066 = vmatmul.mubr.f32.gmra.mrb[0].mxu0 %v7928
  %v8067 = vpop.f32.mrb[0].mxu0
  %v8068 = vadd.f32 0.0, %v8067
  %v8069 = vpop.f32.mrb[0].mxu0
  %8070 = vmatprep.mubr.f32.mxu0 0.0
  %8071 = vmatmul.mubr.f32.gmra.mrb[0].mxu0 %v7931
  %v8072 = vpop.f32.mrb[0].mxu0
  %v8073 = vadd.f32 0.0, %v8072
  %v8074 = vpop.f32.mrb[0].mxu0
  %8075 = vmatprep.mubr.f32.mxu0 0.0
  %8076 = vmatmul.mubr.f32.gmra.mrb[0].mxu0 %v7934
  %v8077 = vpop.f32.mrb[0].mxu0
  %v8078 = vadd.f32 0.0, %v8077
  %v8079 = vpop.f32.mrb[0].mxu0
  %8080 = vdwg.mxu0
  %v8081 = vadd.f32 %v7898, %v8003
  %v8082 = vadd.f32 %v7899, %v8008
  %v8083 = vadd.f32 %v7900, %v8013
  %v8084 = vadd.f32 %v7901, %v8018
  %v8085 = vadd.f32 %v7902, %v8023
  %v8086 = vadd.f32 %v7903, %v8028
  %v8087 = vadd.f32 %v7904, %v8033
  %v8088 = vadd.f32 %v7905, %v8038
  %v8089 = vadd.f32 %v7906, %v8043
  %v8090 = vadd.f32 %v7907, %v8048
  %v8091 = vadd.f32 %v7908, %v8053
  %v8092 = vadd.f32 %v7909, %v8058
  %v8093 = vadd.f32 %v7910, %v8063
  %v8094 = vadd.f32 %v7911, %v8068
  %v8095 = vadd.f32 %v7912, %v8073
  %v8096 = vadd.f32 %v7913, %v8078
  %v8097 = vld [vmem:[%s5] sm:$0x1]
  %v8099 = vlaneseq
  %v8100 = vshrl.u32 %v8099, 7
  %v8101 = vsub.s32 0, %v8100
  %v8102 = vrot.slane %v8097, %v8101
  %v8104 = vadd.f32 %v8081, %v8102
  %v8105 = vadd.f32 %v8082, %v8102
  %v8106 = vadd.f32 %v8083, %v8102
  %v8107 = vadd.f32 %v8084, %v8102
  %v8108 = vadd.f32 %v8085, %v8102
  %v8109 = vadd.f32 %v8086, %v8102
  %v8110 = vadd.f32 %v8087, %v8102
  %v8111 = vadd.f32 %v8088, %v8102
  %v8112 = vadd.f32 %v8089, %v8102
  %v8113 = vadd.f32 %v8090, %v8102
  %v8114 = vadd.f32 %v8091, %v8102
  %v8115 = vadd.f32 %v8092, %v8102
  %v8116 = vadd.f32 %v8093, %v8102
  %v8117 = vadd.f32 %v8094, %v8102
  %v8118 = vadd.f32 %v8095, %v8102
  %v8119 = vadd.f32 %v8096, %v8102
  %v8120 = vtanh.pop %v8104
  %v8121 = vtanh.pop %v8105
  %v8122 = vtanh.pop %v8106
  %v8123 = vtanh.pop %v8107
  %v8124 = vtanh.pop %v8108
  %v8125 = vtanh.pop %v8109
  %v8126 = vtanh.pop %v8110
  %v8127 = vtanh.pop %v8111
  %v8128 = vtanh.pop %v8112
  %v8129 = vtanh.pop %v8113
  %v8130 = vtanh.pop %v8114
  %v8131 = vtanh.pop %v8115
  %v8132 = vtanh.pop %v8116
  %v8133 = vtanh.pop %v8117
  %v8134 = vtanh.pop %v8118
  %v8135 = vtanh.pop %v8119
  %v8136 = vld [vmem:[%s6] sm:$0xff]
  %v8137 = vld [vmem:[%s6 + $0x8] sm:$0xff]
  %v8138 = vld [vmem:[%s6 + $0x10] sm:$0xff]
  %v8139 = vld [vmem:[%s6 + $0x18] sm:$0xff]
  %v8140 = vld [vmem:[%s6 + $0x20] sm:$0xff]
  %v8141 = vld [vmem:[%s6 + $0x28] sm:$0xff]
  %v8142 = vld [vmem:[%s6 + $0x30] sm:$0xff]
  %v8143 = vld [vmem:[%s6 + $0x38] sm:$0xff]
  %v8144 = vld [vmem:[%s6 + $0x40] sm:$0xff]
  %v8145 = vld [vmem:[%s6 + $0x48] sm:$0xff]
  %v8146 = vld [vmem:[%s6 + $0x50] sm:$0xff]
  %v8147 = vld [vmem:[%s6 + $0x58] sm:$0xff]
  %v8148 = vld [vmem:[%s6 + $0x60] sm:$0xff]
  %v8149 = vld [vmem:[%s6 + $0x68] sm:$0xff]
  %v8150 = vld [vmem:[%s6 + $0x70] sm:$0xff]
  %v8151 = vld [vmem:[%s6 + $0x78] sm:$0xff]
  %8152 = vmatprep.subr.mxu0 0.0
  %8153 = vmatpush1.msra.mxu0 %v7152
  %8154 = vmatprep.subr.mxu0 0.0
  %8155 = vmatpush1.msra.mxu0 %v7153
  %8156 = vmatprep.subr.mxu0 0.0
  %8157 = vmatpush1.msra.mxu0 %v7154
  %8158 = vmatprep.subr.mxu0 0.0
  %8159 = vmatpush1.msra.mxu0 %v7155
  %8160 = vmatprep.subr.mxu0 0.0
  %8161 = vmatpush1.msra.mxu0 %v7156
  %8162 = vmatprep.subr.mxu0 0.0
  %8163 = vmatpush1.msra.mxu0 %v7157
  %8164 = vmatprep.subr.mxu0 0.0
  %8165 = vmatpush1.msra.mxu0 %v7158
  %8166 = vmatprep.subr.mxu0 0.0
  %8167 = vmatpush1.msra.mxu0 %v7159
  %8168 = vmatprep.subr.mxu0 0.0
  %8169 = vmatpush1.msra.mxu0 %v7160
  %8170 = vmatprep.subr.mxu0 0.0
  %8171 = vmatpush1.msra.mxu0 0.0
  %8172 = vmatprep.subr.mxu0 0.0
  %8173 = vmatpush1.msra.mxu0 0.0
  %8174 = vmatprep.subr.mxu0 0.0
  %8175 = vmatpush1.msra.mxu0 0.0
  %8176 = vmatprep.subr.mxu0 0.0
  %8177 = vmatpush1.msra.mxu0 0.0
  %8178 = vmatprep.subr.mxu0 0.0
  %8179 = vmatpush1.msra.mxu0 0.0
  %8180 = vmatprep.subr.mxu0 0.0
  %8181 = vmatpush1.msra.mxu0 0.0
  %8182 = vmatprep.subr.mxu0 0.0
  %8183 = vmatpush1.msra.mxu0 0.0
  %8184 = vmatprep.subr.mxu0 0.0
  %8185 = vmatpush1.msra.mxu0 0.0
  %8186 = vmatprep.subr.mxu0 0.0
  %8187 = vmatpush1.msra.mxu0 0.0
  %8188 = vmatprep.subr.mxu0 0.0
  %8189 = vmatpush1.msra.mxu0 0.0
  %8190 = vmatprep.subr.mxu0 0.0
  %8191 = vmatpush1.msra.mxu0 0.0
  %8192 = vmatprep.subr.mxu0 0.0
  %8193 = vmatpush1.msra.mxu0 0.0
  %8194 = vmatprep.subr.mxu0 0.0
  %8195 = vmatpush1.msra.mxu0 0.0
  %8196 = vmatprep.subr.mxu0 0.0
  %8197 = vmatpush1.msra.mxu0 0.0
  %8198 = vmatprep.subr.mxu0 0.0
  %8199 = vmatpush1.msra.mxu0 0.0
  %8200 = vmatprep.subr.mxu0 0.0
  %8201 = vmatpush1.msra.mxu0 0.0
  %8202 = vmatprep.subr.mxu0 0.0
  %8203 = vmatpush1.msra.mxu0 0.0
  %8204 = vmatprep.subr.mxu0 0.0
  %8205 = vmatpush1.msra.mxu0 0.0
  %8206 = vmatprep.subr.mxu0 0.0
  %8207 = vmatpush1.msra.mxu0 0.0
  %8208 = vmatprep.subr.mxu0 0.0
  %8209 = vmatpush1.msra.mxu0 0.0
  %8210 = vmatprep.subr.mxu0 0.0
  %8211 = vmatpush1.msra.mxu0 0.0
  %8212 = vmatprep.subr.mxu0 0.0
  %8213 = vmatpush1.msra.mxu0 0.0
  %8214 = vmatprep.subr.mxu0 0.0
  %8215 = vmatpush1.msra.mxu0 0.0
  %8216 = vmatprep.mubr.f32.mxu0 0.0
  %8217 = vmatmul.mubr.f32.gmra.mrb[0].mxu0 %v7368
  %v8218 = vpop.f32.mrb[0].mxu0
  %v8219 = vadd.f32 0.0, %v8218
  %v8220 = vpop.f32.mrb[0].mxu0
  %8221 = vmatprep.mubr.f32.mxu0 0.0
  %8222 = vmatmul.mubr.f32.gmra.mrb[0].mxu0 %v7371
  %v8223 = vpop.f32.mrb[0].mxu0
  %v8224 = vadd.f32 0.0, %v8223
  %v8225 = vpop.f32.mrb[0].mxu0
  %8226 = vmatprep.mubr.f32.mxu0 0.0
  %8227 = vmatmul.mubr.f32.gmra.mrb[0].mxu0 %v7374
  %v8228 = vpop.f32.mrb[0].mxu0
  %v8229 = vadd.f32 0.0, %v8228
  %v8230 = vpop.f32.mrb[0].mxu0
  %8231 = vmatprep.mubr.f32.mxu0 0.0
  %8232 = vmatmul.mubr.f32.gmra.mrb[0].mxu0 %v7377
  %v8233 = vpop.f32.mrb[0].mxu0
  %v8234 = vadd.f32 0.0, %v8233
  %v8235 = vpop.f32.mrb[0].mxu0
  %8236 = vmatprep.mubr.f32.mxu0 0.0
  %8237 = vmatmul.mubr.f32.gmra.mrb[0].mxu0 %v7380
  %v8238 = vpop.f32.mrb[0].mxu0
  %v8239 = vadd.f32 0.0, %v8238
  %v8240 = vpop.f32.mrb[0].mxu0
  %8241 = vmatprep.mubr.f32.mxu0 0.0
  %8242 = vmatmul.mubr.f32.gmra.mrb[0].mxu0 %v7383
  %v8243 = vpop.f32.mrb[0].mxu0
  %v8244 = vadd.f32 0.0, %v8243
  %v8245 = vpop.f32.mrb[0].mxu0
  %8246 = vmatprep.mubr.f32.mxu0 0.0
  %8247 = vmatmul.mubr.f32.gmra.mrb[0].mxu0 %v7386
  %v8248 = vpop.f32.mrb[0].mxu0
  %v8249 = vadd.f32 0.0, %v8248
  %v8250 = vpop.f32.mrb[0].mxu0
  %8251 = vmatprep.mubr.f32.mxu0 0.0
  %8252 = vmatmul.mubr.f32.gmra.mrb[0].mxu0 %v7389
  %v8253 = vpop.f32.mrb[0].mxu0
  %v8254 = vadd.f32 0.0, %v8253
  %v8255 = vpop.f32.mrb[0].mxu0
  %8256 = vmatprep.mubr.f32.mxu0 0.0
  %8257 = vmatmul.mubr.f32.gmra.mrb[0].mxu0 %v7392
  %v8258 = vpop.f32.mrb[0].mxu0
  %v8259 = vadd.f32 0.0, %v8258
  %v8260 = vpop.f32.mrb[0].mxu0
  %8261 = vmatprep.mubr.f32.mxu0 0.0
  %8262 = vmatmul.mubr.f32.gmra.mrb[0].mxu0 %v7395
  %v8263 = vpop.f32.mrb[0].mxu0
  %v8264 = vadd.f32 0.0, %v8263
  %v8265 = vpop.f32.mrb[0].mxu0
  %8266 = vmatprep.mubr.f32.mxu0 0.0
  %8267 = vmatmul.mubr.f32.gmra.mrb[0].mxu0 %v7398
  %v8268 = vpop.f32.mrb[0].mxu0
  %v8269 = vadd.f32 0.0, %v8268
  %v8270 = vpop.f32.mrb[0].mxu0
  %8271 = vmatprep.mubr.f32.mxu0 0.0
  %8272 = vmatmul.mubr.f32.gmra.mrb[0].mxu0 %v7401
  %v8273 = vpop.f32.mrb[0].mxu0
  %v8274 = vadd.f32 0.0, %v8273
  %v8275 = vpop.f32.mrb[0].mxu0
  %8276 = vmatprep.mubr.f32.mxu0 0.0
  %8277 = vmatmul.mubr.f32.gmra.mrb[0].mxu0 %v7559
  %v8278 = vpop.f32.mrb[0].mxu0
  %v8279 = vadd.f32 0.0, %v8278
  %v8280 = vpop.f32.mrb[0].mxu0
  %8281 = vmatprep.mubr.f32.mxu0 0.0
  %8282 = vmatmul.mubr.f32.gmra.mrb[0].mxu0 %v7562
  %v8283 = vpop.f32.mrb[0].mxu0
  %v8284 = vadd.f32 0.0, %v8283
  %v8285 = vpop.f32.mrb[0].mxu0
  %8286 = vmatprep.mubr.f32.mxu0 0.0
  %8287 = vmatmul.mubr.f32.gmra.mrb[0].mxu0 %v7565
  %v8288 = vpop.f32.mrb[0].mxu0
  %v8289 = vadd.f32 0.0, %v8288
  %v8290 = vpop.f32.mrb[0].mxu0
  %8291 = vmatprep.mubr.f32.mxu0 0.0
  %8292 = vmatmul.mubr.f32.gmra.mrb[0].mxu0 %v7568
  %v8293 = vpop.f32.mrb[0].mxu0
  %v8294 = vadd.f32 0.0, %v8293
  %v8295 = vpop.f32.mrb[0].mxu0
  %8296 = vdwg.mxu0
  %8297 = vmatprep.subr.mxu0 0.0
  %8298 = vmatpush1.msra.mxu0 %v7142
  %8299 = vmatprep.subr.mxu0 0.0
  %8300 = vmatpush1.msra.mxu0 %v7143
  %8301 = vmatprep.subr.mxu0 0.0
  %8302 = vmatpush1.msra.mxu0 %v7144
  %8303 = vmatprep.subr.mxu0 0.0
  %8304 = vmatpush1.msra.mxu0 %v7145
  %8305 = vmatprep.subr.mxu0 0.0
  %8306 = vmatpush1.msra.mxu0 %v7146
  %8307 = vmatprep.subr.mxu0 0.0
  %8308 = vmatpush1.msra.mxu0 %v7147
  %8309 = vmatprep.subr.mxu0 0.0
  %8310 = vmatpush1.msra.mxu0 %v7148
  %8311 = vmatprep.subr.mxu0 0.0
  %8312 = vmatpush1.msra.mxu0 %v7149
  %8313 = vmatprep.subr.mxu0 0.0
  %8314 = vmatpush1.msra.mxu0 %v7150
  %8315 = vmatprep.subr.mxu0 0.0
  %8316 = vmatpush1.msra.mxu0 0.0
  %8317 = vmatprep.subr.mxu0 0.0
  %8318 = vmatpush1.msra.mxu0 0.0
  %8319 = vmatprep.subr.mxu0 0.0
  %8320 = vmatpush1.msra.mxu0 0.0
  %8321 = vmatprep.subr.mxu0 0.0
  %8322 = vmatpush1.msra.mxu0 0.0
  %8323 = vmatprep.subr.mxu0 0.0
  %8324 = vmatpush1.msra.mxu0 0.0
  %8325 = vmatprep.subr.mxu0 0.0
  %8326 = vmatpush1.msra.mxu0 0.0
  %8327 = vmatprep.subr.mxu0 0.0
  %8328 = vmatpush1.msra.mxu0 0.0
  %8329 = vmatprep.subr.mxu0 0.0
  %8330 = vmatpush1.msra.mxu0 0.0
  %8331 = vmatprep.subr.mxu0 0.0
  %8332 = vmatpush1.msra.mxu0 0.0
  %8333 = vmatprep.subr.mxu0 0.0
  %8334 = vmatpush1.msra.mxu0 0.0
  %8335 = vmatprep.subr.mxu0 0.0
  %8336 = vmatpush1.msra.mxu0 0.0
  %8337 = vmatprep.subr.mxu0 0.0
  %8338 = vmatpush1.msra.mxu0 0.0
  %8339 = vmatprep.subr.mxu0 0.0
  %8340 = vmatpush1.msra.mxu0 0.0
  %8341 = vmatprep.subr.mxu0 0.0
  %8342 = vmatpush1.msra.mxu0 0.0
  %8343 = vmatprep.subr.mxu0 0.0
  %8344 = vmatpush1.msra.mxu0 0.0
  %8345 = vmatprep.subr.mxu0 0.0
  %8346 = vmatpush1.msra.mxu0 0.0
  %8347 = vmatprep.subr.mxu0 0.0
  %8348 = vmatpush1.msra.mxu0 0.0
  %8349 = vmatprep.subr.mxu0 0.0
  %8350 = vmatpush1.msra.mxu0 0.0
  %8351 = vmatprep.subr.mxu0 0.0
  %8352 = vmatpush1.msra.mxu0 0.0
  %8353 = vmatprep.subr.mxu0 0.0
  %8354 = vmatpush1.msra.mxu0 0.0
  %8355 = vmatprep.subr.mxu0 0.0
  %8356 = vmatpush1.msra.mxu0 0.0
  %8357 = vmatprep.subr.mxu0 0.0
  %8358 = vmatpush1.msra.mxu0 0.0
  %8359 = vmatprep.subr.mxu0 0.0
  %8360 = vmatpush1.msra.mxu0 0.0
  %8361 = vmatprep.mubr.f32.mxu0 0.0
  %8362 = vmatmul.mubr.f32.gmra.mrb[0].mxu0 %v7163
  %v8363 = vpop.f32.mrb[0].mxu0
  %v8364 = vadd.f32 %v8219, %v8363
  %v8365 = vpop.f32.mrb[0].mxu0
  %8366 = vmatprep.mubr.f32.mxu0 0.0
  %8367 = vmatmul.mubr.f32.gmra.mrb[0].mxu0 %v7166
  %v8368 = vpop.f32.mrb[0].mxu0
  %v8369 = vadd.f32 %v8224, %v8368
  %v8370 = vpop.f32.mrb[0].mxu0
  %8371 = vmatprep.mubr.f32.mxu0 0.0
  %8372 = vmatmul.mubr.f32.gmra.mrb[0].mxu0 %v7169
  %v8373 = vpop.f32.mrb[0].mxu0
  %v8374 = vadd.f32 %v8229, %v8373
  %v8375 = vpop.f32.mrb[0].mxu0
  %8376 = vmatprep.mubr.f32.mxu0 0.0
  %8377 = vmatmul.mubr.f32.gmra.mrb[0].mxu0 %v7172
  %v8378 = vpop.f32.mrb[0].mxu0
  %v8379 = vadd.f32 %v8234, %v8378
  %v8380 = vpop.f32.mrb[0].mxu0
  %8381 = vmatprep.mubr.f32.mxu0 0.0
  %8382 = vmatmul.mubr.f32.gmra.mrb[0].mxu0 %v7175
  %v8383 = vpop.f32.mrb[0].mxu0
  %v8384 = vadd.f32 %v8239, %v8383
  %v8385 = vpop.f32.mrb[0].mxu0
  %8386 = vmatprep.mubr.f32.mxu0 0.0
  %8387 = vmatmul.mubr.f32.gmra.mrb[0].mxu0 %v7178
  %v8388 = vpop.f32.mrb[0].mxu0
  %v8389 = vadd.f32 %v8244, %v8388
  %v8390 = vpop.f32.mrb[0].mxu0
  %8391 = vmatprep.mubr.f32.mxu0 0.0
  %8392 = vmatmul.mubr.f32.gmra.mrb[0].mxu0 %v7181
  %v8393 = vpop.f32.mrb[0].mxu0
  %v8394 = vadd.f32 %v8249, %v8393
  %v8395 = vpop.f32.mrb[0].mxu0
  %8396 = vmatprep.mubr.f32.mxu0 0.0
  %8397 = vmatmul.mubr.f32.gmra.mrb[0].mxu0 %v7184
  %v8398 = vpop.f32.mrb[0].mxu0
  %v8399 = vadd.f32 %v8254, %v8398
  %v8400 = vpop.f32.mrb[0].mxu0
  %8401 = vmatprep.mubr.f32.mxu0 0.0
  %8402 = vmatmul.mubr.f32.gmra.mrb[0].mxu0 %v7187
  %v8403 = vpop.f32.mrb[0].mxu0
  %v8404 = vadd.f32 %v8259, %v8403
  %v8405 = vpop.f32.mrb[0].mxu0
  %8406 = vmatprep.mubr.f32.mxu0 0.0
  %8407 = vmatmul.mubr.f32.gmra.mrb[0].mxu0 %v7190
  %v8408 = vpop.f32.mrb[0].mxu0
  %v8409 = vadd.f32 %v8264, %v8408
  %v8410 = vpop.f32.mrb[0].mxu0
  %8411 = vmatprep.mubr.f32.mxu0 0.0
  %8412 = vmatmul.mubr.f32.gmra.mrb[0].mxu0 %v7193
  %v8413 = vpop.f32.mrb[0].mxu0
  %v8414 = vadd.f32 %v8269, %v8413
  %v8415 = vpop.f32.mrb[0].mxu0
  %8416 = vmatprep.mubr.f32.mxu0 0.0
  %8417 = vmatmul.mubr.f32.gmra.mrb[0].mxu0 %v7196
  %v8418 = vpop.f32.mrb[0].mxu0
  %v8419 = vadd.f32 %v8274, %v8418
  %v8420 = vpop.f32.mrb[0].mxu0
  %8421 = vmatprep.mubr.f32.mxu0 0.0
  %8422 = vmatmul.mubr.f32.gmra.mrb[0].mxu0 %v7199
  %v8423 = vpop.f32.mrb[0].mxu0
  %v8424 = vadd.f32 %v8279, %v8423
  %v8425 = vpop.f32.mrb[0].mxu0
  %8426 = vmatprep.mubr.f32.mxu0 0.0
  %8427 = vmatmul.mubr.f32.gmra.mrb[0].mxu0 %v7202
  %v8428 = vpop.f32.mrb[0].mxu0
  %v8429 = vadd.f32 %v8284, %v8428
  %v8430 = vpop.f32.mrb[0].mxu0
  %8431 = vmatprep.mubr.f32.mxu0 0.0
  %8432 = vmatmul.mubr.f32.gmra.mrb[0].mxu0 %v7205
  %v8433 = vpop.f32.mrb[0].mxu0
  %v8434 = vadd.f32 %v8289, %v8433
  %v8435 = vpop.f32.mrb[0].mxu0
  %8436 = vmatprep.mubr.f32.mxu0 0.0
  %8437 = vmatmul.mubr.f32.gmra.mrb[0].mxu0 %v7208
  %v8438 = vpop.f32.mrb[0].mxu0
  %v8439 = vadd.f32 %v8294, %v8438
  %v8440 = vpop.f32.mrb[0].mxu0
  %8441 = vdwg.mxu0
  %8442 = vmatprep.subr.mxu0 0.0
  %8443 = vmatpush1.msra.mxu0 %v7549
  %8444 = vmatprep.subr.mxu0 0.0
  %8445 = vmatpush1.msra.mxu0 %v7550
  %8446 = vmatprep.subr.mxu0 0.0
  %8447 = vmatpush1.msra.mxu0 %v7551
  %8448 = vmatprep.subr.mxu0 0.0
  %8449 = vmatpush1.msra.mxu0 %v7552
  %8450 = vmatprep.subr.mxu0 0.0
  %8451 = vmatpush1.msra.mxu0 %v7553
  %8452 = vmatprep.subr.mxu0 0.0
  %8453 = vmatpush1.msra.mxu0 %v7554
  %8454 = vmatprep.subr.mxu0 0.0
  %8455 = vmatpush1.msra.mxu0 %v7555
  %8456 = vmatprep.subr.mxu0 0.0
  %8457 = vmatpush1.msra.mxu0 %v7556
  %8458 = vmatprep.subr.mxu0 0.0
  %8459 = vmatpush1.msra.mxu0 %v7557
  %8460 = vmatprep.subr.mxu0 0.0
  %8461 = vmatpush1.msra.mxu0 0.0
  %8462 = vmatprep.subr.mxu0 0.0
  %8463 = vmatpush1.msra.mxu0 0.0
  %8464 = vmatprep.subr.mxu0 0.0
  %8465 = vmatpush1.msra.mxu0 0.0
  %8466 = vmatprep.subr.mxu0 0.0
  %8467 = vmatpush1.msra.mxu0 0.0
  %8468 = vmatprep.subr.mxu0 0.0
  %8469 = vmatpush1.msra.mxu0 0.0
  %8470 = vmatprep.subr.mxu0 0.0
  %8471 = vmatpush1.msra.mxu0 0.0
  %8472 = vmatprep.subr.mxu0 0.0
  %8473 = vmatpush1.msra.mxu0 0.0
  %8474 = vmatprep.subr.mxu0 0.0
  %8475 = vmatpush1.msra.mxu0 0.0
  %8476 = vmatprep.subr.mxu0 0.0
  %8477 = vmatpush1.msra.mxu0 0.0
  %8478 = vmatprep.subr.mxu0 0.0
  %8479 = vmatpush1.msra.mxu0 0.0
  %8480 = vmatprep.subr.mxu0 0.0
  %8481 = vmatpush1.msra.mxu0 0.0
  %8482 = vmatprep.subr.mxu0 0.0
  %8483 = vmatpush1.msra.mxu0 0.0
  %8484 = vmatprep.subr.mxu0 0.0
  %8485 = vmatpush1.msra.mxu0 0.0
  %8486 = vmatprep.subr.mxu0 0.0
  %8487 = vmatpush1.msra.mxu0 0.0
  %8488 = vmatprep.subr.mxu0 0.0
  %8489 = vmatpush1.msra.mxu0 0.0
  %8490 = vmatprep.subr.mxu0 0.0
  %8491 = vmatpush1.msra.mxu0 0.0
  %8492 = vmatprep.subr.mxu0 0.0
  %8493 = vmatpush1.msra.mxu0 0.0
  %8494 = vmatprep.subr.mxu0 0.0
  %8495 = vmatpush1.msra.mxu0 0.0
  %8496 = vmatprep.subr.mxu0 0.0
  %8497 = vmatpush1.msra.mxu0 0.0
  %8498 = vmatprep.subr.mxu0 0.0
  %8499 = vmatpush1.msra.mxu0 0.0
  %8500 = vmatprep.subr.mxu0 0.0
  %8501 = vmatpush1.msra.mxu0 0.0
  %8502 = vmatprep.subr.mxu0 0.0
  %8503 = vmatpush1.msra.mxu0 0.0
  %8504 = vmatprep.subr.mxu0 0.0
  %8505 = vmatpush1.msra.mxu0 0.0
  %8506 = vmatprep.mubr.f32.mxu0 0.0
  %8507 = vmatmul.mubr.f32.gmra.mrb[0].mxu0 %v7175
  %v8508 = vpop.f32.mrb[0].mxu0
  %v8509 = vadd.f32 0.0, %v8508
  %v8510 = vpop.f32.mrb[0].mxu0
  %8511 = vmatprep.mubr.f32.mxu0 0.0
  %8512 = vmatmul.mubr.f32.gmra.mrb[0].mxu0 %v7178
  %v8513 = vpop.f32.mrb[0].mxu0
  %v8514 = vadd.f32 0.0, %v8513
  %v8515 = vpop.f32.mrb[0].mxu0
  %8516 = vmatprep.mubr.f32.mxu0 0.0
  %8517 = vmatmul.mubr.f32.gmra.mrb[0].mxu0 %v7181
  %v8518 = vpop.f32.mrb[0].mxu0
  %v8519 = vadd.f32 0.0, %v8518
  %v8520 = vpop.f32.mrb[0].mxu0
  %8521 = vmatprep.mubr.f32.mxu0 0.0
  %8522 = vmatmul.mubr.f32.gmra.mrb[0].mxu0 %v7184
  %v8523 = vpop.f32.mrb[0].mxu0
  %v8524 = vadd.f32 0.0, %v8523
  %v8525 = vpop.f32.mrb[0].mxu0
  %8526 = vmatprep.mubr.f32.mxu0 0.0
  %8527 = vmatmul.mubr.f32.gmra.mrb[0].mxu0 %v7187
  %v8528 = vpop.f32.mrb[0].mxu0
  %v8529 = vadd.f32 0.0, %v8528
  %v8530 = vpop.f32.mrb[0].mxu0
  %8531 = vmatprep.mubr.f32.mxu0 0.0
  %8532 = vmatmul.mubr.f32.gmra.mrb[0].mxu0 %v7190
  %v8533 = vpop.f32.mrb[0].mxu0
  %v8534 = vadd.f32 0.0, %v8533
  %v8535 = vpop.f32.mrb[0].mxu0
  %8536 = vmatprep.mubr.f32.mxu0 0.0
  %8537 = vmatmul.mubr.f32.gmra.mrb[0].mxu0 %v7193
  %v8538 = vpop.f32.mrb[0].mxu0
  %v8539 = vadd.f32 0.0, %v8538
  %v8540 = vpop.f32.mrb[0].mxu0
  %8541 = vmatprep.mubr.f32.mxu0 0.0
  %8542 = vmatmul.mubr.f32.gmra.mrb[0].mxu0 %v7196
  %v8543 = vpop.f32.mrb[0].mxu0
  %v8544 = vadd.f32 0.0, %v8543
  %v8545 = vpop.f32.mrb[0].mxu0
  %8546 = vmatprep.mubr.f32.mxu0 0.0
  %8547 = vmatmul.mubr.f32.gmra.mrb[0].mxu0 %v7199
  %v8548 = vpop.f32.mrb[0].mxu0
  %v8549 = vadd.f32 0.0, %v8548
  %v8550 = vpop.f32.mrb[0].mxu0
  %8551 = vmatprep.mubr.f32.mxu0 0.0
  %8552 = vmatmul.mubr.f32.gmra.mrb[0].mxu0 %v7202
  %v8553 = vpop.f32.mrb[0].mxu0
  %v8554 = vadd.f32 0.0, %v8553
  %v8555 = vpop.f32.mrb[0].mxu0
  %8556 = vmatprep.mubr.f32.mxu0 0.0
  %8557 = vmatmul.mubr.f32.gmra.mrb[0].mxu0 %v7205
  %v8558 = vpop.f32.mrb[0].mxu0
  %v8559 = vadd.f32 0.0, %v8558
  %v8560 = vpop.f32.mrb[0].mxu0
  %8561 = vmatprep.mubr.f32.mxu0 0.0
  %8562 = vmatmul.mubr.f32.gmra.mrb[0].mxu0 %v7208
  %v8563 = vpop.f32.mrb[0].mxu0
  %v8564 = vadd.f32 0.0, %v8563
  %v8565 = vpop.f32.mrb[0].mxu0
  %8566 = vmatprep.mubr.f32.mxu0 0.0
  %8567 = vmatmul.mubr.f32.gmra.mrb[0].mxu0 %v7742
  %v8568 = vpop.f32.mrb[0].mxu0
  %v8569 = vadd.f32 0.0, %v8568
  %v8570 = vpop.f32.mrb[0].mxu0
  %8571 = vmatprep.mubr.f32.mxu0 0.0
  %8572 = vmatmul.mubr.f32.gmra.mrb[0].mxu0 %v7745
  %v8573 = vpop.f32.mrb[0].mxu0
  %v8574 = vadd.f32 0.0, %v8573
  %v8575 = vpop.f32.mrb[0].mxu0
  %8576 = vmatprep.mubr.f32.mxu0 0.0
  %8577 = vmatmul.mubr.f32.gmra.mrb[0].mxu0 %v7748
  %v8578 = vpop.f32.mrb[0].mxu0
  %v8579 = vadd.f32 0.0, %v8578
  %v8580 = vpop.f32.mrb[0].mxu0
  %8581 = vmatprep.mubr.f32.mxu0 0.0
  %8582 = vmatmul.mubr.f32.gmra.mrb[0].mxu0 %v7751
  %v8583 = vpop.f32.mrb[0].mxu0
  %v8584 = vadd.f32 0.0, %v8583
  %v8585 = vpop.f32.mrb[0].mxu0
  %8586 = vdwg.mxu0
  %v8587 = vadd.f32 %v8364, %v8509
  %v8588 = vadd.f32 %v8369, %v8514
  %v8589 = vadd.f32 %v8374, %v8519
  %v8590 = vadd.f32 %v8379, %v8524
  %v8591 = vadd.f32 %v8384, %v8529
  %v8592 = vadd.f32 %v8389, %v8534
  %v8593 = vadd.f32 %v8394, %v8539
  %v8594 = vadd.f32 %v8399, %v8544
  %v8595 = vadd.f32 %v8404, %v8549
  %v8596 = vadd.f32 %v8409, %v8554
  %v8597 = vadd.f32 %v8414, %v8559
  %v8598 = vadd.f32 %v8419, %v8564
  %v8599 = vadd.f32 %v8424, %v8569
  %v8600 = vadd.f32 %v8429, %v8574
  %v8601 = vadd.f32 %v8434, %v8579
  %v8602 = vadd.f32 %v8439, %v8584
  %8603 = vmatprep.subr.mxu0 0.0
  %8604 = vmatpush1.msra.mxu0 %v7732
  %8605 = vmatprep.subr.mxu0 0.0
  %8606 = vmatpush1.msra.mxu0 %v7733
  %8607 = vmatprep.subr.mxu0 0.0
  %8608 = vmatpush1.msra.mxu0 %v7734
  %8609 = vmatprep.subr.mxu0 0.0
  %8610 = vmatpush1.msra.mxu0 %v7735
  %8611 = vmatprep.subr.mxu0 0.0
  %8612 = vmatpush1.msra.mxu0 %v7736
  %8613 = vmatprep.subr.mxu0 0.0
  %8614 = vmatpush1.msra.mxu0 %v7737
  %8615 = vmatprep.subr.mxu0 0.0
  %8616 = vmatpush1.msra.mxu0 %v7738
  %8617 = vmatprep.subr.mxu0 0.0
  %8618 = vmatpush1.msra.mxu0 %v7739
  %8619 = vmatprep.subr.mxu0 0.0
  %8620 = vmatpush1.msra.mxu0 %v7740
  %8621 = vmatprep.subr.mxu0 0.0
  %8622 = vmatpush1.msra.mxu0 0.0
  %8623 = vmatprep.subr.mxu0 0.0
  %8624 = vmatpush1.msra.mxu0 0.0
  %8625 = vmatprep.subr.mxu0 0.0
  %8626 = vmatpush1.msra.mxu0 0.0
  %8627 = vmatprep.subr.mxu0 0.0
  %8628 = vmatpush1.msra.mxu0 0.0
  %8629 = vmatprep.subr.mxu0 0.0
  %8630 = vmatpush1.msra.mxu0 0.0
  %8631 = vmatprep.subr.mxu0 0.0
  %8632 = vmatpush1.msra.mxu0 0.0
  %8633 = vmatprep.subr.mxu0 0.0
  %8634 = vmatpush1.msra.mxu0 0.0
  %8635 = vmatprep.subr.mxu0 0.0
  %8636 = vmatpush1.msra.mxu0 0.0
  %8637 = vmatprep.subr.mxu0 0.0
  %8638 = vmatpush1.msra.mxu0 0.0
  %8639 = vmatprep.subr.mxu0 0.0
  %8640 = vmatpush1.msra.mxu0 0.0
  %8641 = vmatprep.subr.mxu0 0.0
  %8642 = vmatpush1.msra.mxu0 0.0
  %8643 = vmatprep.subr.mxu0 0.0
  %8644 = vmatpush1.msra.mxu0 0.0
  %8645 = vmatprep.subr.mxu0 0.0
  %8646 = vmatpush1.msra.mxu0 0.0
  %8647 = vmatprep.subr.mxu0 0.0
  %8648 = vmatpush1.msra.mxu0 0.0
  %8649 = vmatprep.subr.mxu0 0.0
  %8650 = vmatpush1.msra.mxu0 0.0
  %8651 = vmatprep.subr.mxu0 0.0
  %8652 = vmatpush1.msra.mxu0 0.0
  %8653 = vmatprep.subr.mxu0 0.0
  %8654 = vmatpush1.msra.mxu0 0.0
  %8655 = vmatprep.subr.mxu0 0.0
  %8656 = vmatpush1.msra.mxu0 0.0
  %8657 = vmatprep.subr.mxu0 0.0
  %8658 = vmatpush1.msra.mxu0 0.0
  %8659 = vmatprep.subr.mxu0 0.0
  %8660 = vmatpush1.msra.mxu0 0.0
  %8661 = vmatprep.subr.mxu0 0.0
  %8662 = vmatpush1.msra.mxu0 0.0
  %8663 = vmatprep.subr.mxu0 0.0
  %8664 = vmatpush1.msra.mxu0 0.0
  %8665 = vmatprep.subr.mxu0 0.0
  %8666 = vmatpush1.msra.mxu0 0.0
  %8667 = vmatprep.mubr.f32.mxu0 0.0
  %8668 = vmatmul.mubr.f32.gmra.mrb[0].mxu0 %v7380
  %v8669 = vpop.f32.mrb[0].mxu0
  %v8670 = vadd.f32 0.0, %v8669
  %v8671 = vpop.f32.mrb[0].mxu0
  %8672 = vmatprep.mubr.f32.mxu0 0.0
  %8673 = vmatmul.mubr.f32.gmra.mrb[0].mxu0 %v7383
  %v8674 = vpop.f32.mrb[0].mxu0
  %v8675 = vadd.f32 0.0, %v8674
  %v8676 = vpop.f32.mrb[0].mxu0
  %8677 = vmatprep.mubr.f32.mxu0 0.0
  %8678 = vmatmul.mubr.f32.gmra.mrb[0].mxu0 %v7386
  %v8679 = vpop.f32.mrb[0].mxu0
  %v8680 = vadd.f32 0.0, %v8679
  %v8681 = vpop.f32.mrb[0].mxu0
  %8682 = vmatprep.mubr.f32.mxu0 0.0
  %8683 = vmatmul.mubr.f32.gmra.mrb[0].mxu0 %v7389
  %v8684 = vpop.f32.mrb[0].mxu0
  %v8685 = vadd.f32 0.0, %v8684
  %v8686 = vpop.f32.mrb[0].mxu0
  %8687 = vmatprep.mubr.f32.mxu0 0.0
  %8688 = vmatmul.mubr.f32.gmra.mrb[0].mxu0 %v7392
  %v8689 = vpop.f32.mrb[0].mxu0
  %v8690 = vadd.f32 0.0, %v8689
  %v8691 = vpop.f32.mrb[0].mxu0
  %8692 = vmatprep.mubr.f32.mxu0 0.0
  %8693 = vmatmul.mubr.f32.gmra.mrb[0].mxu0 %v7395
  %v8694 = vpop.f32.mrb[0].mxu0
  %v8695 = vadd.f32 0.0, %v8694
  %v8696 = vpop.f32.mrb[0].mxu0
  %8697 = vmatprep.mubr.f32.mxu0 0.0
  %8698 = vmatmul.mubr.f32.gmra.mrb[0].mxu0 %v7398
  %v8699 = vpop.f32.mrb[0].mxu0
  %v8700 = vadd.f32 0.0, %v8699
  %v8701 = vpop.f32.mrb[0].mxu0
  %8702 = vmatprep.mubr.f32.mxu0 0.0
  %8703 = vmatmul.mubr.f32.gmra.mrb[0].mxu0 %v7401
  %v8704 = vpop.f32.mrb[0].mxu0
  %v8705 = vadd.f32 0.0, %v8704
  %v8706 = vpop.f32.mrb[0].mxu0
  %8707 = vmatprep.mubr.f32.mxu0 0.0
  %8708 = vmatmul.mubr.f32.gmra.mrb[0].mxu0 %v7559
  %v8709 = vpop.f32.mrb[0].mxu0
  %v8710 = vadd.f32 0.0, %v8709
  %v8711 = vpop.f32.mrb[0].mxu0
  %8712 = vmatprep.mubr.f32.mxu0 0.0
  %8713 = vmatmul.mubr.f32.gmra.mrb[0].mxu0 %v7562
  %v8714 = vpop.f32.mrb[0].mxu0
  %v8715 = vadd.f32 0.0, %v8714
  %v8716 = vpop.f32.mrb[0].mxu0
  %8717 = vmatprep.mubr.f32.mxu0 0.0
  %8718 = vmatmul.mubr.f32.gmra.mrb[0].mxu0 %v7565
  %v8719 = vpop.f32.mrb[0].mxu0
  %v8720 = vadd.f32 0.0, %v8719
  %v8721 = vpop.f32.mrb[0].mxu0
  %8722 = vmatprep.mubr.f32.mxu0 0.0
  %8723 = vmatmul.mubr.f32.gmra.mrb[0].mxu0 %v7568
  %v8724 = vpop.f32.mrb[0].mxu0
  %v8725 = vadd.f32 0.0, %v8724
  %v8726 = vpop.f32.mrb[0].mxu0
  %8727 = vmatprep.mubr.f32.mxu0 0.0
  %8728 = vmatmul.mubr.f32.gmra.mrb[0].mxu0 %v7925
  %v8729 = vpop.f32.mrb[0].mxu0
  %v8730 = vadd.f32 0.0, %v8729
  %v8731 = vpop.f32.mrb[0].mxu0
  %8732 = vmatprep.mubr.f32.mxu0 0.0
  %8733 = vmatmul.mubr.f32.gmra.mrb[0].mxu0 %v7928
  %v8734 = vpop.f32.mrb[0].mxu0
  %v8735 = vadd.f32 0.0, %v8734
  %v8736 = vpop.f32.mrb[0].mxu0
  %8737 = vmatprep.mubr.f32.mxu0 0.0
  %8738 = vmatmul.mubr.f32.gmra.mrb[0].mxu0 %v7931
  %v8739 = vpop.f32.mrb[0].mxu0
  %v8740 = vadd.f32 0.0, %v8739
  %v8741 = vpop.f32.mrb[0].mxu0
  %8742 = vmatprep.mubr.f32.mxu0 0.0
  %8743 = vmatmul.mubr.f32.gmra.mrb[0].mxu0 %v7934
  %v8744 = vpop.f32.mrb[0].mxu0
  %v8745 = vadd.f32 0.0, %v8744
  %v8746 = vpop.f32.mrb[0].mxu0
  %8747 = vdwg.mxu0
  %v8748 = vadd.f32 %v8587, %v8670
  %v8749 = vadd.f32 %v8588, %v8675
  %v8750 = vadd.f32 %v8589, %v8680
  %v8751 = vadd.f32 %v8590, %v8685
  %v8752 = vadd.f32 %v8591, %v8690
  %v8753 = vadd.f32 %v8592, %v8695
  %v8754 = vadd.f32 %v8593, %v8700
  %v8755 = vadd.f32 %v8594, %v8705
  %v8756 = vadd.f32 %v8595, %v8710
  %v8757 = vadd.f32 %v8596, %v8715
  %v8758 = vadd.f32 %v8597, %v8720
  %v8759 = vadd.f32 %v8598, %v8725
  %v8760 = vadd.f32 %v8599, %v8730
  %v8761 = vadd.f32 %v8600, %v8735
  %v8762 = vadd.f32 %v8601, %v8740
  %v8763 = vadd.f32 %v8602, %v8745
  %v8765 = vsel %vm7161, %v7138, 0
  %v8768 = vsel %vm7161, %v7139, 0
  %v8771 = vsel %vm7161, %v7140, 0
  %v8774 = vsel %vm7161, %v7141, 0
  %8776 = vmatprep.subr.mxu0 0.0
  %8777 = vmatpush1.msra.mxu0 %v7915
  %8778 = vmatprep.subr.mxu0 0.0
  %8779 = vmatpush1.msra.mxu0 %v7916
  %8780 = vmatprep.subr.mxu0 0.0
  %8781 = vmatpush1.msra.mxu0 %v7917
  %8782 = vmatprep.subr.mxu0 0.0
  %8783 = vmatpush1.msra.mxu0 %v7918
  %8784 = vmatprep.subr.mxu0 0.0
  %8785 = vmatpush1.msra.mxu0 %v7919
  %8786 = vmatprep.subr.mxu0 0.0
  %8787 = vmatpush1.msra.mxu0 %v7920
  %8788 = vmatprep.subr.mxu0 0.0
  %8789 = vmatpush1.msra.mxu0 %v7921
  %8790 = vmatprep.subr.mxu0 0.0
  %8791 = vmatpush1.msra.mxu0 %v7922
  %8792 = vmatprep.subr.mxu0 0.0
  %8793 = vmatpush1.msra.mxu0 %v7923
  %8794 = vmatprep.subr.mxu0 0.0
  %8795 = vmatpush1.msra.mxu0 0.0
  %8796 = vmatprep.subr.mxu0 0.0
  %8797 = vmatpush1.msra.mxu0 0.0
  %8798 = vmatprep.subr.mxu0 0.0
  %8799 = vmatpush1.msra.mxu0 0.0
  %8800 = vmatprep.subr.mxu0 0.0
  %8801 = vmatpush1.msra.mxu0 0.0
  %8802 = vmatprep.subr.mxu0 0.0
  %8803 = vmatpush1.msra.mxu0 0.0
  %8804 = vmatprep.subr.mxu0 0.0
  %8805 = vmatpush1.msra.mxu0 0.0
  %8806 = vmatprep.subr.mxu0 0.0
  %8807 = vmatpush1.msra.mxu0 0.0
  %8808 = vmatprep.subr.mxu0 0.0
  %8809 = vmatpush1.msra.mxu0 0.0
  %8810 = vmatprep.subr.mxu0 0.0
  %8811 = vmatpush1.msra.mxu0 0.0
  %8812 = vmatprep.subr.mxu0 0.0
  %8813 = vmatpush1.msra.mxu0 0.0
  %8814 = vmatprep.subr.mxu0 0.0
  %8815 = vmatpush1.msra.mxu0 0.0
  %8816 = vmatprep.subr.mxu0 0.0
  %8817 = vmatpush1.msra.mxu0 0.0
  %8818 = vmatprep.subr.mxu0 0.0
  %8819 = vmatpush1.msra.mxu0 0.0
  %8820 = vmatprep.subr.mxu0 0.0
  %8821 = vmatpush1.msra.mxu0 0.0
  %8822 = vmatprep.subr.mxu0 0.0
  %8823 = vmatpush1.msra.mxu0 0.0
  %8824 = vmatprep.subr.mxu0 0.0
  %8825 = vmatpush1.msra.mxu0 0.0
  %8826 = vmatprep.subr.mxu0 0.0
  %8827 = vmatpush1.msra.mxu0 0.0
  %8828 = vmatprep.subr.mxu0 0.0
  %8829 = vmatpush1.msra.mxu0 0.0
  %8830 = vmatprep.subr.mxu0 0.0
  %8831 = vmatpush1.msra.mxu0 0.0
  %8832 = vmatprep.subr.mxu0 0.0
  %8833 = vmatpush1.msra.mxu0 0.0
  %8834 = vmatprep.subr.mxu0 0.0
  %8835 = vmatpush1.msra.mxu0 0.0
  %8836 = vmatprep.subr.mxu0 0.0
  %8837 = vmatpush1.msra.mxu0 0.0
  %8838 = vmatprep.subr.mxu0 0.0
  %8839 = vmatpush1.msra.mxu0 0.0
  %8840 = vmatprep.mubr.f32.mxu0 0.0
  %8841 = vmatmul.mubr.f32.gmra.mrb[0].mxu0 %v7187
  %v8842 = vpop.f32.mrb[0].mxu0
  %v8843 = vadd.f32 0.0, %v8842
  %v8844 = vpop.f32.mrb[0].mxu0
  %8845 = vmatprep.mubr.f32.mxu0 0.0
  %8846 = vmatmul.mubr.f32.gmra.mrb[0].mxu0 %v7190
  %v8847 = vpop.f32.mrb[0].mxu0
  %v8848 = vadd.f32 0.0, %v8847
  %v8849 = vpop.f32.mrb[0].mxu0
  %8850 = vmatprep.mubr.f32.mxu0 0.0
  %8851 = vmatmul.mubr.f32.gmra.mrb[0].mxu0 %v7193
  %v8852 = vpop.f32.mrb[0].mxu0
  %v8853 = vadd.f32 0.0, %v8852
  %v8854 = vpop.f32.mrb[0].mxu0
  %8855 = vmatprep.mubr.f32.mxu0 0.0
  %8856 = vmatmul.mubr.f32.gmra.mrb[0].mxu0 %v7196
  %v8857 = vpop.f32.mrb[0].mxu0
  %v8858 = vadd.f32 0.0, %v8857
  %v8859 = vpop.f32.mrb[0].mxu0
  %8860 = vmatprep.mubr.f32.mxu0 0.0
  %8861 = vmatmul.mubr.f32.gmra.mrb[0].mxu0 %v7199
  %v8862 = vpop.f32.mrb[0].mxu0
  %v8863 = vadd.f32 0.0, %v8862
  %v8864 = vpop.f32.mrb[0].mxu0
  %8865 = vmatprep.mubr.f32.mxu0 0.0
  %8866 = vmatmul.mubr.f32.gmra.mrb[0].mxu0 %v7202
  %v8867 = vpop.f32.mrb[0].mxu0
  %v8868 = vadd.f32 0.0, %v8867
  %v8869 = vpop.f32.mrb[0].mxu0
  %8870 = vmatprep.mubr.f32.mxu0 0.0
  %8871 = vmatmul.mubr.f32.gmra.mrb[0].mxu0 %v7205
  %v8872 = vpop.f32.mrb[0].mxu0
  %v8873 = vadd.f32 0.0, %v8872
  %v8874 = vpop.f32.mrb[0].mxu0
  %8875 = vmatprep.mubr.f32.mxu0 0.0
  %8876 = vmatmul.mubr.f32.gmra.mrb[0].mxu0 %v7208
  %v8877 = vpop.f32.mrb[0].mxu0
  %v8878 = vadd.f32 0.0, %v8877
  %v8879 = vpop.f32.mrb[0].mxu0
  %8880 = vmatprep.mubr.f32.mxu0 0.0
  %8881 = vmatmul.mubr.f32.gmra.mrb[0].mxu0 %v7742
  %v8882 = vpop.f32.mrb[0].mxu0
  %v8883 = vadd.f32 0.0, %v8882
  %v8884 = vpop.f32.mrb[0].mxu0
  %8885 = vmatprep.mubr.f32.mxu0 0.0
  %8886 = vmatmul.mubr.f32.gmra.mrb[0].mxu0 %v7745
  %v8887 = vpop.f32.mrb[0].mxu0
  %v8888 = vadd.f32 0.0, %v8887
  %v8889 = vpop.f32.mrb[0].mxu0
  %8890 = vmatprep.mubr.f32.mxu0 0.0
  %8891 = vmatmul.mubr.f32.gmra.mrb[0].mxu0 %v7748
  %v8892 = vpop.f32.mrb[0].mxu0
  %v8893 = vadd.f32 0.0, %v8892
  %v8894 = vpop.f32.mrb[0].mxu0
  %8895 = vmatprep.mubr.f32.mxu0 0.0
  %8896 = vmatmul.mubr.f32.gmra.mrb[0].mxu0 %v7751
  %v8897 = vpop.f32.mrb[0].mxu0
  %v8898 = vadd.f32 0.0, %v8897
  %v8899 = vpop.f32.mrb[0].mxu0
  %8900 = vmatprep.mubr.f32.mxu0 0.0
  %8901 = vmatmul.mubr.f32.gmra.mrb[0].mxu0 %v8765
  %v8902 = vpop.f32.mrb[0].mxu0
  %v8903 = vadd.f32 0.0, %v8902
  %v8904 = vpop.f32.mrb[0].mxu0
  %8905 = vmatprep.mubr.f32.mxu0 0.0
  %8906 = vmatmul.mubr.f32.gmra.mrb[0].mxu0 %v8768
  %v8907 = vpop.f32.mrb[0].mxu0
  %v8908 = vadd.f32 0.0, %v8907
  %v8909 = vpop.f32.mrb[0].mxu0
  %8910 = vmatprep.mubr.f32.mxu0 0.0
  %8911 = vmatmul.mubr.f32.gmra.mrb[0].mxu0 %v8771
  %v8912 = vpop.f32.mrb[0].mxu0
  %v8913 = vadd.f32 0.0, %v8912
  %v8914 = vpop.f32.mrb[0].mxu0
  %8915 = vmatprep.mubr.f32.mxu0 0.0
  %8916 = vmatmul.mubr.f32.gmra.mrb[0].mxu0 %v8774
  %v8917 = vpop.f32.mrb[0].mxu0
  %v8918 = vadd.f32 0.0, %v8917
  %v8919 = vpop.f32.mrb[0].mxu0
  %8920 = vdwg.mxu0
  %v8921 = vadd.f32 %v8748, %v8843
  %v8922 = vadd.f32 %v8749, %v8848
  %v8923 = vadd.f32 %v8750, %v8853
  %v8924 = vadd.f32 %v8751, %v8858
  %v8925 = vadd.f32 %v8752, %v8863
  %v8926 = vadd.f32 %v8753, %v8868
  %v8927 = vadd.f32 %v8754, %v8873
  %v8928 = vadd.f32 %v8755, %v8878
  %v8929 = vadd.f32 %v8756, %v8883
  %v8930 = vadd.f32 %v8757, %v8888
  %v8931 = vadd.f32 %v8758, %v8893
  %v8932 = vadd.f32 %v8759, %v8898
  %v8933 = vadd.f32 %v8760, %v8903
  %v8934 = vadd.f32 %v8761, %v8908
  %v8935 = vadd.f32 %v8762, %v8913
  %v8936 = vadd.f32 %v8763, %v8918
  %v8937 = vadd.f32 %v8921, %v8102
  %v8938 = vadd.f32 %v8922, %v8102
  %v8939 = vadd.f32 %v8923, %v8102
  %v8940 = vadd.f32 %v8924, %v8102
  %v8941 = vadd.f32 %v8925, %v8102
  %v8942 = vadd.f32 %v8926, %v8102
  %v8943 = vadd.f32 %v8927, %v8102
  %v8944 = vadd.f32 %v8928, %v8102
  %v8945 = vadd.f32 %v8929, %v8102
  %v8946 = vadd.f32 %v8930, %v8102
  %v8947 = vadd.f32 %v8931, %v8102
  %v8948 = vadd.f32 %v8932, %v8102
  %v8949 = vadd.f32 %v8933, %v8102
  %v8950 = vadd.f32 %v8934, %v8102
  %v8951 = vadd.f32 %v8935, %v8102
  %v8952 = vadd.f32 %v8936, %v8102
  %v8953 = vtanh.pop %v8937
  %v8954 = vtanh.pop %v8938
  %v8955 = vtanh.pop %v8939
  %v8956 = vtanh.pop %v8940
  %v8957 = vtanh.pop %v8941
  %v8958 = vtanh.pop %v8942
  %v8959 = vtanh.pop %v8943
  %v8960 = vtanh.pop %v8944
  %v8961 = vtanh.pop %v8945
  %v8962 = vtanh.pop %v8946
  %v8963 = vtanh.pop %v8947
  %v8964 = vtanh.pop %v8948
  %v8965 = vtanh.pop %v8949
  %v8966 = vtanh.pop %v8950
  %v8967 = vtanh.pop %v8951
  %v8968 = vtanh.pop %v8952
  %8969 = vmatprep.subr.mxu0 0.0
  %8970 = vmatpush1.msra.mxu0 %v8136
  %8971 = vmatprep.subr.mxu0 0.0
  %8972 = vmatpush1.msra.mxu0 %v8137
  %8973 = vmatprep.subr.mxu0 0.0
  %8974 = vmatpush1.msra.mxu0 %v8138
  %8975 = vmatprep.subr.mxu0 0.0
  %8976 = vmatpush1.msra.mxu0 %v8139
  %8977 = vmatprep.subr.mxu0 0.0
  %8978 = vmatpush1.msra.mxu0 %v8140
  %8979 = vmatprep.subr.mxu0 0.0
  %8980 = vmatpush1.msra.mxu0 %v8141
  %8981 = vmatprep.subr.mxu0 0.0
  %8982 = vmatpush1.msra.mxu0 %v8142
  %8983 = vmatprep.subr.mxu0 0.0
  %8984 = vmatpush1.msra.mxu0 %v8143
  %8985 = vmatprep.subr.mxu0 0.0
  %8986 = vmatpush1.msra.mxu0 %v8144
  %8987 = vmatprep.subr.mxu0 0.0
  %8988 = vmatpush1.msra.mxu0 %v8145
  %8989 = vmatprep.subr.mxu0 0.0
  %8990 = vmatpush1.msra.mxu0 %v8146
  %8991 = vmatprep.subr.mxu0 0.0
  %8992 = vmatpush1.msra.mxu0 %v8147
  %8993 = vmatprep.subr.mxu0 0.0
  %8994 = vmatpush1.msra.mxu0 %v8148
  %8995 = vmatprep.subr.mxu0 0.0
  %8996 = vmatpush1.msra.mxu0 %v8149
  %8997 = vmatprep.subr.mxu0 0.0
  %8998 = vmatpush1.msra.mxu0 %v8150
  %8999 = vmatprep.subr.mxu0 0.0
  %9000 = vmatpush1.msra.mxu0 %v8151
  %9001 = vmatprep.subr.mxu0 0.0
  %9002 = vmatpush1.msra.mxu0 0.0
  %9003 = vmatprep.subr.mxu0 0.0
  %9004 = vmatpush1.msra.mxu0 0.0
  %9005 = vmatprep.subr.mxu0 0.0
  %9006 = vmatpush1.msra.mxu0 0.0
  %9007 = vmatprep.subr.mxu0 0.0
  %9008 = vmatpush1.msra.mxu0 0.0
  %9009 = vmatprep.subr.mxu0 0.0
  %9010 = vmatpush1.msra.mxu0 0.0
  %9011 = vmatprep.subr.mxu0 0.0
  %9012 = vmatpush1.msra.mxu0 0.0
  %9013 = vmatprep.subr.mxu0 0.0
  %9014 = vmatpush1.msra.mxu0 0.0
  %9015 = vmatprep.subr.mxu0 0.0
  %9016 = vmatpush1.msra.mxu0 0.0
  %9017 = vmatprep.subr.mxu0 0.0
  %9018 = vmatpush1.msra.mxu0 0.0
  %9019 = vmatprep.subr.mxu0 0.0
  %9020 = vmatpush1.msra.mxu0 0.0
  %9021 = vmatprep.subr.mxu0 0.0
  %9022 = vmatpush1.msra.mxu0 0.0
  %9023 = vmatprep.subr.mxu0 0.0
  %9024 = vmatpush1.msra.mxu0 0.0
  %9025 = vmatprep.subr.mxu0 0.0
  %9026 = vmatpush1.msra.mxu0 0.0
  %9027 = vmatprep.subr.mxu0 0.0
  %9028 = vmatpush1.msra.mxu0 0.0
  %9029 = vmatprep.subr.mxu0 0.0
  %9030 = vmatpush1.msra.mxu0 0.0
  %9031 = vmatprep.subr.mxu0 0.0
  %9032 = vmatpush1.msra.mxu0 0.0
  %9033 = vmatprep.mubr.f32.mxu0 0.0
  %9034 = vmatmul.mubr.f32.gmra.mrb[0].mxu0 %v8953
  %v9035 = vpop.f32.mrb[0].mxu0
  %v9036 = vadd.f32 0.0, %v9035
  %v9037 = vpop.f32.mrb[0].mxu0
  %9038 = vmatprep.mubr.f32.mxu0 0.0
  %9039 = vmatmul.mubr.f32.gmra.mrb[0].mxu0 %v8954
  %v9040 = vpop.f32.mrb[0].mxu0
  %v9041 = vadd.f32 0.0, %v9040
  %v9042 = vpop.f32.mrb[0].mxu0
  %9043 = vmatprep.mubr.f32.mxu0 0.0
  %9044 = vmatmul.mubr.f32.gmra.mrb[0].mxu0 %v8955
  %v9045 = vpop.f32.mrb[0].mxu0
  %v9046 = vadd.f32 0.0, %v9045
  %v9047 = vpop.f32.mrb[0].mxu0
  %9048 = vmatprep.mubr.f32.mxu0 0.0
  %9049 = vmatmul.mubr.f32.gmra.mrb[0].mxu0 %v8956
  %v9050 = vpop.f32.mrb[0].mxu0
  %v9051 = vadd.f32 0.0, %v9050
  %v9052 = vpop.f32.mrb[0].mxu0
  %9053 = vmatprep.mubr.f32.mxu0 0.0
  %9054 = vmatmul.mubr.f32.gmra.mrb[0].mxu0 %v8957
  %v9055 = vpop.f32.mrb[0].mxu0
  %v9056 = vadd.f32 0.0, %v9055
  %v9057 = vpop.f32.mrb[0].mxu0
  %9058 = vmatprep.mubr.f32.mxu0 0.0
  %9059 = vmatmul.mubr.f32.gmra.mrb[0].mxu0 %v8958
  %v9060 = vpop.f32.mrb[0].mxu0
  %v9061 = vadd.f32 0.0, %v9060
  %v9062 = vpop.f32.mrb[0].mxu0
  %9063 = vmatprep.mubr.f32.mxu0 0.0
  %9064 = vmatmul.mubr.f32.gmra.mrb[0].mxu0 %v8959
  %v9065 = vpop.f32.mrb[0].mxu0
  %v9066 = vadd.f32 0.0, %v9065
  %v9067 = vpop.f32.mrb[0].mxu0
  %9068 = vmatprep.mubr.f32.mxu0 0.0
  %9069 = vmatmul.mubr.f32.gmra.mrb[0].mxu0 %v8960
  %v9070 = vpop.f32.mrb[0].mxu0
  %v9071 = vadd.f32 0.0, %v9070
  %v9072 = vpop.f32.mrb[0].mxu0
  %9073 = vmatprep.mubr.f32.mxu0 0.0
  %9074 = vmatmul.mubr.f32.gmra.mrb[0].mxu0 %v8961
  %v9075 = vpop.f32.mrb[0].mxu0
  %v9076 = vadd.f32 0.0, %v9075
  %v9077 = vpop.f32.mrb[0].mxu0
  %9078 = vmatprep.mubr.f32.mxu0 0.0
  %9079 = vmatmul.mubr.f32.gmra.mrb[0].mxu0 %v8962
  %v9080 = vpop.f32.mrb[0].mxu0
  %v9081 = vadd.f32 0.0, %v9080
  %v9082 = vpop.f32.mrb[0].mxu0
  %9083 = vmatprep.mubr.f32.mxu0 0.0
  %9084 = vmatmul.mubr.f32.gmra.mrb[0].mxu0 %v8963
  %v9085 = vpop.f32.mrb[0].mxu0
  %v9086 = vadd.f32 0.0, %v9085
  %v9087 = vpop.f32.mrb[0].mxu0
  %9088 = vmatprep.mubr.f32.mxu0 0.0
  %9089 = vmatmul.mubr.f32.gmra.mrb[0].mxu0 %v8964
  %v9090 = vpop.f32.mrb[0].mxu0
  %v9091 = vadd.f32 0.0, %v9090
  %v9092 = vpop.f32.mrb[0].mxu0
  %9093 = vmatprep.mubr.f32.mxu0 0.0
  %9094 = vmatmul.mubr.f32.gmra.mrb[0].mxu0 %v8965
  %v9095 = vpop.f32.mrb[0].mxu0
  %v9096 = vadd.f32 0.0, %v9095
  %v9097 = vpop.f32.mrb[0].mxu0
  %9098 = vmatprep.mubr.f32.mxu0 0.0
  %9099 = vmatmul.mubr.f32.gmra.mrb[0].mxu0 %v8966
  %v9100 = vpop.f32.mrb[0].mxu0
  %v9101 = vadd.f32 0.0, %v9100
  %v9102 = vpop.f32.mrb[0].mxu0
  %9103 = vmatprep.mubr.f32.mxu0 0.0
  %9104 = vmatmul.mubr.f32.gmra.mrb[0].mxu0 %v8967
  %v9105 = vpop.f32.mrb[0].mxu0
  %v9106 = vadd.f32 0.0, %v9105
  %v9107 = vpop.f32.mrb[0].mxu0
  %9108 = vmatprep.mubr.f32.mxu0 0.0
  %9109 = vmatmul.mubr.f32.gmra.mrb[0].mxu0 %v8968
  %v9110 = vpop.f32.mrb[0].mxu0
  %v9111 = vadd.f32 0.0, %v9110
  %v9112 = vpop.f32.mrb[0].mxu0
  %9113 = vdwg.mxu0
  %9114 = vmatprep.subr.mxu0 0.0
  %9115 = vmatpush1.msra.mxu0 %v8136
  %9116 = vmatprep.subr.mxu0 0.0
  %9117 = vmatpush1.msra.mxu0 %v8137
  %9118 = vmatprep.subr.mxu0 0.0
  %9119 = vmatpush1.msra.mxu0 %v8138
  %9120 = vmatprep.subr.mxu0 0.0
  %9121 = vmatpush1.msra.mxu0 %v8139
  %9122 = vmatprep.subr.mxu0 0.0
  %9123 = vmatpush1.msra.mxu0 %v8140
  %9124 = vmatprep.subr.mxu0 0.0
  %9125 = vmatpush1.msra.mxu0 %v8141
  %9126 = vmatprep.subr.mxu0 0.0
  %9127 = vmatpush1.msra.mxu0 %v8142
  %9128 = vmatprep.subr.mxu0 0.0
  %9129 = vmatpush1.msra.mxu0 %v8143
  %9130 = vmatprep.subr.mxu0 0.0
  %9131 = vmatpush1.msra.mxu0 %v8144
  %9132 = vmatprep.subr.mxu0 0.0
  %9133 = vmatpush1.msra.mxu0 %v8145
  %9134 = vmatprep.subr.mxu0 0.0
  %9135 = vmatpush1.msra.mxu0 %v8146
  %9136 = vmatprep.subr.mxu0 0.0
  %9137 = vmatpush1.msra.mxu0 %v8147
  %9138 = vmatprep.subr.mxu0 0.0
  %9139 = vmatpush1.msra.mxu0 %v8148
  %9140 = vmatprep.subr.mxu0 0.0
  %9141 = vmatpush1.msra.mxu0 %v8149
  %9142 = vmatprep.subr.mxu0 0.0
  %9143 = vmatpush1.msra.mxu0 %v8150
  %9144 = vmatprep.subr.mxu0 0.0
  %9145 = vmatpush1.msra.mxu0 %v8151
  %9146 = vmatprep.subr.mxu0 0.0
  %9147 = vmatpush1.msra.mxu0 0.0
  %9148 = vmatprep.subr.mxu0 0.0
  %9149 = vmatpush1.msra.mxu0 0.0
  %9150 = vmatprep.subr.mxu0 0.0
  %9151 = vmatpush1.msra.mxu0 0.0
  %9152 = vmatprep.subr.mxu0 0.0
  %9153 = vmatpush1.msra.mxu0 0.0
  %9154 = vmatprep.subr.mxu0 0.0
  %9155 = vmatpush1.msra.mxu0 0.0
  %9156 = vmatprep.subr.mxu0 0.0
  %9157 = vmatpush1.msra.mxu0 0.0
  %9158 = vmatprep.subr.mxu0 0.0
  %9159 = vmatpush1.msra.mxu0 0.0
  %9160 = vmatprep.subr.mxu0 0.0
  %9161 = vmatpush1.msra.mxu0 0.0
  %9162 = vmatprep.subr.mxu0 0.0
  %9163 = vmatpush1.msra.mxu0 0.0
  %9164 = vmatprep.subr.mxu0 0.0
  %9165 = vmatpush1.msra.mxu0 0.0
  %9166 = vmatprep.subr.mxu0 0.0
  %9167 = vmatpush1.msra.mxu0 0.0
  %9168 = vmatprep.subr.mxu0 0.0
  %9169 = vmatpush1.msra.mxu0 0.0
  %9170 = vmatprep.subr.mxu0 0.0
  %9171 = vmatpush1.msra.mxu0 0.0
  %9172 = vmatprep.subr.mxu0 0.0
  %9173 = vmatpush1.msra.mxu0 0.0
  %9174 = vmatprep.subr.mxu0 0.0
  %9175 = vmatpush1.msra.mxu0 0.0
  %9176 = vmatprep.subr.mxu0 0.0
  %9177 = vmatpush1.msra.mxu0 0.0
  %9178 = vmatprep.mubr.f32.mxu0 0.0
  %9179 = vmatmul.mubr.f32.gmra.mrb[0].mxu0 %v8120
  %v9180 = vpop.f32.mrb[0].mxu0
  %v9181 = vadd.f32 %v9036, %v9180
  %v9182 = vpop.f32.mrb[0].mxu0
  %9183 = vmatprep.mubr.f32.mxu0 0.0
  %9184 = vmatmul.mubr.f32.gmra.mrb[0].mxu0 %v8121
  %v9185 = vpop.f32.mrb[0].mxu0
  %v9186 = vadd.f32 %v9041, %v9185
  %v9187 = vpop.f32.mrb[0].mxu0
  %9188 = vmatprep.mubr.f32.mxu0 0.0
  %9189 = vmatmul.mubr.f32.gmra.mrb[0].mxu0 %v8122
  %v9190 = vpop.f32.mrb[0].mxu0
  %v9191 = vadd.f32 %v9046, %v9190
  %v9192 = vpop.f32.mrb[0].mxu0
  %9193 = vmatprep.mubr.f32.mxu0 0.0
  %9194 = vmatmul.mubr.f32.gmra.mrb[0].mxu0 %v8123
  %v9195 = vpop.f32.mrb[0].mxu0
  %v9196 = vadd.f32 %v9051, %v9195
  %v9197 = vpop.f32.mrb[0].mxu0
  %9198 = vmatprep.mubr.f32.mxu0 0.0
  %9199 = vmatmul.mubr.f32.gmra.mrb[0].mxu0 %v8124
  %v9200 = vpop.f32.mrb[0].mxu0
  %v9201 = vadd.f32 %v9056, %v9200
  %v9202 = vpop.f32.mrb[0].mxu0
  %9203 = vmatprep.mubr.f32.mxu0 0.0
  %9204 = vmatmul.mubr.f32.gmra.mrb[0].mxu0 %v8125
  %v9205 = vpop.f32.mrb[0].mxu0
  %v9206 = vadd.f32 %v9061, %v9205
  %v9207 = vpop.f32.mrb[0].mxu0
  %9208 = vmatprep.mubr.f32.mxu0 0.0
  %9209 = vmatmul.mubr.f32.gmra.mrb[0].mxu0 %v8126
  %v9210 = vpop.f32.mrb[0].mxu0
  %v9211 = vadd.f32 %v9066, %v9210
  %v9212 = vpop.f32.mrb[0].mxu0
  %9213 = vmatprep.mubr.f32.mxu0 0.0
  %9214 = vmatmul.mubr.f32.gmra.mrb[0].mxu0 %v8127
  %v9215 = vpop.f32.mrb[0].mxu0
  %v9216 = vadd.f32 %v9071, %v9215
  %v9217 = vpop.f32.mrb[0].mxu0
  %9218 = vmatprep.mubr.f32.mxu0 0.0
  %9219 = vmatmul.mubr.f32.gmra.mrb[0].mxu0 %v8128
  %v9220 = vpop.f32.mrb[0].mxu0
  %v9221 = vadd.f32 %v9076, %v9220
  %v9222 = vpop.f32.mrb[0].mxu0
  %9223 = vmatprep.mubr.f32.mxu0 0.0
  %9224 = vmatmul.mubr.f32.gmra.mrb[0].mxu0 %v8129
  %v9225 = vpop.f32.mrb[0].mxu0
  %v9226 = vadd.f32 %v9081, %v9225
  %v9227 = vpop.f32.mrb[0].mxu0
  %9228 = vmatprep.mubr.f32.mxu0 0.0
  %9229 = vmatmul.mubr.f32.gmra.mrb[0].mxu0 %v8130
  %v9230 = vpop.f32.mrb[0].mxu0
  %v9231 = vadd.f32 %v9086, %v9230
  %v9232 = vpop.f32.mrb[0].mxu0
  %9233 = vmatprep.mubr.f32.mxu0 0.0
  %9234 = vmatmul.mubr.f32.gmra.mrb[0].mxu0 %v8131
  %v9235 = vpop.f32.mrb[0].mxu0
  %v9236 = vadd.f32 %v9091, %v9235
  %v9237 = vpop.f32.mrb[0].mxu0
  %9238 = vmatprep.mubr.f32.mxu0 0.0
  %9239 = vmatmul.mubr.f32.gmra.mrb[0].mxu0 %v8132
  %v9240 = vpop.f32.mrb[0].mxu0
  %v9241 = vadd.f32 %v9096, %v9240
  %v9242 = vpop.f32.mrb[0].mxu0
  %9243 = vmatprep.mubr.f32.mxu0 0.0
  %9244 = vmatmul.mubr.f32.gmra.mrb[0].mxu0 %v8133
  %v9245 = vpop.f32.mrb[0].mxu0
  %v9246 = vadd.f32 %v9101, %v9245
  %v9247 = vpop.f32.mrb[0].mxu0
  %9248 = vmatprep.mubr.f32.mxu0 0.0
  %9249 = vmatmul.mubr.f32.gmra.mrb[0].mxu0 %v8134
  %v9250 = vpop.f32.mrb[0].mxu0
  %v9251 = vadd.f32 %v9106, %v9250
  %v9252 = vpop.f32.mrb[0].mxu0
  %9253 = vmatprep.mubr.f32.mxu0 0.0
  %9254 = vmatmul.mubr.f32.gmra.mrb[0].mxu0 %v8135
  %v9255 = vpop.f32.mrb[0].mxu0
  %v9256 = vadd.f32 %v9111, %v9255
  %v9257 = vpop.f32.mrb[0].mxu0
  %9258 = vdwg.mxu0
  %v9259 = vmul.f32 %v9181, 0.5
  %v9260 = vmul.f32 %v9186, 0.5
  %v9261 = vmul.f32 %v9191, 0.5
  %v9262 = vmul.f32 %v9196, 0.5
  %v9263 = vmul.f32 %v9201, 0.5
  %v9264 = vmul.f32 %v9206, 0.5
  %v9265 = vmul.f32 %v9211, 0.5
  %v9266 = vmul.f32 %v9216, 0.5
  %v9267 = vmul.f32 %v9221, 0.5
  %v9268 = vmul.f32 %v9226, 0.5
  %v9269 = vmul.f32 %v9231, 0.5
  %v9270 = vmul.f32 %v9236, 0.5
  %v9271 = vmul.f32 %v9241, 0.5
  %v9272 = vmul.f32 %v9246, 0.5
  %v9273 = vmul.f32 %v9251, 0.5
  %v9274 = vmul.f32 %v9256, 0.5
  %v9275 = vld [vmem:[%s7] sm:$0xff]
  %v9276 = vld [vmem:[%s7 + $0x8] sm:$0xff]
  %v9277 = vld [vmem:[%s7 + $0x10] sm:$0xff]
  %v9278 = vld [vmem:[%s7 + $0x18] sm:$0xff]
  %v9279 = vld [vmem:[%s7 + $0x20] sm:$0xff]
  %v9280 = vld [vmem:[%s7 + $0x28] sm:$0xff]
  %v9281 = vld [vmem:[%s7 + $0x30] sm:$0xff]
  %v9282 = vld [vmem:[%s7 + $0x38] sm:$0xff]
  %s9283 = scalar_lea.vmem %s7, 64
  %v9284 = vld [vmem:[%s9283] sm:$0xff]
  %v9285 = vld [vmem:[%s9283 + $0x8] sm:$0xff]
  %v9286 = vld [vmem:[%s9283 + $0x10] sm:$0xff]
  %v9287 = vld [vmem:[%s9283 + $0x18] sm:$0xff]
  %v9288 = vld [vmem:[%s9283 + $0x20] sm:$0xff]
  %v9289 = vld [vmem:[%s9283 + $0x28] sm:$0xff]
  %v9290 = vld [vmem:[%s9283 + $0x30] sm:$0xff]
  %v9291 = vld [vmem:[%s9283 + $0x38] sm:$0xff]
  %vm9292 = vcmask 523264
  %v9294 = vsel %vm9292, %v9263, 0
  %v9297 = vsel %vm9292, %v9264, 0
  %v9300 = vsel %vm9292, %v9265, 0
  %v9303 = vsel %vm9292, %v9266, 0
  %9305 = vmatprep.subr.mxu0 0.0
  %9306 = vmatpush1.msra.mxu0 %v9284
  %9307 = vmatprep.subr.mxu0 0.0
  %9308 = vmatpush1.msra.mxu0 %v9285
  %9309 = vmatprep.subr.mxu0 0.0
  %9310 = vmatpush1.msra.mxu0 %v9286
  %9311 = vmatprep.subr.mxu0 0.0
  %9312 = vmatpush1.msra.mxu0 %v9287
  %9313 = vmatprep.subr.mxu0 0.0
  %9314 = vmatpush1.msra.mxu0 %v9288
  %9315 = vmatprep.subr.mxu0 0.0
  %9316 = vmatpush1.msra.mxu0 %v9289
  %9317 = vmatprep.subr.mxu0 0.0
  %9318 = vmatpush1.msra.mxu0 %v9290
  %9319 = vmatprep.subr.mxu0 0.0
  %9320 = vmatpush1.msra.mxu0 %v9291
  %9321 = vmatprep.subr.mxu0 0.0
  %9322 = vmatpush1.msra.mxu0 0.0
  %9323 = vmatprep.subr.mxu0 0.0
  %9324 = vmatpush1.msra.mxu0 0.0
  %9325 = vmatprep.subr.mxu0 0.0
  %9326 = vmatpush1.msra.mxu0 0.0
  %9327 = vmatprep.subr.mxu0 0.0
  %9328 = vmatpush1.msra.mxu0 0.0
  %9329 = vmatprep.subr.mxu0 0.0
  %9330 = vmatpush1.msra.mxu0 0.0
  %9331 = vmatprep.subr.mxu0 0.0
  %9332 = vmatpush1.msra.mxu0 0.0
  %9333 = vmatprep.subr.mxu0 0.0
  %9334 = vmatpush1.msra.mxu0 0.0
  %9335 = vmatprep.subr.mxu0 0.0
  %9336 = vmatpush1.msra.mxu0 0.0
  %9337 = vmatprep.subr.mxu0 0.0
  %9338 = vmatpush1.msra.mxu0 0.0
  %9339 = vmatprep.subr.mxu0 0.0
  %9340 = vmatpush1.msra.mxu0 0.0
  %9341 = vmatprep.subr.mxu0 0.0
  %9342 = vmatpush1.msra.mxu0 0.0
  %9343 = vmatprep.subr.mxu0 0.0
  %9344 = vmatpush1.msra.mxu0 0.0
  %9345 = vmatprep.subr.mxu0 0.0
  %9346 = vmatpush1.msra.mxu0 0.0
  %9347 = vmatprep.subr.mxu0 0.0
  %9348 = vmatpush1.msra.mxu0 0.0
  %9349 = vmatprep.subr.mxu0 0.0
  %9350 = vmatpush1.msra.mxu0 0.0
  %9351 = vmatprep.subr.mxu0 0.0
  %9352 = vmatpush1.msra.mxu0 0.0
  %9353 = vmatprep.subr.mxu0 0.0
  %9354 = vmatpush1.msra.mxu0 0.0
  %9355 = vmatprep.subr.mxu0 0.0
  %9356 = vmatpush1.msra.mxu0 0.0
  %9357 = vmatprep.subr.mxu0 0.0
  %9358 = vmatpush1.msra.mxu0 0.0
  %9359 = vmatprep.subr.mxu0 0.0
  %9360 = vmatpush1.msra.mxu0 0.0
  %9361 = vmatprep.subr.mxu0 0.0
  %9362 = vmatpush1.msra.mxu0 0.0
  %9363 = vmatprep.subr.mxu0 0.0
  %9364 = vmatpush1.msra.mxu0 0.0
  %9365 = vmatprep.subr.mxu0 0.0
  %9366 = vmatpush1.msra.mxu0 0.0
  %9367 = vmatprep.subr.mxu0 0.0
  %9368 = vmatpush1.msra.mxu0 0.0
  %9369 = vmatprep.mubr.f32.mxu0 0.0
  %9370 = vmatmul.mubr.f32.gmra.mrb[0].mxu0 %v9294
  %v9371 = vpop.f32.mrb[0].mxu0
  %v9372 = vadd.f32 0.0, %v9371
  %v9373 = vpop.f32.mrb[0].mxu0
  %9374 = vmatprep.mubr.f32.mxu0 0.0
  %9375 = vmatmul.mubr.f32.gmra.mrb[0].mxu0 %v9297
  %v9376 = vpop.f32.mrb[0].mxu0
  %v9377 = vadd.f32 0.0, %v9376
  %v9378 = vpop.f32.mrb[0].mxu0
  %9379 = vmatprep.mubr.f32.mxu0 0.0
  %9380 = vmatmul.mubr.f32.gmra.mrb[0].mxu0 %v9300
  %v9381 = vpop.f32.mrb[0].mxu0
  %v9382 = vadd.f32 0.0, %v9381
  %v9383 = vpop.f32.mrb[0].mxu0
  %9384 = vmatprep.mubr.f32.mxu0 0.0
  %9385 = vmatmul.mubr.f32.gmra.mrb[0].mxu0 %v9303
  %v9386 = vpop.f32.mrb[0].mxu0
  %v9387 = vadd.f32 0.0, %v9386
  %v9388 = vpop.f32.mrb[0].mxu0
  %9389 = vdwg.mxu0
  %v9391 = vsel %vm9292, %v9259, 0
  %v9394 = vsel %vm9292, %v9260, 0
  %v9397 = vsel %vm9292, %v9261, 0
  %v9400 = vsel %vm9292, %v9262, 0
  %9402 = vmatprep.subr.mxu0 0.0
  %9403 = vmatpush1.msra.mxu0 %v9275
  %9404 = vmatprep.subr.mxu0 0.0
  %9405 = vmatpush1.msra.mxu0 %v9276
  %9406 = vmatprep.subr.mxu0 0.0
  %9407 = vmatpush1.msra.mxu0 %v9277
  %9408 = vmatprep.subr.mxu0 0.0
  %9409 = vmatpush1.msra.mxu0 %v9278
  %9410 = vmatprep.subr.mxu0 0.0
  %9411 = vmatpush1.msra.mxu0 %v9279
  %9412 = vmatprep.subr.mxu0 0.0
  %9413 = vmatpush1.msra.mxu0 %v9280
  %9414 = vmatprep.subr.mxu0 0.0
  %9415 = vmatpush1.msra.mxu0 %v9281
  %9416 = vmatprep.subr.mxu0 0.0
  %9417 = vmatpush1.msra.mxu0 %v9282
  %9418 = vmatprep.subr.mxu0 0.0
  %9419 = vmatpush1.msra.mxu0 0.0
  %9420 = vmatprep.subr.mxu0 0.0
  %9421 = vmatpush1.msra.mxu0 0.0
  %9422 = vmatprep.subr.mxu0 0.0
  %9423 = vmatpush1.msra.mxu0 0.0
  %9424 = vmatprep.subr.mxu0 0.0
  %9425 = vmatpush1.msra.mxu0 0.0
  %9426 = vmatprep.subr.mxu0 0.0
  %9427 = vmatpush1.msra.mxu0 0.0
  %9428 = vmatprep.subr.mxu0 0.0
  %9429 = vmatpush1.msra.mxu0 0.0
  %9430 = vmatprep.subr.mxu0 0.0
  %9431 = vmatpush1.msra.mxu0 0.0
  %9432 = vmatprep.subr.mxu0 0.0
  %9433 = vmatpush1.msra.mxu0 0.0
  %9434 = vmatprep.subr.mxu0 0.0
  %9435 = vmatpush1.msra.mxu0 0.0
  %9436 = vmatprep.subr.mxu0 0.0
  %9437 = vmatpush1.msra.mxu0 0.0
  %9438 = vmatprep.subr.mxu0 0.0
  %9439 = vmatpush1.msra.mxu0 0.0
  %9440 = vmatprep.subr.mxu0 0.0
  %9441 = vmatpush1.msra.mxu0 0.0
  %9442 = vmatprep.subr.mxu0 0.0
  %9443 = vmatpush1.msra.mxu0 0.0
  %9444 = vmatprep.subr.mxu0 0.0
  %9445 = vmatpush1.msra.mxu0 0.0
  %9446 = vmatprep.subr.mxu0 0.0
  %9447 = vmatpush1.msra.mxu0 0.0
  %9448 = vmatprep.subr.mxu0 0.0
  %9449 = vmatpush1.msra.mxu0 0.0
  %9450 = vmatprep.subr.mxu0 0.0
  %9451 = vmatpush1.msra.mxu0 0.0
  %9452 = vmatprep.subr.mxu0 0.0
  %9453 = vmatpush1.msra.mxu0 0.0
  %9454 = vmatprep.subr.mxu0 0.0
  %9455 = vmatpush1.msra.mxu0 0.0
  %9456 = vmatprep.subr.mxu0 0.0
  %9457 = vmatpush1.msra.mxu0 0.0
  %9458 = vmatprep.subr.mxu0 0.0
  %9459 = vmatpush1.msra.mxu0 0.0
  %9460 = vmatprep.subr.mxu0 0.0
  %9461 = vmatpush1.msra.mxu0 0.0
  %9462 = vmatprep.subr.mxu0 0.0
  %9463 = vmatpush1.msra.mxu0 0.0
  %9464 = vmatprep.subr.mxu0 0.0
  %9465 = vmatpush1.msra.mxu0 0.0
  %9466 = vmatprep.mubr.f32.mxu0 0.0
  %9467 = vmatmul.mubr.f32.gmra.mrb[0].mxu0 %v9391
  %v9468 = vpop.f32.mrb[0].mxu0
  %v9469 = vadd.f32 %v9372, %v9468
  %v9470 = vpop.f32.mrb[0].mxu0
  %9471 = vmatprep.mubr.f32.mxu0 0.0
  %9472 = vmatmul.mubr.f32.gmra.mrb[0].mxu0 %v9394
  %v9473 = vpop.f32.mrb[0].mxu0
  %v9474 = vadd.f32 %v9377, %v9473
  %v9475 = vpop.f32.mrb[0].mxu0
  %9476 = vmatprep.mubr.f32.mxu0 0.0
  %9477 = vmatmul.mubr.f32.gmra.mrb[0].mxu0 %v9397
  %v9478 = vpop.f32.mrb[0].mxu0
  %v9479 = vadd.f32 %v9382, %v9478
  %v9480 = vpop.f32.mrb[0].mxu0
  %9481 = vmatprep.mubr.f32.mxu0 0.0
  %9482 = vmatmul.mubr.f32.gmra.mrb[0].mxu0 %v9400
  %v9483 = vpop.f32.mrb[0].mxu0
  %v9484 = vadd.f32 %v9387, %v9483
  %v9485 = vpop.f32.mrb[0].mxu0
  %9486 = vdwg.mxu0
  %s9487 = scalar_lea.vmem %s7, 128
  %v9488 = vld [vmem:[%s9487] sm:$0xff]
  %v9489 = vld [vmem:[%s9487 + $0x8] sm:$0xff]
  %v9490 = vld [vmem:[%s9487 + $0x10] sm:$0xff]
  %v9491 = vld [vmem:[%s9487 + $0x18] sm:$0xff]
  %v9492 = vld [vmem:[%s9487 + $0x20] sm:$0xff]
  %v9493 = vld [vmem:[%s9487 + $0x28] sm:$0xff]
  %v9494 = vld [vmem:[%s9487 + $0x30] sm:$0xff]
  %v9495 = vld [vmem:[%s9487 + $0x38] sm:$0xff]
  %v9497 = vsel %vm9292, %v9267, 0
  %v9500 = vsel %vm9292, %v9268, 0
  %v9503 = vsel %vm9292, %v9269, 0
  %v9506 = vsel %vm9292, %v9270, 0
  %9508 = vmatprep.subr.mxu0 0.0
  %9509 = vmatpush1.msra.mxu0 %v9488
  %9510 = vmatprep.subr.mxu0 0.0
  %9511 = vmatpush1.msra.mxu0 %v9489
  %9512 = vmatprep.subr.mxu0 0.0
  %9513 = vmatpush1.msra.mxu0 %v9490
  %9514 = vmatprep.subr.mxu0 0.0
  %9515 = vmatpush1.msra.mxu0 %v9491
  %9516 = vmatprep.subr.mxu0 0.0
  %9517 = vmatpush1.msra.mxu0 %v9492
  %9518 = vmatprep.subr.mxu0 0.0
  %9519 = vmatpush1.msra.mxu0 %v9493
  %9520 = vmatprep.subr.mxu0 0.0
  %9521 = vmatpush1.msra.mxu0 %v9494
  %9522 = vmatprep.subr.mxu0 0.0
  %9523 = vmatpush1.msra.mxu0 %v9495
  %9524 = vmatprep.subr.mxu0 0.0
  %9525 = vmatpush1.msra.mxu0 0.0
  %9526 = vmatprep.subr.mxu0 0.0
  %9527 = vmatpush1.msra.mxu0 0.0
  %9528 = vmatprep.subr.mxu0 0.0
  %9529 = vmatpush1.msra.mxu0 0.0
  %9530 = vmatprep.subr.mxu0 0.0
  %9531 = vmatpush1.msra.mxu0 0.0
  %9532 = vmatprep.subr.mxu0 0.0
  %9533 = vmatpush1.msra.mxu0 0.0
  %9534 = vmatprep.subr.mxu0 0.0
  %9535 = vmatpush1.msra.mxu0 0.0
  %9536 = vmatprep.subr.mxu0 0.0
  %9537 = vmatpush1.msra.mxu0 0.0
  %9538 = vmatprep.subr.mxu0 0.0
  %9539 = vmatpush1.msra.mxu0 0.0
  %9540 = vmatprep.subr.mxu0 0.0
  %9541 = vmatpush1.msra.mxu0 0.0
  %9542 = vmatprep.subr.mxu0 0.0
  %9543 = vmatpush1.msra.mxu0 0.0
  %9544 = vmatprep.subr.mxu0 0.0
  %9545 = vmatpush1.msra.mxu0 0.0
  %9546 = vmatprep.subr.mxu0 0.0
  %9547 = vmatpush1.msra.mxu0 0.0
  %9548 = vmatprep.subr.mxu0 0.0
  %9549 = vmatpush1.msra.mxu0 0.0
  %9550 = vmatprep.subr.mxu0 0.0
  %9551 = vmatpush1.msra.mxu0 0.0
  %9552 = vmatprep.subr.mxu0 0.0
  %9553 = vmatpush1.msra.mxu0 0.0
  %9554 = vmatprep.subr.mxu0 0.0
  %9555 = vmatpush1.msra.mxu0 0.0
  %9556 = vmatprep.subr.mxu0 0.0
  %9557 = vmatpush1.msra.mxu0 0.0
  %9558 = vmatprep.subr.mxu0 0.0
  %9559 = vmatpush1.msra.mxu0 0.0
  %9560 = vmatprep.subr.mxu0 0.0
  %9561 = vmatpush1.msra.mxu0 0.0
  %9562 = vmatprep.subr.mxu0 0.0
  %9563 = vmatpush1.msra.mxu0 0.0
  %9564 = vmatprep.subr.mxu0 0.0
  %9565 = vmatpush1.msra.mxu0 0.0
  %9566 = vmatprep.subr.mxu0 0.0
  %9567 = vmatpush1.msra.mxu0 0.0
  %9568 = vmatprep.subr.mxu0 0.0
  %9569 = vmatpush1.msra.mxu0 0.0
  %9570 = vmatprep.subr.mxu0 0.0
  %9571 = vmatpush1.msra.mxu0 0.0
  %9572 = vmatprep.mubr.f32.mxu0 0.0
  %9573 = vmatmul.mubr.f32.gmra.mrb[0].mxu0 %v9497
  %v9574 = vpop.f32.mrb[0].mxu0
  %v9575 = vadd.f32 0.0, %v9574
  %v9576 = vpop.f32.mrb[0].mxu0
  %9577 = vmatprep.mubr.f32.mxu0 0.0
  %9578 = vmatmul.mubr.f32.gmra.mrb[0].mxu0 %v9500
  %v9579 = vpop.f32.mrb[0].mxu0
  %v9580 = vadd.f32 0.0, %v9579
  %v9581 = vpop.f32.mrb[0].mxu0
  %9582 = vmatprep.mubr.f32.mxu0 0.0
  %9583 = vmatmul.mubr.f32.gmra.mrb[0].mxu0 %v9503
  %v9584 = vpop.f32.mrb[0].mxu0
  %v9585 = vadd.f32 0.0, %v9584
  %v9586 = vpop.f32.mrb[0].mxu0
  %9587 = vmatprep.mubr.f32.mxu0 0.0
  %9588 = vmatmul.mubr.f32.gmra.mrb[0].mxu0 %v9506
  %v9589 = vpop.f32.mrb[0].mxu0
  %v9590 = vadd.f32 0.0, %v9589
  %v9591 = vpop.f32.mrb[0].mxu0
  %9592 = vdwg.mxu0
  %v9593 = vadd.f32 %v9469, %v9575
  %v9594 = vadd.f32 %v9474, %v9580
  %v9595 = vadd.f32 %v9479, %v9585
  %v9596 = vadd.f32 %v9484, %v9590
  %s9597 = scalar_lea.vmem %s7, 192
  %v9598 = vld [vmem:[%s9597] sm:$0xff]
  %v9599 = vld [vmem:[%s9597 + $0x8] sm:$0xff]
  %v9600 = vld [vmem:[%s9597 + $0x10] sm:$0xff]
  %v9601 = vld [vmem:[%s9597 + $0x18] sm:$0xff]
  %v9602 = vld [vmem:[%s9597 + $0x20] sm:$0xff]
  %v9603 = vld [vmem:[%s9597 + $0x28] sm:$0xff]
  %v9604 = vld [vmem:[%s9597 + $0x30] sm:$0xff]
  %v9605 = vld [vmem:[%s9597 + $0x38] sm:$0xff]
  %v9607 = vsel %vm9292, %v9271, 0
  %v9610 = vsel %vm9292, %v9272, 0
  %v9613 = vsel %vm9292, %v9273, 0
  %v9616 = vsel %vm9292, %v9274, 0
  %9618 = vmatprep.subr.mxu0 0.0
  %9619 = vmatpush1.msra.mxu0 %v9598
  %9620 = vmatprep.subr.mxu0 0.0
  %9621 = vmatpush1.msra.mxu0 %v9599
  %9622 = vmatprep.subr.mxu0 0.0
  %9623 = vmatpush1.msra.mxu0 %v9600
  %9624 = vmatprep.subr.mxu0 0.0
  %9625 = vmatpush1.msra.mxu0 %v9601
  %9626 = vmatprep.subr.mxu0 0.0
  %9627 = vmatpush1.msra.mxu0 %v9602
  %9628 = vmatprep.subr.mxu0 0.0
  %9629 = vmatpush1.msra.mxu0 %v9603
  %9630 = vmatprep.subr.mxu0 0.0
  %9631 = vmatpush1.msra.mxu0 %v9604
  %9632 = vmatprep.subr.mxu0 0.0
  %9633 = vmatpush1.msra.mxu0 %v9605
  %9634 = vmatprep.subr.mxu0 0.0
  %9635 = vmatpush1.msra.mxu0 0.0
  %9636 = vmatprep.subr.mxu0 0.0
  %9637 = vmatpush1.msra.mxu0 0.0
  %9638 = vmatprep.subr.mxu0 0.0
  %9639 = vmatpush1.msra.mxu0 0.0
  %9640 = vmatprep.subr.mxu0 0.0
  %9641 = vmatpush1.msra.mxu0 0.0
  %9642 = vmatprep.subr.mxu0 0.0
  %9643 = vmatpush1.msra.mxu0 0.0
  %9644 = vmatprep.subr.mxu0 0.0
  %9645 = vmatpush1.msra.mxu0 0.0
  %9646 = vmatprep.subr.mxu0 0.0
  %9647 = vmatpush1.msra.mxu0 0.0
  %9648 = vmatprep.subr.mxu0 0.0
  %9649 = vmatpush1.msra.mxu0 0.0
  %9650 = vmatprep.subr.mxu0 0.0
  %9651 = vmatpush1.msra.mxu0 0.0
  %9652 = vmatprep.subr.mxu0 0.0
  %9653 = vmatpush1.msra.mxu0 0.0
  %9654 = vmatprep.subr.mxu0 0.0
  %9655 = vmatpush1.msra.mxu0 0.0
  %9656 = vmatprep.subr.mxu0 0.0
  %9657 = vmatpush1.msra.mxu0 0.0
  %9658 = vmatprep.subr.mxu0 0.0
  %9659 = vmatpush1.msra.mxu0 0.0
  %9660 = vmatprep.subr.mxu0 0.0
  %9661 = vmatpush1.msra.mxu0 0.0
  %9662 = vmatprep.subr.mxu0 0.0
  %9663 = vmatpush1.msra.mxu0 0.0
  %9664 = vmatprep.subr.mxu0 0.0
  %9665 = vmatpush1.msra.mxu0 0.0
  %9666 = vmatprep.subr.mxu0 0.0
  %9667 = vmatpush1.msra.mxu0 0.0
  %9668 = vmatprep.subr.mxu0 0.0
  %9669 = vmatpush1.msra.mxu0 0.0
  %9670 = vmatprep.subr.mxu0 0.0
  %9671 = vmatpush1.msra.mxu0 0.0
  %9672 = vmatprep.subr.mxu0 0.0
  %9673 = vmatpush1.msra.mxu0 0.0
  %9674 = vmatprep.subr.mxu0 0.0
  %9675 = vmatpush1.msra.mxu0 0.0
  %9676 = vmatprep.subr.mxu0 0.0
  %9677 = vmatpush1.msra.mxu0 0.0
  %9678 = vmatprep.subr.mxu0 0.0
  %9679 = vmatpush1.msra.mxu0 0.0
  %9680 = vmatprep.subr.mxu0 0.0
  %9681 = vmatpush1.msra.mxu0 0.0
  %9682 = vmatprep.mubr.f32.mxu0 0.0
  %9683 = vmatmul.mubr.f32.gmra.mrb[0].mxu0 %v9607
  %v9684 = vpop.f32.mrb[0].mxu0
  %v9685 = vadd.f32 0.0, %v9684
  %v9686 = vpop.f32.mrb[0].mxu0
  %9687 = vmatprep.mubr.f32.mxu0 0.0
  %9688 = vmatmul.mubr.f32.gmra.mrb[0].mxu0 %v9610
  %v9689 = vpop.f32.mrb[0].mxu0
  %v9690 = vadd.f32 0.0, %v9689
  %v9691 = vpop.f32.mrb[0].mxu0
  %9692 = vmatprep.mubr.f32.mxu0 0.0
  %9693 = vmatmul.mubr.f32.gmra.mrb[0].mxu0 %v9613
  %v9694 = vpop.f32.mrb[0].mxu0
  %v9695 = vadd.f32 0.0, %v9694
  %v9696 = vpop.f32.mrb[0].mxu0
  %9697 = vmatprep.mubr.f32.mxu0 0.0
  %9698 = vmatmul.mubr.f32.gmra.mrb[0].mxu0 %v9616
  %v9699 = vpop.f32.mrb[0].mxu0
  %v9700 = vadd.f32 0.0, %v9699
  %v9701 = vpop.f32.mrb[0].mxu0
  %9702 = vdwg.mxu0
  %v9703 = vadd.f32 %v9593, %v9685
  %v9704 = vadd.f32 %v9594, %v9690
  %v9705 = vadd.f32 %v9595, %v9695
  %v9706 = vadd.f32 %v9596, %v9700
  %v9707 = vld [vmem:[%s8] sm:$0x1]
  %v9709 = vlaneseq
  %v9710 = vshrl.u32 %v9709, 7
  %v9711 = vsub.s32 0, %v9710
  %v9712 = vrot.slane %v9707, %v9711
  %v9714 = vadd.f32 %v9703, %v9712
  %v9715 = vadd.f32 %v9704, %v9712
  %v9716 = vadd.f32 %v9705, %v9712
  %v9717 = vadd.f32 %v9706, %v9712
  %v9718 = vtanh.pop %v9714
  %v9719 = vtanh.pop %v9715
  %v9720 = vtanh.pop %v9716
  %v9721 = vtanh.pop %v9717
  %v9722 = vld [vmem:[%s9] sm:$0xff]
  %v9723 = vld [vmem:[%s9 + $0x8] sm:$0xff]
  %v9724 = vld [vmem:[%s9 + $0x10] sm:$0xff]
  %v9725 = vld [vmem:[%s9 + $0x18] sm:$0xff]
  %v9726 = vld [vmem:[%s9 + $0x20] sm:$0xff]
  %v9727 = vld [vmem:[%s9 + $0x28] sm:$0xff]
  %v9728 = vld [vmem:[%s9 + $0x30] sm:$0xff]
  %v9729 = vld [vmem:[%s9 + $0x38] sm:$0xff]
  %v9730 = vld [vmem:[%s9 + $0x40] sm:$0xff]
  %v9731 = vld [vmem:[%s9 + $0x48] sm:$0xff]
  %v9732 = vld [vmem:[%s9 + $0x50] sm:$0xff]
  %v9733 = vld [vmem:[%s9 + $0x58] sm:$0xff]
  %v9734 = vld [vmem:[%s9 + $0x60] sm:$0xff]
  %v9735 = vld [vmem:[%s9 + $0x68] sm:$0xff]
  %v9736 = vld [vmem:[%s9 + $0x70] sm:$0xff]
  %v9737 = vld [vmem:[%s10] sm:$0x1]
  %v9739 = vlaneseq
  %v9740 = vshrl.u32 %v9739, 7
  %v9741 = vsub.s32 0, %v9740
  %v9742 = vrot.slane %v9737, %v9741
  %vm9744 = vcmask 982016
  %v9746 = vsel %vm9744, %v9718, 0
  %v9749 = vsel %vm9744, %v9719, 0
  %v9752 = vsel %vm9744, %v9720, 0
  %v9755 = vsel %vm9744, %v9721, 0
  %9757 = vmatprep.subr.mxu0 0.0
  %9758 = vmatpush1.msra.mxu0 %v9722
  %9759 = vmatprep.subr.mxu0 0.0
  %9760 = vmatpush1.msra.mxu0 %v9723
  %9761 = vmatprep.subr.mxu0 0.0
  %9762 = vmatpush1.msra.mxu0 %v9724
  %9763 = vmatprep.subr.mxu0 0.0
  %9764 = vmatpush1.msra.mxu0 %v9725
  %9765 = vmatprep.subr.mxu0 0.0
  %9766 = vmatpush1.msra.mxu0 %v9726
  %9767 = vmatprep.subr.mxu0 0.0
  %9768 = vmatpush1.msra.mxu0 %v9727
  %9769 = vmatprep.subr.mxu0 0.0
  %9770 = vmatpush1.msra.mxu0 %v9728
  %9771 = vmatprep.subr.mxu0 0.0
  %9772 = vmatpush1.msra.mxu0 %v9729
  %9773 = vmatprep.subr.mxu0 0.0
  %9774 = vmatpush1.msra.mxu0 %v9730
  %9775 = vmatprep.subr.mxu0 0.0
  %9776 = vmatpush1.msra.mxu0 %v9731
  %9777 = vmatprep.subr.mxu0 0.0
  %9778 = vmatpush1.msra.mxu0 %v9732
  %9779 = vmatprep.subr.mxu0 0.0
  %9780 = vmatpush1.msra.mxu0 %v9733
  %9781 = vmatprep.subr.mxu0 0.0
  %9782 = vmatpush1.msra.mxu0 %v9734
  %9783 = vmatprep.subr.mxu0 0.0
  %9784 = vmatpush1.msra.mxu0 %v9735
  %9785 = vmatprep.subr.mxu0 0.0
  %9786 = vmatpush1.msra.mxu0 %v9736
  %9787 = vmatprep.subr.mxu0 0.0
  %9788 = vmatpush1.msra.mxu0 0.0
  %9789 = vmatprep.subr.mxu0 0.0
  %9790 = vmatpush1.msra.mxu0 0.0
  %9791 = vmatprep.subr.mxu0 0.0
  %9792 = vmatpush1.msra.mxu0 0.0
  %9793 = vmatprep.subr.mxu0 0.0
  %9794 = vmatpush1.msra.mxu0 0.0
  %9795 = vmatprep.subr.mxu0 0.0
  %9796 = vmatpush1.msra.mxu0 0.0
  %9797 = vmatprep.subr.mxu0 0.0
  %9798 = vmatpush1.msra.mxu0 0.0
  %9799 = vmatprep.subr.mxu0 0.0
  %9800 = vmatpush1.msra.mxu0 0.0
  %9801 = vmatprep.subr.mxu0 0.0
  %9802 = vmatpush1.msra.mxu0 0.0
  %9803 = vmatprep.subr.mxu0 0.0
  %9804 = vmatpush1.msra.mxu0 0.0
  %9805 = vmatprep.subr.mxu0 0.0
  %9806 = vmatpush1.msra.mxu0 0.0
  %9807 = vmatprep.subr.mxu0 0.0
  %9808 = vmatpush1.msra.mxu0 0.0
  %9809 = vmatprep.subr.mxu0 0.0
  %9810 = vmatpush1.msra.mxu0 0.0
  %9811 = vmatprep.subr.mxu0 0.0
  %9812 = vmatpush1.msra.mxu0 0.0
  %9813 = vmatprep.subr.mxu0 0.0
  %9814 = vmatpush1.msra.mxu0 0.0
  %9815 = vmatprep.subr.mxu0 0.0
  %9816 = vmatpush1.msra.mxu0 0.0
  %9817 = vmatprep.subr.mxu0 0.0
  %9818 = vmatpush1.msra.mxu0 0.0
  %9819 = vmatprep.subr.mxu0 0.0
  %9820 = vmatpush1.msra.mxu0 0.0
  %9821 = vmatprep.mubr.f32.mxu0 0.0
  %9822 = vmatmul.mubr.f32.gmra.mrb[0].mxu0 %v9746
  %v9823 = vpop.f32.mrb[0].mxu0
  %v9824 = vadd.f32 %v9742, %v9823
  %v9825 = vpop.f32.mrb[0].mxu0
  %9826 = vmatprep.mubr.f32.mxu0 0.0
  %9827 = vmatmul.mubr.f32.gmra.mrb[0].mxu0 %v9749
  %v9828 = vpop.f32.mrb[0].mxu0
  %v9829 = vadd.f32 %v9742, %v9828
  %v9830 = vpop.f32.mrb[0].mxu0
  %9831 = vmatprep.mubr.f32.mxu0 0.0
  %9832 = vmatmul.mubr.f32.gmra.mrb[0].mxu0 %v9752
  %v9833 = vpop.f32.mrb[0].mxu0
  %v9834 = vadd.f32 %v9742, %v9833
  %v9835 = vpop.f32.mrb[0].mxu0
  %9836 = vmatprep.mubr.f32.mxu0 0.0
  %9837 = vmatmul.mubr.f32.gmra.mrb[0].mxu0 %v9755
  %v9838 = vpop.f32.mrb[0].mxu0
  %v9839 = vadd.f32 %v9742, %v9838
  %v9840 = vpop.f32.mrb[0].mxu0
  %9841 = vdwg.mxu0
  %v9842 = vtanh.pop %v9824
  %v9843 = vtanh.pop %v9829
  %v9844 = vtanh.pop %v9834
  %v9845 = vtanh.pop %v9839
  %v9846 = vld [vmem:[%s11] sm:$0xff]
  %v9847 = vld [vmem:[%s11 + $0x8] sm:$0xff]
  %v9848 = vld [vmem:[%s11 + $0x10] sm:$0xff]
  %v9849 = vld [vmem:[%s11 + $0x18] sm:$0xff]
  %v9850 = vld [vmem:[%s11 + $0x20] sm:$0xff]
  %v9851 = vld [vmem:[%s11 + $0x28] sm:$0xff]
  %v9852 = vld [vmem:[%s11 + $0x30] sm:$0xff]
  %v9853 = vld [vmem:[%s11 + $0x38] sm:$0xff]
  %v9854 = vld [vmem:[%s11 + $0x40] sm:$0xff]
  %v9855 = vld [vmem:[%s11 + $0x48] sm:$0xff]
  %v9856 = vld [vmem:[%s11 + $0x50] sm:$0xf]
  %v9857 = vld [vmem:[%s12] sm:$0x1]
  %v9859 = vlaneseq
  %v9860 = vshrl.u32 %v9859, 7
  %v9861 = vsub.s32 0, %v9860
  %v9862 = vrot.slane %v9857, %v9861
  %vm9864 = vcmask 687104
  %v9866 = vsel %vm9864, %v9842, 0
  %v9869 = vsel %vm9864, %v9843, 0
  %v9872 = vsel %vm9864, %v9844, 0
  %v9875 = vsel %vm9864, %v9845, 0
  %v9878 = vsel %vm183, %v9856, 0
  %9880 = vmatprep.subr.mxu0 0.0
  %9881 = vmatpush1.msra.mxu0 %v9846
  %9882 = vmatprep.subr.mxu0 0.0
  %9883 = vmatpush1.msra.mxu0 %v9847
  %9884 = vmatprep.subr.mxu0 0.0
  %9885 = vmatpush1.msra.mxu0 %v9848
  %9886 = vmatprep.subr.mxu0 0.0
  %9887 = vmatpush1.msra.mxu0 %v9849
  %9888 = vmatprep.subr.mxu0 0.0
  %9889 = vmatpush1.msra.mxu0 %v9850
  %9890 = vmatprep.subr.mxu0 0.0
  %9891 = vmatpush1.msra.mxu0 %v9851
  %9892 = vmatprep.subr.mxu0 0.0
  %9893 = vmatpush1.msra.mxu0 %v9852
  %9894 = vmatprep.subr.mxu0 0.0
  %9895 = vmatpush1.msra.mxu0 %v9853
  %9896 = vmatprep.subr.mxu0 0.0
  %9897 = vmatpush1.msra.mxu0 %v9854
  %9898 = vmatprep.subr.mxu0 0.0
  %9899 = vmatpush1.msra.mxu0 %v9855
  %9900 = vmatprep.subr.mxu0 0.0
  %9901 = vmatpush1.msra.mxu0 %v9878
  %9902 = vmatprep.subr.mxu0 0.0
  %9903 = vmatpush1.msra.mxu0 0.0
  %9904 = vmatprep.subr.mxu0 0.0
  %9905 = vmatpush1.msra.mxu0 0.0
  %9906 = vmatprep.subr.mxu0 0.0
  %9907 = vmatpush1.msra.mxu0 0.0
  %9908 = vmatprep.subr.mxu0 0.0
  %9909 = vmatpush1.msra.mxu0 0.0
  %9910 = vmatprep.subr.mxu0 0.0
  %9911 = vmatpush1.msra.mxu0 0.0
  %9912 = vmatprep.subr.mxu0 0.0
  %9913 = vmatpush1.msra.mxu0 0.0
  %9914 = vmatprep.subr.mxu0 0.0
  %9915 = vmatpush1.msra.mxu0 0.0
  %9916 = vmatprep.subr.mxu0 0.0
  %9917 = vmatpush1.msra.mxu0 0.0
  %9918 = vmatprep.subr.mxu0 0.0
  %9919 = vmatpush1.msra.mxu0 0.0
  %9920 = vmatprep.subr.mxu0 0.0
  %9921 = vmatpush1.msra.mxu0 0.0
  %9922 = vmatprep.subr.mxu0 0.0
  %9923 = vmatpush1.msra.mxu0 0.0
  %9924 = vmatprep.subr.mxu0 0.0
  %9925 = vmatpush1.msra.mxu0 0.0
  %9926 = vmatprep.subr.mxu0 0.0
  %9927 = vmatpush1.msra.mxu0 0.0
  %9928 = vmatprep.subr.mxu0 0.0
  %9929 = vmatpush1.msra.mxu0 0.0
  %9930 = vmatprep.subr.mxu0 0.0
  %9931 = vmatpush1.msra.mxu0 0.0
  %9932 = vmatprep.subr.mxu0 0.0
  %9933 = vmatpush1.msra.mxu0 0.0
  %9934 = vmatprep.subr.mxu0 0.0
  %9935 = vmatpush1.msra.mxu0 0.0
  %9936 = vmatprep.subr.mxu0 0.0
  %9937 = vmatpush1.msra.mxu0 0.0
  %9938 = vmatprep.subr.mxu0 0.0
  %9939 = vmatpush1.msra.mxu0 0.0
  %9940 = vmatprep.subr.mxu0 0.0
  %9941 = vmatpush1.msra.mxu0 0.0
  %9942 = vmatprep.subr.mxu0 0.0
  %9943 = vmatpush1.msra.mxu0 0.0
  %9944 = vmatprep.mubr.f32.mxu0 0.0
  %9945 = vmatmul.mubr.f32.gmra.mrb[0].mxu0 %v9866
  %v9946 = vpop.f32.mrb[0].mxu0
  %v9947 = vadd.f32 %v9862, %v9946
  %v9948 = vpop.f32.mrb[0].mxu0
  %9949 = vmatprep.mubr.f32.mxu0 0.0
  %9950 = vmatmul.mubr.f32.gmra.mrb[0].mxu0 %v9869
  %v9951 = vpop.f32.mrb[0].mxu0
  %v9952 = vadd.f32 %v9862, %v9951
  %v9953 = vpop.f32.mrb[0].mxu0
  %9954 = vmatprep.mubr.f32.mxu0 0.0
  %9955 = vmatmul.mubr.f32.gmra.mrb[0].mxu0 %v9872
  %v9956 = vpop.f32.mrb[0].mxu0
  %v9957 = vadd.f32 %v9862, %v9956
  %v9958 = vpop.f32.mrb[0].mxu0
  %9959 = vmatprep.mubr.f32.mxu0 0.0
  %9960 = vmatmul.mubr.f32.gmra.mrb[0].mxu0 %v9875
  %v9961 = vpop.f32.mrb[0].mxu0
  %v9962 = vadd.f32 %v9862, %v9961
  %v9963 = vpop.f32.mrb[0].mxu0
  %9964 = vdwg.mxu0
  %9965 = vst [vmem:[%s13] sm:$0xff] %v9947
  %9966 = vst [vmem:[%s13 + $0x8] sm:$0xff] %v9952
  %9967 = vst [vmem:[%s13 + $0x10] sm:$0xff] %v9957
  %9968 = vst [vmem:[%s13 + $0x18] sm:$0xff] %v9962
  // Predicated region
  $region54: #{lenet_forward.1} parent=0 // pred_check
    _
  $region55: #{lenet_forward.1} parent=0 // pred_check_branch
    %9970 = sbr.rel (0) target = $region57
  $region56: #{lenet_forward.1} parent=0 // pred_region
    _
  $region57: #{lenet_forward.1} parent=0 // pred_fallthru
    _
  // Predicated region
  $region58: #{lenet_forward.1} parent=0 // pred_check
    _
  $region59: #{lenet_forward.1} parent=0 // pred_check_branch
    %9972 = sbr.rel (0) target = $region61
  $region60: #{lenet_forward.1} parent=0 // pred_region
    _
  $region61: #{lenet_forward.1} parent=0 // pred_fallthru
    _

</llo_original>
